<compile_context>
chip_gen: v7x
topology: tpu7x:2x2x1
jax: 0.10.0
libtpu: 0.0.40
codegen_flags: <defaults>
</compile_context>

<pallas_src>
import numpy as np
import jax
import jax.numpy as jnp
from jax.experimental import pallas as pl
from jax.experimental.pallas import tpu as pltpu

LANE = 128      # TPU lane width; all feature dims in this model are <= 128
D_HEAD = 128    # head hidden width fixed by the module ([128, 128, num_class])


def _block_meta(dims):
    # (in_features, out_features, has_downsample) per VectorResBlock
    return [(dims[i], dims[i + 1], dims[i] != dims[i + 1]) for i in range(len(dims) - 1)]


def _round_up(n, m):
    return ((n + m - 1) // m) * m


def _pad_vec(v, width):
    return jnp.pad(v, (0, width - v.shape[0]))


def _pad_mat(m, rows, cols):
    return jnp.pad(m, ((0, rows - m.shape[0]), (0, cols - m.shape[1])))


def _block_diag(mats, rstride, cstride, rows, cols, dtype):
    out = jnp.zeros((rows, cols), dtype)
    for h, m in enumerate(mats):
        out = out.at[h * rstride:h * rstride + m.shape[0],
                     h * cstride:h * cstride + m.shape[1]].set(m.astype(dtype))
    return out


# ---------------------------------------------------------------------------
# Parameter preparation (done once, outside the kernel)
# ---------------------------------------------------------------------------

def fold_block(p, has_ds):
    """Fold BN2 into fc1's columns and the downsample BN into its Linear's columns.

    Returns (s1, b1, W1_folded_bf16, b2, W2_bf16, Wd_folded_bf16 | None, bd | None).
    Only BN1 (pre-ReLU) must stay as an explicit scale/shift.
    """
    if has_ds:
        s1, b1, W1, s2, b2, W2, Wd, sd, bd = p
        return (s1, b1, (W1 * s2).astype(jnp.bfloat16), b2, W2.astype(jnp.bfloat16),
                (Wd * sd).astype(jnp.bfloat16), bd)
    s1, b1, W1, s2, b2, W2 = p
    return (s1, b1, (W1 * s2).astype(jnp.bfloat16), b2, W2.astype(jnp.bfloat16),
            None, None)


def prepare_params(shared_params, head_params, shared_meta, head_meta, num_bs, num_class):
    """Fold BN params and pack everything into 6 lane-padded arrays."""
    assert all(din <= LANE and dout <= LANE for (din, dout, _) in shared_meta)
    assert len(head_meta) == 2
    assert head_meta[0][0] == D_HEAD and head_meta[0][1] == D_HEAD and not head_meta[0][2]
    assert head_meta[1][0] == D_HEAD
    # TODO(synk): widen the fused-head output block for num_bs * num_class > 128.
    assert num_bs * num_class <= LANE

    shared_folded = [fold_block(p, m[2]) for p, m in zip(shared_params, shared_meta)]
    heads_folded = [[fold_block(p, m[2]) for p, m in zip(head, head_meta)]
                    for head in head_params]

    nbL = num_bs * D_HEAD

    # ---- shared trunk: zero-pad every weight to (128, 128), every vector to (128,) ----
    w128, vecs = [], []
    for (s1, b1, W1, b2, W2, Wd, bd), (_, _, has_ds) in zip(shared_folded, shared_meta):
        vecs += [_pad_vec(s1, LANE), _pad_vec(b1, LANE), _pad_vec(b2, LANE)]
        w128 += [_pad_mat(W1, LANE, LANE), _pad_mat(W2, LANE, LANE)]
        if has_ds:
            vecs.append(_pad_vec(bd, LANE))
            w128.append(_pad_mat(Wd, LANE, LANE))

    # ---- heads: fuse across heads (block-diagonal weights, concatenated vectors) ----
    A = [hf[0] for hf in heads_folded]   # VectorResBlock(128, 128), no downsample
    B = [hf[1] for hf in heads_folded]   # VectorResBlock(128, num_class)
    head_b_ds = B[0][5] is not None
    assert head_b_ds or num_bs == 1      # num_class == 128 with fused heads not supported

    vecA = jnp.stack([
        jnp.concatenate([a[0] for a in A]),     # s1 of head block 1   (nbL,)
        jnp.concatenate([a[1] for a in A]),     # b1 of head block 1
        jnp.concatenate([a[3] for a in A]),     # folded b2 of head block 1
        jnp.concatenate([b[0] for b in B]),     # s1 of head block 2
        jnp.concatenate([b[1] for b in B]),     # b1 of head block 2
    ])
    W1A = _block_diag([a[2] for a in A], D_HEAD, D_HEAD, nbL, nbL, jnp.bfloat16)
    W2A = _block_diag([a[4] for a in A], D_HEAD, D_HEAD, nbL, nbL, jnp.bfloat16)
    W1B = _block_diag([b[2] for b in B], D_HEAD, num_class, nbL, LANE, jnp.bfloat16)
    W2B = _block_diag([b[4] for b in B], num_class, num_class, LANE, LANE, jnp.bfloat16)
    w128.append(W2B)                            # lives in the (128,128) weight stack

    if head_b_ds:
        WdB = _block_diag([b[5] for b in B], D_HEAD, num_class, nbL, LANE, jnp.bfloat16)
        bdB = _pad_vec(jnp.concatenate([b[6] for b in B]), LANE)
    else:
        WdB = jnp.zeros((nbL, LANE), jnp.bfloat16)
        bdB = jnp.zeros((LANE,), jnp.float32)
    vecB = jnp.stack([_pad_vec(jnp.concatenate([b[3] for b in B]), LANE), bdB])

    packed = dict(
        w128=jnp.stack(w128),                   # (n128, 128, 128) bf16
        vec_shared=jnp.stack(vecs),             # (nvec, 128)      f32
        wA=jnp.stack([W1A, W2A]),               # (2, nbL, nbL)    bf16
        wB=jnp.stack([W1B, WdB]),               # (2, nbL, 128)    bf16
        vecA=vecA,                              # (5, nbL)         f32
        vecB=vecB,                              # (2, 128)         f32
    )
    return packed, shared_folded, heads_folded, head_b_ds


# ---------------------------------------------------------------------------
# Kernel
# ---------------------------------------------------------------------------

def make_kernel(shared_meta, feature_dim, num_bs, head_b_ds):
    # The head_b_ds == False path (identity residual) only type-checks for num_bs == 1;
    # keep in sync with the assert in prepare_params.
    if not head_b_ds:
        assert num_bs == 1

    def kernel(x_ref, w128_ref, vs_ref, wA_ref, wB_ref, vA_ref, vB_ref, out_ref):
        def mm(a, w):
            # bf16 operands on the MXU, f32 accumulation (elementwise math stays f32)
            return jnp.dot(a.astype(jnp.bfloat16), w, preferred_element_type=jnp.float32)

        # small vector tables: load each exactly once (no per-head re-reads)
        VS = vs_ref[...]            # (nvec, 128)
        VA = vA_ref[...]            # (5, num_bs*128)
        VB = vB_ref[...]            # (2, 128)

        def row(tbl, i):
            return tbl[i:i + 1, :]  # keep 2-D (1, width) for clean lane broadcast

        # x arrives with only its F useful lanes (4x less input DMA); lane-pad in VMEM.
        xt = x_ref[...]             # (TB, F) f32
        tb = xt.shape[0]
        if feature_dim < LANE:
            xt = jnp.pad(xt, ((0, 0), (0, LANE - feature_dim)))
        h = xt                      # (TB, 128); lanes >= feature_dim are zero
        wi = 0
        vi = 0

        # ---- shared trunk: VectorResBlock + ReLU per stage ----
        for (_, _, has_ds) in shared_meta:
            a = jnp.maximum(h * row(VS, vi) + row(VS, vi + 1), 0.0)     # BN1 + ReLU
            o = mm(a, w128_ref[wi]) + row(VS, vi + 2)                   # fc1 (+ folded BN2)
            o = jnp.maximum(o, 0.0)                                     # ReLU
            o = mm(o, w128_ref[wi + 1])                                 # fc2
            wi += 2
            vi += 3
            if has_ds:
                idn = mm(h, w128_ref[wi]) + row(VS, vi)                 # folded downsample
                wi += 1
                vi += 1
            else:
                idn = h
            h = jnp.maximum(o + idn, 0.0)                               # residual + trunk ReLU

        # ---- fused output heads, lane layout [head0 | head1 | ...] ----
        hrep = jnp.concatenate([h] * num_bs, axis=-1) if num_bs > 1 else h

        # head block 1: 128 -> 128 per head (block-diagonal), no downsample, then ReLU
        a = jnp.maximum(hrep * row(VA, 0) + row(VA, 1), 0.0)
        o = mm(a, wA_ref[0]) + row(VA, 2)
        o = jnp.maximum(o, 0.0)
        o = mm(o, wA_ref[1])
        y = jnp.maximum(o + hrep, 0.0)

        # head block 2: 128 -> num_class per head (block-diagonal), no trailing ReLU
        a = jnp.maximum(y * row(VA, 3) + row(VA, 4), 0.0)
        o = mm(a, wB_ref[0]) + row(VB, 0)
        o = jnp.maximum(o, 0.0)
        o = mm(o, w128_ref[wi])                                         # fused head W2
        if head_b_ds:
            idn = mm(y, wB_ref[1]) + row(VB, 1)                         # folded downsample
        else:
            idn = y
        out_ref[...] = o + idn      # (TB, 128) dense lane store; lanes >= nb*nc are zero

    return kernel


# ---------------------------------------------------------------------------
# Wrapper
# ---------------------------------------------------------------------------

def beam_prediction_forward(x, packed, shared_meta, num_bs, num_class, head_b_ds,
                            batch_tile=512, vmem_limit_bytes=None):
    """batch_tile: sweep 256/512(/1024).  For v7x pick it so Bp//TB is >= 2 and even
    (both TensorCores); for v5e/v6e and small B a 1-step grid is best.  If batch_tile is
    pushed past ~1024, pass vmem_limit_bytes explicitly (v5e scoped default is 16 MiB)."""
    B, F = x.shape
    assert F <= LANE
    TB = min(batch_tile, _round_up(B, 8))
    Bp = _round_up(B, TB)
    # Batch-dim pad only (skipped when already aligned); NO lane pad — the kernel pads.
    xp = x if Bp == B else jnp.pad(x, ((0, Bp - B), (0, 0)))

    kernel = make_kernel(shared_meta, F, num_bs, head_b_ds)
    const3 = lambda i: (0, 0, 0)                    # weights resident across grid steps
    const2 = lambda i: (0, 0)

    cparams = dict(dimension_semantics=("parallel",))
    if vmem_limit_bytes is not None:
        cparams["vmem_limit_bytes"] = vmem_limit_bytes

    out = pl.pallas_call(
        kernel,
        out_shape=jax.ShapeDtypeStruct((Bp, LANE), jnp.float32),
        grid=(Bp // TB,),
        in_specs=[
            # last block dim == full array dim (F) -> legal and 4x fewer input DMA bytes
            pl.BlockSpec((TB, F), lambda i: (i, 0)),
            pl.BlockSpec(packed["w128"].shape, const3),
            pl.BlockSpec(packed["vec_shared"].shape, const2),
            pl.BlockSpec(packed["wA"].shape, const3),
            pl.BlockSpec(packed["wB"].shape, const3),
            pl.BlockSpec(packed["vecA"].shape, const2),
            pl.BlockSpec(packed["vecB"].shape, const2),
        ],
        out_specs=pl.BlockSpec((TB, LANE), lambda i: (i, 0)),
        compiler_params=pltpu.CompilerParams(**cparams),
    )(xp, packed["w128"], packed["vec_shared"], packed["wA"], packed["wB"],
      packed["vecA"], packed["vecB"])

    # torch.stack(outputs, dim=-2) -> (batch, num_bs, num_class)
    return out[:B, :num_bs * num_class].reshape(B, num_bs, num_class)


# ---------------------------------------------------------------------------
# References
# ---------------------------------------------------------------------------

def ref_forward_folded(x, shared_folded, heads_folded):
    """Pure-JAX reference using the exact folded/bf16 weights (and bf16 matmul
    activations) the kernel consumes.  Not bit-identical to the kernel: the f32
    intermediates differ by ~1 ULP between backends, which can flip bf16 roundings."""
    def mm(a, w):
        return jnp.dot(a.astype(jnp.bfloat16), w, preferred_element_type=jnp.float32)

    def block(h, p):
        s1, b1, W1, b2, W2, Wd, bd = p
        o = jnp.maximum(h * s1 + b1, 0.0)
        o = mm(o, W1) + b2
        o = jnp.maximum(o, 0.0)
        o = mm(o, W2)
        idn = h if Wd is None else mm(h, Wd) + bd
        return o + idn

    h = x
    for p in shared_folded:
        h = jnp.maximum(block(h, p), 0.0)
    outs = []
    for head in heads_folded:
        y = jnp.maximum(block(h, head[0]), 0.0)
        outs.append(block(y, head[1]))
    return jnp.stack(outs, axis=-2)


def ref_forward_f32(x, shared_params, head_params, shared_meta, head_meta):
    """Unfolded f32 reference matching the PyTorch module (inference-mode BN)."""
    def block(h, p, has_ds):
        if has_ds:
            s1, b1, W1, s2, b2, W2, Wd, sd, bd = p
        else:
            s1, b1, W1, s2, b2, W2 = p
        o = jnp.maximum(h * s1 + b1, 0.0)
        o = jnp.dot(o, W1, preferred_element_type=jnp.float32)
        o = jnp.maximum(o * s2 + b2, 0.0)
        o = jnp.dot(o, W2, preferred_element_type=jnp.float32)
        idn = (jnp.dot(h, Wd, preferred_element_type=jnp.float32) * sd + bd) if has_ds else h
        return o + idn

    h = x
    for p, (_, _, ds) in zip(shared_params, shared_meta):
        h = jnp.maximum(block(h, p, ds), 0.0)
    outs = []
    for head in head_params:
        y = h
        for bi, (p, (_, _, ds)) in enumerate(zip(head, head_meta)):
            y = block(y, p, ds)
            if bi < len(head_meta) - 1:
                y = jnp.maximum(y, 0.0)
        outs.append(y)
    return jnp.stack(outs, axis=-2)


# ---------------------------------------------------------------------------
# Parameter init (inference-mode BN: running stats + affine already folded to scale/shift)
# ---------------------------------------------------------------------------

def init_resblock(key, din, dout, has_ds):
    ks = jax.random.split(key, 6)

    def bn(k, d):
        k1, k2 = jax.random.split(k)
        return (1.0 + 0.1 * jax.random.normal(k1, (d,), jnp.float32),
                0.05 * jax.random.normal(k2, (d,), jnp.float32))

    def lin(k, di, do):
        std = (2.0 / (di + do)) ** 0.5  # xavier-normal, stored transposed: (in, out)
        return std * jax.random.normal(k, (di, do), jnp.float32)

    s1, b1 = bn(ks[0], din)
    W1 = lin(ks[1], din, dout)
    s2, b2 = bn(ks[2], dout)
    W2 = lin(ks[3], dout, dout)
    params = [s1, b1, W1, s2, b2, W2]
    if has_ds:
        Wd = lin(ks[4], din, dout)
        sd, bd = bn(ks[5], dout)
        params += [Wd, sd, bd]
    return params


if __name__ == "__main__":
    B, FEATURE_DIM, NUM_BS, NUM_CLASS = 256, 32, 2, 16
    shared_dims = [FEATURE_DIM, 128, 64, 32, 64, 128]
    head_dims = [D_HEAD, D_HEAD, NUM_CLASS]
    shared_meta = _block_meta(shared_dims)
    head_meta = _block_meta(head_dims)

    key = jax.random.PRNGKey(0)
    n_keys = 1 + len(shared_meta) + NUM_BS * len(head_meta)
    keys = jax.random.split(key, n_keys)

    x = jax.random.normal(keys[0], (B, FEATURE_DIM), jnp.float32)

    ki = 1
    shared_params = []
    for (din, dout, has_ds) in shared_meta:
        shared_params.append(init_resblock(keys[ki], din, dout, has_ds))
        ki += 1
    head_params = []
    for _ in range(NUM_BS):
        hp = []
        for (din, dout, has_ds) in head_meta:
            hp.append(init_resblock(keys[ki], din, dout, has_ds))
            ki += 1
        head_params.append(hp)

    packed, shared_folded, heads_folded, head_b_ds = prepare_params(
        shared_params, head_params, shared_meta, head_meta, NUM_BS, NUM_CLASS)

    # B=256 with batch_tile=512 -> TB=256, a single grid step (good for v5e/v6e demo).
    out = beam_prediction_forward(x, packed, shared_meta, NUM_BS, NUM_CLASS, head_b_ds,
                                  batch_tile=512)
    out = jax.block_until_ready(out)
    assert out.shape == (B, NUM_BS, NUM_CLASS)

    # Check vs a reference doing the same folded/bf16 math.  Both paths round matmul
    # activations to bf16, but from slightly different f32 intermediates, so agreement is
    # at bf16-chain accuracy (observed max abs diff ~6e-3), not bit-exact.
    ref_bf16 = ref_forward_folded(x, shared_folded, heads_folded)
    np.testing.assert_allclose(np.asarray(out), np.asarray(ref_bf16), rtol=3e-2, atol=3e-2)

    # Loose check vs the full-precision, unfolded f32 module math (bf16 weight/activation
    # quantization over ~15 chained matmuls introduces small, expected deviations).
    ref_f32 = ref_forward_f32(x, shared_params, head_params, shared_meta, head_meta)
    np.testing.assert_allclose(np.asarray(out), np.asarray(ref_f32), rtol=1e-1, atol=1e-1)

    print("KERNEL_OK")
</pallas_src>

<mosaic_0001>
module attributes {stable_mosaic.version = 11 : i64} {
  func.func @kernel(%arg0: i32, %arg1: memref<256x32xf32, #tpu.memory_space<vmem>>, %arg2: memref<16x128x128xbf16, #tpu.memory_space<vmem>>, %arg3: memref<20x128xf32, #tpu.memory_space<vmem>>, %arg4: memref<2x256x256xbf16, #tpu.memory_space<vmem>>, %arg5: memref<2x256x128xbf16, #tpu.memory_space<vmem>>, %arg6: memref<5x256xf32, #tpu.memory_space<vmem>>, %arg7: memref<2x128xf32, #tpu.memory_space<vmem>>, %arg8: memref<256x128xf32, #tpu.memory_space<vmem>>) attributes {dimension_semantics = [#tpu.dimension_semantics<parallel>], iteration_bounds = array<i64: 1>, scalar_prefetch = 0 : i64, scratch_operands = 0 : i64, tpu.core_type = #tpu.core_type<tc>, window_params = [{transform_indices = @transform_0, window_bounds = array<i64: 256, 32>}, {pipeline_mode = #tpu.pipeline_mode<synchronous>, transform_indices = @transform_1, window_bounds = array<i64: 16, 128, 128>}, {pipeline_mode = #tpu.pipeline_mode<synchronous>, transform_indices = @transform_2, window_bounds = array<i64: 20, 128>}, {pipeline_mode = #tpu.pipeline_mode<synchronous>, transform_indices = @transform_3, window_bounds = array<i64: 2, 256, 256>}, {pipeline_mode = #tpu.pipeline_mode<synchronous>, transform_indices = @transform_4, window_bounds = array<i64: 2, 256, 128>}, {pipeline_mode = #tpu.pipeline_mode<synchronous>, transform_indices = @transform_5, window_bounds = array<i64: 5, 256>}, {pipeline_mode = #tpu.pipeline_mode<synchronous>, transform_indices = @transform_6, window_bounds = array<i64: 2, 128>}, {transform_indices = @transform_7, window_bounds = array<i64: 256, 128>}]} {
    %c0 = arith.constant 0 : index
    %c0_0 = arith.constant 0 : index
    %0 = vector.load %arg3[%c0, %c0_0] : memref<20x128xf32, #tpu.memory_space<vmem>>, vector<20x128xf32>
    %c0_1 = arith.constant 0 : index
    %c0_2 = arith.constant 0 : index
    %1 = vector.load %arg6[%c0_1, %c0_2] : memref<5x256xf32, #tpu.memory_space<vmem>>, vector<5x256xf32>
    %c0_3 = arith.constant 0 : index
    %c0_4 = arith.constant 0 : index
    %2 = vector.load %arg7[%c0_3, %c0_4] : memref<2x128xf32, #tpu.memory_space<vmem>>, vector<2x128xf32>
    %c0_5 = arith.constant 0 : index
    %c0_6 = arith.constant 0 : index
    %3 = vector.load %arg1[%c0_5, %c0_6] : memref<256x32xf32, #tpu.memory_space<vmem>>, vector<256x32xf32>
    %c0_i32 = arith.constant 0 : i32
    %4 = arith.sitofp %c0_i32 : i32 to f32
    %5 = vector.broadcast %4 : f32 to vector<256x96xf32>
    %6 = tpu.concatenate %3, %5 in 1 : vector<256x32xf32>, vector<256x96xf32> -> vector<256x128xf32>
    %7 = vector.extract_strided_slice %0 {offsets = [0, 0], sizes = [1, 128], strides = [1, 1]} : vector<20x128xf32> to vector<1x128xf32>
    %8 = vector.broadcast %7 : vector<1x128xf32> to vector<256x128xf32>
    %9 = arith.mulf %6, %8 : vector<256x128xf32>
    %10 = vector.extract_strided_slice %0 {offsets = [1, 0], sizes = [1, 128], strides = [1, 1]} : vector<20x128xf32> to vector<1x128xf32>
    %11 = vector.broadcast %10 : vector<1x128xf32> to vector<256x128xf32>
    %12 = arith.addf %9, %11 : vector<256x128xf32>
    %cst = arith.constant 0.000000e+00 : f32
    %13 = vector.broadcast %cst : f32 to vector<256x128xf32>
    %14 = arith.maximumf %12, %13 : vector<256x128xf32>
    %c0_7 = arith.constant 0 : index
    %c0_8 = arith.constant 0 : index
    %c0_9 = arith.constant 0 : index
    %15 = vector.load %arg2[%c0_7, %c0_8, %c0_9] : memref<16x128x128xbf16, #tpu.memory_space<vmem>>, vector<1x128x128xbf16>
    %16 = vector.shape_cast %15 : vector<1x128x128xbf16> to vector<128x128xbf16>
    %17 = arith.truncf %14 : vector<256x128xf32> to vector<256x128xbf16>
    %cst_10 = arith.constant dense<0.000000e+00> : vector<256x128xf32>
    %18 = tpu.matmul %17, %16, %cst_10 {dimension_numbers = #tpu.dot_dimension_numbers<[1], [0], [0], [1], [0, 0, 1, 1], [], []>} : vector<256x128xbf16>, vector<128x128xbf16>, vector<256x128xf32> -> vector<256x128xf32>
    %19 = vector.extract_strided_slice %0 {offsets = [2, 0], sizes = [1, 128], strides = [1, 1]} : vector<20x128xf32> to vector<1x128xf32>
    %20 = vector.broadcast %19 : vector<1x128xf32> to vector<256x128xf32>
    %21 = arith.addf %18, %20 : vector<256x128xf32>
    %cst_11 = arith.constant 0.000000e+00 : f32
    %22 = vector.broadcast %cst_11 : f32 to vector<256x128xf32>
    %23 = arith.maximumf %21, %22 : vector<256x128xf32>
    %c1 = arith.constant 1 : index
    %c0_12 = arith.constant 0 : index
    %c0_13 = arith.constant 0 : index
    %24 = vector.load %arg2[%c1, %c0_12, %c0_13] : memref<16x128x128xbf16, #tpu.memory_space<vmem>>, vector<1x128x128xbf16>
    %25 = vector.shape_cast %24 : vector<1x128x128xbf16> to vector<128x128xbf16>
    %26 = arith.truncf %23 : vector<256x128xf32> to vector<256x128xbf16>
    %cst_14 = arith.constant dense<0.000000e+00> : vector<256x128xf32>
    %27 = tpu.matmul %26, %25, %cst_14 {dimension_numbers = #tpu.dot_dimension_numbers<[1], [0], [0], [1], [0, 0, 1, 1], [], []>} : vector<256x128xbf16>, vector<128x128xbf16>, vector<256x128xf32> -> vector<256x128xf32>
    %c2 = arith.constant 2 : index
    %c0_15 = arith.constant 0 : index
    %c0_16 = arith.constant 0 : index
    %28 = vector.load %arg2[%c2, %c0_15, %c0_16] : memref<16x128x128xbf16, #tpu.memory_space<vmem>>, vector<1x128x128xbf16>
    %29 = vector.shape_cast %28 : vector<1x128x128xbf16> to vector<128x128xbf16>
    %30 = arith.truncf %6 : vector<256x128xf32> to vector<256x128xbf16>
    %cst_17 = arith.constant dense<0.000000e+00> : vector<256x128xf32>
    %31 = tpu.matmul %30, %29, %cst_17 {dimension_numbers = #tpu.dot_dimension_numbers<[1], [0], [0], [1], [0, 0, 1, 1], [], []>} : vector<256x128xbf16>, vector<128x128xbf16>, vector<256x128xf32> -> vector<256x128xf32>
    %32 = vector.extract_strided_slice %0 {offsets = [3, 0], sizes = [1, 128], strides = [1, 1]} : vector<20x128xf32> to vector<1x128xf32>
    %33 = vector.broadcast %32 : vector<1x128xf32> to vector<256x128xf32>
    %34 = arith.addf %31, %33 : vector<256x128xf32>
    %35 = arith.addf %27, %34 : vector<256x128xf32>
    %cst_18 = arith.constant 0.000000e+00 : f32
    %36 = vector.broadcast %cst_18 : f32 to vector<256x128xf32>
    %37 = arith.maximumf %35, %36 : vector<256x128xf32>
    %38 = vector.extract_strided_slice %0 {offsets = [4, 0], sizes = [1, 128], strides = [1, 1]} : vector<20x128xf32> to vector<1x128xf32>
    %39 = vector.broadcast %38 : vector<1x128xf32> to vector<256x128xf32>
    %40 = arith.mulf %37, %39 : vector<256x128xf32>
    %41 = vector.extract_strided_slice %0 {offsets = [5, 0], sizes = [1, 128], strides = [1, 1]} : vector<20x128xf32> to vector<1x128xf32>
    %42 = vector.broadcast %41 : vector<1x128xf32> to vector<256x128xf32>
    %43 = arith.addf %40, %42 : vector<256x128xf32>
    %cst_19 = arith.constant 0.000000e+00 : f32
    %44 = vector.broadcast %cst_19 : f32 to vector<256x128xf32>
    %45 = arith.maximumf %43, %44 : vector<256x128xf32>
    %c3 = arith.constant 3 : index
    %c0_20 = arith.constant 0 : index
    %c0_21 = arith.constant 0 : index
    %46 = vector.load %arg2[%c3, %c0_20, %c0_21] : memref<16x128x128xbf16, #tpu.memory_space<vmem>>, vector<1x128x128xbf16>
    %47 = vector.shape_cast %46 : vector<1x128x128xbf16> to vector<128x128xbf16>
    %48 = arith.truncf %45 : vector<256x128xf32> to vector<256x128xbf16>
    %cst_22 = arith.constant dense<0.000000e+00> : vector<256x128xf32>
    %49 = tpu.matmul %48, %47, %cst_22 {dimension_numbers = #tpu.dot_dimension_numbers<[1], [0], [0], [1], [0, 0, 1, 1], [], []>} : vector<256x128xbf16>, vector<128x128xbf16>, vector<256x128xf32> -> vector<256x128xf32>
    %50 = vector.extract_strided_slice %0 {offsets = [6, 0], sizes = [1, 128], strides = [1, 1]} : vector<20x128xf32> to vector<1x128xf32>
    %51 = vector.broadcast %50 : vector<1x128xf32> to vector<256x128xf32>
    %52 = arith.addf %49, %51 : vector<256x128xf32>
    %cst_23 = arith.constant 0.000000e+00 : f32
    %53 = vector.broadcast %cst_23 : f32 to vector<256x128xf32>
    %54 = arith.maximumf %52, %53 : vector<256x128xf32>
    %c4 = arith.constant 4 : index
    %c0_24 = arith.constant 0 : index
    %c0_25 = arith.constant 0 : index
    %55 = vector.load %arg2[%c4, %c0_24, %c0_25] : memref<16x128x128xbf16, #tpu.memory_space<vmem>>, vector<1x128x128xbf16>
    %56 = vector.shape_cast %55 : vector<1x128x128xbf16> to vector<128x128xbf16>
    %57 = arith.truncf %54 : vector<256x128xf32> to vector<256x128xbf16>
    %cst_26 = arith.constant dense<0.000000e+00> : vector<256x128xf32>
    %58 = tpu.matmul %57, %56, %cst_26 {dimension_numbers = #tpu.dot_dimension_numbers<[1], [0], [0], [1], [0, 0, 1, 1], [], []>} : vector<256x128xbf16>, vector<128x128xbf16>, vector<256x128xf32> -> vector<256x128xf32>
    %c5 = arith.constant 5 : index
    %c0_27 = arith.constant 0 : index
    %c0_28 = arith.constant 0 : index
    %59 = vector.load %arg2[%c5, %c0_27, %c0_28] : memref<16x128x128xbf16, #tpu.memory_space<vmem>>, vector<1x128x128xbf16>
    %60 = vector.shape_cast %59 : vector<1x128x128xbf16> to vector<128x128xbf16>
    %61 = arith.truncf %37 : vector<256x128xf32> to vector<256x128xbf16>
    %cst_29 = arith.constant dense<0.000000e+00> : vector<256x128xf32>
    %62 = tpu.matmul %61, %60, %cst_29 {dimension_numbers = #tpu.dot_dimension_numbers<[1], [0], [0], [1], [0, 0, 1, 1], [], []>} : vector<256x128xbf16>, vector<128x128xbf16>, vector<256x128xf32> -> vector<256x128xf32>
    %63 = vector.extract_strided_slice %0 {offsets = [7, 0], sizes = [1, 128], strides = [1, 1]} : vector<20x128xf32> to vector<1x128xf32>
    %64 = vector.broadcast %63 : vector<1x128xf32> to vector<256x128xf32>
    %65 = arith.addf %62, %64 : vector<256x128xf32>
    %66 = arith.addf %58, %65 : vector<256x128xf32>
    %cst_30 = arith.constant 0.000000e+00 : f32
    %67 = vector.broadcast %cst_30 : f32 to vector<256x128xf32>
    %68 = arith.maximumf %66, %67 : vector<256x128xf32>
    %69 = vector.extract_strided_slice %0 {offsets = [8, 0], sizes = [1, 128], strides = [1, 1]} : vector<20x128xf32> to vector<1x128xf32>
    %70 = vector.broadcast %69 : vector<1x128xf32> to vector<256x128xf32>
    %71 = arith.mulf %68, %70 : vector<256x128xf32>
    %72 = vector.extract_strided_slice %0 {offsets = [9, 0], sizes = [1, 128], strides = [1, 1]} : vector<20x128xf32> to vector<1x128xf32>
    %73 = vector.broadcast %72 : vector<1x128xf32> to vector<256x128xf32>
    %74 = arith.addf %71, %73 : vector<256x128xf32>
    %cst_31 = arith.constant 0.000000e+00 : f32
    %75 = vector.broadcast %cst_31 : f32 to vector<256x128xf32>
    %76 = arith.maximumf %74, %75 : vector<256x128xf32>
    %c6 = arith.constant 6 : index
    %c0_32 = arith.constant 0 : index
    %c0_33 = arith.constant 0 : index
    %77 = vector.load %arg2[%c6, %c0_32, %c0_33] : memref<16x128x128xbf16, #tpu.memory_space<vmem>>, vector<1x128x128xbf16>
    %78 = vector.shape_cast %77 : vector<1x128x128xbf16> to vector<128x128xbf16>
    %79 = arith.truncf %76 : vector<256x128xf32> to vector<256x128xbf16>
    %cst_34 = arith.constant dense<0.000000e+00> : vector<256x128xf32>
    %80 = tpu.matmul %79, %78, %cst_34 {dimension_numbers = #tpu.dot_dimension_numbers<[1], [0], [0], [1], [0, 0, 1, 1], [], []>} : vector<256x128xbf16>, vector<128x128xbf16>, vector<256x128xf32> -> vector<256x128xf32>
    %81 = vector.extract_strided_slice %0 {offsets = [10, 0], sizes = [1, 128], strides = [1, 1]} : vector<20x128xf32> to vector<1x128xf32>
    %82 = vector.broadcast %81 : vector<1x128xf32> to vector<256x128xf32>
    %83 = arith.addf %80, %82 : vector<256x128xf32>
    %cst_35 = arith.constant 0.000000e+00 : f32
    %84 = vector.broadcast %cst_35 : f32 to vector<256x128xf32>
    %85 = arith.maximumf %83, %84 : vector<256x128xf32>
    %c7 = arith.constant 7 : index
    %c0_36 = arith.constant 0 : index
    %c0_37 = arith.constant 0 : index
    %86 = vector.load %arg2[%c7, %c0_36, %c0_37] : memref<16x128x128xbf16, #tpu.memory_space<vmem>>, vector<1x128x128xbf16>
    %87 = vector.shape_cast %86 : vector<1x128x128xbf16> to vector<128x128xbf16>
    %88 = arith.truncf %85 : vector<256x128xf32> to vector<256x128xbf16>
    %cst_38 = arith.constant dense<0.000000e+00> : vector<256x128xf32>
    %89 = tpu.matmul %88, %87, %cst_38 {dimension_numbers = #tpu.dot_dimension_numbers<[1], [0], [0], [1], [0, 0, 1, 1], [], []>} : vector<256x128xbf16>, vector<128x128xbf16>, vector<256x128xf32> -> vector<256x128xf32>
    %c8 = arith.constant 8 : index
    %c0_39 = arith.constant 0 : index
    %c0_40 = arith.constant 0 : index
    %90 = vector.load %arg2[%c8, %c0_39, %c0_40] : memref<16x128x128xbf16, #tpu.memory_space<vmem>>, vector<1x128x128xbf16>
    %91 = vector.shape_cast %90 : vector<1x128x128xbf16> to vector<128x128xbf16>
    %92 = arith.truncf %68 : vector<256x128xf32> to vector<256x128xbf16>
    %cst_41 = arith.constant dense<0.000000e+00> : vector<256x128xf32>
    %93 = tpu.matmul %92, %91, %cst_41 {dimension_numbers = #tpu.dot_dimension_numbers<[1], [0], [0], [1], [0, 0, 1, 1], [], []>} : vector<256x128xbf16>, vector<128x128xbf16>, vector<256x128xf32> -> vector<256x128xf32>
    %94 = vector.extract_strided_slice %0 {offsets = [11, 0], sizes = [1, 128], strides = [1, 1]} : vector<20x128xf32> to vector<1x128xf32>
    %95 = vector.broadcast %94 : vector<1x128xf32> to vector<256x128xf32>
    %96 = arith.addf %93, %95 : vector<256x128xf32>
    %97 = arith.addf %89, %96 : vector<256x128xf32>
    %cst_42 = arith.constant 0.000000e+00 : f32
    %98 = vector.broadcast %cst_42 : f32 to vector<256x128xf32>
    %99 = arith.maximumf %97, %98 : vector<256x128xf32>
    %100 = vector.extract_strided_slice %0 {offsets = [12, 0], sizes = [1, 128], strides = [1, 1]} : vector<20x128xf32> to vector<1x128xf32>
    %101 = vector.broadcast %100 : vector<1x128xf32> to vector<256x128xf32>
    %102 = arith.mulf %99, %101 : vector<256x128xf32>
    %103 = vector.extract_strided_slice %0 {offsets = [13, 0], sizes = [1, 128], strides = [1, 1]} : vector<20x128xf32> to vector<1x128xf32>
    %104 = vector.broadcast %103 : vector<1x128xf32> to vector<256x128xf32>
    %105 = arith.addf %102, %104 : vector<256x128xf32>
    %cst_43 = arith.constant 0.000000e+00 : f32
    %106 = vector.broadcast %cst_43 : f32 to vector<256x128xf32>
    %107 = arith.maximumf %105, %106 : vector<256x128xf32>
    %c9 = arith.constant 9 : index
    %c0_44 = arith.constant 0 : index
    %c0_45 = arith.constant 0 : index
    %108 = vector.load %arg2[%c9, %c0_44, %c0_45] : memref<16x128x128xbf16, #tpu.memory_space<vmem>>, vector<1x128x128xbf16>
    %109 = vector.shape_cast %108 : vector<1x128x128xbf16> to vector<128x128xbf16>
    %110 = arith.truncf %107 : vector<256x128xf32> to vector<256x128xbf16>
    %cst_46 = arith.constant dense<0.000000e+00> : vector<256x128xf32>
    %111 = tpu.matmul %110, %109, %cst_46 {dimension_numbers = #tpu.dot_dimension_numbers<[1], [0], [0], [1], [0, 0, 1, 1], [], []>} : vector<256x128xbf16>, vector<128x128xbf16>, vector<256x128xf32> -> vector<256x128xf32>
    %112 = vector.extract_strided_slice %0 {offsets = [14, 0], sizes = [1, 128], strides = [1, 1]} : vector<20x128xf32> to vector<1x128xf32>
    %113 = vector.broadcast %112 : vector<1x128xf32> to vector<256x128xf32>
    %114 = arith.addf %111, %113 : vector<256x128xf32>
    %cst_47 = arith.constant 0.000000e+00 : f32
    %115 = vector.broadcast %cst_47 : f32 to vector<256x128xf32>
    %116 = arith.maximumf %114, %115 : vector<256x128xf32>
    %c10 = arith.constant 10 : index
    %c0_48 = arith.constant 0 : index
    %c0_49 = arith.constant 0 : index
    %117 = vector.load %arg2[%c10, %c0_48, %c0_49] : memref<16x128x128xbf16, #tpu.memory_space<vmem>>, vector<1x128x128xbf16>
    %118 = vector.shape_cast %117 : vector<1x128x128xbf16> to vector<128x128xbf16>
    %119 = arith.truncf %116 : vector<256x128xf32> to vector<256x128xbf16>
    %cst_50 = arith.constant dense<0.000000e+00> : vector<256x128xf32>
    %120 = tpu.matmul %119, %118, %cst_50 {dimension_numbers = #tpu.dot_dimension_numbers<[1], [0], [0], [1], [0, 0, 1, 1], [], []>} : vector<256x128xbf16>, vector<128x128xbf16>, vector<256x128xf32> -> vector<256x128xf32>
    %c11 = arith.constant 11 : index
    %c0_51 = arith.constant 0 : index
    %c0_52 = arith.constant 0 : index
    %121 = vector.load %arg2[%c11, %c0_51, %c0_52] : memref<16x128x128xbf16, #tpu.memory_space<vmem>>, vector<1x128x128xbf16>
    %122 = vector.shape_cast %121 : vector<1x128x128xbf16> to vector<128x128xbf16>
    %123 = arith.truncf %99 : vector<256x128xf32> to vector<256x128xbf16>
    %cst_53 = arith.constant dense<0.000000e+00> : vector<256x128xf32>
    %124 = tpu.matmul %123, %122, %cst_53 {dimension_numbers = #tpu.dot_dimension_numbers<[1], [0], [0], [1], [0, 0, 1, 1], [], []>} : vector<256x128xbf16>, vector<128x128xbf16>, vector<256x128xf32> -> vector<256x128xf32>
    %125 = vector.extract_strided_slice %0 {offsets = [15, 0], sizes = [1, 128], strides = [1, 1]} : vector<20x128xf32> to vector<1x128xf32>
    %126 = vector.broadcast %125 : vector<1x128xf32> to vector<256x128xf32>
    %127 = arith.addf %124, %126 : vector<256x128xf32>
    %128 = arith.addf %120, %127 : vector<256x128xf32>
    %cst_54 = arith.constant 0.000000e+00 : f32
    %129 = vector.broadcast %cst_54 : f32 to vector<256x128xf32>
    %130 = arith.maximumf %128, %129 : vector<256x128xf32>
    %131 = vector.extract_strided_slice %0 {offsets = [16, 0], sizes = [1, 128], strides = [1, 1]} : vector<20x128xf32> to vector<1x128xf32>
    %132 = vector.broadcast %131 : vector<1x128xf32> to vector<256x128xf32>
    %133 = arith.mulf %130, %132 : vector<256x128xf32>
    %134 = vector.extract_strided_slice %0 {offsets = [17, 0], sizes = [1, 128], strides = [1, 1]} : vector<20x128xf32> to vector<1x128xf32>
    %135 = vector.broadcast %134 : vector<1x128xf32> to vector<256x128xf32>
    %136 = arith.addf %133, %135 : vector<256x128xf32>
    %cst_55 = arith.constant 0.000000e+00 : f32
    %137 = vector.broadcast %cst_55 : f32 to vector<256x128xf32>
    %138 = arith.maximumf %136, %137 : vector<256x128xf32>
    %c12 = arith.constant 12 : index
    %c0_56 = arith.constant 0 : index
    %c0_57 = arith.constant 0 : index
    %139 = vector.load %arg2[%c12, %c0_56, %c0_57] : memref<16x128x128xbf16, #tpu.memory_space<vmem>>, vector<1x128x128xbf16>
    %140 = vector.shape_cast %139 : vector<1x128x128xbf16> to vector<128x128xbf16>
    %141 = arith.truncf %138 : vector<256x128xf32> to vector<256x128xbf16>
    %cst_58 = arith.constant dense<0.000000e+00> : vector<256x128xf32>
    %142 = tpu.matmul %141, %140, %cst_58 {dimension_numbers = #tpu.dot_dimension_numbers<[1], [0], [0], [1], [0, 0, 1, 1], [], []>} : vector<256x128xbf16>, vector<128x128xbf16>, vector<256x128xf32> -> vector<256x128xf32>
    %143 = vector.extract_strided_slice %0 {offsets = [18, 0], sizes = [1, 128], strides = [1, 1]} : vector<20x128xf32> to vector<1x128xf32>
    %144 = vector.broadcast %143 : vector<1x128xf32> to vector<256x128xf32>
    %145 = arith.addf %142, %144 : vector<256x128xf32>
    %cst_59 = arith.constant 0.000000e+00 : f32
    %146 = vector.broadcast %cst_59 : f32 to vector<256x128xf32>
    %147 = arith.maximumf %145, %146 : vector<256x128xf32>
    %c13 = arith.constant 13 : index
    %c0_60 = arith.constant 0 : index
    %c0_61 = arith.constant 0 : index
    %148 = vector.load %arg2[%c13, %c0_60, %c0_61] : memref<16x128x128xbf16, #tpu.memory_space<vmem>>, vector<1x128x128xbf16>
    %149 = vector.shape_cast %148 : vector<1x128x128xbf16> to vector<128x128xbf16>
    %150 = arith.truncf %147 : vector<256x128xf32> to vector<256x128xbf16>
    %cst_62 = arith.constant dense<0.000000e+00> : vector<256x128xf32>
    %151 = tpu.matmul %150, %149, %cst_62 {dimension_numbers = #tpu.dot_dimension_numbers<[1], [0], [0], [1], [0, 0, 1, 1], [], []>} : vector<256x128xbf16>, vector<128x128xbf16>, vector<256x128xf32> -> vector<256x128xf32>
    %c14 = arith.constant 14 : index
    %c0_63 = arith.constant 0 : index
    %c0_64 = arith.constant 0 : index
    %152 = vector.load %arg2[%c14, %c0_63, %c0_64] : memref<16x128x128xbf16, #tpu.memory_space<vmem>>, vector<1x128x128xbf16>
    %153 = vector.shape_cast %152 : vector<1x128x128xbf16> to vector<128x128xbf16>
    %154 = arith.truncf %130 : vector<256x128xf32> to vector<256x128xbf16>
    %cst_65 = arith.constant dense<0.000000e+00> : vector<256x128xf32>
    %155 = tpu.matmul %154, %153, %cst_65 {dimension_numbers = #tpu.dot_dimension_numbers<[1], [0], [0], [1], [0, 0, 1, 1], [], []>} : vector<256x128xbf16>, vector<128x128xbf16>, vector<256x128xf32> -> vector<256x128xf32>
    %156 = vector.extract_strided_slice %0 {offsets = [19, 0], sizes = [1, 128], strides = [1, 1]} : vector<20x128xf32> to vector<1x128xf32>
    %157 = vector.broadcast %156 : vector<1x128xf32> to vector<256x128xf32>
    %158 = arith.addf %155, %157 : vector<256x128xf32>
    %159 = arith.addf %151, %158 : vector<256x128xf32>
    %cst_66 = arith.constant 0.000000e+00 : f32
    %160 = vector.broadcast %cst_66 : f32 to vector<256x128xf32>
    %161 = arith.maximumf %159, %160 : vector<256x128xf32>
    %162 = tpu.concatenate %161, %161 in 1 : vector<256x128xf32>, vector<256x128xf32> -> vector<256x256xf32>
    %163 = vector.extract_strided_slice %1 {offsets = [0, 0], sizes = [1, 256], strides = [1, 1]} : vector<5x256xf32> to vector<1x256xf32>
    %164 = vector.broadcast %163 : vector<1x256xf32> to vector<256x256xf32>
    %165 = arith.mulf %162, %164 : vector<256x256xf32>
    %166 = vector.extract_strided_slice %1 {offsets = [1, 0], sizes = [1, 256], strides = [1, 1]} : vector<5x256xf32> to vector<1x256xf32>
    %167 = vector.broadcast %166 : vector<1x256xf32> to vector<256x256xf32>
    %168 = arith.addf %165, %167 : vector<256x256xf32>
    %cst_67 = arith.constant 0.000000e+00 : f32
    %169 = vector.broadcast %cst_67 : f32 to vector<256x256xf32>
    %170 = arith.maximumf %168, %169 : vector<256x256xf32>
    %c0_68 = arith.constant 0 : index
    %c0_69 = arith.constant 0 : index
    %c0_70 = arith.constant 0 : index
    %171 = vector.load %arg4[%c0_68, %c0_69, %c0_70] : memref<2x256x256xbf16, #tpu.memory_space<vmem>>, vector<1x256x256xbf16>
    %172 = vector.shape_cast %171 : vector<1x256x256xbf16> to vector<256x256xbf16>
    %173 = arith.truncf %170 : vector<256x256xf32> to vector<256x256xbf16>
    %cst_71 = arith.constant dense<0.000000e+00> : vector<256x256xf32>
    %174 = tpu.matmul %173, %172, %cst_71 {dimension_numbers = #tpu.dot_dimension_numbers<[1], [0], [0], [1], [0, 0, 1, 1], [], []>} : vector<256x256xbf16>, vector<256x256xbf16>, vector<256x256xf32> -> vector<256x256xf32>
    %175 = vector.extract_strided_slice %1 {offsets = [2, 0], sizes = [1, 256], strides = [1, 1]} : vector<5x256xf32> to vector<1x256xf32>
    %176 = vector.broadcast %175 : vector<1x256xf32> to vector<256x256xf32>
    %177 = arith.addf %174, %176 : vector<256x256xf32>
    %cst_72 = arith.constant 0.000000e+00 : f32
    %178 = vector.broadcast %cst_72 : f32 to vector<256x256xf32>
    %179 = arith.maximumf %177, %178 : vector<256x256xf32>
    %c1_73 = arith.constant 1 : index
    %c0_74 = arith.constant 0 : index
    %c0_75 = arith.constant 0 : index
    %180 = vector.load %arg4[%c1_73, %c0_74, %c0_75] : memref<2x256x256xbf16, #tpu.memory_space<vmem>>, vector<1x256x256xbf16>
    %181 = vector.shape_cast %180 : vector<1x256x256xbf16> to vector<256x256xbf16>
    %182 = arith.truncf %179 : vector<256x256xf32> to vector<256x256xbf16>
    %cst_76 = arith.constant dense<0.000000e+00> : vector<256x256xf32>
    %183 = tpu.matmul %182, %181, %cst_76 {dimension_numbers = #tpu.dot_dimension_numbers<[1], [0], [0], [1], [0, 0, 1, 1], [], []>} : vector<256x256xbf16>, vector<256x256xbf16>, vector<256x256xf32> -> vector<256x256xf32>
    %184 = arith.addf %183, %162 : vector<256x256xf32>
    %cst_77 = arith.constant 0.000000e+00 : f32
    %185 = vector.broadcast %cst_77 : f32 to vector<256x256xf32>
    %186 = arith.maximumf %184, %185 : vector<256x256xf32>
    %187 = vector.extract_strided_slice %1 {offsets = [3, 0], sizes = [1, 256], strides = [1, 1]} : vector<5x256xf32> to vector<1x256xf32>
    %188 = vector.broadcast %187 : vector<1x256xf32> to vector<256x256xf32>
    %189 = arith.mulf %186, %188 : vector<256x256xf32>
    %190 = vector.extract_strided_slice %1 {offsets = [4, 0], sizes = [1, 256], strides = [1, 1]} : vector<5x256xf32> to vector<1x256xf32>
    %191 = vector.broadcast %190 : vector<1x256xf32> to vector<256x256xf32>
    %192 = arith.addf %189, %191 : vector<256x256xf32>
    %cst_78 = arith.constant 0.000000e+00 : f32
    %193 = vector.broadcast %cst_78 : f32 to vector<256x256xf32>
    %194 = arith.maximumf %192, %193 : vector<256x256xf32>
    %c0_79 = arith.constant 0 : index
    %c0_80 = arith.constant 0 : index
    %c0_81 = arith.constant 0 : index
    %195 = vector.load %arg5[%c0_79, %c0_80, %c0_81] : memref<2x256x128xbf16, #tpu.memory_space<vmem>>, vector<1x256x128xbf16>
    %196 = vector.shape_cast %195 : vector<1x256x128xbf16> to vector<256x128xbf16>
    %197 = arith.truncf %194 : vector<256x256xf32> to vector<256x256xbf16>
    %cst_82 = arith.constant dense<0.000000e+00> : vector<256x128xf32>
    %198 = tpu.matmul %197, %196, %cst_82 {dimension_numbers = #tpu.dot_dimension_numbers<[1], [0], [0], [1], [0, 0, 1, 1], [], []>} : vector<256x256xbf16>, vector<256x128xbf16>, vector<256x128xf32> -> vector<256x128xf32>
    %199 = vector.extract_strided_slice %2 {offsets = [0, 0], sizes = [1, 128], strides = [1, 1]} : vector<2x128xf32> to vector<1x128xf32>
    %200 = vector.broadcast %199 : vector<1x128xf32> to vector<256x128xf32>
    %201 = arith.addf %198, %200 : vector<256x128xf32>
    %cst_83 = arith.constant 0.000000e+00 : f32
    %202 = vector.broadcast %cst_83 : f32 to vector<256x128xf32>
    %203 = arith.maximumf %201, %202 : vector<256x128xf32>
    %c15 = arith.constant 15 : index
    %c0_84 = arith.constant 0 : index
    %c0_85 = arith.constant 0 : index
    %204 = vector.load %arg2[%c15, %c0_84, %c0_85] : memref<16x128x128xbf16, #tpu.memory_space<vmem>>, vector<1x128x128xbf16>
    %205 = vector.shape_cast %204 : vector<1x128x128xbf16> to vector<128x128xbf16>
    %206 = arith.truncf %203 : vector<256x128xf32> to vector<256x128xbf16>
    %cst_86 = arith.constant dense<0.000000e+00> : vector<256x128xf32>
    %207 = tpu.matmul %206, %205, %cst_86 {dimension_numbers = #tpu.dot_dimension_numbers<[1], [0], [0], [1], [0, 0, 1, 1], [], []>} : vector<256x128xbf16>, vector<128x128xbf16>, vector<256x128xf32> -> vector<256x128xf32>
    %c1_87 = arith.constant 1 : index
    %c0_88 = arith.constant 0 : index
    %c0_89 = arith.constant 0 : index
    %208 = vector.load %arg5[%c1_87, %c0_88, %c0_89] : memref<2x256x128xbf16, #tpu.memory_space<vmem>>, vector<1x256x128xbf16>
    %209 = vector.shape_cast %208 : vector<1x256x128xbf16> to vector<256x128xbf16>
    %210 = arith.truncf %186 : vector<256x256xf32> to vector<256x256xbf16>
    %cst_90 = arith.constant dense<0.000000e+00> : vector<256x128xf32>
    %211 = tpu.matmul %210, %209, %cst_90 {dimension_numbers = #tpu.dot_dimension_numbers<[1], [0], [0], [1], [0, 0, 1, 1], [], []>} : vector<256x256xbf16>, vector<256x128xbf16>, vector<256x128xf32> -> vector<256x128xf32>
    %212 = vector.extract_strided_slice %2 {offsets = [1, 0], sizes = [1, 128], strides = [1, 1]} : vector<2x128xf32> to vector<1x128xf32>
    %213 = vector.broadcast %212 : vector<1x128xf32> to vector<256x128xf32>
    %214 = arith.addf %211, %213 : vector<256x128xf32>
    %215 = arith.addf %207, %214 : vector<256x128xf32>
    %c0_91 = arith.constant 0 : index
    %c0_92 = arith.constant 0 : index
    %216 = vector.load %arg8[%c0_91, %c0_92] : memref<256x128xf32, #tpu.memory_space<vmem>>, vector<256x128xf32>
    tpu.vector_store %arg8[%c0_91, %c0_92], %215 {strides = array<i32>} : memref<256x128xf32, #tpu.memory_space<vmem>>, vector<256x128xf32>,
    return
  }
  func.func @transform_0(%arg0: i32) -> (i32, i32) {
    %c0_i32 = arith.constant 0 : i32
    %c0_i32_0 = arith.constant 0 : i32
    return %arg0, %c0_i32 : i32, i32
  }
  func.func @transform_1(%arg0: i32) -> (i32, i32, i32) {
    %c0_i32 = arith.constant 0 : i32
    %c0_i32_0 = arith.constant 0 : i32
    %c0_i32_1 = arith.constant 0 : i32
    %c0_i32_2 = arith.constant 0 : i32
    return %c0_i32, %c0_i32_0, %c0_i32_1 : i32, i32, i32
  }
  func.func @transform_2(%arg0: i32) -> (i32, i32) {
    %c0_i32 = arith.constant 0 : i32
    %c0_i32_0 = arith.constant 0 : i32
    %c0_i32_1 = arith.constant 0 : i32
    return %c0_i32, %c0_i32_0 : i32, i32
  }
  func.func @transform_3(%arg0: i32) -> (i32, i32, i32) {
    %c0_i32 = arith.constant 0 : i32
    %c0_i32_0 = arith.constant 0 : i32
    %c0_i32_1 = arith.constant 0 : i32
    %c0_i32_2 = arith.constant 0 : i32
    return %c0_i32, %c0_i32_0, %c0_i32_1 : i32, i32, i32
  }
  func.func @transform_4(%arg0: i32) -> (i32, i32, i32) {
    %c0_i32 = arith.constant 0 : i32
    %c0_i32_0 = arith.constant 0 : i32
    %c0_i32_1 = arith.constant 0 : i32
    %c0_i32_2 = arith.constant 0 : i32
    return %c0_i32, %c0_i32_0, %c0_i32_1 : i32, i32, i32
  }
  func.func @transform_5(%arg0: i32) -> (i32, i32) {
    %c0_i32 = arith.constant 0 : i32
    %c0_i32_0 = arith.constant 0 : i32
    %c0_i32_1 = arith.constant 0 : i32
    return %c0_i32, %c0_i32_0 : i32, i32
  }
  func.func @transform_6(%arg0: i32) -> (i32, i32) {
    %c0_i32 = arith.constant 0 : i32
    %c0_i32_0 = arith.constant 0 : i32
    %c0_i32_1 = arith.constant 0 : i32
    return %c0_i32, %c0_i32_0 : i32, i32
  }
  func.func @transform_7(%arg0: i32) -> (i32, i32) {
    %c0_i32 = arith.constant 0 : i32
    %c0_i32_0 = arith.constant 0 : i32
    return %arg0, %c0_i32 : i32, i32
  }
}

</mosaic_0001>

<llo_original>
// kernel: tpu_custom_call.1
$region0: #{tpu_custom_call.1}
  #allocation0 [shape = 'u32[]', space=smem, size = 0x4, offset = 0x4, fixed_abs, tag = 'smem constant byte address 0x4 - core index']
  #allocation1 [shape = 'u32[144,128]{1,0:T(1,128)}', space=vmem, size = 0x12000, scoped, tag = 'internal scratch']
  %s0 = inlined_call_operand.vmem [shape: f32[256,32], index: 0, kind: input, shape index: {}]
  %s1 = inlined_call_operand.hbm [shape: bf16[16,128,128], index: 1, kind: input, shape index: {}]
  %s2 = inlined_call_operand.vmem [shape: f32[20,128], index: 2, kind: input, shape index: {}]
  %s3 = inlined_call_operand.hbm [shape: bf16[2,256,256], index: 3, kind: input, shape index: {}]
  %s4 = inlined_call_operand.vmem [shape: bf16[2,256,128], index: 4, kind: input, shape index: {}]
  %s5 = inlined_call_operand.vmem [shape: f32[5,256], index: 5, kind: input, shape index: {}]
  %s6 = inlined_call_operand.vmem [shape: f32[2,128], index: 6, kind: input, shape index: {}]
  %s7 = inlined_call_operand.hbm [shape: f32[256,128], index: 7, kind: output, shape index: {}]
  %s8 = sld [smem:[#allocation0]]
  $region46: #{tpu_custom_call.1} parent=0
    _
  %s10 = ssub.s32 1, %s8
  %s11 = scalar_select 0, %s10, %s8
  $region1: #{tpu_custom_call.1} parent=0
    #allocation2 [shape = 'u8[524288]{0}', space=vmem, size = 0x80000, scoped, tag = 'input window, operand 1, single buffered']
    #allocation3 [shape = 's32[1]{0}', space=sflag, size = 0x4, scoped, tag = 'scoped memory for tpu_custom_call.1']
    #allocation4 [shape = 's32[1]{0}', space=sflag, size = 0x4, scoped, tag = 'scoped memory for tpu_custom_call.1']
    #allocation5 [shape = 'u8[262144]{0}', space=vmem, size = 0x40000, scoped, tag = 'input window, operand 3, single buffered']
    #allocation6 [shape = 's32[1]{0}', space=sflag, size = 0x4, scoped, tag = 'scoped memory for tpu_custom_call.1']
    #allocation7 [shape = 'u8[131072]{0}', space=vmem, size = 0x20000, scoped, tag = 'output window, operand 0, single buffered']
    %12 = vsyncpa [#allocation3], 0
    %13 = vsyncpa [#allocation6], 0
    %14 = vsyncpa [#allocation4], 0
    // Predicated region
    $region2: #{tpu_custom_call.1} parent=1 // pred_check
      _
    $region3: #{tpu_custom_call.1} parent=1 // pred_check_branch
      %16 = sbr.rel (0) target = $region5
    $region4: #{tpu_custom_call.1} parent=1 // pred_region
      _
    $region5: #{tpu_custom_call.1} parent=1 // pred_fallthru
      _
    // Predicated region
    $region6: #{tpu_custom_call.1} parent=1 // pred_check
      _
    $region7: #{tpu_custom_call.1} parent=1 // pred_check_branch
      %18 = sbr.rel (0) target = $region9
    $region8: #{tpu_custom_call.1} parent=1 // pred_region
      %s20 = ssub.s32 16384, 16384
      %21 = vsyncadd [#allocation3], %s20
      %s22 = sshll.u32 [#allocation2], 4
      %s23 = int_to_ptr.vmem [resolvable:$true] %s22
      %28 = dma.hbm_to_vmem [thread:$0]  %s1, 16384, %s23, [#allocation3], 64, 64, 4
    $region9: #{tpu_custom_call.1} parent=1 // pred_fallthru
      _
    // Predicated region
    $region10: #{tpu_custom_call.1} parent=1 // pred_check
      _
    $region11: #{tpu_custom_call.1} parent=1 // pred_check_branch
      %30 = sbr.rel (0) target = $region13
    $region12: #{tpu_custom_call.1} parent=1 // pred_region
      _
    $region13: #{tpu_custom_call.1} parent=1 // pred_fallthru
      _
    // Predicated region
    $region14: #{tpu_custom_call.1} parent=1 // pred_check
      _
    $region15: #{tpu_custom_call.1} parent=1 // pred_check_branch
      %32 = sbr.rel (0) target = $region17
    $region16: #{tpu_custom_call.1} parent=1 // pred_region
      %s34 = ssub.s32 8192, 8192
      %35 = vsyncadd [#allocation6], %s34
      %s36 = sshll.u32 [#allocation5], 4
      %s37 = int_to_ptr.vmem [resolvable:$true] %s36
      %42 = dma.hbm_to_vmem [thread:$0]  %s3, 8192, %s37, [#allocation6], 128, 128, 8
    $region17: #{tpu_custom_call.1} parent=1 // pred_fallthru
      _
    // Predicated region
    $region18: #{tpu_custom_call.1} parent=1 // pred_check
      _
    $region19: #{tpu_custom_call.1} parent=1 // pred_check_branch
      %44 = sbr.rel (0) target = $region21
    $region20: #{tpu_custom_call.1} parent=1 // pred_region
      _
    $region21: #{tpu_custom_call.1} parent=1 // pred_fallthru
      _
    // Predicated region
    $region22: #{tpu_custom_call.1} parent=1 // pred_check
      _
    $region23: #{tpu_custom_call.1} parent=1 // pred_check_branch
      %46 = sbr.rel (0) target = $region25
    $region24: #{tpu_custom_call.1} parent=1 // pred_region
      _
    $region25: #{tpu_custom_call.1} parent=1 // pred_fallthru
      _
    // Predicated region
    $region26: #{tpu_custom_call.1} parent=1 // pred_check
      _
    $region27: #{tpu_custom_call.1} parent=1 // pred_check_branch
      %48 = sbr.rel (0) target = $region29
    $region28: #{tpu_custom_call.1} parent=1 // pred_region
      _
    $region29: #{tpu_custom_call.1} parent=1 // pred_fallthru
      _
    // Predicated region
    $region30: #{tpu_custom_call.1} parent=1 // pred_check
      _
    $region31: #{tpu_custom_call.1} parent=1 // pred_check_branch
      %50 = sbr.rel (0) target = $region33
    $region32: #{tpu_custom_call.1} parent=1 // pred_region
      %51 = dma.done [#allocation3], 16384
    $region33: #{tpu_custom_call.1} parent=1 // pred_fallthru
      _
    // Predicated region
    $region34: #{tpu_custom_call.1} parent=1 // pred_check
      _
    $region35: #{tpu_custom_call.1} parent=1 // pred_check_branch
      %53 = sbr.rel (0) target = $region37
    $region36: #{tpu_custom_call.1} parent=1 // pred_region
      %54 = dma.done [#allocation6], 8192
    $region37: #{tpu_custom_call.1} parent=1 // pred_fallthru
      _
    %v56 = vld [vmem:[%s2] sm:$0xff]
    %v57 = vld [vmem:[%s2 + $0x8] sm:$0xff]
    %v58 = vld [vmem:[%s2 + $0x10] sm:$0xf]
    %v59 = vld [vmem:[%s5] sm:$0x1f]
    %v60 = vld [vmem:[%s5 + $0x8] sm:$0x1f]
    %v61 = vld [vmem:[%s6] sm:$0x3]
    %v62 = vld [vmem:[%s0] sm:$0xff]
    %v63 = vld [vmem:[%s0 + $0x8] sm:$0xff]
    %v64 = vld [vmem:[%s0 + $0x10] sm:$0xff]
    %v65 = vld [vmem:[%s0 + $0x18] sm:$0xff]
    %v66 = vld [vmem:[%s0 + $0x20] sm:$0xff]
    %v67 = vld [vmem:[%s0 + $0x28] sm:$0xff]
    %v68 = vld [vmem:[%s0 + $0x30] sm:$0xff]
    %v69 = vld [vmem:[%s0 + $0x38] sm:$0xff]
    %v70 = vld [vmem:[%s0 + $0x40] sm:$0xff]
    %v71 = vld [vmem:[%s0 + $0x48] sm:$0xff]
    %v72 = vld [vmem:[%s0 + $0x50] sm:$0xff]
    %v73 = vld [vmem:[%s0 + $0x58] sm:$0xff]
    %v74 = vld [vmem:[%s0 + $0x60] sm:$0xff]
    %v75 = vld [vmem:[%s0 + $0x68] sm:$0xff]
    %v76 = vld [vmem:[%s0 + $0x70] sm:$0xff]
    %v77 = vld [vmem:[%s0 + $0x78] sm:$0xff]
    %v78 = vld [vmem:[%s0 + $0x80] sm:$0xff]
    %v79 = vld [vmem:[%s0 + $0x88] sm:$0xff]
    %v80 = vld [vmem:[%s0 + $0x90] sm:$0xff]
    %v81 = vld [vmem:[%s0 + $0x98] sm:$0xff]
    %v82 = vld [vmem:[%s0 + $0xa0] sm:$0xff]
    %v83 = vld [vmem:[%s0 + $0xa8] sm:$0xff]
    %v84 = vld [vmem:[%s0 + $0xb0] sm:$0xff]
    %v85 = vld [vmem:[%s0 + $0xb8] sm:$0xff]
    %v86 = vld [vmem:[%s0 + $0xc0] sm:$0xff]
    %v87 = vld [vmem:[%s0 + $0xc8] sm:$0xff]
    %v88 = vld [vmem:[%s0 + $0xd0] sm:$0xff]
    %v89 = vld [vmem:[%s0 + $0xd8] sm:$0xff]
    %v90 = vld [vmem:[%s0 + $0xe0] sm:$0xff]
    %v91 = vld [vmem:[%s0 + $0xe8] sm:$0xff]
    %v92 = vld [vmem:[%s0 + $0xf0] sm:$0xff]
    %v93 = vld [vmem:[%s0 + $0xf8] sm:$0xff]
    %vm94 = vcmask 261120
    %v95 = vsel %vm94, %v62, 0.0
    %v96 = vsel %vm94, %v63, 0.0
    %v97 = vsel %vm94, %v64, 0.0
    %v98 = vsel %vm94, %v65, 0.0
    %v99 = vsel %vm94, %v66, 0.0
    %v100 = vsel %vm94, %v67, 0.0
    %v101 = vsel %vm94, %v68, 0.0
    %v102 = vsel %vm94, %v69, 0.0
    %v103 = vsel %vm94, %v70, 0.0
    %v104 = vsel %vm94, %v71, 0.0
    %v105 = vsel %vm94, %v72, 0.0
    %v106 = vsel %vm94, %v73, 0.0
    %v107 = vsel %vm94, %v74, 0.0
    %v108 = vsel %vm94, %v75, 0.0
    %v109 = vsel %vm94, %v76, 0.0
    %v110 = vsel %vm94, %v77, 0.0
    %v111 = vsel %vm94, %v78, 0.0
    %v112 = vsel %vm94, %v79, 0.0
    %v113 = vsel %vm94, %v80, 0.0
    %v114 = vsel %vm94, %v81, 0.0
    %v115 = vsel %vm94, %v82, 0.0
    %v116 = vsel %vm94, %v83, 0.0
    %v117 = vsel %vm94, %v84, 0.0
    %v118 = vsel %vm94, %v85, 0.0
    %v119 = vsel %vm94, %v86, 0.0
    %v120 = vsel %vm94, %v87, 0.0
    %v121 = vsel %vm94, %v88, 0.0
    %v122 = vsel %vm94, %v89, 0.0
    %v123 = vsel %vm94, %v90, 0.0
    %v124 = vsel %vm94, %v91, 0.0
    %v125 = vsel %vm94, %v92, 0.0
    %v126 = vsel %vm94, %v93, 0.0
    %v127 = vlaneseq
    %v128 = vshrl.u32 %v127, 7
    %v129 = vsub.s32 0, %v128
    %v130 = vrot.slane %v56, %v129
    %v131 = vmul.f32 %v95, %v130
    %v132 = vmul.f32 %v96, %v130
    %v133 = vmul.f32 %v97, %v130
    %v134 = vmul.f32 %v98, %v130
    %v135 = vmul.f32 %v99, %v130
    %v136 = vmul.f32 %v100, %v130
    %v137 = vmul.f32 %v101, %v130
    %v138 = vmul.f32 %v102, %v130
    %v139 = vmul.f32 %v103, %v130
    %v140 = vmul.f32 %v104, %v130
    %v141 = vmul.f32 %v105, %v130
    %v142 = vmul.f32 %v106, %v130
    %v143 = vmul.f32 %v107, %v130
    %v144 = vmul.f32 %v108, %v130
    %v145 = vmul.f32 %v109, %v130
    %v146 = vmul.f32 %v110, %v130
    %v147 = vmul.f32 %v111, %v130
    %v148 = vmul.f32 %v112, %v130
    %v149 = vmul.f32 %v113, %v130
    %v150 = vmul.f32 %v114, %v130
    %v151 = vmul.f32 %v115, %v130
    %v152 = vmul.f32 %v116, %v130
    %v153 = vmul.f32 %v117, %v130
    %v154 = vmul.f32 %v118, %v130
    %v155 = vmul.f32 %v119, %v130
    %v156 = vmul.f32 %v120, %v130
    %v157 = vmul.f32 %v121, %v130
    %v158 = vmul.f32 %v122, %v130
    %v159 = vmul.f32 %v123, %v130
    %v160 = vmul.f32 %v124, %v130
    %v161 = vmul.f32 %v125, %v130
    %v162 = vmul.f32 %v126, %v130
    %v163 = vlaneseq
    %v164 = vshrl.u32 %v163, 7
    %v165 = vsub.s32 1, %v164
    %v166 = vrot.slane %v56, %v165
    %v167 = vadd.f32 %v131, %v166
    %v168 = vadd.f32 %v132, %v166
    %v169 = vadd.f32 %v133, %v166
    %v170 = vadd.f32 %v134, %v166
    %v171 = vadd.f32 %v135, %v166
    %v172 = vadd.f32 %v136, %v166
    %v173 = vadd.f32 %v137, %v166
    %v174 = vadd.f32 %v138, %v166
    %v175 = vadd.f32 %v139, %v166
    %v176 = vadd.f32 %v140, %v166
    %v177 = vadd.f32 %v141, %v166
    %v178 = vadd.f32 %v142, %v166
    %v179 = vadd.f32 %v143, %v166
    %v180 = vadd.f32 %v144, %v166
    %v181 = vadd.f32 %v145, %v166
    %v182 = vadd.f32 %v146, %v166
    %v183 = vadd.f32 %v147, %v166
    %v184 = vadd.f32 %v148, %v166
    %v185 = vadd.f32 %v149, %v166
    %v186 = vadd.f32 %v150, %v166
    %v187 = vadd.f32 %v151, %v166
    %v188 = vadd.f32 %v152, %v166
    %v189 = vadd.f32 %v153, %v166
    %v190 = vadd.f32 %v154, %v166
    %v191 = vadd.f32 %v155, %v166
    %v192 = vadd.f32 %v156, %v166
    %v193 = vadd.f32 %v157, %v166
    %v194 = vadd.f32 %v158, %v166
    %v195 = vadd.f32 %v159, %v166
    %v196 = vadd.f32 %v160, %v166
    %v197 = vadd.f32 %v161, %v166
    %v198 = vadd.f32 %v162, %v166
    %v199 = vmax.f32 %v167, 0.0
    %v200 = vmax.f32 %v168, 0.0
    %v201 = vmax.f32 %v169, 0.0
    %v202 = vmax.f32 %v170, 0.0
    %v203 = vmax.f32 %v171, 0.0
    %v204 = vmax.f32 %v172, 0.0
    %v205 = vmax.f32 %v173, 0.0
    %v206 = vmax.f32 %v174, 0.0
    %v207 = vmax.f32 %v175, 0.0
    %v208 = vmax.f32 %v176, 0.0
    %v209 = vmax.f32 %v177, 0.0
    %v210 = vmax.f32 %v178, 0.0
    %v211 = vmax.f32 %v179, 0.0
    %v212 = vmax.f32 %v180, 0.0
    %v213 = vmax.f32 %v181, 0.0
    %v214 = vmax.f32 %v182, 0.0
    %v215 = vmax.f32 %v183, 0.0
    %v216 = vmax.f32 %v184, 0.0
    %v217 = vmax.f32 %v185, 0.0
    %v218 = vmax.f32 %v186, 0.0
    %v219 = vmax.f32 %v187, 0.0
    %v220 = vmax.f32 %v188, 0.0
    %v221 = vmax.f32 %v189, 0.0
    %v222 = vmax.f32 %v190, 0.0
    %v223 = vmax.f32 %v191, 0.0
    %v224 = vmax.f32 %v192, 0.0
    %v225 = vmax.f32 %v193, 0.0
    %v226 = vmax.f32 %v194, 0.0
    %v227 = vmax.f32 %v195, 0.0
    %v228 = vmax.f32 %v196, 0.0
    %v229 = vmax.f32 %v197, 0.0
    %v230 = vmax.f32 %v198, 0.0
    %v231 = vld [vmem:[#allocation2] sm:$0xf]
    %v232 = vld [vmem:[#allocation2 + $0x4] sm:$0xf]
    %v233 = vld [vmem:[#allocation2 + $0x8] sm:$0xf]
    %v234 = vld [vmem:[#allocation2 + $0xc] sm:$0xf]
    %v235 = vld [vmem:[#allocation2 + $0x10] sm:$0xf]
    %v236 = vld [vmem:[#allocation2 + $0x14] sm:$0xf]
    %v237 = vld [vmem:[#allocation2 + $0x18] sm:$0xf]
    %v238 = vld [vmem:[#allocation2 + $0x1c] sm:$0xf]
    %v239 = vld [vmem:[#allocation2 + $0x20] sm:$0xf]
    %v240 = vld [vmem:[#allocation2 + $0x24] sm:$0xf]
    %v241 = vld [vmem:[#allocation2 + $0x28] sm:$0xf]
    %v242 = vld [vmem:[#allocation2 + $0x2c] sm:$0xf]
    %v243 = vld [vmem:[#allocation2 + $0x30] sm:$0xf]
    %v244 = vld [vmem:[#allocation2 + $0x34] sm:$0xf]
    %v245 = vld [vmem:[#allocation2 + $0x38] sm:$0xf]
    %v246 = vld [vmem:[#allocation2 + $0x3c] sm:$0xf]
    %v247 = vpack.c.bf16 %v200, %v199
    %v248 = vpack.c.bf16 %v202, %v201
    %v249 = vpack.c.bf16 %v204, %v203
    %v250 = vpack.c.bf16 %v206, %v205
    %v251 = vpack.c.bf16 %v208, %v207
    %v252 = vpack.c.bf16 %v210, %v209
    %v253 = vpack.c.bf16 %v212, %v211
    %v254 = vpack.c.bf16 %v214, %v213
    %v255 = vpack.c.bf16 %v216, %v215
    %v256 = vpack.c.bf16 %v218, %v217
    %v257 = vpack.c.bf16 %v220, %v219
    %v258 = vpack.c.bf16 %v222, %v221
    %v259 = vpack.c.bf16 %v224, %v223
    %v260 = vpack.c.bf16 %v226, %v225
    %v261 = vpack.c.bf16 %v228, %v227
    %v262 = vpack.c.bf16 %v230, %v229
    %v263 = vlaneseq
    %v264 = vshrl.u32 %v263, 7
    %v265 = vsub.s32 2, %v264
    %v266 = vrot.slane %v56, %v265
    %v283 = vunpack.c.l.b16 %v231
    %v284 = vunpack.c.l.b16 %v232
    %v285 = vunpack.c.l.b16 %v233
    %v286 = vunpack.c.l.b16 %v234
    %v287 = vunpack.c.l.b16 %v235
    %v288 = vunpack.c.l.b16 %v236
    %v289 = vunpack.c.l.b16 %v237
    %v290 = vunpack.c.l.b16 %v238
    %v291 = vunpack.c.l.b16 %v239
    %v292 = vunpack.c.l.b16 %v240
    %v293 = vunpack.c.l.b16 %v241
    %v294 = vunpack.c.l.b16 %v242
    %v295 = vunpack.c.l.b16 %v243
    %v296 = vunpack.c.l.b16 %v244
    %v297 = vunpack.c.l.b16 %v245
    %v298 = vunpack.c.l.b16 %v246
    %v299 = vpack.c.b16 %v284, %v283
    %v300 = vpack.c.b16 %v286, %v285
    %v301 = vpack.c.b16 %v288, %v287
    %v302 = vpack.c.b16 %v290, %v289
    %v303 = vpack.c.b16 %v292, %v291
    %v304 = vpack.c.b16 %v294, %v293
    %v305 = vpack.c.b16 %v296, %v295
    %v306 = vpack.c.b16 %v298, %v297
    %315 = vmatprep.subr.bf16.mxu0 0
    %316 = vmatpush1.bf16.msra.mxu0 %v299
    %317 = vmatprep.subr.bf16.mxu0 0
    %318 = vmatpush1.bf16.msra.mxu0 %v300
    %319 = vmatprep.subr.bf16.mxu0 0
    %320 = vmatpush1.bf16.msra.mxu0 %v301
    %321 = vmatprep.subr.bf16.mxu0 0
    %322 = vmatpush1.bf16.msra.mxu0 %v302
    %323 = vmatprep.subr.bf16.mxu0 0
    %324 = vmatpush1.bf16.msra.mxu0 %v303
    %325 = vmatprep.subr.bf16.mxu0 0
    %326 = vmatpush1.bf16.msra.mxu0 %v304
    %327 = vmatprep.subr.bf16.mxu0 0
    %328 = vmatpush1.bf16.msra.mxu0 %v305
    %329 = vmatprep.subr.bf16.mxu0 0
    %330 = vmatpush1.bf16.msra.mxu0 %v306
    %331 = vmatprep.subr.bf16.mxu0 0
    %332 = vmatpush1.bf16.msra.mxu0 0
    %333 = vmatprep.subr.bf16.mxu0 0
    %334 = vmatpush1.bf16.msra.mxu0 0
    %335 = vmatprep.subr.bf16.mxu0 0
    %336 = vmatpush1.bf16.msra.mxu0 0
    %337 = vmatprep.subr.bf16.mxu0 0
    %338 = vmatpush1.bf16.msra.mxu0 0
    %339 = vmatprep.subr.bf16.mxu0 0
    %340 = vmatpush1.bf16.msra.mxu0 0
    %341 = vmatprep.subr.bf16.mxu0 0
    %342 = vmatpush1.bf16.msra.mxu0 0
    %343 = vmatprep.subr.bf16.mxu0 0
    %344 = vmatpush1.bf16.msra.mxu0 0
    %345 = vmatprep.subr.bf16.mxu0 0
    %346 = vmatpush1.bf16.msra.mxu0 0
    %347 = vmatprep.mubr.bf16.mxu0 0
    %348 = vmatmul.mubr.bf16.gmra.mrb[0].mxu0 %v247
    %v349 = vpop.f32.mrb[0].mxu0
    %v350 = vadd.f32 %v266, %v349
    %v351 = vpop.f32.mrb[0].mxu0
    %v352 = vpop.f32.mrb[0].mxu0
    %v353 = vadd.f32 %v266, %v352
    %v354 = vpop.f32.mrb[0].mxu0
    %355 = vmatprep.mubr.bf16.mxu0 0
    %356 = vmatmul.mubr.bf16.gmra.mrb[0].mxu0 %v248
    %v357 = vpop.f32.mrb[0].mxu0
    %v358 = vadd.f32 %v266, %v357
    %v359 = vpop.f32.mrb[0].mxu0
    %v360 = vpop.f32.mrb[0].mxu0
    %v361 = vadd.f32 %v266, %v360
    %v362 = vpop.f32.mrb[0].mxu0
    %363 = vmatprep.mubr.bf16.mxu0 0
    %364 = vmatmul.mubr.bf16.gmra.mrb[0].mxu0 %v249
    %v365 = vpop.f32.mrb[0].mxu0
    %v366 = vadd.f32 %v266, %v365
    %v367 = vpop.f32.mrb[0].mxu0
    %v368 = vpop.f32.mrb[0].mxu0
    %v369 = vadd.f32 %v266, %v368
    %v370 = vpop.f32.mrb[0].mxu0
    %371 = vmatprep.mubr.bf16.mxu0 0
    %372 = vmatmul.mubr.bf16.gmra.mrb[0].mxu0 %v250
    %v373 = vpop.f32.mrb[0].mxu0
    %v374 = vadd.f32 %v266, %v373
    %v375 = vpop.f32.mrb[0].mxu0
    %v376 = vpop.f32.mrb[0].mxu0
    %v377 = vadd.f32 %v266, %v376
    %v378 = vpop.f32.mrb[0].mxu0
    %379 = vmatprep.mubr.bf16.mxu0 0
    %380 = vmatmul.mubr.bf16.gmra.mrb[0].mxu0 %v251
    %v381 = vpop.f32.mrb[0].mxu0
    %v382 = vadd.f32 %v266, %v381
    %v383 = vpop.f32.mrb[0].mxu0
    %v384 = vpop.f32.mrb[0].mxu0
    %v385 = vadd.f32 %v266, %v384
    %v386 = vpop.f32.mrb[0].mxu0
    %387 = vmatprep.mubr.bf16.mxu0 0
    %388 = vmatmul.mubr.bf16.gmra.mrb[0].mxu0 %v252
    %v389 = vpop.f32.mrb[0].mxu0
    %v390 = vadd.f32 %v266, %v389
    %v391 = vpop.f32.mrb[0].mxu0
    %v392 = vpop.f32.mrb[0].mxu0
    %v393 = vadd.f32 %v266, %v392
    %v394 = vpop.f32.mrb[0].mxu0
    %395 = vmatprep.mubr.bf16.mxu0 0
    %396 = vmatmul.mubr.bf16.gmra.mrb[0].mxu0 %v253
    %v397 = vpop.f32.mrb[0].mxu0
    %v398 = vadd.f32 %v266, %v397
    %v399 = vpop.f32.mrb[0].mxu0
    %v400 = vpop.f32.mrb[0].mxu0
    %v401 = vadd.f32 %v266, %v400
    %v402 = vpop.f32.mrb[0].mxu0
    %403 = vmatprep.mubr.bf16.mxu0 0
    %404 = vmatmul.mubr.bf16.gmra.mrb[0].mxu0 %v254
    %v405 = vpop.f32.mrb[0].mxu0
    %v406 = vadd.f32 %v266, %v405
    %v407 = vpop.f32.mrb[0].mxu0
    %v408 = vpop.f32.mrb[0].mxu0
    %v409 = vadd.f32 %v266, %v408
    %v410 = vpop.f32.mrb[0].mxu0
    %411 = vmatprep.mubr.bf16.mxu0 0
    %412 = vmatmul.mubr.bf16.gmra.mrb[0].mxu0 %v255
    %v413 = vpop.f32.mrb[0].mxu0
    %v414 = vadd.f32 %v266, %v413
    %v415 = vpop.f32.mrb[0].mxu0
    %v416 = vpop.f32.mrb[0].mxu0
    %v417 = vadd.f32 %v266, %v416
    %v418 = vpop.f32.mrb[0].mxu0
    %419 = vmatprep.mubr.bf16.mxu0 0
    %420 = vmatmul.mubr.bf16.gmra.mrb[0].mxu0 %v256
    %v421 = vpop.f32.mrb[0].mxu0
    %v422 = vadd.f32 %v266, %v421
    %v423 = vpop.f32.mrb[0].mxu0
    %v424 = vpop.f32.mrb[0].mxu0
    %v425 = vadd.f32 %v266, %v424
    %v426 = vpop.f32.mrb[0].mxu0
    %427 = vmatprep.mubr.bf16.mxu0 0
    %428 = vmatmul.mubr.bf16.gmra.mrb[0].mxu0 %v257
    %v429 = vpop.f32.mrb[0].mxu0
    %v430 = vadd.f32 %v266, %v429
    %v431 = vpop.f32.mrb[0].mxu0
    %v432 = vpop.f32.mrb[0].mxu0
    %v433 = vadd.f32 %v266, %v432
    %v434 = vpop.f32.mrb[0].mxu0
    %435 = vmatprep.mubr.bf16.mxu0 0
    %436 = vmatmul.mubr.bf16.gmra.mrb[0].mxu0 %v258
    %v437 = vpop.f32.mrb[0].mxu0
    %v438 = vadd.f32 %v266, %v437
    %v439 = vpop.f32.mrb[0].mxu0
    %v440 = vpop.f32.mrb[0].mxu0
    %v441 = vadd.f32 %v266, %v440
    %v442 = vpop.f32.mrb[0].mxu0
    %443 = vmatprep.mubr.bf16.mxu0 0
    %444 = vmatmul.mubr.bf16.gmra.mrb[0].mxu0 %v259
    %v445 = vpop.f32.mrb[0].mxu0
    %v446 = vadd.f32 %v266, %v445
    %v447 = vpop.f32.mrb[0].mxu0
    %v448 = vpop.f32.mrb[0].mxu0
    %v449 = vadd.f32 %v266, %v448
    %v450 = vpop.f32.mrb[0].mxu0
    %451 = vmatprep.mubr.bf16.mxu0 0
    %452 = vmatmul.mubr.bf16.gmra.mrb[0].mxu0 %v260
    %v453 = vpop.f32.mrb[0].mxu0
    %v454 = vadd.f32 %v266, %v453
    %v455 = vpop.f32.mrb[0].mxu0
    %v456 = vpop.f32.mrb[0].mxu0
    %v457 = vadd.f32 %v266, %v456
    %v458 = vpop.f32.mrb[0].mxu0
    %459 = vmatprep.mubr.bf16.mxu0 0
    %460 = vmatmul.mubr.bf16.gmra.mrb[0].mxu0 %v261
    %v461 = vpop.f32.mrb[0].mxu0
    %v462 = vadd.f32 %v266, %v461
    %v463 = vpop.f32.mrb[0].mxu0
    %v464 = vpop.f32.mrb[0].mxu0
    %v465 = vadd.f32 %v266, %v464
    %v466 = vpop.f32.mrb[0].mxu0
    %467 = vmatprep.mubr.bf16.mxu0 0
    %468 = vmatmul.mubr.bf16.gmra.mrb[0].mxu0 %v262
    %v469 = vpop.f32.mrb[0].mxu0
    %v470 = vadd.f32 %v266, %v469
    %v471 = vpop.f32.mrb[0].mxu0
    %v472 = vpop.f32.mrb[0].mxu0
    %v473 = vadd.f32 %v266, %v472
    %v474 = vpop.f32.mrb[0].mxu0
    %475 = vdwg.mxu0
    %v476 = vmax.f32 %v350, 0.0
    %v477 = vmax.f32 %v353, 0.0
    %v478 = vmax.f32 %v358, 0.0
    %v479 = vmax.f32 %v361, 0.0
    %v480 = vmax.f32 %v366, 0.0
    %v481 = vmax.f32 %v369, 0.0
    %v482 = vmax.f32 %v374, 0.0
    %v483 = vmax.f32 %v377, 0.0
    %v484 = vmax.f32 %v382, 0.0
    %v485 = vmax.f32 %v385, 0.0
    %v486 = vmax.f32 %v390, 0.0
    %v487 = vmax.f32 %v393, 0.0
    %v488 = vmax.f32 %v398, 0.0
    %v489 = vmax.f32 %v401, 0.0
    %v490 = vmax.f32 %v406, 0.0
    %v491 = vmax.f32 %v409, 0.0
    %v492 = vmax.f32 %v414, 0.0
    %v493 = vmax.f32 %v417, 0.0
    %v494 = vmax.f32 %v422, 0.0
    %v495 = vmax.f32 %v425, 0.0
    %v496 = vmax.f32 %v430, 0.0
    %v497 = vmax.f32 %v433, 0.0
    %v498 = vmax.f32 %v438, 0.0
    %v499 = vmax.f32 %v441, 0.0
    %v500 = vmax.f32 %v446, 0.0
    %v501 = vmax.f32 %v449, 0.0
    %v502 = vmax.f32 %v454, 0.0
    %v503 = vmax.f32 %v457, 0.0
    %v504 = vmax.f32 %v462, 0.0
    %v505 = vmax.f32 %v465, 0.0
    %v506 = vmax.f32 %v470, 0.0
    %v507 = vmax.f32 %v473, 0.0
    %s508 = scalar_lea.vmem [#allocation2], 64
    %v509 = vld [vmem:[%s508] sm:$0xf]
    %v510 = vld [vmem:[%s508 + $0x4] sm:$0xf]
    %v511 = vld [vmem:[%s508 + $0x8] sm:$0xf]
    %v512 = vld [vmem:[%s508 + $0xc] sm:$0xf]
    %v513 = vld [vmem:[%s508 + $0x10] sm:$0xf]
    %v514 = vld [vmem:[%s508 + $0x14] sm:$0xf]
    %v515 = vld [vmem:[%s508 + $0x18] sm:$0xf]
    %v516 = vld [vmem:[%s508 + $0x1c] sm:$0xf]
    %v517 = vld [vmem:[%s508 + $0x20] sm:$0xf]
    %v518 = vld [vmem:[%s508 + $0x24] sm:$0xf]
    %v519 = vld [vmem:[%s508 + $0x28] sm:$0xf]
    %v520 = vld [vmem:[%s508 + $0x2c] sm:$0xf]
    %v521 = vld [vmem:[%s508 + $0x30] sm:$0xf]
    %v522 = vld [vmem:[%s508 + $0x34] sm:$0xf]
    %v523 = vld [vmem:[%s508 + $0x38] sm:$0xf]
    %v524 = vld [vmem:[%s508 + $0x3c] sm:$0xf]
    %v525 = vpack.c.bf16 %v477, %v476
    %v526 = vpack.c.bf16 %v479, %v478
    %v527 = vpack.c.bf16 %v481, %v480
    %v528 = vpack.c.bf16 %v483, %v482
    %v529 = vpack.c.bf16 %v485, %v484
    %v530 = vpack.c.bf16 %v487, %v486
    %v531 = vpack.c.bf16 %v489, %v488
    %v532 = vpack.c.bf16 %v491, %v490
    %v533 = vpack.c.bf16 %v493, %v492
    %v534 = vpack.c.bf16 %v495, %v494
    %v535 = vpack.c.bf16 %v497, %v496
    %v536 = vpack.c.bf16 %v499, %v498
    %v537 = vpack.c.bf16 %v501, %v500
    %v538 = vpack.c.bf16 %v503, %v502
    %v539 = vpack.c.bf16 %v505, %v504
    %v540 = vpack.c.bf16 %v507, %v506
    %s541 = scalar_lea.vmem [#allocation2], 128
    %v542 = vld [vmem:[%s541] sm:$0xf]
    %v543 = vld [vmem:[%s541 + $0x4] sm:$0xf]
    %v544 = vld [vmem:[%s541 + $0x8] sm:$0xf]
    %v545 = vld [vmem:[%s541 + $0xc] sm:$0xf]
    %v546 = vld [vmem:[%s541 + $0x10] sm:$0xf]
    %v547 = vld [vmem:[%s541 + $0x14] sm:$0xf]
    %v548 = vld [vmem:[%s541 + $0x18] sm:$0xf]
    %v549 = vld [vmem:[%s541 + $0x1c] sm:$0xf]
    %v550 = vld [vmem:[%s541 + $0x20] sm:$0xf]
    %v551 = vld [vmem:[%s541 + $0x24] sm:$0xf]
    %v552 = vld [vmem:[%s541 + $0x28] sm:$0xf]
    %v553 = vld [vmem:[%s541 + $0x2c] sm:$0xf]
    %v554 = vld [vmem:[%s541 + $0x30] sm:$0xf]
    %v555 = vld [vmem:[%s541 + $0x34] sm:$0xf]
    %v556 = vld [vmem:[%s541 + $0x38] sm:$0xf]
    %v557 = vld [vmem:[%s541 + $0x3c] sm:$0xf]
    %v558 = vpack.c.bf16 %v96, %v95
    %v559 = vpack.c.bf16 %v98, %v97
    %v560 = vpack.c.bf16 %v100, %v99
    %v561 = vpack.c.bf16 %v102, %v101
    %v562 = vpack.c.bf16 %v104, %v103
    %v563 = vpack.c.bf16 %v106, %v105
    %v564 = vpack.c.bf16 %v108, %v107
    %v565 = vpack.c.bf16 %v110, %v109
    %v566 = vpack.c.bf16 %v112, %v111
    %v567 = vpack.c.bf16 %v114, %v113
    %v568 = vpack.c.bf16 %v116, %v115
    %v569 = vpack.c.bf16 %v118, %v117
    %v570 = vpack.c.bf16 %v120, %v119
    %v571 = vpack.c.bf16 %v122, %v121
    %v572 = vpack.c.bf16 %v124, %v123
    %v573 = vpack.c.bf16 %v126, %v125
    %v574 = vlaneseq
    %v575 = vshrl.u32 %v574, 7
    %v576 = vsub.s32 3, %v575
    %v577 = vrot.slane %v56, %v576
    %v594 = vunpack.c.l.b16 %v542
    %v595 = vunpack.c.l.b16 %v543
    %v596 = vunpack.c.l.b16 %v544
    %v597 = vunpack.c.l.b16 %v545
    %v598 = vunpack.c.l.b16 %v546
    %v599 = vunpack.c.l.b16 %v547
    %v600 = vunpack.c.l.b16 %v548
    %v601 = vunpack.c.l.b16 %v549
    %v602 = vunpack.c.l.b16 %v550
    %v603 = vunpack.c.l.b16 %v551
    %v604 = vunpack.c.l.b16 %v552
    %v605 = vunpack.c.l.b16 %v553
    %v606 = vunpack.c.l.b16 %v554
    %v607 = vunpack.c.l.b16 %v555
    %v608 = vunpack.c.l.b16 %v556
    %v609 = vunpack.c.l.b16 %v557
    %v610 = vpack.c.b16 %v595, %v594
    %v611 = vpack.c.b16 %v597, %v596
    %v612 = vpack.c.b16 %v599, %v598
    %v613 = vpack.c.b16 %v601, %v600
    %v614 = vpack.c.b16 %v603, %v602
    %v615 = vpack.c.b16 %v605, %v604
    %v616 = vpack.c.b16 %v607, %v606
    %v617 = vpack.c.b16 %v609, %v608
    %626 = vmatprep.subr.bf16.mxu0 0
    %627 = vmatpush1.bf16.msra.mxu0 %v610
    %628 = vmatprep.subr.bf16.mxu0 0
    %629 = vmatpush1.bf16.msra.mxu0 %v611
    %630 = vmatprep.subr.bf16.mxu0 0
    %631 = vmatpush1.bf16.msra.mxu0 %v612
    %632 = vmatprep.subr.bf16.mxu0 0
    %633 = vmatpush1.bf16.msra.mxu0 %v613
    %634 = vmatprep.subr.bf16.mxu0 0
    %635 = vmatpush1.bf16.msra.mxu0 %v614
    %636 = vmatprep.subr.bf16.mxu0 0
    %637 = vmatpush1.bf16.msra.mxu0 %v615
    %638 = vmatprep.subr.bf16.mxu0 0
    %639 = vmatpush1.bf16.msra.mxu0 %v616
    %640 = vmatprep.subr.bf16.mxu0 0
    %641 = vmatpush1.bf16.msra.mxu0 %v617
    %642 = vmatprep.subr.bf16.mxu0 0
    %643 = vmatpush1.bf16.msra.mxu0 0
    %644 = vmatprep.subr.bf16.mxu0 0
    %645 = vmatpush1.bf16.msra.mxu0 0
    %646 = vmatprep.subr.bf16.mxu0 0
    %647 = vmatpush1.bf16.msra.mxu0 0
    %648 = vmatprep.subr.bf16.mxu0 0
    %649 = vmatpush1.bf16.msra.mxu0 0
    %650 = vmatprep.subr.bf16.mxu0 0
    %651 = vmatpush1.bf16.msra.mxu0 0
    %652 = vmatprep.subr.bf16.mxu0 0
    %653 = vmatpush1.bf16.msra.mxu0 0
    %654 = vmatprep.subr.bf16.mxu0 0
    %655 = vmatpush1.bf16.msra.mxu0 0
    %656 = vmatprep.subr.bf16.mxu0 0
    %657 = vmatpush1.bf16.msra.mxu0 0
    %658 = vmatprep.mubr.bf16.mxu0 0
    %659 = vmatmul.mubr.bf16.gmra.mrb[0].mxu0 %v558
    %v660 = vpop.f32.mrb[0].mxu0
    %v661 = vadd.f32 %v577, %v660
    %v662 = vpop.f32.mrb[0].mxu0
    %v663 = vpop.f32.mrb[0].mxu0
    %v664 = vadd.f32 %v577, %v663
    %v665 = vpop.f32.mrb[0].mxu0
    %666 = vmatprep.mubr.bf16.mxu0 0
    %667 = vmatmul.mubr.bf16.gmra.mrb[0].mxu0 %v559
    %v668 = vpop.f32.mrb[0].mxu0
    %v669 = vadd.f32 %v577, %v668
    %v670 = vpop.f32.mrb[0].mxu0
    %v671 = vpop.f32.mrb[0].mxu0
    %v672 = vadd.f32 %v577, %v671
    %v673 = vpop.f32.mrb[0].mxu0
    %674 = vmatprep.mubr.bf16.mxu0 0
    %675 = vmatmul.mubr.bf16.gmra.mrb[0].mxu0 %v560
    %v676 = vpop.f32.mrb[0].mxu0
    %v677 = vadd.f32 %v577, %v676
    %v678 = vpop.f32.mrb[0].mxu0
    %v679 = vpop.f32.mrb[0].mxu0
    %v680 = vadd.f32 %v577, %v679
    %v681 = vpop.f32.mrb[0].mxu0
    %682 = vmatprep.mubr.bf16.mxu0 0
    %683 = vmatmul.mubr.bf16.gmra.mrb[0].mxu0 %v561
    %v684 = vpop.f32.mrb[0].mxu0
    %v685 = vadd.f32 %v577, %v684
    %v686 = vpop.f32.mrb[0].mxu0
    %v687 = vpop.f32.mrb[0].mxu0
    %v688 = vadd.f32 %v577, %v687
    %v689 = vpop.f32.mrb[0].mxu0
    %690 = vmatprep.mubr.bf16.mxu0 0
    %691 = vmatmul.mubr.bf16.gmra.mrb[0].mxu0 %v562
    %v692 = vpop.f32.mrb[0].mxu0
    %v693 = vadd.f32 %v577, %v692
    %v694 = vpop.f32.mrb[0].mxu0
    %v695 = vpop.f32.mrb[0].mxu0
    %v696 = vadd.f32 %v577, %v695
    %v697 = vpop.f32.mrb[0].mxu0
    %698 = vmatprep.mubr.bf16.mxu0 0
    %699 = vmatmul.mubr.bf16.gmra.mrb[0].mxu0 %v563
    %v700 = vpop.f32.mrb[0].mxu0
    %v701 = vadd.f32 %v577, %v700
    %v702 = vpop.f32.mrb[0].mxu0
    %v703 = vpop.f32.mrb[0].mxu0
    %v704 = vadd.f32 %v577, %v703
    %v705 = vpop.f32.mrb[0].mxu0
    %706 = vmatprep.mubr.bf16.mxu0 0
    %707 = vmatmul.mubr.bf16.gmra.mrb[0].mxu0 %v564
    %v708 = vpop.f32.mrb[0].mxu0
    %v709 = vadd.f32 %v577, %v708
    %v710 = vpop.f32.mrb[0].mxu0
    %v711 = vpop.f32.mrb[0].mxu0
    %v712 = vadd.f32 %v577, %v711
    %v713 = vpop.f32.mrb[0].mxu0
    %714 = vmatprep.mubr.bf16.mxu0 0
    %715 = vmatmul.mubr.bf16.gmra.mrb[0].mxu0 %v565
    %v716 = vpop.f32.mrb[0].mxu0
    %v717 = vadd.f32 %v577, %v716
    %v718 = vpop.f32.mrb[0].mxu0
    %v719 = vpop.f32.mrb[0].mxu0
    %v720 = vadd.f32 %v577, %v719
    %v721 = vpop.f32.mrb[0].mxu0
    %722 = vmatprep.mubr.bf16.mxu0 0
    %723 = vmatmul.mubr.bf16.gmra.mrb[0].mxu0 %v566
    %v724 = vpop.f32.mrb[0].mxu0
    %v725 = vadd.f32 %v577, %v724
    %v726 = vpop.f32.mrb[0].mxu0
    %v727 = vpop.f32.mrb[0].mxu0
    %v728 = vadd.f32 %v577, %v727
    %v729 = vpop.f32.mrb[0].mxu0
    %730 = vmatprep.mubr.bf16.mxu0 0
    %731 = vmatmul.mubr.bf16.gmra.mrb[0].mxu0 %v567
    %v732 = vpop.f32.mrb[0].mxu0
    %v733 = vadd.f32 %v577, %v732
    %v734 = vpop.f32.mrb[0].mxu0
    %v735 = vpop.f32.mrb[0].mxu0
    %v736 = vadd.f32 %v577, %v735
    %v737 = vpop.f32.mrb[0].mxu0
    %738 = vmatprep.mubr.bf16.mxu0 0
    %739 = vmatmul.mubr.bf16.gmra.mrb[0].mxu0 %v568
    %v740 = vpop.f32.mrb[0].mxu0
    %v741 = vadd.f32 %v577, %v740
    %v742 = vpop.f32.mrb[0].mxu0
    %v743 = vpop.f32.mrb[0].mxu0
    %v744 = vadd.f32 %v577, %v743
    %v745 = vpop.f32.mrb[0].mxu0
    %746 = vmatprep.mubr.bf16.mxu0 0
    %747 = vmatmul.mubr.bf16.gmra.mrb[0].mxu0 %v569
    %v748 = vpop.f32.mrb[0].mxu0
    %v749 = vadd.f32 %v577, %v748
    %v750 = vpop.f32.mrb[0].mxu0
    %v751 = vpop.f32.mrb[0].mxu0
    %v752 = vadd.f32 %v577, %v751
    %v753 = vpop.f32.mrb[0].mxu0
    %754 = vmatprep.mubr.bf16.mxu0 0
    %755 = vmatmul.mubr.bf16.gmra.mrb[0].mxu0 %v570
    %v756 = vpop.f32.mrb[0].mxu0
    %v757 = vadd.f32 %v577, %v756
    %v758 = vpop.f32.mrb[0].mxu0
    %v759 = vpop.f32.mrb[0].mxu0
    %v760 = vadd.f32 %v577, %v759
    %v761 = vpop.f32.mrb[0].mxu0
    %762 = vmatprep.mubr.bf16.mxu0 0
    %763 = vmatmul.mubr.bf16.gmra.mrb[0].mxu0 %v571
    %v764 = vpop.f32.mrb[0].mxu0
    %v765 = vadd.f32 %v577, %v764
    %v766 = vpop.f32.mrb[0].mxu0
    %v767 = vpop.f32.mrb[0].mxu0
    %v768 = vadd.f32 %v577, %v767
    %v769 = vpop.f32.mrb[0].mxu0
    %770 = vmatprep.mubr.bf16.mxu0 0
    %771 = vmatmul.mubr.bf16.gmra.mrb[0].mxu0 %v572
    %v772 = vpop.f32.mrb[0].mxu0
    %v773 = vadd.f32 %v577, %v772
    %v774 = vpop.f32.mrb[0].mxu0
    %v775 = vpop.f32.mrb[0].mxu0
    %v776 = vadd.f32 %v577, %v775
    %v777 = vpop.f32.mrb[0].mxu0
    %778 = vmatprep.mubr.bf16.mxu0 0
    %779 = vmatmul.mubr.bf16.gmra.mrb[0].mxu0 %v573
    %v780 = vpop.f32.mrb[0].mxu0
    %v781 = vadd.f32 %v577, %v780
    %v782 = vpop.f32.mrb[0].mxu0
    %v783 = vpop.f32.mrb[0].mxu0
    %v784 = vadd.f32 %v577, %v783
    %v785 = vpop.f32.mrb[0].mxu0
    %786 = vdwg.mxu0
    %v803 = vunpack.c.l.b16 %v509
    %v804 = vunpack.c.l.b16 %v510
    %v805 = vunpack.c.l.b16 %v511
    %v806 = vunpack.c.l.b16 %v512
    %v807 = vunpack.c.l.b16 %v513
    %v808 = vunpack.c.l.b16 %v514
    %v809 = vunpack.c.l.b16 %v515
    %v810 = vunpack.c.l.b16 %v516
    %v811 = vunpack.c.l.b16 %v517
    %v812 = vunpack.c.l.b16 %v518
    %v813 = vunpack.c.l.b16 %v519
    %v814 = vunpack.c.l.b16 %v520
    %v815 = vunpack.c.l.b16 %v521
    %v816 = vunpack.c.l.b16 %v522
    %v817 = vunpack.c.l.b16 %v523
    %v818 = vunpack.c.l.b16 %v524
    %v819 = vpack.c.b16 %v804, %v803
    %v820 = vpack.c.b16 %v806, %v805
    %v821 = vpack.c.b16 %v808, %v807
    %v822 = vpack.c.b16 %v810, %v809
    %v823 = vpack.c.b16 %v812, %v811
    %v824 = vpack.c.b16 %v814, %v813
    %v825 = vpack.c.b16 %v816, %v815
    %v826 = vpack.c.b16 %v818, %v817
    %835 = vmatprep.subr.bf16.mxu0 0
    %836 = vmatpush1.bf16.msra.mxu0 %v819
    %837 = vmatprep.subr.bf16.mxu0 0
    %838 = vmatpush1.bf16.msra.mxu0 %v820
    %839 = vmatprep.subr.bf16.mxu0 0
    %840 = vmatpush1.bf16.msra.mxu0 %v821
    %841 = vmatprep.subr.bf16.mxu0 0
    %842 = vmatpush1.bf16.msra.mxu0 %v822
    %843 = vmatprep.subr.bf16.mxu0 0
    %844 = vmatpush1.bf16.msra.mxu0 %v823
    %845 = vmatprep.subr.bf16.mxu0 0
    %846 = vmatpush1.bf16.msra.mxu0 %v824
    %847 = vmatprep.subr.bf16.mxu0 0
    %848 = vmatpush1.bf16.msra.mxu0 %v825
    %849 = vmatprep.subr.bf16.mxu0 0
    %850 = vmatpush1.bf16.msra.mxu0 %v826
    %851 = vmatprep.subr.bf16.mxu0 0
    %852 = vmatpush1.bf16.msra.mxu0 0
    %853 = vmatprep.subr.bf16.mxu0 0
    %854 = vmatpush1.bf16.msra.mxu0 0
    %855 = vmatprep.subr.bf16.mxu0 0
    %856 = vmatpush1.bf16.msra.mxu0 0
    %857 = vmatprep.subr.bf16.mxu0 0
    %858 = vmatpush1.bf16.msra.mxu0 0
    %859 = vmatprep.subr.bf16.mxu0 0
    %860 = vmatpush1.bf16.msra.mxu0 0
    %861 = vmatprep.subr.bf16.mxu0 0
    %862 = vmatpush1.bf16.msra.mxu0 0
    %863 = vmatprep.subr.bf16.mxu0 0
    %864 = vmatpush1.bf16.msra.mxu0 0
    %865 = vmatprep.subr.bf16.mxu0 0
    %866 = vmatpush1.bf16.msra.mxu0 0
    %867 = vmatprep.mubr.bf16.mxu0 0
    %868 = vmatmul.mubr.bf16.gmra.mrb[0].mxu0 %v525
    %v869 = vpop.f32.mrb[0].mxu0
    %v870 = vadd.f32 %v661, %v869
    %v871 = vpop.f32.mrb[0].mxu0
    %v872 = vpop.f32.mrb[0].mxu0
    %v873 = vadd.f32 %v664, %v872
    %v874 = vpop.f32.mrb[0].mxu0
    %875 = vmatprep.mubr.bf16.mxu0 0
    %876 = vmatmul.mubr.bf16.gmra.mrb[0].mxu0 %v526
    %v877 = vpop.f32.mrb[0].mxu0
    %v878 = vadd.f32 %v669, %v877
    %v879 = vpop.f32.mrb[0].mxu0
    %v880 = vpop.f32.mrb[0].mxu0
    %v881 = vadd.f32 %v672, %v880
    %v882 = vpop.f32.mrb[0].mxu0
    %883 = vmatprep.mubr.bf16.mxu0 0
    %884 = vmatmul.mubr.bf16.gmra.mrb[0].mxu0 %v527
    %v885 = vpop.f32.mrb[0].mxu0
    %v886 = vadd.f32 %v677, %v885
    %v887 = vpop.f32.mrb[0].mxu0
    %v888 = vpop.f32.mrb[0].mxu0
    %v889 = vadd.f32 %v680, %v888
    %v890 = vpop.f32.mrb[0].mxu0
    %891 = vmatprep.mubr.bf16.mxu0 0
    %892 = vmatmul.mubr.bf16.gmra.mrb[0].mxu0 %v528
    %v893 = vpop.f32.mrb[0].mxu0
    %v894 = vadd.f32 %v685, %v893
    %v895 = vpop.f32.mrb[0].mxu0
    %v896 = vpop.f32.mrb[0].mxu0
    %v897 = vadd.f32 %v688, %v896
    %v898 = vpop.f32.mrb[0].mxu0
    %899 = vmatprep.mubr.bf16.mxu0 0
    %900 = vmatmul.mubr.bf16.gmra.mrb[0].mxu0 %v529
    %v901 = vpop.f32.mrb[0].mxu0
    %v902 = vadd.f32 %v693, %v901
    %v903 = vpop.f32.mrb[0].mxu0
    %v904 = vpop.f32.mrb[0].mxu0
    %v905 = vadd.f32 %v696, %v904
    %v906 = vpop.f32.mrb[0].mxu0
    %907 = vmatprep.mubr.bf16.mxu0 0
    %908 = vmatmul.mubr.bf16.gmra.mrb[0].mxu0 %v530
    %v909 = vpop.f32.mrb[0].mxu0
    %v910 = vadd.f32 %v701, %v909
    %v911 = vpop.f32.mrb[0].mxu0
    %v912 = vpop.f32.mrb[0].mxu0
    %v913 = vadd.f32 %v704, %v912
    %v914 = vpop.f32.mrb[0].mxu0
    %915 = vmatprep.mubr.bf16.mxu0 0
    %916 = vmatmul.mubr.bf16.gmra.mrb[0].mxu0 %v531
    %v917 = vpop.f32.mrb[0].mxu0
    %v918 = vadd.f32 %v709, %v917
    %v919 = vpop.f32.mrb[0].mxu0
    %v920 = vpop.f32.mrb[0].mxu0
    %v921 = vadd.f32 %v712, %v920
    %v922 = vpop.f32.mrb[0].mxu0
    %923 = vmatprep.mubr.bf16.mxu0 0
    %924 = vmatmul.mubr.bf16.gmra.mrb[0].mxu0 %v532
    %v925 = vpop.f32.mrb[0].mxu0
    %v926 = vadd.f32 %v717, %v925
    %v927 = vpop.f32.mrb[0].mxu0
    %v928 = vpop.f32.mrb[0].mxu0
    %v929 = vadd.f32 %v720, %v928
    %v930 = vpop.f32.mrb[0].mxu0
    %931 = vmatprep.mubr.bf16.mxu0 0
    %932 = vmatmul.mubr.bf16.gmra.mrb[0].mxu0 %v533
    %v933 = vpop.f32.mrb[0].mxu0
    %v934 = vadd.f32 %v725, %v933
    %v935 = vpop.f32.mrb[0].mxu0
    %v936 = vpop.f32.mrb[0].mxu0
    %v937 = vadd.f32 %v728, %v936
    %v938 = vpop.f32.mrb[0].mxu0
    %939 = vmatprep.mubr.bf16.mxu0 0
    %940 = vmatmul.mubr.bf16.gmra.mrb[0].mxu0 %v534
    %v941 = vpop.f32.mrb[0].mxu0
    %v942 = vadd.f32 %v733, %v941
    %v943 = vpop.f32.mrb[0].mxu0
    %v944 = vpop.f32.mrb[0].mxu0
    %v945 = vadd.f32 %v736, %v944
    %v946 = vpop.f32.mrb[0].mxu0
    %947 = vmatprep.mubr.bf16.mxu0 0
    %948 = vmatmul.mubr.bf16.gmra.mrb[0].mxu0 %v535
    %v949 = vpop.f32.mrb[0].mxu0
    %v950 = vadd.f32 %v741, %v949
    %v951 = vpop.f32.mrb[0].mxu0
    %v952 = vpop.f32.mrb[0].mxu0
    %v953 = vadd.f32 %v744, %v952
    %v954 = vpop.f32.mrb[0].mxu0
    %955 = vmatprep.mubr.bf16.mxu0 0
    %956 = vmatmul.mubr.bf16.gmra.mrb[0].mxu0 %v536
    %v957 = vpop.f32.mrb[0].mxu0
    %v958 = vadd.f32 %v749, %v957
    %v959 = vpop.f32.mrb[0].mxu0
    %v960 = vpop.f32.mrb[0].mxu0
    %v961 = vadd.f32 %v752, %v960
    %v962 = vpop.f32.mrb[0].mxu0
    %963 = vmatprep.mubr.bf16.mxu0 0
    %964 = vmatmul.mubr.bf16.gmra.mrb[0].mxu0 %v537
    %v965 = vpop.f32.mrb[0].mxu0
    %v966 = vadd.f32 %v757, %v965
    %v967 = vpop.f32.mrb[0].mxu0
    %v968 = vpop.f32.mrb[0].mxu0
    %v969 = vadd.f32 %v760, %v968
    %v970 = vpop.f32.mrb[0].mxu0
    %971 = vmatprep.mubr.bf16.mxu0 0
    %972 = vmatmul.mubr.bf16.gmra.mrb[0].mxu0 %v538
    %v973 = vpop.f32.mrb[0].mxu0
    %v974 = vadd.f32 %v765, %v973
    %v975 = vpop.f32.mrb[0].mxu0
    %v976 = vpop.f32.mrb[0].mxu0
    %v977 = vadd.f32 %v768, %v976
    %v978 = vpop.f32.mrb[0].mxu0
    %979 = vmatprep.mubr.bf16.mxu0 0
    %980 = vmatmul.mubr.bf16.gmra.mrb[0].mxu0 %v539
    %v981 = vpop.f32.mrb[0].mxu0
    %v982 = vadd.f32 %v773, %v981
    %v983 = vpop.f32.mrb[0].mxu0
    %v984 = vpop.f32.mrb[0].mxu0
    %v985 = vadd.f32 %v776, %v984
    %v986 = vpop.f32.mrb[0].mxu0
    %987 = vmatprep.mubr.bf16.mxu0 0
    %988 = vmatmul.mubr.bf16.gmra.mrb[0].mxu0 %v540
    %v989 = vpop.f32.mrb[0].mxu0
    %v990 = vadd.f32 %v781, %v989
    %v991 = vpop.f32.mrb[0].mxu0
    %v992 = vpop.f32.mrb[0].mxu0
    %v993 = vadd.f32 %v784, %v992
    %v994 = vpop.f32.mrb[0].mxu0
    %995 = vdwg.mxu0
    %v996 = vmax.f32 %v870, 0.0
    %v997 = vmax.f32 %v873, 0.0
    %v998 = vmax.f32 %v878, 0.0
    %v999 = vmax.f32 %v881, 0.0
    %v1000 = vmax.f32 %v886, 0.0
    %v1001 = vmax.f32 %v889, 0.0
    %v1002 = vmax.f32 %v894, 0.0
    %v1003 = vmax.f32 %v897, 0.0
    %v1004 = vmax.f32 %v902, 0.0
    %v1005 = vmax.f32 %v905, 0.0
    %v1006 = vmax.f32 %v910, 0.0
    %v1007 = vmax.f32 %v913, 0.0
    %v1008 = vmax.f32 %v918, 0.0
    %v1009 = vmax.f32 %v921, 0.0
    %v1010 = vmax.f32 %v926, 0.0
    %v1011 = vmax.f32 %v929, 0.0
    %v1012 = vmax.f32 %v934, 0.0
    %v1013 = vmax.f32 %v937, 0.0
    %v1014 = vmax.f32 %v942, 0.0
    %v1015 = vmax.f32 %v945, 0.0
    %v1016 = vmax.f32 %v950, 0.0
    %v1017 = vmax.f32 %v953, 0.0
    %v1018 = vmax.f32 %v958, 0.0
    %v1019 = vmax.f32 %v961, 0.0
    %v1020 = vmax.f32 %v966, 0.0
    %v1021 = vmax.f32 %v969, 0.0
    %v1022 = vmax.f32 %v974, 0.0
    %v1023 = vmax.f32 %v977, 0.0
    %v1024 = vmax.f32 %v982, 0.0
    %v1025 = vmax.f32 %v985, 0.0
    %v1026 = vmax.f32 %v990, 0.0
    %v1027 = vmax.f32 %v993, 0.0
    %v1028 = vlaneseq
    %v1029 = vshrl.u32 %v1028, 7
    %v1030 = vsub.s32 4, %v1029
    %v1031 = vrot.slane %v56, %v1030
    %v1032 = vmul.f32 %v996, %v1031
    %v1033 = vmul.f32 %v997, %v1031
    %v1034 = vmul.f32 %v998, %v1031
    %v1035 = vmul.f32 %v999, %v1031
    %v1036 = vmul.f32 %v1000, %v1031
    %v1037 = vmul.f32 %v1001, %v1031
    %v1038 = vmul.f32 %v1002, %v1031
    %v1039 = vmul.f32 %v1003, %v1031
    %v1040 = vmul.f32 %v1004, %v1031
    %v1041 = vmul.f32 %v1005, %v1031
    %v1042 = vmul.f32 %v1006, %v1031
    %v1043 = vmul.f32 %v1007, %v1031
    %v1044 = vmul.f32 %v1008, %v1031
    %v1045 = vmul.f32 %v1009, %v1031
    %v1046 = vmul.f32 %v1010, %v1031
    %v1047 = vmul.f32 %v1011, %v1031
    %v1048 = vmul.f32 %v1012, %v1031
    %v1049 = vmul.f32 %v1013, %v1031
    %v1050 = vmul.f32 %v1014, %v1031
    %v1051 = vmul.f32 %v1015, %v1031
    %v1052 = vmul.f32 %v1016, %v1031
    %v1053 = vmul.f32 %v1017, %v1031
    %v1054 = vmul.f32 %v1018, %v1031
    %v1055 = vmul.f32 %v1019, %v1031
    %v1056 = vmul.f32 %v1020, %v1031
    %v1057 = vmul.f32 %v1021, %v1031
    %v1058 = vmul.f32 %v1022, %v1031
    %v1059 = vmul.f32 %v1023, %v1031
    %v1060 = vmul.f32 %v1024, %v1031
    %v1061 = vmul.f32 %v1025, %v1031
    %v1062 = vmul.f32 %v1026, %v1031
    %v1063 = vmul.f32 %v1027, %v1031
    %v1064 = vlaneseq
    %v1065 = vshrl.u32 %v1064, 7
    %v1066 = vsub.s32 5, %v1065
    %v1067 = vrot.slane %v56, %v1066
    %v1068 = vadd.f32 %v1032, %v1067
    %v1069 = vadd.f32 %v1033, %v1067
    %v1070 = vadd.f32 %v1034, %v1067
    %v1071 = vadd.f32 %v1035, %v1067
    %v1072 = vadd.f32 %v1036, %v1067
    %v1073 = vadd.f32 %v1037, %v1067
    %v1074 = vadd.f32 %v1038, %v1067
    %v1075 = vadd.f32 %v1039, %v1067
    %v1076 = vadd.f32 %v1040, %v1067
    %v1077 = vadd.f32 %v1041, %v1067
    %v1078 = vadd.f32 %v1042, %v1067
    %v1079 = vadd.f32 %v1043, %v1067
    %v1080 = vadd.f32 %v1044, %v1067
    %v1081 = vadd.f32 %v1045, %v1067
    %v1082 = vadd.f32 %v1046, %v1067
    %v1083 = vadd.f32 %v1047, %v1067
    %v1084 = vadd.f32 %v1048, %v1067
    %v1085 = vadd.f32 %v1049, %v1067
    %v1086 = vadd.f32 %v1050, %v1067
    %v1087 = vadd.f32 %v1051, %v1067
    %v1088 = vadd.f32 %v1052, %v1067
    %v1089 = vadd.f32 %v1053, %v1067
    %v1090 = vadd.f32 %v1054, %v1067
    %v1091 = vadd.f32 %v1055, %v1067
    %v1092 = vadd.f32 %v1056, %v1067
    %v1093 = vadd.f32 %v1057, %v1067
    %v1094 = vadd.f32 %v1058, %v1067
    %v1095 = vadd.f32 %v1059, %v1067
    %v1096 = vadd.f32 %v1060, %v1067
    %v1097 = vadd.f32 %v1061, %v1067
    %v1098 = vadd.f32 %v1062, %v1067
    %v1099 = vadd.f32 %v1063, %v1067
    %v1100 = vmax.f32 %v1068, 0.0
    %v1101 = vmax.f32 %v1069, 0.0
    %v1102 = vmax.f32 %v1070, 0.0
    %v1103 = vmax.f32 %v1071, 0.0
    %v1104 = vmax.f32 %v1072, 0.0
    %v1105 = vmax.f32 %v1073, 0.0
    %v1106 = vmax.f32 %v1074, 0.0
    %v1107 = vmax.f32 %v1075, 0.0
    %v1108 = vmax.f32 %v1076, 0.0
    %v1109 = vmax.f32 %v1077, 0.0
    %v1110 = vmax.f32 %v1078, 0.0
    %v1111 = vmax.f32 %v1079, 0.0
    %v1112 = vmax.f32 %v1080, 0.0
    %v1113 = vmax.f32 %v1081, 0.0
    %v1114 = vmax.f32 %v1082, 0.0
    %v1115 = vmax.f32 %v1083, 0.0
    %v1116 = vmax.f32 %v1084, 0.0
    %v1117 = vmax.f32 %v1085, 0.0
    %v1118 = vmax.f32 %v1086, 0.0
    %v1119 = vmax.f32 %v1087, 0.0
    %v1120 = vmax.f32 %v1088, 0.0
    %v1121 = vmax.f32 %v1089, 0.0
    %v1122 = vmax.f32 %v1090, 0.0
    %v1123 = vmax.f32 %v1091, 0.0
    %v1124 = vmax.f32 %v1092, 0.0
    %v1125 = vmax.f32 %v1093, 0.0
    %v1126 = vmax.f32 %v1094, 0.0
    %v1127 = vmax.f32 %v1095, 0.0
    %v1128 = vmax.f32 %v1096, 0.0
    %v1129 = vmax.f32 %v1097, 0.0
    %v1130 = vmax.f32 %v1098, 0.0
    %v1131 = vmax.f32 %v1099, 0.0
    %s1132 = scalar_lea.vmem [#allocation2], 192
    %v1133 = vld [vmem:[%s1132] sm:$0xf]
    %v1134 = vld [vmem:[%s1132 + $0x4] sm:$0xf]
    %v1135 = vld [vmem:[%s1132 + $0x8] sm:$0xf]
    %v1136 = vld [vmem:[%s1132 + $0xc] sm:$0xf]
    %v1137 = vld [vmem:[%s1132 + $0x10] sm:$0xf]
    %v1138 = vld [vmem:[%s1132 + $0x14] sm:$0xf]
    %v1139 = vld [vmem:[%s1132 + $0x18] sm:$0xf]
    %v1140 = vld [vmem:[%s1132 + $0x1c] sm:$0xf]
    %v1141 = vld [vmem:[%s1132 + $0x20] sm:$0xf]
    %v1142 = vld [vmem:[%s1132 + $0x24] sm:$0xf]
    %v1143 = vld [vmem:[%s1132 + $0x28] sm:$0xf]
    %v1144 = vld [vmem:[%s1132 + $0x2c] sm:$0xf]
    %v1145 = vld [vmem:[%s1132 + $0x30] sm:$0xf]
    %v1146 = vld [vmem:[%s1132 + $0x34] sm:$0xf]
    %v1147 = vld [vmem:[%s1132 + $0x38] sm:$0xf]
    %v1148 = vld [vmem:[%s1132 + $0x3c] sm:$0xf]
    %v1149 = vpack.c.bf16 %v1101, %v1100
    %v1150 = vpack.c.bf16 %v1103, %v1102
    %v1151 = vpack.c.bf16 %v1105, %v1104
    %v1152 = vpack.c.bf16 %v1107, %v1106
    %v1153 = vpack.c.bf16 %v1109, %v1108
    %v1154 = vpack.c.bf16 %v1111, %v1110
    %v1155 = vpack.c.bf16 %v1113, %v1112
    %v1156 = vpack.c.bf16 %v1115, %v1114
    %v1157 = vpack.c.bf16 %v1117, %v1116
    %v1158 = vpack.c.bf16 %v1119, %v1118
    %v1159 = vpack.c.bf16 %v1121, %v1120
    %v1160 = vpack.c.bf16 %v1123, %v1122
    %v1161 = vpack.c.bf16 %v1125, %v1124
    %v1162 = vpack.c.bf16 %v1127, %v1126
    %v1163 = vpack.c.bf16 %v1129, %v1128
    %v1164 = vpack.c.bf16 %v1131, %v1130
    %v1165 = vlaneseq
    %v1166 = vshrl.u32 %v1165, 7
    %v1167 = vsub.s32 6, %v1166
    %v1168 = vrot.slane %v56, %v1167
    %v1185 = vunpack.c.l.b16 %v1133
    %v1186 = vunpack.c.l.b16 %v1134
    %v1187 = vunpack.c.l.b16 %v1135
    %v1188 = vunpack.c.l.b16 %v1136
    %v1189 = vunpack.c.l.b16 %v1137
    %v1190 = vunpack.c.l.b16 %v1138
    %v1191 = vunpack.c.l.b16 %v1139
    %v1192 = vunpack.c.l.b16 %v1140
    %v1193 = vunpack.c.l.b16 %v1141
    %v1194 = vunpack.c.l.b16 %v1142
    %v1195 = vunpack.c.l.b16 %v1143
    %v1196 = vunpack.c.l.b16 %v1144
    %v1197 = vunpack.c.l.b16 %v1145
    %v1198 = vunpack.c.l.b16 %v1146
    %v1199 = vunpack.c.l.b16 %v1147
    %v1200 = vunpack.c.l.b16 %v1148
    %v1201 = vpack.c.b16 %v1186, %v1185
    %v1202 = vpack.c.b16 %v1188, %v1187
    %v1203 = vpack.c.b16 %v1190, %v1189
    %v1204 = vpack.c.b16 %v1192, %v1191
    %v1205 = vpack.c.b16 %v1194, %v1193
    %v1206 = vpack.c.b16 %v1196, %v1195
    %v1207 = vpack.c.b16 %v1198, %v1197
    %v1208 = vpack.c.b16 %v1200, %v1199
    %1217 = vmatprep.subr.bf16.mxu0 0
    %1218 = vmatpush1.bf16.msra.mxu0 %v1201
    %1219 = vmatprep.subr.bf16.mxu0 0
    %1220 = vmatpush1.bf16.msra.mxu0 %v1202
    %1221 = vmatprep.subr.bf16.mxu0 0
    %1222 = vmatpush1.bf16.msra.mxu0 %v1203
    %1223 = vmatprep.subr.bf16.mxu0 0
    %1224 = vmatpush1.bf16.msra.mxu0 %v1204
    %1225 = vmatprep.subr.bf16.mxu0 0
    %1226 = vmatpush1.bf16.msra.mxu0 %v1205
    %1227 = vmatprep.subr.bf16.mxu0 0
    %1228 = vmatpush1.bf16.msra.mxu0 %v1206
    %1229 = vmatprep.subr.bf16.mxu0 0
    %1230 = vmatpush1.bf16.msra.mxu0 %v1207
    %1231 = vmatprep.subr.bf16.mxu0 0
    %1232 = vmatpush1.bf16.msra.mxu0 %v1208
    %1233 = vmatprep.subr.bf16.mxu0 0
    %1234 = vmatpush1.bf16.msra.mxu0 0
    %1235 = vmatprep.subr.bf16.mxu0 0
    %1236 = vmatpush1.bf16.msra.mxu0 0
    %1237 = vmatprep.subr.bf16.mxu0 0
    %1238 = vmatpush1.bf16.msra.mxu0 0
    %1239 = vmatprep.subr.bf16.mxu0 0
    %1240 = vmatpush1.bf16.msra.mxu0 0
    %1241 = vmatprep.subr.bf16.mxu0 0
    %1242 = vmatpush1.bf16.msra.mxu0 0
    %1243 = vmatprep.subr.bf16.mxu0 0
    %1244 = vmatpush1.bf16.msra.mxu0 0
    %1245 = vmatprep.subr.bf16.mxu0 0
    %1246 = vmatpush1.bf16.msra.mxu0 0
    %1247 = vmatprep.subr.bf16.mxu0 0
    %1248 = vmatpush1.bf16.msra.mxu0 0
    %1249 = vmatprep.mubr.bf16.mxu0 0
    %1250 = vmatmul.mubr.bf16.gmra.mrb[0].mxu0 %v1149
    %v1251 = vpop.f32.mrb[0].mxu0
    %v1252 = vadd.f32 %v1168, %v1251
    %v1253 = vpop.f32.mrb[0].mxu0
    %v1254 = vpop.f32.mrb[0].mxu0
    %v1255 = vadd.f32 %v1168, %v1254
    %v1256 = vpop.f32.mrb[0].mxu0
    %1257 = vmatprep.mubr.bf16.mxu0 0
    %1258 = vmatmul.mubr.bf16.gmra.mrb[0].mxu0 %v1150
    %v1259 = vpop.f32.mrb[0].mxu0
    %v1260 = vadd.f32 %v1168, %v1259
    %v1261 = vpop.f32.mrb[0].mxu0
    %v1262 = vpop.f32.mrb[0].mxu0
    %v1263 = vadd.f32 %v1168, %v1262
    %v1264 = vpop.f32.mrb[0].mxu0
    %1265 = vmatprep.mubr.bf16.mxu0 0
    %1266 = vmatmul.mubr.bf16.gmra.mrb[0].mxu0 %v1151
    %v1267 = vpop.f32.mrb[0].mxu0
    %v1268 = vadd.f32 %v1168, %v1267
    %v1269 = vpop.f32.mrb[0].mxu0
    %v1270 = vpop.f32.mrb[0].mxu0
    %v1271 = vadd.f32 %v1168, %v1270
    %v1272 = vpop.f32.mrb[0].mxu0
    %1273 = vmatprep.mubr.bf16.mxu0 0
    %1274 = vmatmul.mubr.bf16.gmra.mrb[0].mxu0 %v1152
    %v1275 = vpop.f32.mrb[0].mxu0
    %v1276 = vadd.f32 %v1168, %v1275
    %v1277 = vpop.f32.mrb[0].mxu0
    %v1278 = vpop.f32.mrb[0].mxu0
    %v1279 = vadd.f32 %v1168, %v1278
    %v1280 = vpop.f32.mrb[0].mxu0
    %1281 = vmatprep.mubr.bf16.mxu0 0
    %1282 = vmatmul.mubr.bf16.gmra.mrb[0].mxu0 %v1153
    %v1283 = vpop.f32.mrb[0].mxu0
    %v1284 = vadd.f32 %v1168, %v1283
    %v1285 = vpop.f32.mrb[0].mxu0
    %v1286 = vpop.f32.mrb[0].mxu0
    %v1287 = vadd.f32 %v1168, %v1286
    %v1288 = vpop.f32.mrb[0].mxu0
    %1289 = vmatprep.mubr.bf16.mxu0 0
    %1290 = vmatmul.mubr.bf16.gmra.mrb[0].mxu0 %v1154
    %v1291 = vpop.f32.mrb[0].mxu0
    %v1292 = vadd.f32 %v1168, %v1291
    %v1293 = vpop.f32.mrb[0].mxu0
    %v1294 = vpop.f32.mrb[0].mxu0
    %v1295 = vadd.f32 %v1168, %v1294
    %v1296 = vpop.f32.mrb[0].mxu0
    %1297 = vmatprep.mubr.bf16.mxu0 0
    %1298 = vmatmul.mubr.bf16.gmra.mrb[0].mxu0 %v1155
    %v1299 = vpop.f32.mrb[0].mxu0
    %v1300 = vadd.f32 %v1168, %v1299
    %v1301 = vpop.f32.mrb[0].mxu0
    %v1302 = vpop.f32.mrb[0].mxu0
    %v1303 = vadd.f32 %v1168, %v1302
    %v1304 = vpop.f32.mrb[0].mxu0
    %1305 = vmatprep.mubr.bf16.mxu0 0
    %1306 = vmatmul.mubr.bf16.gmra.mrb[0].mxu0 %v1156
    %v1307 = vpop.f32.mrb[0].mxu0
    %v1308 = vadd.f32 %v1168, %v1307
    %v1309 = vpop.f32.mrb[0].mxu0
    %v1310 = vpop.f32.mrb[0].mxu0
    %v1311 = vadd.f32 %v1168, %v1310
    %v1312 = vpop.f32.mrb[0].mxu0
    %1313 = vmatprep.mubr.bf16.mxu0 0
    %1314 = vmatmul.mubr.bf16.gmra.mrb[0].mxu0 %v1157
    %v1315 = vpop.f32.mrb[0].mxu0
    %v1316 = vadd.f32 %v1168, %v1315
    %v1317 = vpop.f32.mrb[0].mxu0
    %v1318 = vpop.f32.mrb[0].mxu0
    %v1319 = vadd.f32 %v1168, %v1318
    %v1320 = vpop.f32.mrb[0].mxu0
    %1321 = vmatprep.mubr.bf16.mxu0 0
    %1322 = vmatmul.mubr.bf16.gmra.mrb[0].mxu0 %v1158
    %v1323 = vpop.f32.mrb[0].mxu0
    %v1324 = vadd.f32 %v1168, %v1323
    %v1325 = vpop.f32.mrb[0].mxu0
    %v1326 = vpop.f32.mrb[0].mxu0
    %v1327 = vadd.f32 %v1168, %v1326
    %v1328 = vpop.f32.mrb[0].mxu0
    %1329 = vmatprep.mubr.bf16.mxu0 0
    %1330 = vmatmul.mubr.bf16.gmra.mrb[0].mxu0 %v1159
    %v1331 = vpop.f32.mrb[0].mxu0
    %v1332 = vadd.f32 %v1168, %v1331
    %v1333 = vpop.f32.mrb[0].mxu0
    %v1334 = vpop.f32.mrb[0].mxu0
    %v1335 = vadd.f32 %v1168, %v1334
    %v1336 = vpop.f32.mrb[0].mxu0
    %1337 = vmatprep.mubr.bf16.mxu0 0
    %1338 = vmatmul.mubr.bf16.gmra.mrb[0].mxu0 %v1160
    %v1339 = vpop.f32.mrb[0].mxu0
    %v1340 = vadd.f32 %v1168, %v1339
    %v1341 = vpop.f32.mrb[0].mxu0
    %v1342 = vpop.f32.mrb[0].mxu0
    %v1343 = vadd.f32 %v1168, %v1342
    %v1344 = vpop.f32.mrb[0].mxu0
    %1345 = vmatprep.mubr.bf16.mxu0 0
    %1346 = vmatmul.mubr.bf16.gmra.mrb[0].mxu0 %v1161
    %v1347 = vpop.f32.mrb[0].mxu0
    %v1348 = vadd.f32 %v1168, %v1347
    %v1349 = vpop.f32.mrb[0].mxu0
    %v1350 = vpop.f32.mrb[0].mxu0
    %v1351 = vadd.f32 %v1168, %v1350
    %v1352 = vpop.f32.mrb[0].mxu0
    %1353 = vmatprep.mubr.bf16.mxu0 0
    %1354 = vmatmul.mubr.bf16.gmra.mrb[0].mxu0 %v1162
    %v1355 = vpop.f32.mrb[0].mxu0
    %v1356 = vadd.f32 %v1168, %v1355
    %v1357 = vpop.f32.mrb[0].mxu0
    %v1358 = vpop.f32.mrb[0].mxu0
    %v1359 = vadd.f32 %v1168, %v1358
    %v1360 = vpop.f32.mrb[0].mxu0
    %1361 = vmatprep.mubr.bf16.mxu0 0
    %1362 = vmatmul.mubr.bf16.gmra.mrb[0].mxu0 %v1163
    %v1363 = vpop.f32.mrb[0].mxu0
    %v1364 = vadd.f32 %v1168, %v1363
    %v1365 = vpop.f32.mrb[0].mxu0
    %v1366 = vpop.f32.mrb[0].mxu0
    %v1367 = vadd.f32 %v1168, %v1366
    %v1368 = vpop.f32.mrb[0].mxu0
    %1369 = vmatprep.mubr.bf16.mxu0 0
    %1370 = vmatmul.mubr.bf16.gmra.mrb[0].mxu0 %v1164
    %v1371 = vpop.f32.mrb[0].mxu0
    %v1372 = vadd.f32 %v1168, %v1371
    %v1373 = vpop.f32.mrb[0].mxu0
    %v1374 = vpop.f32.mrb[0].mxu0
    %v1375 = vadd.f32 %v1168, %v1374
    %v1376 = vpop.f32.mrb[0].mxu0
    %1377 = vdwg.mxu0
    %v1378 = vmax.f32 %v1252, 0.0
    %v1379 = vmax.f32 %v1255, 0.0
    %v1380 = vmax.f32 %v1260, 0.0
    %v1381 = vmax.f32 %v1263, 0.0
    %v1382 = vmax.f32 %v1268, 0.0
    %v1383 = vmax.f32 %v1271, 0.0
    %v1384 = vmax.f32 %v1276, 0.0
    %v1385 = vmax.f32 %v1279, 0.0
    %v1386 = vmax.f32 %v1284, 0.0
    %v1387 = vmax.f32 %v1287, 0.0
    %v1388 = vmax.f32 %v1292, 0.0
    %v1389 = vmax.f32 %v1295, 0.0
    %v1390 = vmax.f32 %v1300, 0.0
    %v1391 = vmax.f32 %v1303, 0.0
    %v1392 = vmax.f32 %v1308, 0.0
    %v1393 = vmax.f32 %v1311, 0.0
    %v1394 = vmax.f32 %v1316, 0.0
    %v1395 = vmax.f32 %v1319, 0.0
    %v1396 = vmax.f32 %v1324, 0.0
    %v1397 = vmax.f32 %v1327, 0.0
    %v1398 = vmax.f32 %v1332, 0.0
    %v1399 = vmax.f32 %v1335, 0.0
    %v1400 = vmax.f32 %v1340, 0.0
    %v1401 = vmax.f32 %v1343, 0.0
    %v1402 = vmax.f32 %v1348, 0.0
    %v1403 = vmax.f32 %v1351, 0.0
    %v1404 = vmax.f32 %v1356, 0.0
    %v1405 = vmax.f32 %v1359, 0.0
    %v1406 = vmax.f32 %v1364, 0.0
    %v1407 = vmax.f32 %v1367, 0.0
    %v1408 = vmax.f32 %v1372, 0.0
    %v1409 = vmax.f32 %v1375, 0.0
    %s1410 = scalar_lea.vmem [#allocation2], 256
    %v1411 = vld [vmem:[%s1410] sm:$0xf]
    %v1412 = vld [vmem:[%s1410 + $0x4] sm:$0xf]
    %v1413 = vld [vmem:[%s1410 + $0x8] sm:$0xf]
    %v1414 = vld [vmem:[%s1410 + $0xc] sm:$0xf]
    %v1415 = vld [vmem:[%s1410 + $0x10] sm:$0xf]
    %v1416 = vld [vmem:[%s1410 + $0x14] sm:$0xf]
    %v1417 = vld [vmem:[%s1410 + $0x18] sm:$0xf]
    %v1418 = vld [vmem:[%s1410 + $0x1c] sm:$0xf]
    %v1419 = vld [vmem:[%s1410 + $0x20] sm:$0xf]
    %v1420 = vld [vmem:[%s1410 + $0x24] sm:$0xf]
    %v1421 = vld [vmem:[%s1410 + $0x28] sm:$0xf]
    %v1422 = vld [vmem:[%s1410 + $0x2c] sm:$0xf]
    %v1423 = vld [vmem:[%s1410 + $0x30] sm:$0xf]
    %v1424 = vld [vmem:[%s1410 + $0x34] sm:$0xf]
    %v1425 = vld [vmem:[%s1410 + $0x38] sm:$0xf]
    %v1426 = vld [vmem:[%s1410 + $0x3c] sm:$0xf]
    %v1427 = vpack.c.bf16 %v1379, %v1378
    %v1428 = vpack.c.bf16 %v1381, %v1380
    %v1429 = vpack.c.bf16 %v1383, %v1382
    %v1430 = vpack.c.bf16 %v1385, %v1384
    %v1431 = vpack.c.bf16 %v1387, %v1386
    %v1432 = vpack.c.bf16 %v1389, %v1388
    %v1433 = vpack.c.bf16 %v1391, %v1390
    %v1434 = vpack.c.bf16 %v1393, %v1392
    %v1435 = vpack.c.bf16 %v1395, %v1394
    %v1436 = vpack.c.bf16 %v1397, %v1396
    %v1437 = vpack.c.bf16 %v1399, %v1398
    %v1438 = vpack.c.bf16 %v1401, %v1400
    %v1439 = vpack.c.bf16 %v1403, %v1402
    %v1440 = vpack.c.bf16 %v1405, %v1404
    %v1441 = vpack.c.bf16 %v1407, %v1406
    %v1442 = vpack.c.bf16 %v1409, %v1408
    %s1443 = scalar_lea.vmem [#allocation2], 320
    %v1444 = vld [vmem:[%s1443] sm:$0xf]
    %v1445 = vld [vmem:[%s1443 + $0x4] sm:$0xf]
    %v1446 = vld [vmem:[%s1443 + $0x8] sm:$0xf]
    %v1447 = vld [vmem:[%s1443 + $0xc] sm:$0xf]
    %v1448 = vld [vmem:[%s1443 + $0x10] sm:$0xf]
    %v1449 = vld [vmem:[%s1443 + $0x14] sm:$0xf]
    %v1450 = vld [vmem:[%s1443 + $0x18] sm:$0xf]
    %v1451 = vld [vmem:[%s1443 + $0x1c] sm:$0xf]
    %v1452 = vld [vmem:[%s1443 + $0x20] sm:$0xf]
    %v1453 = vld [vmem:[%s1443 + $0x24] sm:$0xf]
    %v1454 = vld [vmem:[%s1443 + $0x28] sm:$0xf]
    %v1455 = vld [vmem:[%s1443 + $0x2c] sm:$0xf]
    %v1456 = vld [vmem:[%s1443 + $0x30] sm:$0xf]
    %v1457 = vld [vmem:[%s1443 + $0x34] sm:$0xf]
    %v1458 = vld [vmem:[%s1443 + $0x38] sm:$0xf]
    %v1459 = vld [vmem:[%s1443 + $0x3c] sm:$0xf]
    %v1460 = vpack.c.bf16 %v997, %v996
    %v1461 = vpack.c.bf16 %v999, %v998
    %v1462 = vpack.c.bf16 %v1001, %v1000
    %v1463 = vpack.c.bf16 %v1003, %v1002
    %v1464 = vpack.c.bf16 %v1005, %v1004
    %v1465 = vpack.c.bf16 %v1007, %v1006
    %v1466 = vpack.c.bf16 %v1009, %v1008
    %v1467 = vpack.c.bf16 %v1011, %v1010
    %v1468 = vpack.c.bf16 %v1013, %v1012
    %v1469 = vpack.c.bf16 %v1015, %v1014
    %v1470 = vpack.c.bf16 %v1017, %v1016
    %v1471 = vpack.c.bf16 %v1019, %v1018
    %v1472 = vpack.c.bf16 %v1021, %v1020
    %v1473 = vpack.c.bf16 %v1023, %v1022
    %v1474 = vpack.c.bf16 %v1025, %v1024
    %v1475 = vpack.c.bf16 %v1027, %v1026
    %v1476 = vlaneseq
    %v1477 = vshrl.u32 %v1476, 7
    %v1478 = vsub.s32 7, %v1477
    %v1479 = vrot.slane %v56, %v1478
    %v1496 = vunpack.c.l.b16 %v1444
    %v1497 = vunpack.c.l.b16 %v1445
    %v1498 = vunpack.c.l.b16 %v1446
    %v1499 = vunpack.c.l.b16 %v1447
    %v1500 = vunpack.c.l.b16 %v1448
    %v1501 = vunpack.c.l.b16 %v1449
    %v1502 = vunpack.c.l.b16 %v1450
    %v1503 = vunpack.c.l.b16 %v1451
    %v1504 = vunpack.c.l.b16 %v1452
    %v1505 = vunpack.c.l.b16 %v1453
    %v1506 = vunpack.c.l.b16 %v1454
    %v1507 = vunpack.c.l.b16 %v1455
    %v1508 = vunpack.c.l.b16 %v1456
    %v1509 = vunpack.c.l.b16 %v1457
    %v1510 = vunpack.c.l.b16 %v1458
    %v1511 = vunpack.c.l.b16 %v1459
    %v1512 = vpack.c.b16 %v1497, %v1496
    %v1513 = vpack.c.b16 %v1499, %v1498
    %v1514 = vpack.c.b16 %v1501, %v1500
    %v1515 = vpack.c.b16 %v1503, %v1502
    %v1516 = vpack.c.b16 %v1505, %v1504
    %v1517 = vpack.c.b16 %v1507, %v1506
    %v1518 = vpack.c.b16 %v1509, %v1508
    %v1519 = vpack.c.b16 %v1511, %v1510
    %1528 = vmatprep.subr.bf16.mxu0 0
    %1529 = vmatpush1.bf16.msra.mxu0 %v1512
    %1530 = vmatprep.subr.bf16.mxu0 0
    %1531 = vmatpush1.bf16.msra.mxu0 %v1513
    %1532 = vmatprep.subr.bf16.mxu0 0
    %1533 = vmatpush1.bf16.msra.mxu0 %v1514
    %1534 = vmatprep.subr.bf16.mxu0 0
    %1535 = vmatpush1.bf16.msra.mxu0 %v1515
    %1536 = vmatprep.subr.bf16.mxu0 0
    %1537 = vmatpush1.bf16.msra.mxu0 %v1516
    %1538 = vmatprep.subr.bf16.mxu0 0
    %1539 = vmatpush1.bf16.msra.mxu0 %v1517
    %1540 = vmatprep.subr.bf16.mxu0 0
    %1541 = vmatpush1.bf16.msra.mxu0 %v1518
    %1542 = vmatprep.subr.bf16.mxu0 0
    %1543 = vmatpush1.bf16.msra.mxu0 %v1519
    %1544 = vmatprep.subr.bf16.mxu0 0
    %1545 = vmatpush1.bf16.msra.mxu0 0
    %1546 = vmatprep.subr.bf16.mxu0 0
    %1547 = vmatpush1.bf16.msra.mxu0 0
    %1548 = vmatprep.subr.bf16.mxu0 0
    %1549 = vmatpush1.bf16.msra.mxu0 0
    %1550 = vmatprep.subr.bf16.mxu0 0
    %1551 = vmatpush1.bf16.msra.mxu0 0
    %1552 = vmatprep.subr.bf16.mxu0 0
    %1553 = vmatpush1.bf16.msra.mxu0 0
    %1554 = vmatprep.subr.bf16.mxu0 0
    %1555 = vmatpush1.bf16.msra.mxu0 0
    %1556 = vmatprep.subr.bf16.mxu0 0
    %1557 = vmatpush1.bf16.msra.mxu0 0
    %1558 = vmatprep.subr.bf16.mxu0 0
    %1559 = vmatpush1.bf16.msra.mxu0 0
    %1560 = vmatprep.mubr.bf16.mxu0 0
    %1561 = vmatmul.mubr.bf16.gmra.mrb[0].mxu0 %v1460
    %v1562 = vpop.f32.mrb[0].mxu0
    %v1563 = vadd.f32 %v1479, %v1562
    %v1564 = vpop.f32.mrb[0].mxu0
    %v1565 = vpop.f32.mrb[0].mxu0
    %v1566 = vadd.f32 %v1479, %v1565
    %v1567 = vpop.f32.mrb[0].mxu0
    %1568 = vmatprep.mubr.bf16.mxu0 0
    %1569 = vmatmul.mubr.bf16.gmra.mrb[0].mxu0 %v1461
    %v1570 = vpop.f32.mrb[0].mxu0
    %v1571 = vadd.f32 %v1479, %v1570
    %v1572 = vpop.f32.mrb[0].mxu0
    %v1573 = vpop.f32.mrb[0].mxu0
    %v1574 = vadd.f32 %v1479, %v1573
    %v1575 = vpop.f32.mrb[0].mxu0
    %1576 = vmatprep.mubr.bf16.mxu0 0
    %1577 = vmatmul.mubr.bf16.gmra.mrb[0].mxu0 %v1462
    %v1578 = vpop.f32.mrb[0].mxu0
    %v1579 = vadd.f32 %v1479, %v1578
    %v1580 = vpop.f32.mrb[0].mxu0
    %v1581 = vpop.f32.mrb[0].mxu0
    %v1582 = vadd.f32 %v1479, %v1581
    %v1583 = vpop.f32.mrb[0].mxu0
    %1584 = vmatprep.mubr.bf16.mxu0 0
    %1585 = vmatmul.mubr.bf16.gmra.mrb[0].mxu0 %v1463
    %v1586 = vpop.f32.mrb[0].mxu0
    %v1587 = vadd.f32 %v1479, %v1586
    %v1588 = vpop.f32.mrb[0].mxu0
    %v1589 = vpop.f32.mrb[0].mxu0
    %v1590 = vadd.f32 %v1479, %v1589
    %v1591 = vpop.f32.mrb[0].mxu0
    %1592 = vmatprep.mubr.bf16.mxu0 0
    %1593 = vmatmul.mubr.bf16.gmra.mrb[0].mxu0 %v1464
    %v1594 = vpop.f32.mrb[0].mxu0
    %v1595 = vadd.f32 %v1479, %v1594
    %v1596 = vpop.f32.mrb[0].mxu0
    %v1597 = vpop.f32.mrb[0].mxu0
    %v1598 = vadd.f32 %v1479, %v1597
    %v1599 = vpop.f32.mrb[0].mxu0
    %1600 = vmatprep.mubr.bf16.mxu0 0
    %1601 = vmatmul.mubr.bf16.gmra.mrb[0].mxu0 %v1465
    %v1602 = vpop.f32.mrb[0].mxu0
    %v1603 = vadd.f32 %v1479, %v1602
    %v1604 = vpop.f32.mrb[0].mxu0
    %v1605 = vpop.f32.mrb[0].mxu0
    %v1606 = vadd.f32 %v1479, %v1605
    %v1607 = vpop.f32.mrb[0].mxu0
    %1608 = vmatprep.mubr.bf16.mxu0 0
    %1609 = vmatmul.mubr.bf16.gmra.mrb[0].mxu0 %v1466
    %v1610 = vpop.f32.mrb[0].mxu0
    %v1611 = vadd.f32 %v1479, %v1610
    %v1612 = vpop.f32.mrb[0].mxu0
    %v1613 = vpop.f32.mrb[0].mxu0
    %v1614 = vadd.f32 %v1479, %v1613
    %v1615 = vpop.f32.mrb[0].mxu0
    %1616 = vmatprep.mubr.bf16.mxu0 0
    %1617 = vmatmul.mubr.bf16.gmra.mrb[0].mxu0 %v1467
    %v1618 = vpop.f32.mrb[0].mxu0
    %v1619 = vadd.f32 %v1479, %v1618
    %v1620 = vpop.f32.mrb[0].mxu0
    %v1621 = vpop.f32.mrb[0].mxu0
    %v1622 = vadd.f32 %v1479, %v1621
    %v1623 = vpop.f32.mrb[0].mxu0
    %1624 = vmatprep.mubr.bf16.mxu0 0
    %1625 = vmatmul.mubr.bf16.gmra.mrb[0].mxu0 %v1468
    %v1626 = vpop.f32.mrb[0].mxu0
    %v1627 = vadd.f32 %v1479, %v1626
    %v1628 = vpop.f32.mrb[0].mxu0
    %v1629 = vpop.f32.mrb[0].mxu0
    %v1630 = vadd.f32 %v1479, %v1629
    %v1631 = vpop.f32.mrb[0].mxu0
    %1632 = vmatprep.mubr.bf16.mxu0 0
    %1633 = vmatmul.mubr.bf16.gmra.mrb[0].mxu0 %v1469
    %v1634 = vpop.f32.mrb[0].mxu0
    %v1635 = vadd.f32 %v1479, %v1634
    %v1636 = vpop.f32.mrb[0].mxu0
    %v1637 = vpop.f32.mrb[0].mxu0
    %v1638 = vadd.f32 %v1479, %v1637
    %v1639 = vpop.f32.mrb[0].mxu0
    %1640 = vmatprep.mubr.bf16.mxu0 0
    %1641 = vmatmul.mubr.bf16.gmra.mrb[0].mxu0 %v1470
    %v1642 = vpop.f32.mrb[0].mxu0
    %v1643 = vadd.f32 %v1479, %v1642
    %v1644 = vpop.f32.mrb[0].mxu0
    %v1645 = vpop.f32.mrb[0].mxu0
    %v1646 = vadd.f32 %v1479, %v1645
    %v1647 = vpop.f32.mrb[0].mxu0
    %1648 = vmatprep.mubr.bf16.mxu0 0
    %1649 = vmatmul.mubr.bf16.gmra.mrb[0].mxu0 %v1471
    %v1650 = vpop.f32.mrb[0].mxu0
    %v1651 = vadd.f32 %v1479, %v1650
    %v1652 = vpop.f32.mrb[0].mxu0
    %v1653 = vpop.f32.mrb[0].mxu0
    %v1654 = vadd.f32 %v1479, %v1653
    %v1655 = vpop.f32.mrb[0].mxu0
    %1656 = vmatprep.mubr.bf16.mxu0 0
    %1657 = vmatmul.mubr.bf16.gmra.mrb[0].mxu0 %v1472
    %v1658 = vpop.f32.mrb[0].mxu0
    %v1659 = vadd.f32 %v1479, %v1658
    %v1660 = vpop.f32.mrb[0].mxu0
    %v1661 = vpop.f32.mrb[0].mxu0
    %v1662 = vadd.f32 %v1479, %v1661
    %v1663 = vpop.f32.mrb[0].mxu0
    %1664 = vmatprep.mubr.bf16.mxu0 0
    %1665 = vmatmul.mubr.bf16.gmra.mrb[0].mxu0 %v1473
    %v1666 = vpop.f32.mrb[0].mxu0
    %v1667 = vadd.f32 %v1479, %v1666
    %v1668 = vpop.f32.mrb[0].mxu0
    %v1669 = vpop.f32.mrb[0].mxu0
    %v1670 = vadd.f32 %v1479, %v1669
    %v1671 = vpop.f32.mrb[0].mxu0
    %1672 = vmatprep.mubr.bf16.mxu0 0
    %1673 = vmatmul.mubr.bf16.gmra.mrb[0].mxu0 %v1474
    %v1674 = vpop.f32.mrb[0].mxu0
    %v1675 = vadd.f32 %v1479, %v1674
    %v1676 = vpop.f32.mrb[0].mxu0
    %v1677 = vpop.f32.mrb[0].mxu0
    %v1678 = vadd.f32 %v1479, %v1677
    %v1679 = vpop.f32.mrb[0].mxu0
    %1680 = vmatprep.mubr.bf16.mxu0 0
    %1681 = vmatmul.mubr.bf16.gmra.mrb[0].mxu0 %v1475
    %v1682 = vpop.f32.mrb[0].mxu0
    %v1683 = vadd.f32 %v1479, %v1682
    %v1684 = vpop.f32.mrb[0].mxu0
    %v1685 = vpop.f32.mrb[0].mxu0
    %v1686 = vadd.f32 %v1479, %v1685
    %v1687 = vpop.f32.mrb[0].mxu0
    %1688 = vdwg.mxu0
    %v1705 = vunpack.c.l.b16 %v1411
    %v1706 = vunpack.c.l.b16 %v1412
    %v1707 = vunpack.c.l.b16 %v1413
    %v1708 = vunpack.c.l.b16 %v1414
    %v1709 = vunpack.c.l.b16 %v1415
    %v1710 = vunpack.c.l.b16 %v1416
    %v1711 = vunpack.c.l.b16 %v1417
    %v1712 = vunpack.c.l.b16 %v1418
    %v1713 = vunpack.c.l.b16 %v1419
    %v1714 = vunpack.c.l.b16 %v1420
    %v1715 = vunpack.c.l.b16 %v1421
    %v1716 = vunpack.c.l.b16 %v1422
    %v1717 = vunpack.c.l.b16 %v1423
    %v1718 = vunpack.c.l.b16 %v1424
    %v1719 = vunpack.c.l.b16 %v1425
    %v1720 = vunpack.c.l.b16 %v1426
    %v1721 = vpack.c.b16 %v1706, %v1705
    %v1722 = vpack.c.b16 %v1708, %v1707
    %v1723 = vpack.c.b16 %v1710, %v1709
    %v1724 = vpack.c.b16 %v1712, %v1711
    %v1725 = vpack.c.b16 %v1714, %v1713
    %v1726 = vpack.c.b16 %v1716, %v1715
    %v1727 = vpack.c.b16 %v1718, %v1717
    %v1728 = vpack.c.b16 %v1720, %v1719
    %1737 = vmatprep.subr.bf16.mxu0 0
    %1738 = vmatpush1.bf16.msra.mxu0 %v1721
    %1739 = vmatprep.subr.bf16.mxu0 0
    %1740 = vmatpush1.bf16.msra.mxu0 %v1722
    %1741 = vmatprep.subr.bf16.mxu0 0
    %1742 = vmatpush1.bf16.msra.mxu0 %v1723
    %1743 = vmatprep.subr.bf16.mxu0 0
    %1744 = vmatpush1.bf16.msra.mxu0 %v1724
    %1745 = vmatprep.subr.bf16.mxu0 0
    %1746 = vmatpush1.bf16.msra.mxu0 %v1725
    %1747 = vmatprep.subr.bf16.mxu0 0
    %1748 = vmatpush1.bf16.msra.mxu0 %v1726
    %1749 = vmatprep.subr.bf16.mxu0 0
    %1750 = vmatpush1.bf16.msra.mxu0 %v1727
    %1751 = vmatprep.subr.bf16.mxu0 0
    %1752 = vmatpush1.bf16.msra.mxu0 %v1728
    %1753 = vmatprep.subr.bf16.mxu0 0
    %1754 = vmatpush1.bf16.msra.mxu0 0
    %1755 = vmatprep.subr.bf16.mxu0 0
    %1756 = vmatpush1.bf16.msra.mxu0 0
    %1757 = vmatprep.subr.bf16.mxu0 0
    %1758 = vmatpush1.bf16.msra.mxu0 0
    %1759 = vmatprep.subr.bf16.mxu0 0
    %1760 = vmatpush1.bf16.msra.mxu0 0
    %1761 = vmatprep.subr.bf16.mxu0 0
    %1762 = vmatpush1.bf16.msra.mxu0 0
    %1763 = vmatprep.subr.bf16.mxu0 0
    %1764 = vmatpush1.bf16.msra.mxu0 0
    %1765 = vmatprep.subr.bf16.mxu0 0
    %1766 = vmatpush1.bf16.msra.mxu0 0
    %1767 = vmatprep.subr.bf16.mxu0 0
    %1768 = vmatpush1.bf16.msra.mxu0 0
    %1769 = vmatprep.mubr.bf16.mxu0 0
    %1770 = vmatmul.mubr.bf16.gmra.mrb[0].mxu0 %v1427
    %v1771 = vpop.f32.mrb[0].mxu0
    %v1772 = vadd.f32 %v1563, %v1771
    %v1773 = vpop.f32.mrb[0].mxu0
    %v1774 = vpop.f32.mrb[0].mxu0
    %v1775 = vadd.f32 %v1566, %v1774
    %v1776 = vpop.f32.mrb[0].mxu0
    %1777 = vmatprep.mubr.bf16.mxu0 0
    %1778 = vmatmul.mubr.bf16.gmra.mrb[0].mxu0 %v1428
    %v1779 = vpop.f32.mrb[0].mxu0
    %v1780 = vadd.f32 %v1571, %v1779
    %v1781 = vpop.f32.mrb[0].mxu0
    %v1782 = vpop.f32.mrb[0].mxu0
    %v1783 = vadd.f32 %v1574, %v1782
    %v1784 = vpop.f32.mrb[0].mxu0
    %1785 = vmatprep.mubr.bf16.mxu0 0
    %1786 = vmatmul.mubr.bf16.gmra.mrb[0].mxu0 %v1429
    %v1787 = vpop.f32.mrb[0].mxu0
    %v1788 = vadd.f32 %v1579, %v1787
    %v1789 = vpop.f32.mrb[0].mxu0
    %v1790 = vpop.f32.mrb[0].mxu0
    %v1791 = vadd.f32 %v1582, %v1790
    %v1792 = vpop.f32.mrb[0].mxu0
    %1793 = vmatprep.mubr.bf16.mxu0 0
    %1794 = vmatmul.mubr.bf16.gmra.mrb[0].mxu0 %v1430
    %v1795 = vpop.f32.mrb[0].mxu0
    %v1796 = vadd.f32 %v1587, %v1795
    %v1797 = vpop.f32.mrb[0].mxu0
    %v1798 = vpop.f32.mrb[0].mxu0
    %v1799 = vadd.f32 %v1590, %v1798
    %v1800 = vpop.f32.mrb[0].mxu0
    %1801 = vmatprep.mubr.bf16.mxu0 0
    %1802 = vmatmul.mubr.bf16.gmra.mrb[0].mxu0 %v1431
    %v1803 = vpop.f32.mrb[0].mxu0
    %v1804 = vadd.f32 %v1595, %v1803
    %v1805 = vpop.f32.mrb[0].mxu0
    %v1806 = vpop.f32.mrb[0].mxu0
    %v1807 = vadd.f32 %v1598, %v1806
    %v1808 = vpop.f32.mrb[0].mxu0
    %1809 = vmatprep.mubr.bf16.mxu0 0
    %1810 = vmatmul.mubr.bf16.gmra.mrb[0].mxu0 %v1432
    %v1811 = vpop.f32.mrb[0].mxu0
    %v1812 = vadd.f32 %v1603, %v1811
    %v1813 = vpop.f32.mrb[0].mxu0
    %v1814 = vpop.f32.mrb[0].mxu0
    %v1815 = vadd.f32 %v1606, %v1814
    %v1816 = vpop.f32.mrb[0].mxu0
    %1817 = vmatprep.mubr.bf16.mxu0 0
    %1818 = vmatmul.mubr.bf16.gmra.mrb[0].mxu0 %v1433
    %v1819 = vpop.f32.mrb[0].mxu0
    %v1820 = vadd.f32 %v1611, %v1819
    %v1821 = vpop.f32.mrb[0].mxu0
    %v1822 = vpop.f32.mrb[0].mxu0
    %v1823 = vadd.f32 %v1614, %v1822
    %v1824 = vpop.f32.mrb[0].mxu0
    %1825 = vmatprep.mubr.bf16.mxu0 0
    %1826 = vmatmul.mubr.bf16.gmra.mrb[0].mxu0 %v1434
    %v1827 = vpop.f32.mrb[0].mxu0
    %v1828 = vadd.f32 %v1619, %v1827
    %v1829 = vpop.f32.mrb[0].mxu0
    %v1830 = vpop.f32.mrb[0].mxu0
    %v1831 = vadd.f32 %v1622, %v1830
    %v1832 = vpop.f32.mrb[0].mxu0
    %1833 = vmatprep.mubr.bf16.mxu0 0
    %1834 = vmatmul.mubr.bf16.gmra.mrb[0].mxu0 %v1435
    %v1835 = vpop.f32.mrb[0].mxu0
    %v1836 = vadd.f32 %v1627, %v1835
    %v1837 = vpop.f32.mrb[0].mxu0
    %v1838 = vpop.f32.mrb[0].mxu0
    %v1839 = vadd.f32 %v1630, %v1838
    %v1840 = vpop.f32.mrb[0].mxu0
    %1841 = vmatprep.mubr.bf16.mxu0 0
    %1842 = vmatmul.mubr.bf16.gmra.mrb[0].mxu0 %v1436
    %v1843 = vpop.f32.mrb[0].mxu0
    %v1844 = vadd.f32 %v1635, %v1843
    %v1845 = vpop.f32.mrb[0].mxu0
    %v1846 = vpop.f32.mrb[0].mxu0
    %v1847 = vadd.f32 %v1638, %v1846
    %v1848 = vpop.f32.mrb[0].mxu0
    %1849 = vmatprep.mubr.bf16.mxu0 0
    %1850 = vmatmul.mubr.bf16.gmra.mrb[0].mxu0 %v1437
    %v1851 = vpop.f32.mrb[0].mxu0
    %v1852 = vadd.f32 %v1643, %v1851
    %v1853 = vpop.f32.mrb[0].mxu0
    %v1854 = vpop.f32.mrb[0].mxu0
    %v1855 = vadd.f32 %v1646, %v1854
    %v1856 = vpop.f32.mrb[0].mxu0
    %1857 = vmatprep.mubr.bf16.mxu0 0
    %1858 = vmatmul.mubr.bf16.gmra.mrb[0].mxu0 %v1438
    %v1859 = vpop.f32.mrb[0].mxu0
    %v1860 = vadd.f32 %v1651, %v1859
    %v1861 = vpop.f32.mrb[0].mxu0
    %v1862 = vpop.f32.mrb[0].mxu0
    %v1863 = vadd.f32 %v1654, %v1862
    %v1864 = vpop.f32.mrb[0].mxu0
    %1865 = vmatprep.mubr.bf16.mxu0 0
    %1866 = vmatmul.mubr.bf16.gmra.mrb[0].mxu0 %v1439
    %v1867 = vpop.f32.mrb[0].mxu0
    %v1868 = vadd.f32 %v1659, %v1867
    %v1869 = vpop.f32.mrb[0].mxu0
    %v1870 = vpop.f32.mrb[0].mxu0
    %v1871 = vadd.f32 %v1662, %v1870
    %v1872 = vpop.f32.mrb[0].mxu0
    %1873 = vmatprep.mubr.bf16.mxu0 0
    %1874 = vmatmul.mubr.bf16.gmra.mrb[0].mxu0 %v1440
    %v1875 = vpop.f32.mrb[0].mxu0
    %v1876 = vadd.f32 %v1667, %v1875
    %v1877 = vpop.f32.mrb[0].mxu0
    %v1878 = vpop.f32.mrb[0].mxu0
    %v1879 = vadd.f32 %v1670, %v1878
    %v1880 = vpop.f32.mrb[0].mxu0
    %1881 = vmatprep.mubr.bf16.mxu0 0
    %1882 = vmatmul.mubr.bf16.gmra.mrb[0].mxu0 %v1441
    %v1883 = vpop.f32.mrb[0].mxu0
    %v1884 = vadd.f32 %v1675, %v1883
    %v1885 = vpop.f32.mrb[0].mxu0
    %v1886 = vpop.f32.mrb[0].mxu0
    %v1887 = vadd.f32 %v1678, %v1886
    %v1888 = vpop.f32.mrb[0].mxu0
    %1889 = vmatprep.mubr.bf16.mxu0 0
    %1890 = vmatmul.mubr.bf16.gmra.mrb[0].mxu0 %v1442
    %v1891 = vpop.f32.mrb[0].mxu0
    %v1892 = vadd.f32 %v1683, %v1891
    %v1893 = vpop.f32.mrb[0].mxu0
    %v1894 = vpop.f32.mrb[0].mxu0
    %v1895 = vadd.f32 %v1686, %v1894
    %v1896 = vpop.f32.mrb[0].mxu0
    %1897 = vdwg.mxu0
    %v1898 = vmax.f32 %v1772, 0.0
    %v1899 = vmax.f32 %v1775, 0.0
    %v1900 = vmax.f32 %v1780, 0.0
    %v1901 = vmax.f32 %v1783, 0.0
    %v1902 = vmax.f32 %v1788, 0.0
    %v1903 = vmax.f32 %v1791, 0.0
    %v1904 = vmax.f32 %v1796, 0.0
    %v1905 = vmax.f32 %v1799, 0.0
    %v1906 = vmax.f32 %v1804, 0.0
    %v1907 = vmax.f32 %v1807, 0.0
    %v1908 = vmax.f32 %v1812, 0.0
    %v1909 = vmax.f32 %v1815, 0.0
    %v1910 = vmax.f32 %v1820, 0.0
    %v1911 = vmax.f32 %v1823, 0.0
    %v1912 = vmax.f32 %v1828, 0.0
    %v1913 = vmax.f32 %v1831, 0.0
    %v1914 = vmax.f32 %v1836, 0.0
    %v1915 = vmax.f32 %v1839, 0.0
    %v1916 = vmax.f32 %v1844, 0.0
    %v1917 = vmax.f32 %v1847, 0.0
    %v1918 = vmax.f32 %v1852, 0.0
    %v1919 = vmax.f32 %v1855, 0.0
    %v1920 = vmax.f32 %v1860, 0.0
    %v1921 = vmax.f32 %v1863, 0.0
    %v1922 = vmax.f32 %v1868, 0.0
    %v1923 = vmax.f32 %v1871, 0.0
    %v1924 = vmax.f32 %v1876, 0.0
    %v1925 = vmax.f32 %v1879, 0.0
    %v1926 = vmax.f32 %v1884, 0.0
    %v1927 = vmax.f32 %v1887, 0.0
    %v1928 = vmax.f32 %v1892, 0.0
    %v1929 = vmax.f32 %v1895, 0.0
    %v1930 = vlaneseq
    %v1931 = vshrl.u32 %v1930, 7
    %v1932 = vsub.s32 0, %v1931
    %v1933 = vrot.slane %v57, %v1932
    %v1934 = vmul.f32 %v1898, %v1933
    %v1935 = vmul.f32 %v1899, %v1933
    %v1936 = vmul.f32 %v1900, %v1933
    %v1937 = vmul.f32 %v1901, %v1933
    %v1938 = vmul.f32 %v1902, %v1933
    %v1939 = vmul.f32 %v1903, %v1933
    %v1940 = vmul.f32 %v1904, %v1933
    %v1941 = vmul.f32 %v1905, %v1933
    %v1942 = vmul.f32 %v1906, %v1933
    %v1943 = vmul.f32 %v1907, %v1933
    %v1944 = vmul.f32 %v1908, %v1933
    %v1945 = vmul.f32 %v1909, %v1933
    %v1946 = vmul.f32 %v1910, %v1933
    %v1947 = vmul.f32 %v1911, %v1933
    %v1948 = vmul.f32 %v1912, %v1933
    %v1949 = vmul.f32 %v1913, %v1933
    %v1950 = vmul.f32 %v1914, %v1933
    %v1951 = vmul.f32 %v1915, %v1933
    %v1952 = vmul.f32 %v1916, %v1933
    %v1953 = vmul.f32 %v1917, %v1933
    %v1954 = vmul.f32 %v1918, %v1933
    %v1955 = vmul.f32 %v1919, %v1933
    %v1956 = vmul.f32 %v1920, %v1933
    %v1957 = vmul.f32 %v1921, %v1933
    %v1958 = vmul.f32 %v1922, %v1933
    %v1959 = vmul.f32 %v1923, %v1933
    %v1960 = vmul.f32 %v1924, %v1933
    %v1961 = vmul.f32 %v1925, %v1933
    %v1962 = vmul.f32 %v1926, %v1933
    %v1963 = vmul.f32 %v1927, %v1933
    %v1964 = vmul.f32 %v1928, %v1933
    %v1965 = vmul.f32 %v1929, %v1933
    %v1966 = vlaneseq
    %v1967 = vshrl.u32 %v1966, 7
    %v1968 = vsub.s32 1, %v1967
    %v1969 = vrot.slane %v57, %v1968
    %v1970 = vadd.f32 %v1934, %v1969
    %v1971 = vadd.f32 %v1935, %v1969
    %v1972 = vadd.f32 %v1936, %v1969
    %v1973 = vadd.f32 %v1937, %v1969
    %v1974 = vadd.f32 %v1938, %v1969
    %v1975 = vadd.f32 %v1939, %v1969
    %v1976 = vadd.f32 %v1940, %v1969
    %v1977 = vadd.f32 %v1941, %v1969
    %v1978 = vadd.f32 %v1942, %v1969
    %v1979 = vadd.f32 %v1943, %v1969
    %v1980 = vadd.f32 %v1944, %v1969
    %v1981 = vadd.f32 %v1945, %v1969
    %v1982 = vadd.f32 %v1946, %v1969
    %v1983 = vadd.f32 %v1947, %v1969
    %v1984 = vadd.f32 %v1948, %v1969
    %v1985 = vadd.f32 %v1949, %v1969
    %v1986 = vadd.f32 %v1950, %v1969
    %v1987 = vadd.f32 %v1951, %v1969
    %v1988 = vadd.f32 %v1952, %v1969
    %v1989 = vadd.f32 %v1953, %v1969
    %v1990 = vadd.f32 %v1954, %v1969
    %v1991 = vadd.f32 %v1955, %v1969
    %v1992 = vadd.f32 %v1956, %v1969
    %v1993 = vadd.f32 %v1957, %v1969
    %v1994 = vadd.f32 %v1958, %v1969
    %v1995 = vadd.f32 %v1959, %v1969
    %v1996 = vadd.f32 %v1960, %v1969
    %v1997 = vadd.f32 %v1961, %v1969
    %v1998 = vadd.f32 %v1962, %v1969
    %v1999 = vadd.f32 %v1963, %v1969
    %v2000 = vadd.f32 %v1964, %v1969
    %v2001 = vadd.f32 %v1965, %v1969
    %v2002 = vmax.f32 %v1970, 0.0
    %v2003 = vmax.f32 %v1971, 0.0
    %v2004 = vmax.f32 %v1972, 0.0
    %v2005 = vmax.f32 %v1973, 0.0
    %v2006 = vmax.f32 %v1974, 0.0
    %v2007 = vmax.f32 %v1975, 0.0
    %v2008 = vmax.f32 %v1976, 0.0
    %v2009 = vmax.f32 %v1977, 0.0
    %v2010 = vmax.f32 %v1978, 0.0
    %v2011 = vmax.f32 %v1979, 0.0
    %v2012 = vmax.f32 %v1980, 0.0
    %v2013 = vmax.f32 %v1981, 0.0
    %v2014 = vmax.f32 %v1982, 0.0
    %v2015 = vmax.f32 %v1983, 0.0
    %v2016 = vmax.f32 %v1984, 0.0
    %v2017 = vmax.f32 %v1985, 0.0
    %v2018 = vmax.f32 %v1986, 0.0
    %v2019 = vmax.f32 %v1987, 0.0
    %v2020 = vmax.f32 %v1988, 0.0
    %v2021 = vmax.f32 %v1989, 0.0
    %v2022 = vmax.f32 %v1990, 0.0
    %v2023 = vmax.f32 %v1991, 0.0
    %v2024 = vmax.f32 %v1992, 0.0
    %v2025 = vmax.f32 %v1993, 0.0
    %v2026 = vmax.f32 %v1994, 0.0
    %v2027 = vmax.f32 %v1995, 0.0
    %v2028 = vmax.f32 %v1996, 0.0
    %v2029 = vmax.f32 %v1997, 0.0
    %v2030 = vmax.f32 %v1998, 0.0
    %v2031 = vmax.f32 %v1999, 0.0
    %v2032 = vmax.f32 %v2000, 0.0
    %v2033 = vmax.f32 %v2001, 0.0
    %s2034 = scalar_lea.vmem [#allocation2], 384
    %v2035 = vld [vmem:[%s2034] sm:$0xf]
    %v2036 = vld [vmem:[%s2034 + $0x4] sm:$0xf]
    %v2037 = vld [vmem:[%s2034 + $0x8] sm:$0xf]
    %v2038 = vld [vmem:[%s2034 + $0xc] sm:$0xf]
    %v2039 = vld [vmem:[%s2034 + $0x10] sm:$0xf]
    %v2040 = vld [vmem:[%s2034 + $0x14] sm:$0xf]
    %v2041 = vld [vmem:[%s2034 + $0x18] sm:$0xf]
    %v2042 = vld [vmem:[%s2034 + $0x1c] sm:$0xf]
    %v2043 = vld [vmem:[%s2034 + $0x20] sm:$0xf]
    %v2044 = vld [vmem:[%s2034 + $0x24] sm:$0xf]
    %v2045 = vld [vmem:[%s2034 + $0x28] sm:$0xf]
    %v2046 = vld [vmem:[%s2034 + $0x2c] sm:$0xf]
    %v2047 = vld [vmem:[%s2034 + $0x30] sm:$0xf]
    %v2048 = vld [vmem:[%s2034 + $0x34] sm:$0xf]
    %v2049 = vld [vmem:[%s2034 + $0x38] sm:$0xf]
    %v2050 = vld [vmem:[%s2034 + $0x3c] sm:$0xf]
    %v2051 = vpack.c.bf16 %v2003, %v2002
    %v2052 = vpack.c.bf16 %v2005, %v2004
    %v2053 = vpack.c.bf16 %v2007, %v2006
    %v2054 = vpack.c.bf16 %v2009, %v2008
    %v2055 = vpack.c.bf16 %v2011, %v2010
    %v2056 = vpack.c.bf16 %v2013, %v2012
    %v2057 = vpack.c.bf16 %v2015, %v2014
    %v2058 = vpack.c.bf16 %v2017, %v2016
    %v2059 = vpack.c.bf16 %v2019, %v2018
    %v2060 = vpack.c.bf16 %v2021, %v2020
    %v2061 = vpack.c.bf16 %v2023, %v2022
    %v2062 = vpack.c.bf16 %v2025, %v2024
    %v2063 = vpack.c.bf16 %v2027, %v2026
    %v2064 = vpack.c.bf16 %v2029, %v2028
    %v2065 = vpack.c.bf16 %v2031, %v2030
    %v2066 = vpack.c.bf16 %v2033, %v2032
    %v2067 = vlaneseq
    %v2068 = vshrl.u32 %v2067, 7
    %v2069 = vsub.s32 2, %v2068
    %v2070 = vrot.slane %v57, %v2069
    %v2087 = vunpack.c.l.b16 %v2035
    %v2088 = vunpack.c.l.b16 %v2036
    %v2089 = vunpack.c.l.b16 %v2037
    %v2090 = vunpack.c.l.b16 %v2038
    %v2091 = vunpack.c.l.b16 %v2039
    %v2092 = vunpack.c.l.b16 %v2040
    %v2093 = vunpack.c.l.b16 %v2041
    %v2094 = vunpack.c.l.b16 %v2042
    %v2095 = vunpack.c.l.b16 %v2043
    %v2096 = vunpack.c.l.b16 %v2044
    %v2097 = vunpack.c.l.b16 %v2045
    %v2098 = vunpack.c.l.b16 %v2046
    %v2099 = vunpack.c.l.b16 %v2047
    %v2100 = vunpack.c.l.b16 %v2048
    %v2101 = vunpack.c.l.b16 %v2049
    %v2102 = vunpack.c.l.b16 %v2050
    %v2103 = vpack.c.b16 %v2088, %v2087
    %v2104 = vpack.c.b16 %v2090, %v2089
    %v2105 = vpack.c.b16 %v2092, %v2091
    %v2106 = vpack.c.b16 %v2094, %v2093
    %v2107 = vpack.c.b16 %v2096, %v2095
    %v2108 = vpack.c.b16 %v2098, %v2097
    %v2109 = vpack.c.b16 %v2100, %v2099
    %v2110 = vpack.c.b16 %v2102, %v2101
    %2119 = vmatprep.subr.bf16.mxu0 0
    %2120 = vmatpush1.bf16.msra.mxu0 %v2103
    %2121 = vmatprep.subr.bf16.mxu0 0
    %2122 = vmatpush1.bf16.msra.mxu0 %v2104
    %2123 = vmatprep.subr.bf16.mxu0 0
    %2124 = vmatpush1.bf16.msra.mxu0 %v2105
    %2125 = vmatprep.subr.bf16.mxu0 0
    %2126 = vmatpush1.bf16.msra.mxu0 %v2106
    %2127 = vmatprep.subr.bf16.mxu0 0
    %2128 = vmatpush1.bf16.msra.mxu0 %v2107
    %2129 = vmatprep.subr.bf16.mxu0 0
    %2130 = vmatpush1.bf16.msra.mxu0 %v2108
    %2131 = vmatprep.subr.bf16.mxu0 0
    %2132 = vmatpush1.bf16.msra.mxu0 %v2109
    %2133 = vmatprep.subr.bf16.mxu0 0
    %2134 = vmatpush1.bf16.msra.mxu0 %v2110
    %2135 = vmatprep.subr.bf16.mxu0 0
    %2136 = vmatpush1.bf16.msra.mxu0 0
    %2137 = vmatprep.subr.bf16.mxu0 0
    %2138 = vmatpush1.bf16.msra.mxu0 0
    %2139 = vmatprep.subr.bf16.mxu0 0
    %2140 = vmatpush1.bf16.msra.mxu0 0
    %2141 = vmatprep.subr.bf16.mxu0 0
    %2142 = vmatpush1.bf16.msra.mxu0 0
    %2143 = vmatprep.subr.bf16.mxu0 0
    %2144 = vmatpush1.bf16.msra.mxu0 0
    %2145 = vmatprep.subr.bf16.mxu0 0
    %2146 = vmatpush1.bf16.msra.mxu0 0
    %2147 = vmatprep.subr.bf16.mxu0 0
    %2148 = vmatpush1.bf16.msra.mxu0 0
    %2149 = vmatprep.subr.bf16.mxu0 0
    %2150 = vmatpush1.bf16.msra.mxu0 0
    %2151 = vmatprep.mubr.bf16.mxu0 0
    %2152 = vmatmul.mubr.bf16.gmra.mrb[0].mxu0 %v2051
    %v2153 = vpop.f32.mrb[0].mxu0
    %v2154 = vadd.f32 %v2070, %v2153
    %v2155 = vpop.f32.mrb[0].mxu0
    %v2156 = vpop.f32.mrb[0].mxu0
    %v2157 = vadd.f32 %v2070, %v2156
    %v2158 = vpop.f32.mrb[0].mxu0
    %2159 = vmatprep.mubr.bf16.mxu0 0
    %2160 = vmatmul.mubr.bf16.gmra.mrb[0].mxu0 %v2052
    %v2161 = vpop.f32.mrb[0].mxu0
    %v2162 = vadd.f32 %v2070, %v2161
    %v2163 = vpop.f32.mrb[0].mxu0
    %v2164 = vpop.f32.mrb[0].mxu0
    %v2165 = vadd.f32 %v2070, %v2164
    %v2166 = vpop.f32.mrb[0].mxu0
    %2167 = vmatprep.mubr.bf16.mxu0 0
    %2168 = vmatmul.mubr.bf16.gmra.mrb[0].mxu0 %v2053
    %v2169 = vpop.f32.mrb[0].mxu0
    %v2170 = vadd.f32 %v2070, %v2169
    %v2171 = vpop.f32.mrb[0].mxu0
    %v2172 = vpop.f32.mrb[0].mxu0
    %v2173 = vadd.f32 %v2070, %v2172
    %v2174 = vpop.f32.mrb[0].mxu0
    %2175 = vmatprep.mubr.bf16.mxu0 0
    %2176 = vmatmul.mubr.bf16.gmra.mrb[0].mxu0 %v2054
    %v2177 = vpop.f32.mrb[0].mxu0
    %v2178 = vadd.f32 %v2070, %v2177
    %v2179 = vpop.f32.mrb[0].mxu0
    %v2180 = vpop.f32.mrb[0].mxu0
    %v2181 = vadd.f32 %v2070, %v2180
    %v2182 = vpop.f32.mrb[0].mxu0
    %2183 = vmatprep.mubr.bf16.mxu0 0
    %2184 = vmatmul.mubr.bf16.gmra.mrb[0].mxu0 %v2055
    %v2185 = vpop.f32.mrb[0].mxu0
    %v2186 = vadd.f32 %v2070, %v2185
    %v2187 = vpop.f32.mrb[0].mxu0
    %v2188 = vpop.f32.mrb[0].mxu0
    %v2189 = vadd.f32 %v2070, %v2188
    %v2190 = vpop.f32.mrb[0].mxu0
    %2191 = vmatprep.mubr.bf16.mxu0 0
    %2192 = vmatmul.mubr.bf16.gmra.mrb[0].mxu0 %v2056
    %v2193 = vpop.f32.mrb[0].mxu0
    %v2194 = vadd.f32 %v2070, %v2193
    %v2195 = vpop.f32.mrb[0].mxu0
    %v2196 = vpop.f32.mrb[0].mxu0
    %v2197 = vadd.f32 %v2070, %v2196
    %v2198 = vpop.f32.mrb[0].mxu0
    %2199 = vmatprep.mubr.bf16.mxu0 0
    %2200 = vmatmul.mubr.bf16.gmra.mrb[0].mxu0 %v2057
    %v2201 = vpop.f32.mrb[0].mxu0
    %v2202 = vadd.f32 %v2070, %v2201
    %v2203 = vpop.f32.mrb[0].mxu0
    %v2204 = vpop.f32.mrb[0].mxu0
    %v2205 = vadd.f32 %v2070, %v2204
    %v2206 = vpop.f32.mrb[0].mxu0
    %2207 = vmatprep.mubr.bf16.mxu0 0
    %2208 = vmatmul.mubr.bf16.gmra.mrb[0].mxu0 %v2058
    %v2209 = vpop.f32.mrb[0].mxu0
    %v2210 = vadd.f32 %v2070, %v2209
    %v2211 = vpop.f32.mrb[0].mxu0
    %v2212 = vpop.f32.mrb[0].mxu0
    %v2213 = vadd.f32 %v2070, %v2212
    %v2214 = vpop.f32.mrb[0].mxu0
    %2215 = vmatprep.mubr.bf16.mxu0 0
    %2216 = vmatmul.mubr.bf16.gmra.mrb[0].mxu0 %v2059
    %v2217 = vpop.f32.mrb[0].mxu0
    %v2218 = vadd.f32 %v2070, %v2217
    %v2219 = vpop.f32.mrb[0].mxu0
    %v2220 = vpop.f32.mrb[0].mxu0
    %v2221 = vadd.f32 %v2070, %v2220
    %v2222 = vpop.f32.mrb[0].mxu0
    %2223 = vmatprep.mubr.bf16.mxu0 0
    %2224 = vmatmul.mubr.bf16.gmra.mrb[0].mxu0 %v2060
    %v2225 = vpop.f32.mrb[0].mxu0
    %v2226 = vadd.f32 %v2070, %v2225
    %v2227 = vpop.f32.mrb[0].mxu0
    %v2228 = vpop.f32.mrb[0].mxu0
    %v2229 = vadd.f32 %v2070, %v2228
    %v2230 = vpop.f32.mrb[0].mxu0
    %2231 = vmatprep.mubr.bf16.mxu0 0
    %2232 = vmatmul.mubr.bf16.gmra.mrb[0].mxu0 %v2061
    %v2233 = vpop.f32.mrb[0].mxu0
    %v2234 = vadd.f32 %v2070, %v2233
    %v2235 = vpop.f32.mrb[0].mxu0
    %v2236 = vpop.f32.mrb[0].mxu0
    %v2237 = vadd.f32 %v2070, %v2236
    %v2238 = vpop.f32.mrb[0].mxu0
    %2239 = vmatprep.mubr.bf16.mxu0 0
    %2240 = vmatmul.mubr.bf16.gmra.mrb[0].mxu0 %v2062
    %v2241 = vpop.f32.mrb[0].mxu0
    %v2242 = vadd.f32 %v2070, %v2241
    %v2243 = vpop.f32.mrb[0].mxu0
    %v2244 = vpop.f32.mrb[0].mxu0
    %v2245 = vadd.f32 %v2070, %v2244
    %v2246 = vpop.f32.mrb[0].mxu0
    %2247 = vmatprep.mubr.bf16.mxu0 0
    %2248 = vmatmul.mubr.bf16.gmra.mrb[0].mxu0 %v2063
    %v2249 = vpop.f32.mrb[0].mxu0
    %v2250 = vadd.f32 %v2070, %v2249
    %v2251 = vpop.f32.mrb[0].mxu0
    %v2252 = vpop.f32.mrb[0].mxu0
    %v2253 = vadd.f32 %v2070, %v2252
    %v2254 = vpop.f32.mrb[0].mxu0
    %2255 = vmatprep.mubr.bf16.mxu0 0
    %2256 = vmatmul.mubr.bf16.gmra.mrb[0].mxu0 %v2064
    %v2257 = vpop.f32.mrb[0].mxu0
    %v2258 = vadd.f32 %v2070, %v2257
    %v2259 = vpop.f32.mrb[0].mxu0
    %v2260 = vpop.f32.mrb[0].mxu0
    %v2261 = vadd.f32 %v2070, %v2260
    %v2262 = vpop.f32.mrb[0].mxu0
    %2263 = vmatprep.mubr.bf16.mxu0 0
    %2264 = vmatmul.mubr.bf16.gmra.mrb[0].mxu0 %v2065
    %v2265 = vpop.f32.mrb[0].mxu0
    %v2266 = vadd.f32 %v2070, %v2265
    %v2267 = vpop.f32.mrb[0].mxu0
    %v2268 = vpop.f32.mrb[0].mxu0
    %v2269 = vadd.f32 %v2070, %v2268
    %v2270 = vpop.f32.mrb[0].mxu0
    %2271 = vmatprep.mubr.bf16.mxu0 0
    %2272 = vmatmul.mubr.bf16.gmra.mrb[0].mxu0 %v2066
    %v2273 = vpop.f32.mrb[0].mxu0
    %v2274 = vadd.f32 %v2070, %v2273
    %v2275 = vpop.f32.mrb[0].mxu0
    %v2276 = vpop.f32.mrb[0].mxu0
    %v2277 = vadd.f32 %v2070, %v2276
    %v2278 = vpop.f32.mrb[0].mxu0
    %2279 = vdwg.mxu0
    %v2280 = vmax.f32 %v2154, 0.0
    %v2281 = vmax.f32 %v2157, 0.0
    %v2282 = vmax.f32 %v2162, 0.0
    %v2283 = vmax.f32 %v2165, 0.0
    %v2284 = vmax.f32 %v2170, 0.0
    %v2285 = vmax.f32 %v2173, 0.0
    %v2286 = vmax.f32 %v2178, 0.0
    %v2287 = vmax.f32 %v2181, 0.0
    %v2288 = vmax.f32 %v2186, 0.0
    %v2289 = vmax.f32 %v2189, 0.0
    %v2290 = vmax.f32 %v2194, 0.0
    %v2291 = vmax.f32 %v2197, 0.0
    %v2292 = vmax.f32 %v2202, 0.0
    %v2293 = vmax.f32 %v2205, 0.0
    %v2294 = vmax.f32 %v2210, 0.0
    %v2295 = vmax.f32 %v2213, 0.0
    %v2296 = vmax.f32 %v2218, 0.0
    %v2297 = vmax.f32 %v2221, 0.0
    %v2298 = vmax.f32 %v2226, 0.0
    %v2299 = vmax.f32 %v2229, 0.0
    %v2300 = vmax.f32 %v2234, 0.0
    %v2301 = vmax.f32 %v2237, 0.0
    %v2302 = vmax.f32 %v2242, 0.0
    %v2303 = vmax.f32 %v2245, 0.0
    %v2304 = vmax.f32 %v2250, 0.0
    %v2305 = vmax.f32 %v2253, 0.0
    %v2306 = vmax.f32 %v2258, 0.0
    %v2307 = vmax.f32 %v2261, 0.0
    %v2308 = vmax.f32 %v2266, 0.0
    %v2309 = vmax.f32 %v2269, 0.0
    %v2310 = vmax.f32 %v2274, 0.0
    %v2311 = vmax.f32 %v2277, 0.0
    %s2312 = scalar_lea.vmem [#allocation2], 448
    %v2313 = vld [vmem:[%s2312] sm:$0xf]
    %v2314 = vld [vmem:[%s2312 + $0x4] sm:$0xf]
    %v2315 = vld [vmem:[%s2312 + $0x8] sm:$0xf]
    %v2316 = vld [vmem:[%s2312 + $0xc] sm:$0xf]
    %v2317 = vld [vmem:[%s2312 + $0x10] sm:$0xf]
    %v2318 = vld [vmem:[%s2312 + $0x14] sm:$0xf]
    %v2319 = vld [vmem:[%s2312 + $0x18] sm:$0xf]
    %v2320 = vld [vmem:[%s2312 + $0x1c] sm:$0xf]
    %v2321 = vld [vmem:[%s2312 + $0x20] sm:$0xf]
    %v2322 = vld [vmem:[%s2312 + $0x24] sm:$0xf]
    %v2323 = vld [vmem:[%s2312 + $0x28] sm:$0xf]
    %v2324 = vld [vmem:[%s2312 + $0x2c] sm:$0xf]
    %v2325 = vld [vmem:[%s2312 + $0x30] sm:$0xf]
    %v2326 = vld [vmem:[%s2312 + $0x34] sm:$0xf]
    %v2327 = vld [vmem:[%s2312 + $0x38] sm:$0xf]
    %v2328 = vld [vmem:[%s2312 + $0x3c] sm:$0xf]
    %v2329 = vpack.c.bf16 %v2281, %v2280
    %v2330 = vpack.c.bf16 %v2283, %v2282
    %v2331 = vpack.c.bf16 %v2285, %v2284
    %v2332 = vpack.c.bf16 %v2287, %v2286
    %v2333 = vpack.c.bf16 %v2289, %v2288
    %v2334 = vpack.c.bf16 %v2291, %v2290
    %v2335 = vpack.c.bf16 %v2293, %v2292
    %v2336 = vpack.c.bf16 %v2295, %v2294
    %v2337 = vpack.c.bf16 %v2297, %v2296
    %v2338 = vpack.c.bf16 %v2299, %v2298
    %v2339 = vpack.c.bf16 %v2301, %v2300
    %v2340 = vpack.c.bf16 %v2303, %v2302
    %v2341 = vpack.c.bf16 %v2305, %v2304
    %v2342 = vpack.c.bf16 %v2307, %v2306
    %v2343 = vpack.c.bf16 %v2309, %v2308
    %v2344 = vpack.c.bf16 %v2311, %v2310
    %s2345 = scalar_lea.vmem [#allocation2], 512
    %v2346 = vld [vmem:[%s2345] sm:$0xf]
    %v2347 = vld [vmem:[%s2345 + $0x4] sm:$0xf]
    %v2348 = vld [vmem:[%s2345 + $0x8] sm:$0xf]
    %v2349 = vld [vmem:[%s2345 + $0xc] sm:$0xf]
    %v2350 = vld [vmem:[%s2345 + $0x10] sm:$0xf]
    %v2351 = vld [vmem:[%s2345 + $0x14] sm:$0xf]
    %v2352 = vld [vmem:[%s2345 + $0x18] sm:$0xf]
    %v2353 = vld [vmem:[%s2345 + $0x1c] sm:$0xf]
    %v2354 = vld [vmem:[%s2345 + $0x20] sm:$0xf]
    %v2355 = vld [vmem:[%s2345 + $0x24] sm:$0xf]
    %v2356 = vld [vmem:[%s2345 + $0x28] sm:$0xf]
    %v2357 = vld [vmem:[%s2345 + $0x2c] sm:$0xf]
    %v2358 = vld [vmem:[%s2345 + $0x30] sm:$0xf]
    %v2359 = vld [vmem:[%s2345 + $0x34] sm:$0xf]
    %v2360 = vld [vmem:[%s2345 + $0x38] sm:$0xf]
    %v2361 = vld [vmem:[%s2345 + $0x3c] sm:$0xf]
    %v2362 = vpack.c.bf16 %v1899, %v1898
    %v2363 = vpack.c.bf16 %v1901, %v1900
    %v2364 = vpack.c.bf16 %v1903, %v1902
    %v2365 = vpack.c.bf16 %v1905, %v1904
    %v2366 = vpack.c.bf16 %v1907, %v1906
    %v2367 = vpack.c.bf16 %v1909, %v1908
    %v2368 = vpack.c.bf16 %v1911, %v1910
    %v2369 = vpack.c.bf16 %v1913, %v1912
    %v2370 = vpack.c.bf16 %v1915, %v1914
    %v2371 = vpack.c.bf16 %v1917, %v1916
    %v2372 = vpack.c.bf16 %v1919, %v1918
    %v2373 = vpack.c.bf16 %v1921, %v1920
    %v2374 = vpack.c.bf16 %v1923, %v1922
    %v2375 = vpack.c.bf16 %v1925, %v1924
    %v2376 = vpack.c.bf16 %v1927, %v1926
    %v2377 = vpack.c.bf16 %v1929, %v1928
    %v2378 = vlaneseq
    %v2379 = vshrl.u32 %v2378, 7
    %v2380 = vsub.s32 3, %v2379
    %v2381 = vrot.slane %v57, %v2380
    %v2398 = vunpack.c.l.b16 %v2346
    %v2399 = vunpack.c.l.b16 %v2347
    %v2400 = vunpack.c.l.b16 %v2348
    %v2401 = vunpack.c.l.b16 %v2349
    %v2402 = vunpack.c.l.b16 %v2350
    %v2403 = vunpack.c.l.b16 %v2351
    %v2404 = vunpack.c.l.b16 %v2352
    %v2405 = vunpack.c.l.b16 %v2353
    %v2406 = vunpack.c.l.b16 %v2354
    %v2407 = vunpack.c.l.b16 %v2355
    %v2408 = vunpack.c.l.b16 %v2356
    %v2409 = vunpack.c.l.b16 %v2357
    %v2410 = vunpack.c.l.b16 %v2358
    %v2411 = vunpack.c.l.b16 %v2359
    %v2412 = vunpack.c.l.b16 %v2360
    %v2413 = vunpack.c.l.b16 %v2361
    %v2414 = vpack.c.b16 %v2399, %v2398
    %v2415 = vpack.c.b16 %v2401, %v2400
    %v2416 = vpack.c.b16 %v2403, %v2402
    %v2417 = vpack.c.b16 %v2405, %v2404
    %v2418 = vpack.c.b16 %v2407, %v2406
    %v2419 = vpack.c.b16 %v2409, %v2408
    %v2420 = vpack.c.b16 %v2411, %v2410
    %v2421 = vpack.c.b16 %v2413, %v2412
    %2430 = vmatprep.subr.bf16.mxu0 0
    %2431 = vmatpush1.bf16.msra.mxu0 %v2414
    %2432 = vmatprep.subr.bf16.mxu0 0
    %2433 = vmatpush1.bf16.msra.mxu0 %v2415
    %2434 = vmatprep.subr.bf16.mxu0 0
    %2435 = vmatpush1.bf16.msra.mxu0 %v2416
    %2436 = vmatprep.subr.bf16.mxu0 0
    %2437 = vmatpush1.bf16.msra.mxu0 %v2417
    %2438 = vmatprep.subr.bf16.mxu0 0
    %2439 = vmatpush1.bf16.msra.mxu0 %v2418
    %2440 = vmatprep.subr.bf16.mxu0 0
    %2441 = vmatpush1.bf16.msra.mxu0 %v2419
    %2442 = vmatprep.subr.bf16.mxu0 0
    %2443 = vmatpush1.bf16.msra.mxu0 %v2420
    %2444 = vmatprep.subr.bf16.mxu0 0
    %2445 = vmatpush1.bf16.msra.mxu0 %v2421
    %2446 = vmatprep.subr.bf16.mxu0 0
    %2447 = vmatpush1.bf16.msra.mxu0 0
    %2448 = vmatprep.subr.bf16.mxu0 0
    %2449 = vmatpush1.bf16.msra.mxu0 0
    %2450 = vmatprep.subr.bf16.mxu0 0
    %2451 = vmatpush1.bf16.msra.mxu0 0
    %2452 = vmatprep.subr.bf16.mxu0 0
    %2453 = vmatpush1.bf16.msra.mxu0 0
    %2454 = vmatprep.subr.bf16.mxu0 0
    %2455 = vmatpush1.bf16.msra.mxu0 0
    %2456 = vmatprep.subr.bf16.mxu0 0
    %2457 = vmatpush1.bf16.msra.mxu0 0
    %2458 = vmatprep.subr.bf16.mxu0 0
    %2459 = vmatpush1.bf16.msra.mxu0 0
    %2460 = vmatprep.subr.bf16.mxu0 0
    %2461 = vmatpush1.bf16.msra.mxu0 0
    %2462 = vmatprep.mubr.bf16.mxu0 0
    %2463 = vmatmul.mubr.bf16.gmra.mrb[0].mxu0 %v2362
    %v2464 = vpop.f32.mrb[0].mxu0
    %v2465 = vadd.f32 %v2381, %v2464
    %v2466 = vpop.f32.mrb[0].mxu0
    %v2467 = vpop.f32.mrb[0].mxu0
    %v2468 = vadd.f32 %v2381, %v2467
    %v2469 = vpop.f32.mrb[0].mxu0
    %2470 = vmatprep.mubr.bf16.mxu0 0
    %2471 = vmatmul.mubr.bf16.gmra.mrb[0].mxu0 %v2363
    %v2472 = vpop.f32.mrb[0].mxu0
    %v2473 = vadd.f32 %v2381, %v2472
    %v2474 = vpop.f32.mrb[0].mxu0
    %v2475 = vpop.f32.mrb[0].mxu0
    %v2476 = vadd.f32 %v2381, %v2475
    %v2477 = vpop.f32.mrb[0].mxu0
    %2478 = vmatprep.mubr.bf16.mxu0 0
    %2479 = vmatmul.mubr.bf16.gmra.mrb[0].mxu0 %v2364
    %v2480 = vpop.f32.mrb[0].mxu0
    %v2481 = vadd.f32 %v2381, %v2480
    %v2482 = vpop.f32.mrb[0].mxu0
    %v2483 = vpop.f32.mrb[0].mxu0
    %v2484 = vadd.f32 %v2381, %v2483
    %v2485 = vpop.f32.mrb[0].mxu0
    %2486 = vmatprep.mubr.bf16.mxu0 0
    %2487 = vmatmul.mubr.bf16.gmra.mrb[0].mxu0 %v2365
    %v2488 = vpop.f32.mrb[0].mxu0
    %v2489 = vadd.f32 %v2381, %v2488
    %v2490 = vpop.f32.mrb[0].mxu0
    %v2491 = vpop.f32.mrb[0].mxu0
    %v2492 = vadd.f32 %v2381, %v2491
    %v2493 = vpop.f32.mrb[0].mxu0
    %2494 = vmatprep.mubr.bf16.mxu0 0
    %2495 = vmatmul.mubr.bf16.gmra.mrb[0].mxu0 %v2366
    %v2496 = vpop.f32.mrb[0].mxu0
    %v2497 = vadd.f32 %v2381, %v2496
    %v2498 = vpop.f32.mrb[0].mxu0
    %v2499 = vpop.f32.mrb[0].mxu0
    %v2500 = vadd.f32 %v2381, %v2499
    %v2501 = vpop.f32.mrb[0].mxu0
    %2502 = vmatprep.mubr.bf16.mxu0 0
    %2503 = vmatmul.mubr.bf16.gmra.mrb[0].mxu0 %v2367
    %v2504 = vpop.f32.mrb[0].mxu0
    %v2505 = vadd.f32 %v2381, %v2504
    %v2506 = vpop.f32.mrb[0].mxu0
    %v2507 = vpop.f32.mrb[0].mxu0
    %v2508 = vadd.f32 %v2381, %v2507
    %v2509 = vpop.f32.mrb[0].mxu0
    %2510 = vmatprep.mubr.bf16.mxu0 0
    %2511 = vmatmul.mubr.bf16.gmra.mrb[0].mxu0 %v2368
    %v2512 = vpop.f32.mrb[0].mxu0
    %v2513 = vadd.f32 %v2381, %v2512
    %v2514 = vpop.f32.mrb[0].mxu0
    %v2515 = vpop.f32.mrb[0].mxu0
    %v2516 = vadd.f32 %v2381, %v2515
    %v2517 = vpop.f32.mrb[0].mxu0
    %2518 = vmatprep.mubr.bf16.mxu0 0
    %2519 = vmatmul.mubr.bf16.gmra.mrb[0].mxu0 %v2369
    %v2520 = vpop.f32.mrb[0].mxu0
    %v2521 = vadd.f32 %v2381, %v2520
    %v2522 = vpop.f32.mrb[0].mxu0
    %v2523 = vpop.f32.mrb[0].mxu0
    %v2524 = vadd.f32 %v2381, %v2523
    %v2525 = vpop.f32.mrb[0].mxu0
    %2526 = vmatprep.mubr.bf16.mxu0 0
    %2527 = vmatmul.mubr.bf16.gmra.mrb[0].mxu0 %v2370
    %v2528 = vpop.f32.mrb[0].mxu0
    %v2529 = vadd.f32 %v2381, %v2528
    %v2530 = vpop.f32.mrb[0].mxu0
    %v2531 = vpop.f32.mrb[0].mxu0
    %v2532 = vadd.f32 %v2381, %v2531
    %v2533 = vpop.f32.mrb[0].mxu0
    %2534 = vmatprep.mubr.bf16.mxu0 0
    %2535 = vmatmul.mubr.bf16.gmra.mrb[0].mxu0 %v2371
    %v2536 = vpop.f32.mrb[0].mxu0
    %v2537 = vadd.f32 %v2381, %v2536
    %v2538 = vpop.f32.mrb[0].mxu0
    %v2539 = vpop.f32.mrb[0].mxu0
    %v2540 = vadd.f32 %v2381, %v2539
    %v2541 = vpop.f32.mrb[0].mxu0
    %2542 = vmatprep.mubr.bf16.mxu0 0
    %2543 = vmatmul.mubr.bf16.gmra.mrb[0].mxu0 %v2372
    %v2544 = vpop.f32.mrb[0].mxu0
    %v2545 = vadd.f32 %v2381, %v2544
    %v2546 = vpop.f32.mrb[0].mxu0
    %v2547 = vpop.f32.mrb[0].mxu0
    %v2548 = vadd.f32 %v2381, %v2547
    %v2549 = vpop.f32.mrb[0].mxu0
    %2550 = vmatprep.mubr.bf16.mxu0 0
    %2551 = vmatmul.mubr.bf16.gmra.mrb[0].mxu0 %v2373
    %v2552 = vpop.f32.mrb[0].mxu0
    %v2553 = vadd.f32 %v2381, %v2552
    %v2554 = vpop.f32.mrb[0].mxu0
    %v2555 = vpop.f32.mrb[0].mxu0
    %v2556 = vadd.f32 %v2381, %v2555
    %v2557 = vpop.f32.mrb[0].mxu0
    %2558 = vmatprep.mubr.bf16.mxu0 0
    %2559 = vmatmul.mubr.bf16.gmra.mrb[0].mxu0 %v2374
    %v2560 = vpop.f32.mrb[0].mxu0
    %v2561 = vadd.f32 %v2381, %v2560
    %v2562 = vpop.f32.mrb[0].mxu0
    %v2563 = vpop.f32.mrb[0].mxu0
    %v2564 = vadd.f32 %v2381, %v2563
    %v2565 = vpop.f32.mrb[0].mxu0
    %2566 = vmatprep.mubr.bf16.mxu0 0
    %2567 = vmatmul.mubr.bf16.gmra.mrb[0].mxu0 %v2375
    %v2568 = vpop.f32.mrb[0].mxu0
    %v2569 = vadd.f32 %v2381, %v2568
    %v2570 = vpop.f32.mrb[0].mxu0
    %v2571 = vpop.f32.mrb[0].mxu0
    %v2572 = vadd.f32 %v2381, %v2571
    %v2573 = vpop.f32.mrb[0].mxu0
    %2574 = vmatprep.mubr.bf16.mxu0 0
    %2575 = vmatmul.mubr.bf16.gmra.mrb[0].mxu0 %v2376
    %v2576 = vpop.f32.mrb[0].mxu0
    %v2577 = vadd.f32 %v2381, %v2576
    %v2578 = vpop.f32.mrb[0].mxu0
    %v2579 = vpop.f32.mrb[0].mxu0
    %v2580 = vadd.f32 %v2381, %v2579
    %v2581 = vpop.f32.mrb[0].mxu0
    %2582 = vmatprep.mubr.bf16.mxu0 0
    %2583 = vmatmul.mubr.bf16.gmra.mrb[0].mxu0 %v2377
    %v2584 = vpop.f32.mrb[0].mxu0
    %v2585 = vadd.f32 %v2381, %v2584
    %v2586 = vpop.f32.mrb[0].mxu0
    %v2587 = vpop.f32.mrb[0].mxu0
    %v2588 = vadd.f32 %v2381, %v2587
    %v2589 = vpop.f32.mrb[0].mxu0
    %2590 = vdwg.mxu0
    %v2607 = vunpack.c.l.b16 %v2313
    %v2608 = vunpack.c.l.b16 %v2314
    %v2609 = vunpack.c.l.b16 %v2315
    %v2610 = vunpack.c.l.b16 %v2316
    %v2611 = vunpack.c.l.b16 %v2317
    %v2612 = vunpack.c.l.b16 %v2318
    %v2613 = vunpack.c.l.b16 %v2319
    %v2614 = vunpack.c.l.b16 %v2320
    %v2615 = vunpack.c.l.b16 %v2321
    %v2616 = vunpack.c.l.b16 %v2322
    %v2617 = vunpack.c.l.b16 %v2323
    %v2618 = vunpack.c.l.b16 %v2324
    %v2619 = vunpack.c.l.b16 %v2325
    %v2620 = vunpack.c.l.b16 %v2326
    %v2621 = vunpack.c.l.b16 %v2327
    %v2622 = vunpack.c.l.b16 %v2328
    %v2623 = vpack.c.b16 %v2608, %v2607
    %v2624 = vpack.c.b16 %v2610, %v2609
    %v2625 = vpack.c.b16 %v2612, %v2611
    %v2626 = vpack.c.b16 %v2614, %v2613
    %v2627 = vpack.c.b16 %v2616, %v2615
    %v2628 = vpack.c.b16 %v2618, %v2617
    %v2629 = vpack.c.b16 %v2620, %v2619
    %v2630 = vpack.c.b16 %v2622, %v2621
    %2639 = vmatprep.subr.bf16.mxu0 0
    %2640 = vmatpush1.bf16.msra.mxu0 %v2623
    %2641 = vmatprep.subr.bf16.mxu0 0
    %2642 = vmatpush1.bf16.msra.mxu0 %v2624
    %2643 = vmatprep.subr.bf16.mxu0 0
    %2644 = vmatpush1.bf16.msra.mxu0 %v2625
    %2645 = vmatprep.subr.bf16.mxu0 0
    %2646 = vmatpush1.bf16.msra.mxu0 %v2626
    %2647 = vmatprep.subr.bf16.mxu0 0
    %2648 = vmatpush1.bf16.msra.mxu0 %v2627
    %2649 = vmatprep.subr.bf16.mxu0 0
    %2650 = vmatpush1.bf16.msra.mxu0 %v2628
    %2651 = vmatprep.subr.bf16.mxu0 0
    %2652 = vmatpush1.bf16.msra.mxu0 %v2629
    %2653 = vmatprep.subr.bf16.mxu0 0
    %2654 = vmatpush1.bf16.msra.mxu0 %v2630
    %2655 = vmatprep.subr.bf16.mxu0 0
    %2656 = vmatpush1.bf16.msra.mxu0 0
    %2657 = vmatprep.subr.bf16.mxu0 0
    %2658 = vmatpush1.bf16.msra.mxu0 0
    %2659 = vmatprep.subr.bf16.mxu0 0
    %2660 = vmatpush1.bf16.msra.mxu0 0
    %2661 = vmatprep.subr.bf16.mxu0 0
    %2662 = vmatpush1.bf16.msra.mxu0 0
    %2663 = vmatprep.subr.bf16.mxu0 0
    %2664 = vmatpush1.bf16.msra.mxu0 0
    %2665 = vmatprep.subr.bf16.mxu0 0
    %2666 = vmatpush1.bf16.msra.mxu0 0
    %2667 = vmatprep.subr.bf16.mxu0 0
    %2668 = vmatpush1.bf16.msra.mxu0 0
    %2669 = vmatprep.subr.bf16.mxu0 0
    %2670 = vmatpush1.bf16.msra.mxu0 0
    %2671 = vmatprep.mubr.bf16.mxu0 0
    %2672 = vmatmul.mubr.bf16.gmra.mrb[0].mxu0 %v2329
    %v2673 = vpop.f32.mrb[0].mxu0
    %v2674 = vadd.f32 %v2465, %v2673
    %v2675 = vpop.f32.mrb[0].mxu0
    %v2676 = vpop.f32.mrb[0].mxu0
    %v2677 = vadd.f32 %v2468, %v2676
    %v2678 = vpop.f32.mrb[0].mxu0
    %2679 = vmatprep.mubr.bf16.mxu0 0
    %2680 = vmatmul.mubr.bf16.gmra.mrb[0].mxu0 %v2330
    %v2681 = vpop.f32.mrb[0].mxu0
    %v2682 = vadd.f32 %v2473, %v2681
    %v2683 = vpop.f32.mrb[0].mxu0
    %v2684 = vpop.f32.mrb[0].mxu0
    %v2685 = vadd.f32 %v2476, %v2684
    %v2686 = vpop.f32.mrb[0].mxu0
    %2687 = vmatprep.mubr.bf16.mxu0 0
    %2688 = vmatmul.mubr.bf16.gmra.mrb[0].mxu0 %v2331
    %v2689 = vpop.f32.mrb[0].mxu0
    %v2690 = vadd.f32 %v2481, %v2689
    %v2691 = vpop.f32.mrb[0].mxu0
    %v2692 = vpop.f32.mrb[0].mxu0
    %v2693 = vadd.f32 %v2484, %v2692
    %v2694 = vpop.f32.mrb[0].mxu0
    %2695 = vmatprep.mubr.bf16.mxu0 0
    %2696 = vmatmul.mubr.bf16.gmra.mrb[0].mxu0 %v2332
    %v2697 = vpop.f32.mrb[0].mxu0
    %v2698 = vadd.f32 %v2489, %v2697
    %v2699 = vpop.f32.mrb[0].mxu0
    %v2700 = vpop.f32.mrb[0].mxu0
    %v2701 = vadd.f32 %v2492, %v2700
    %v2702 = vpop.f32.mrb[0].mxu0
    %2703 = vmatprep.mubr.bf16.mxu0 0
    %2704 = vmatmul.mubr.bf16.gmra.mrb[0].mxu0 %v2333
    %v2705 = vpop.f32.mrb[0].mxu0
    %v2706 = vadd.f32 %v2497, %v2705
    %v2707 = vpop.f32.mrb[0].mxu0
    %v2708 = vpop.f32.mrb[0].mxu0
    %v2709 = vadd.f32 %v2500, %v2708
    %v2710 = vpop.f32.mrb[0].mxu0
    %2711 = vmatprep.mubr.bf16.mxu0 0
    %2712 = vmatmul.mubr.bf16.gmra.mrb[0].mxu0 %v2334
    %v2713 = vpop.f32.mrb[0].mxu0
    %v2714 = vadd.f32 %v2505, %v2713
    %v2715 = vpop.f32.mrb[0].mxu0
    %v2716 = vpop.f32.mrb[0].mxu0
    %v2717 = vadd.f32 %v2508, %v2716
    %v2718 = vpop.f32.mrb[0].mxu0
    %2719 = vmatprep.mubr.bf16.mxu0 0
    %2720 = vmatmul.mubr.bf16.gmra.mrb[0].mxu0 %v2335
    %v2721 = vpop.f32.mrb[0].mxu0
    %v2722 = vadd.f32 %v2513, %v2721
    %v2723 = vpop.f32.mrb[0].mxu0
    %v2724 = vpop.f32.mrb[0].mxu0
    %v2725 = vadd.f32 %v2516, %v2724
    %v2726 = vpop.f32.mrb[0].mxu0
    %2727 = vmatprep.mubr.bf16.mxu0 0
    %2728 = vmatmul.mubr.bf16.gmra.mrb[0].mxu0 %v2336
    %v2729 = vpop.f32.mrb[0].mxu0
    %v2730 = vadd.f32 %v2521, %v2729
    %v2731 = vpop.f32.mrb[0].mxu0
    %v2732 = vpop.f32.mrb[0].mxu0
    %v2733 = vadd.f32 %v2524, %v2732
    %v2734 = vpop.f32.mrb[0].mxu0
    %2735 = vmatprep.mubr.bf16.mxu0 0
    %2736 = vmatmul.mubr.bf16.gmra.mrb[0].mxu0 %v2337
    %v2737 = vpop.f32.mrb[0].mxu0
    %v2738 = vadd.f32 %v2529, %v2737
    %v2739 = vpop.f32.mrb[0].mxu0
    %v2740 = vpop.f32.mrb[0].mxu0
    %v2741 = vadd.f32 %v2532, %v2740
    %v2742 = vpop.f32.mrb[0].mxu0
    %2743 = vmatprep.mubr.bf16.mxu0 0
    %2744 = vmatmul.mubr.bf16.gmra.mrb[0].mxu0 %v2338
    %v2745 = vpop.f32.mrb[0].mxu0
    %v2746 = vadd.f32 %v2537, %v2745
    %v2747 = vpop.f32.mrb[0].mxu0
    %v2748 = vpop.f32.mrb[0].mxu0
    %v2749 = vadd.f32 %v2540, %v2748
    %v2750 = vpop.f32.mrb[0].mxu0
    %2751 = vmatprep.mubr.bf16.mxu0 0
    %2752 = vmatmul.mubr.bf16.gmra.mrb[0].mxu0 %v2339
    %v2753 = vpop.f32.mrb[0].mxu0
    %v2754 = vadd.f32 %v2545, %v2753
    %v2755 = vpop.f32.mrb[0].mxu0
    %v2756 = vpop.f32.mrb[0].mxu0
    %v2757 = vadd.f32 %v2548, %v2756
    %v2758 = vpop.f32.mrb[0].mxu0
    %2759 = vmatprep.mubr.bf16.mxu0 0
    %2760 = vmatmul.mubr.bf16.gmra.mrb[0].mxu0 %v2340
    %v2761 = vpop.f32.mrb[0].mxu0
    %v2762 = vadd.f32 %v2553, %v2761
    %v2763 = vpop.f32.mrb[0].mxu0
    %v2764 = vpop.f32.mrb[0].mxu0
    %v2765 = vadd.f32 %v2556, %v2764
    %v2766 = vpop.f32.mrb[0].mxu0
    %2767 = vmatprep.mubr.bf16.mxu0 0
    %2768 = vmatmul.mubr.bf16.gmra.mrb[0].mxu0 %v2341
    %v2769 = vpop.f32.mrb[0].mxu0
    %v2770 = vadd.f32 %v2561, %v2769
    %v2771 = vpop.f32.mrb[0].mxu0
    %v2772 = vpop.f32.mrb[0].mxu0
    %v2773 = vadd.f32 %v2564, %v2772
    %v2774 = vpop.f32.mrb[0].mxu0
    %2775 = vmatprep.mubr.bf16.mxu0 0
    %2776 = vmatmul.mubr.bf16.gmra.mrb[0].mxu0 %v2342
    %v2777 = vpop.f32.mrb[0].mxu0
    %v2778 = vadd.f32 %v2569, %v2777
    %v2779 = vpop.f32.mrb[0].mxu0
    %v2780 = vpop.f32.mrb[0].mxu0
    %v2781 = vadd.f32 %v2572, %v2780
    %v2782 = vpop.f32.mrb[0].mxu0
    %2783 = vmatprep.mubr.bf16.mxu0 0
    %2784 = vmatmul.mubr.bf16.gmra.mrb[0].mxu0 %v2343
    %v2785 = vpop.f32.mrb[0].mxu0
    %v2786 = vadd.f32 %v2577, %v2785
    %v2787 = vpop.f32.mrb[0].mxu0
    %v2788 = vpop.f32.mrb[0].mxu0
    %v2789 = vadd.f32 %v2580, %v2788
    %v2790 = vpop.f32.mrb[0].mxu0
    %2791 = vmatprep.mubr.bf16.mxu0 0
    %2792 = vmatmul.mubr.bf16.gmra.mrb[0].mxu0 %v2344
    %v2793 = vpop.f32.mrb[0].mxu0
    %v2794 = vadd.f32 %v2585, %v2793
    %v2795 = vpop.f32.mrb[0].mxu0
    %v2796 = vpop.f32.mrb[0].mxu0
    %v2797 = vadd.f32 %v2588, %v2796
    %v2798 = vpop.f32.mrb[0].mxu0
    %2799 = vdwg.mxu0
    %v2800 = vmax.f32 %v2674, 0.0
    %v2801 = vmax.f32 %v2677, 0.0
    %v2802 = vmax.f32 %v2682, 0.0
    %v2803 = vmax.f32 %v2685, 0.0
    %v2804 = vmax.f32 %v2690, 0.0
    %v2805 = vmax.f32 %v2693, 0.0
    %v2806 = vmax.f32 %v2698, 0.0
    %v2807 = vmax.f32 %v2701, 0.0
    %v2808 = vmax.f32 %v2706, 0.0
    %v2809 = vmax.f32 %v2709, 0.0
    %v2810 = vmax.f32 %v2714, 0.0
    %v2811 = vmax.f32 %v2717, 0.0
    %v2812 = vmax.f32 %v2722, 0.0
    %v2813 = vmax.f32 %v2725, 0.0
    %v2814 = vmax.f32 %v2730, 0.0
    %v2815 = vmax.f32 %v2733, 0.0
    %v2816 = vmax.f32 %v2738, 0.0
    %v2817 = vmax.f32 %v2741, 0.0
    %v2818 = vmax.f32 %v2746, 0.0
    %v2819 = vmax.f32 %v2749, 0.0
    %v2820 = vmax.f32 %v2754, 0.0
    %v2821 = vmax.f32 %v2757, 0.0
    %v2822 = vmax.f32 %v2762, 0.0
    %v2823 = vmax.f32 %v2765, 0.0
    %v2824 = vmax.f32 %v2770, 0.0
    %v2825 = vmax.f32 %v2773, 0.0
    %v2826 = vmax.f32 %v2778, 0.0
    %v2827 = vmax.f32 %v2781, 0.0
    %v2828 = vmax.f32 %v2786, 0.0
    %v2829 = vmax.f32 %v2789, 0.0
    %v2830 = vmax.f32 %v2794, 0.0
    %v2831 = vmax.f32 %v2797, 0.0
    %v2832 = vlaneseq
    %v2833 = vshrl.u32 %v2832, 7
    %v2834 = vsub.s32 4, %v2833
    %v2835 = vrot.slane %v57, %v2834
    %v2836 = vmul.f32 %v2800, %v2835
    %v2837 = vmul.f32 %v2801, %v2835
    %v2838 = vmul.f32 %v2802, %v2835
    %v2839 = vmul.f32 %v2803, %v2835
    %v2840 = vmul.f32 %v2804, %v2835
    %v2841 = vmul.f32 %v2805, %v2835
    %v2842 = vmul.f32 %v2806, %v2835
    %v2843 = vmul.f32 %v2807, %v2835
    %v2844 = vmul.f32 %v2808, %v2835
    %v2845 = vmul.f32 %v2809, %v2835
    %v2846 = vmul.f32 %v2810, %v2835
    %v2847 = vmul.f32 %v2811, %v2835
    %v2848 = vmul.f32 %v2812, %v2835
    %v2849 = vmul.f32 %v2813, %v2835
    %v2850 = vmul.f32 %v2814, %v2835
    %v2851 = vmul.f32 %v2815, %v2835
    %v2852 = vmul.f32 %v2816, %v2835
    %v2853 = vmul.f32 %v2817, %v2835
    %v2854 = vmul.f32 %v2818, %v2835
    %v2855 = vmul.f32 %v2819, %v2835
    %v2856 = vmul.f32 %v2820, %v2835
    %v2857 = vmul.f32 %v2821, %v2835
    %v2858 = vmul.f32 %v2822, %v2835
    %v2859 = vmul.f32 %v2823, %v2835
    %v2860 = vmul.f32 %v2824, %v2835
    %v2861 = vmul.f32 %v2825, %v2835
    %v2862 = vmul.f32 %v2826, %v2835
    %v2863 = vmul.f32 %v2827, %v2835
    %v2864 = vmul.f32 %v2828, %v2835
    %v2865 = vmul.f32 %v2829, %v2835
    %v2866 = vmul.f32 %v2830, %v2835
    %v2867 = vmul.f32 %v2831, %v2835
    %v2868 = vlaneseq
    %v2869 = vshrl.u32 %v2868, 7
    %v2870 = vsub.s32 5, %v2869
    %v2871 = vrot.slane %v57, %v2870
    %v2872 = vadd.f32 %v2836, %v2871
    %v2873 = vadd.f32 %v2837, %v2871
    %v2874 = vadd.f32 %v2838, %v2871
    %v2875 = vadd.f32 %v2839, %v2871
    %v2876 = vadd.f32 %v2840, %v2871
    %v2877 = vadd.f32 %v2841, %v2871
    %v2878 = vadd.f32 %v2842, %v2871
    %v2879 = vadd.f32 %v2843, %v2871
    %v2880 = vadd.f32 %v2844, %v2871
    %v2881 = vadd.f32 %v2845, %v2871
    %v2882 = vadd.f32 %v2846, %v2871
    %v2883 = vadd.f32 %v2847, %v2871
    %v2884 = vadd.f32 %v2848, %v2871
    %v2885 = vadd.f32 %v2849, %v2871
    %v2886 = vadd.f32 %v2850, %v2871
    %v2887 = vadd.f32 %v2851, %v2871
    %v2888 = vadd.f32 %v2852, %v2871
    %v2889 = vadd.f32 %v2853, %v2871
    %v2890 = vadd.f32 %v2854, %v2871
    %v2891 = vadd.f32 %v2855, %v2871
    %v2892 = vadd.f32 %v2856, %v2871
    %v2893 = vadd.f32 %v2857, %v2871
    %v2894 = vadd.f32 %v2858, %v2871
    %v2895 = vadd.f32 %v2859, %v2871
    %v2896 = vadd.f32 %v2860, %v2871
    %v2897 = vadd.f32 %v2861, %v2871
    %v2898 = vadd.f32 %v2862, %v2871
    %v2899 = vadd.f32 %v2863, %v2871
    %v2900 = vadd.f32 %v2864, %v2871
    %v2901 = vadd.f32 %v2865, %v2871
    %v2902 = vadd.f32 %v2866, %v2871
    %v2903 = vadd.f32 %v2867, %v2871
    %v2904 = vmax.f32 %v2872, 0.0
    %v2905 = vmax.f32 %v2873, 0.0
    %v2906 = vmax.f32 %v2874, 0.0
    %v2907 = vmax.f32 %v2875, 0.0
    %v2908 = vmax.f32 %v2876, 0.0
    %v2909 = vmax.f32 %v2877, 0.0
    %v2910 = vmax.f32 %v2878, 0.0
    %v2911 = vmax.f32 %v2879, 0.0
    %v2912 = vmax.f32 %v2880, 0.0
    %v2913 = vmax.f32 %v2881, 0.0
    %v2914 = vmax.f32 %v2882, 0.0
    %v2915 = vmax.f32 %v2883, 0.0
    %v2916 = vmax.f32 %v2884, 0.0
    %v2917 = vmax.f32 %v2885, 0.0
    %v2918 = vmax.f32 %v2886, 0.0
    %v2919 = vmax.f32 %v2887, 0.0
    %v2920 = vmax.f32 %v2888, 0.0
    %v2921 = vmax.f32 %v2889, 0.0
    %v2922 = vmax.f32 %v2890, 0.0
    %v2923 = vmax.f32 %v2891, 0.0
    %v2924 = vmax.f32 %v2892, 0.0
    %v2925 = vmax.f32 %v2893, 0.0
    %v2926 = vmax.f32 %v2894, 0.0
    %v2927 = vmax.f32 %v2895, 0.0
    %v2928 = vmax.f32 %v2896, 0.0
    %v2929 = vmax.f32 %v2897, 0.0
    %v2930 = vmax.f32 %v2898, 0.0
    %v2931 = vmax.f32 %v2899, 0.0
    %v2932 = vmax.f32 %v2900, 0.0
    %v2933 = vmax.f32 %v2901, 0.0
    %v2934 = vmax.f32 %v2902, 0.0
    %v2935 = vmax.f32 %v2903, 0.0
    %s2936 = scalar_lea.vmem [#allocation2], 576
    %v2937 = vld [vmem:[%s2936] sm:$0xf]
    %v2938 = vld [vmem:[%s2936 + $0x4] sm:$0xf]
    %v2939 = vld [vmem:[%s2936 + $0x8] sm:$0xf]
    %v2940 = vld [vmem:[%s2936 + $0xc] sm:$0xf]
    %v2941 = vld [vmem:[%s2936 + $0x10] sm:$0xf]
    %v2942 = vld [vmem:[%s2936 + $0x14] sm:$0xf]
    %v2943 = vld [vmem:[%s2936 + $0x18] sm:$0xf]
    %v2944 = vld [vmem:[%s2936 + $0x1c] sm:$0xf]
    %v2945 = vld [vmem:[%s2936 + $0x20] sm:$0xf]
    %v2946 = vld [vmem:[%s2936 + $0x24] sm:$0xf]
    %v2947 = vld [vmem:[%s2936 + $0x28] sm:$0xf]
    %v2948 = vld [vmem:[%s2936 + $0x2c] sm:$0xf]
    %v2949 = vld [vmem:[%s2936 + $0x30] sm:$0xf]
    %v2950 = vld [vmem:[%s2936 + $0x34] sm:$0xf]
    %v2951 = vld [vmem:[%s2936 + $0x38] sm:$0xf]
    %v2952 = vld [vmem:[%s2936 + $0x3c] sm:$0xf]
    %v2953 = vpack.c.bf16 %v2905, %v2904
    %v2954 = vpack.c.bf16 %v2907, %v2906
    %v2955 = vpack.c.bf16 %v2909, %v2908
    %v2956 = vpack.c.bf16 %v2911, %v2910
    %v2957 = vpack.c.bf16 %v2913, %v2912
    %v2958 = vpack.c.bf16 %v2915, %v2914
    %v2959 = vpack.c.bf16 %v2917, %v2916
    %v2960 = vpack.c.bf16 %v2919, %v2918
    %v2961 = vpack.c.bf16 %v2921, %v2920
    %v2962 = vpack.c.bf16 %v2923, %v2922
    %v2963 = vpack.c.bf16 %v2925, %v2924
    %v2964 = vpack.c.bf16 %v2927, %v2926
    %v2965 = vpack.c.bf16 %v2929, %v2928
    %v2966 = vpack.c.bf16 %v2931, %v2930
    %v2967 = vpack.c.bf16 %v2933, %v2932
    %v2968 = vpack.c.bf16 %v2935, %v2934
    %v2969 = vlaneseq
    %v2970 = vshrl.u32 %v2969, 7
    %v2971 = vsub.s32 6, %v2970
    %v2972 = vrot.slane %v57, %v2971
    %v2989 = vunpack.c.l.b16 %v2937
    %v2990 = vunpack.c.l.b16 %v2938
    %v2991 = vunpack.c.l.b16 %v2939
    %v2992 = vunpack.c.l.b16 %v2940
    %v2993 = vunpack.c.l.b16 %v2941
    %v2994 = vunpack.c.l.b16 %v2942
    %v2995 = vunpack.c.l.b16 %v2943
    %v2996 = vunpack.c.l.b16 %v2944
    %v2997 = vunpack.c.l.b16 %v2945
    %v2998 = vunpack.c.l.b16 %v2946
    %v2999 = vunpack.c.l.b16 %v2947
    %v3000 = vunpack.c.l.b16 %v2948
    %v3001 = vunpack.c.l.b16 %v2949
    %v3002 = vunpack.c.l.b16 %v2950
    %v3003 = vunpack.c.l.b16 %v2951
    %v3004 = vunpack.c.l.b16 %v2952
    %v3005 = vpack.c.b16 %v2990, %v2989
    %v3006 = vpack.c.b16 %v2992, %v2991
    %v3007 = vpack.c.b16 %v2994, %v2993
    %v3008 = vpack.c.b16 %v2996, %v2995
    %v3009 = vpack.c.b16 %v2998, %v2997
    %v3010 = vpack.c.b16 %v3000, %v2999
    %v3011 = vpack.c.b16 %v3002, %v3001
    %v3012 = vpack.c.b16 %v3004, %v3003
    %3021 = vmatprep.subr.bf16.mxu0 0
    %3022 = vmatpush1.bf16.msra.mxu0 %v3005
    %3023 = vmatprep.subr.bf16.mxu0 0
    %3024 = vmatpush1.bf16.msra.mxu0 %v3006
    %3025 = vmatprep.subr.bf16.mxu0 0
    %3026 = vmatpush1.bf16.msra.mxu0 %v3007
    %3027 = vmatprep.subr.bf16.mxu0 0
    %3028 = vmatpush1.bf16.msra.mxu0 %v3008
    %3029 = vmatprep.subr.bf16.mxu0 0
    %3030 = vmatpush1.bf16.msra.mxu0 %v3009
    %3031 = vmatprep.subr.bf16.mxu0 0
    %3032 = vmatpush1.bf16.msra.mxu0 %v3010
    %3033 = vmatprep.subr.bf16.mxu0 0
    %3034 = vmatpush1.bf16.msra.mxu0 %v3011
    %3035 = vmatprep.subr.bf16.mxu0 0
    %3036 = vmatpush1.bf16.msra.mxu0 %v3012
    %3037 = vmatprep.subr.bf16.mxu0 0
    %3038 = vmatpush1.bf16.msra.mxu0 0
    %3039 = vmatprep.subr.bf16.mxu0 0
    %3040 = vmatpush1.bf16.msra.mxu0 0
    %3041 = vmatprep.subr.bf16.mxu0 0
    %3042 = vmatpush1.bf16.msra.mxu0 0
    %3043 = vmatprep.subr.bf16.mxu0 0
    %3044 = vmatpush1.bf16.msra.mxu0 0
    %3045 = vmatprep.subr.bf16.mxu0 0
    %3046 = vmatpush1.bf16.msra.mxu0 0
    %3047 = vmatprep.subr.bf16.mxu0 0
    %3048 = vmatpush1.bf16.msra.mxu0 0
    %3049 = vmatprep.subr.bf16.mxu0 0
    %3050 = vmatpush1.bf16.msra.mxu0 0
    %3051 = vmatprep.subr.bf16.mxu0 0
    %3052 = vmatpush1.bf16.msra.mxu0 0
    %3053 = vmatprep.mubr.bf16.mxu0 0
    %3054 = vmatmul.mubr.bf16.gmra.mrb[0].mxu0 %v2953
    %v3055 = vpop.f32.mrb[0].mxu0
    %v3056 = vadd.f32 %v2972, %v3055
    %v3057 = vpop.f32.mrb[0].mxu0
    %v3058 = vpop.f32.mrb[0].mxu0
    %v3059 = vadd.f32 %v2972, %v3058
    %v3060 = vpop.f32.mrb[0].mxu0
    %3061 = vmatprep.mubr.bf16.mxu0 0
    %3062 = vmatmul.mubr.bf16.gmra.mrb[0].mxu0 %v2954
    %v3063 = vpop.f32.mrb[0].mxu0
    %v3064 = vadd.f32 %v2972, %v3063
    %v3065 = vpop.f32.mrb[0].mxu0
    %v3066 = vpop.f32.mrb[0].mxu0
    %v3067 = vadd.f32 %v2972, %v3066
    %v3068 = vpop.f32.mrb[0].mxu0
    %3069 = vmatprep.mubr.bf16.mxu0 0
    %3070 = vmatmul.mubr.bf16.gmra.mrb[0].mxu0 %v2955
    %v3071 = vpop.f32.mrb[0].mxu0
    %v3072 = vadd.f32 %v2972, %v3071
    %v3073 = vpop.f32.mrb[0].mxu0
    %v3074 = vpop.f32.mrb[0].mxu0
    %v3075 = vadd.f32 %v2972, %v3074
    %v3076 = vpop.f32.mrb[0].mxu0
    %3077 = vmatprep.mubr.bf16.mxu0 0
    %3078 = vmatmul.mubr.bf16.gmra.mrb[0].mxu0 %v2956
    %v3079 = vpop.f32.mrb[0].mxu0
    %v3080 = vadd.f32 %v2972, %v3079
    %v3081 = vpop.f32.mrb[0].mxu0
    %v3082 = vpop.f32.mrb[0].mxu0
    %v3083 = vadd.f32 %v2972, %v3082
    %v3084 = vpop.f32.mrb[0].mxu0
    %3085 = vmatprep.mubr.bf16.mxu0 0
    %3086 = vmatmul.mubr.bf16.gmra.mrb[0].mxu0 %v2957
    %v3087 = vpop.f32.mrb[0].mxu0
    %v3088 = vadd.f32 %v2972, %v3087
    %v3089 = vpop.f32.mrb[0].mxu0
    %v3090 = vpop.f32.mrb[0].mxu0
    %v3091 = vadd.f32 %v2972, %v3090
    %v3092 = vpop.f32.mrb[0].mxu0
    %3093 = vmatprep.mubr.bf16.mxu0 0
    %3094 = vmatmul.mubr.bf16.gmra.mrb[0].mxu0 %v2958
    %v3095 = vpop.f32.mrb[0].mxu0
    %v3096 = vadd.f32 %v2972, %v3095
    %v3097 = vpop.f32.mrb[0].mxu0
    %v3098 = vpop.f32.mrb[0].mxu0
    %v3099 = vadd.f32 %v2972, %v3098
    %v3100 = vpop.f32.mrb[0].mxu0
    %3101 = vmatprep.mubr.bf16.mxu0 0
    %3102 = vmatmul.mubr.bf16.gmra.mrb[0].mxu0 %v2959
    %v3103 = vpop.f32.mrb[0].mxu0
    %v3104 = vadd.f32 %v2972, %v3103
    %v3105 = vpop.f32.mrb[0].mxu0
    %v3106 = vpop.f32.mrb[0].mxu0
    %v3107 = vadd.f32 %v2972, %v3106
    %v3108 = vpop.f32.mrb[0].mxu0
    %3109 = vmatprep.mubr.bf16.mxu0 0
    %3110 = vmatmul.mubr.bf16.gmra.mrb[0].mxu0 %v2960
    %v3111 = vpop.f32.mrb[0].mxu0
    %v3112 = vadd.f32 %v2972, %v3111
    %v3113 = vpop.f32.mrb[0].mxu0
    %v3114 = vpop.f32.mrb[0].mxu0
    %v3115 = vadd.f32 %v2972, %v3114
    %v3116 = vpop.f32.mrb[0].mxu0
    %3117 = vmatprep.mubr.bf16.mxu0 0
    %3118 = vmatmul.mubr.bf16.gmra.mrb[0].mxu0 %v2961
    %v3119 = vpop.f32.mrb[0].mxu0
    %v3120 = vadd.f32 %v2972, %v3119
    %v3121 = vpop.f32.mrb[0].mxu0
    %v3122 = vpop.f32.mrb[0].mxu0
    %v3123 = vadd.f32 %v2972, %v3122
    %v3124 = vpop.f32.mrb[0].mxu0
    %3125 = vmatprep.mubr.bf16.mxu0 0
    %3126 = vmatmul.mubr.bf16.gmra.mrb[0].mxu0 %v2962
    %v3127 = vpop.f32.mrb[0].mxu0
    %v3128 = vadd.f32 %v2972, %v3127
    %v3129 = vpop.f32.mrb[0].mxu0
    %v3130 = vpop.f32.mrb[0].mxu0
    %v3131 = vadd.f32 %v2972, %v3130
    %v3132 = vpop.f32.mrb[0].mxu0
    %3133 = vmatprep.mubr.bf16.mxu0 0
    %3134 = vmatmul.mubr.bf16.gmra.mrb[0].mxu0 %v2963
    %v3135 = vpop.f32.mrb[0].mxu0
    %v3136 = vadd.f32 %v2972, %v3135
    %v3137 = vpop.f32.mrb[0].mxu0
    %v3138 = vpop.f32.mrb[0].mxu0
    %v3139 = vadd.f32 %v2972, %v3138
    %v3140 = vpop.f32.mrb[0].mxu0
    %3141 = vmatprep.mubr.bf16.mxu0 0
    %3142 = vmatmul.mubr.bf16.gmra.mrb[0].mxu0 %v2964
    %v3143 = vpop.f32.mrb[0].mxu0
    %v3144 = vadd.f32 %v2972, %v3143
    %v3145 = vpop.f32.mrb[0].mxu0
    %v3146 = vpop.f32.mrb[0].mxu0
    %v3147 = vadd.f32 %v2972, %v3146
    %v3148 = vpop.f32.mrb[0].mxu0
    %3149 = vmatprep.mubr.bf16.mxu0 0
    %3150 = vmatmul.mubr.bf16.gmra.mrb[0].mxu0 %v2965
    %v3151 = vpop.f32.mrb[0].mxu0
    %v3152 = vadd.f32 %v2972, %v3151
    %v3153 = vpop.f32.mrb[0].mxu0
    %v3154 = vpop.f32.mrb[0].mxu0
    %v3155 = vadd.f32 %v2972, %v3154
    %v3156 = vpop.f32.mrb[0].mxu0
    %3157 = vmatprep.mubr.bf16.mxu0 0
    %3158 = vmatmul.mubr.bf16.gmra.mrb[0].mxu0 %v2966
    %v3159 = vpop.f32.mrb[0].mxu0
    %v3160 = vadd.f32 %v2972, %v3159
    %v3161 = vpop.f32.mrb[0].mxu0
    %v3162 = vpop.f32.mrb[0].mxu0
    %v3163 = vadd.f32 %v2972, %v3162
    %v3164 = vpop.f32.mrb[0].mxu0
    %3165 = vmatprep.mubr.bf16.mxu0 0
    %3166 = vmatmul.mubr.bf16.gmra.mrb[0].mxu0 %v2967
    %v3167 = vpop.f32.mrb[0].mxu0
    %v3168 = vadd.f32 %v2972, %v3167
    %v3169 = vpop.f32.mrb[0].mxu0
    %v3170 = vpop.f32.mrb[0].mxu0
    %v3171 = vadd.f32 %v2972, %v3170
    %v3172 = vpop.f32.mrb[0].mxu0
    %3173 = vmatprep.mubr.bf16.mxu0 0
    %3174 = vmatmul.mubr.bf16.gmra.mrb[0].mxu0 %v2968
    %v3175 = vpop.f32.mrb[0].mxu0
    %v3176 = vadd.f32 %v2972, %v3175
    %v3177 = vpop.f32.mrb[0].mxu0
    %v3178 = vpop.f32.mrb[0].mxu0
    %v3179 = vadd.f32 %v2972, %v3178
    %v3180 = vpop.f32.mrb[0].mxu0
    %3181 = vdwg.mxu0
    %v3182 = vmax.f32 %v3056, 0.0
    %v3183 = vmax.f32 %v3059, 0.0
    %v3184 = vmax.f32 %v3064, 0.0
    %v3185 = vmax.f32 %v3067, 0.0
    %v3186 = vmax.f32 %v3072, 0.0
    %v3187 = vmax.f32 %v3075, 0.0
    %v3188 = vmax.f32 %v3080, 0.0
    %v3189 = vmax.f32 %v3083, 0.0
    %v3190 = vmax.f32 %v3088, 0.0
    %v3191 = vmax.f32 %v3091, 0.0
    %v3192 = vmax.f32 %v3096, 0.0
    %v3193 = vmax.f32 %v3099, 0.0
    %v3194 = vmax.f32 %v3104, 0.0
    %v3195 = vmax.f32 %v3107, 0.0
    %v3196 = vmax.f32 %v3112, 0.0
    %v3197 = vmax.f32 %v3115, 0.0
    %v3198 = vmax.f32 %v3120, 0.0
    %v3199 = vmax.f32 %v3123, 0.0
    %v3200 = vmax.f32 %v3128, 0.0
    %v3201 = vmax.f32 %v3131, 0.0
    %v3202 = vmax.f32 %v3136, 0.0
    %v3203 = vmax.f32 %v3139, 0.0
    %v3204 = vmax.f32 %v3144, 0.0
    %v3205 = vmax.f32 %v3147, 0.0
    %v3206 = vmax.f32 %v3152, 0.0
    %v3207 = vmax.f32 %v3155, 0.0
    %v3208 = vmax.f32 %v3160, 0.0
    %v3209 = vmax.f32 %v3163, 0.0
    %v3210 = vmax.f32 %v3168, 0.0
    %v3211 = vmax.f32 %v3171, 0.0
    %v3212 = vmax.f32 %v3176, 0.0
    %v3213 = vmax.f32 %v3179, 0.0
    %s3214 = scalar_lea.vmem [#allocation2], 640
    %v3215 = vld [vmem:[%s3214] sm:$0xf]
    %v3216 = vld [vmem:[%s3214 + $0x4] sm:$0xf]
    %v3217 = vld [vmem:[%s3214 + $0x8] sm:$0xf]
    %v3218 = vld [vmem:[%s3214 + $0xc] sm:$0xf]
    %v3219 = vld [vmem:[%s3214 + $0x10] sm:$0xf]
    %v3220 = vld [vmem:[%s3214 + $0x14] sm:$0xf]
    %v3221 = vld [vmem:[%s3214 + $0x18] sm:$0xf]
    %v3222 = vld [vmem:[%s3214 + $0x1c] sm:$0xf]
    %v3223 = vld [vmem:[%s3214 + $0x20] sm:$0xf]
    %v3224 = vld [vmem:[%s3214 + $0x24] sm:$0xf]
    %v3225 = vld [vmem:[%s3214 + $0x28] sm:$0xf]
    %v3226 = vld [vmem:[%s3214 + $0x2c] sm:$0xf]
    %v3227 = vld [vmem:[%s3214 + $0x30] sm:$0xf]
    %v3228 = vld [vmem:[%s3214 + $0x34] sm:$0xf]
    %v3229 = vld [vmem:[%s3214 + $0x38] sm:$0xf]
    %v3230 = vld [vmem:[%s3214 + $0x3c] sm:$0xf]
    %v3231 = vpack.c.bf16 %v3183, %v3182
    %v3232 = vpack.c.bf16 %v3185, %v3184
    %v3233 = vpack.c.bf16 %v3187, %v3186
    %v3234 = vpack.c.bf16 %v3189, %v3188
    %v3235 = vpack.c.bf16 %v3191, %v3190
    %v3236 = vpack.c.bf16 %v3193, %v3192
    %v3237 = vpack.c.bf16 %v3195, %v3194
    %v3238 = vpack.c.bf16 %v3197, %v3196
    %v3239 = vpack.c.bf16 %v3199, %v3198
    %v3240 = vpack.c.bf16 %v3201, %v3200
    %v3241 = vpack.c.bf16 %v3203, %v3202
    %v3242 = vpack.c.bf16 %v3205, %v3204
    %v3243 = vpack.c.bf16 %v3207, %v3206
    %v3244 = vpack.c.bf16 %v3209, %v3208
    %v3245 = vpack.c.bf16 %v3211, %v3210
    %v3246 = vpack.c.bf16 %v3213, %v3212
    %s3247 = scalar_lea.vmem [#allocation2], 704
    %v3248 = vld [vmem:[%s3247] sm:$0xf]
    %v3249 = vld [vmem:[%s3247 + $0x4] sm:$0xf]
    %v3250 = vld [vmem:[%s3247 + $0x8] sm:$0xf]
    %v3251 = vld [vmem:[%s3247 + $0xc] sm:$0xf]
    %v3252 = vld [vmem:[%s3247 + $0x10] sm:$0xf]
    %v3253 = vld [vmem:[%s3247 + $0x14] sm:$0xf]
    %v3254 = vld [vmem:[%s3247 + $0x18] sm:$0xf]
    %v3255 = vld [vmem:[%s3247 + $0x1c] sm:$0xf]
    %v3256 = vld [vmem:[%s3247 + $0x20] sm:$0xf]
    %v3257 = vld [vmem:[%s3247 + $0x24] sm:$0xf]
    %v3258 = vld [vmem:[%s3247 + $0x28] sm:$0xf]
    %v3259 = vld [vmem:[%s3247 + $0x2c] sm:$0xf]
    %v3260 = vld [vmem:[%s3247 + $0x30] sm:$0xf]
    %v3261 = vld [vmem:[%s3247 + $0x34] sm:$0xf]
    %v3262 = vld [vmem:[%s3247 + $0x38] sm:$0xf]
    %v3263 = vld [vmem:[%s3247 + $0x3c] sm:$0xf]
    %v3264 = vpack.c.bf16 %v2801, %v2800
    %v3265 = vpack.c.bf16 %v2803, %v2802
    %v3266 = vpack.c.bf16 %v2805, %v2804
    %v3267 = vpack.c.bf16 %v2807, %v2806
    %v3268 = vpack.c.bf16 %v2809, %v2808
    %v3269 = vpack.c.bf16 %v2811, %v2810
    %v3270 = vpack.c.bf16 %v2813, %v2812
    %v3271 = vpack.c.bf16 %v2815, %v2814
    %v3272 = vpack.c.bf16 %v2817, %v2816
    %v3273 = vpack.c.bf16 %v2819, %v2818
    %v3274 = vpack.c.bf16 %v2821, %v2820
    %v3275 = vpack.c.bf16 %v2823, %v2822
    %v3276 = vpack.c.bf16 %v2825, %v2824
    %v3277 = vpack.c.bf16 %v2827, %v2826
    %v3278 = vpack.c.bf16 %v2829, %v2828
    %v3279 = vpack.c.bf16 %v2831, %v2830
    %v3280 = vlaneseq
    %v3281 = vshrl.u32 %v3280, 7
    %v3282 = vsub.s32 7, %v3281
    %v3283 = vrot.slane %v57, %v3282
    %v3300 = vunpack.c.l.b16 %v3248
    %v3301 = vunpack.c.l.b16 %v3249
    %v3302 = vunpack.c.l.b16 %v3250
    %v3303 = vunpack.c.l.b16 %v3251
    %v3304 = vunpack.c.l.b16 %v3252
    %v3305 = vunpack.c.l.b16 %v3253
    %v3306 = vunpack.c.l.b16 %v3254
    %v3307 = vunpack.c.l.b16 %v3255
    %v3308 = vunpack.c.l.b16 %v3256
    %v3309 = vunpack.c.l.b16 %v3257
    %v3310 = vunpack.c.l.b16 %v3258
    %v3311 = vunpack.c.l.b16 %v3259
    %v3312 = vunpack.c.l.b16 %v3260
    %v3313 = vunpack.c.l.b16 %v3261
    %v3314 = vunpack.c.l.b16 %v3262
    %v3315 = vunpack.c.l.b16 %v3263
    %v3316 = vpack.c.b16 %v3301, %v3300
    %v3317 = vpack.c.b16 %v3303, %v3302
    %v3318 = vpack.c.b16 %v3305, %v3304
    %v3319 = vpack.c.b16 %v3307, %v3306
    %v3320 = vpack.c.b16 %v3309, %v3308
    %v3321 = vpack.c.b16 %v3311, %v3310
    %v3322 = vpack.c.b16 %v3313, %v3312
    %v3323 = vpack.c.b16 %v3315, %v3314
    %3332 = vmatprep.subr.bf16.mxu0 0
    %3333 = vmatpush1.bf16.msra.mxu0 %v3316
    %3334 = vmatprep.subr.bf16.mxu0 0
    %3335 = vmatpush1.bf16.msra.mxu0 %v3317
    %3336 = vmatprep.subr.bf16.mxu0 0
    %3337 = vmatpush1.bf16.msra.mxu0 %v3318
    %3338 = vmatprep.subr.bf16.mxu0 0
    %3339 = vmatpush1.bf16.msra.mxu0 %v3319
    %3340 = vmatprep.subr.bf16.mxu0 0
    %3341 = vmatpush1.bf16.msra.mxu0 %v3320
    %3342 = vmatprep.subr.bf16.mxu0 0
    %3343 = vmatpush1.bf16.msra.mxu0 %v3321
    %3344 = vmatprep.subr.bf16.mxu0 0
    %3345 = vmatpush1.bf16.msra.mxu0 %v3322
    %3346 = vmatprep.subr.bf16.mxu0 0
    %3347 = vmatpush1.bf16.msra.mxu0 %v3323
    %3348 = vmatprep.subr.bf16.mxu0 0
    %3349 = vmatpush1.bf16.msra.mxu0 0
    %3350 = vmatprep.subr.bf16.mxu0 0
    %3351 = vmatpush1.bf16.msra.mxu0 0
    %3352 = vmatprep.subr.bf16.mxu0 0
    %3353 = vmatpush1.bf16.msra.mxu0 0
    %3354 = vmatprep.subr.bf16.mxu0 0
    %3355 = vmatpush1.bf16.msra.mxu0 0
    %3356 = vmatprep.subr.bf16.mxu0 0
    %3357 = vmatpush1.bf16.msra.mxu0 0
    %3358 = vmatprep.subr.bf16.mxu0 0
    %3359 = vmatpush1.bf16.msra.mxu0 0
    %3360 = vmatprep.subr.bf16.mxu0 0
    %3361 = vmatpush1.bf16.msra.mxu0 0
    %3362 = vmatprep.subr.bf16.mxu0 0
    %3363 = vmatpush1.bf16.msra.mxu0 0
    %3364 = vmatprep.mubr.bf16.mxu0 0
    %3365 = vmatmul.mubr.bf16.gmra.mrb[0].mxu0 %v3264
    %v3366 = vpop.f32.mrb[0].mxu0
    %v3367 = vadd.f32 %v3283, %v3366
    %v3368 = vpop.f32.mrb[0].mxu0
    %v3369 = vpop.f32.mrb[0].mxu0
    %v3370 = vadd.f32 %v3283, %v3369
    %v3371 = vpop.f32.mrb[0].mxu0
    %3372 = vmatprep.mubr.bf16.mxu0 0
    %3373 = vmatmul.mubr.bf16.gmra.mrb[0].mxu0 %v3265
    %v3374 = vpop.f32.mrb[0].mxu0
    %v3375 = vadd.f32 %v3283, %v3374
    %v3376 = vpop.f32.mrb[0].mxu0
    %v3377 = vpop.f32.mrb[0].mxu0
    %v3378 = vadd.f32 %v3283, %v3377
    %v3379 = vpop.f32.mrb[0].mxu0
    %3380 = vmatprep.mubr.bf16.mxu0 0
    %3381 = vmatmul.mubr.bf16.gmra.mrb[0].mxu0 %v3266
    %v3382 = vpop.f32.mrb[0].mxu0
    %v3383 = vadd.f32 %v3283, %v3382
    %v3384 = vpop.f32.mrb[0].mxu0
    %v3385 = vpop.f32.mrb[0].mxu0
    %v3386 = vadd.f32 %v3283, %v3385
    %v3387 = vpop.f32.mrb[0].mxu0
    %3388 = vmatprep.mubr.bf16.mxu0 0
    %3389 = vmatmul.mubr.bf16.gmra.mrb[0].mxu0 %v3267
    %v3390 = vpop.f32.mrb[0].mxu0
    %v3391 = vadd.f32 %v3283, %v3390
    %v3392 = vpop.f32.mrb[0].mxu0
    %v3393 = vpop.f32.mrb[0].mxu0
    %v3394 = vadd.f32 %v3283, %v3393
    %v3395 = vpop.f32.mrb[0].mxu0
    %3396 = vmatprep.mubr.bf16.mxu0 0
    %3397 = vmatmul.mubr.bf16.gmra.mrb[0].mxu0 %v3268
    %v3398 = vpop.f32.mrb[0].mxu0
    %v3399 = vadd.f32 %v3283, %v3398
    %v3400 = vpop.f32.mrb[0].mxu0
    %v3401 = vpop.f32.mrb[0].mxu0
    %v3402 = vadd.f32 %v3283, %v3401
    %v3403 = vpop.f32.mrb[0].mxu0
    %3404 = vmatprep.mubr.bf16.mxu0 0
    %3405 = vmatmul.mubr.bf16.gmra.mrb[0].mxu0 %v3269
    %v3406 = vpop.f32.mrb[0].mxu0
    %v3407 = vadd.f32 %v3283, %v3406
    %v3408 = vpop.f32.mrb[0].mxu0
    %v3409 = vpop.f32.mrb[0].mxu0
    %v3410 = vadd.f32 %v3283, %v3409
    %v3411 = vpop.f32.mrb[0].mxu0
    %3412 = vmatprep.mubr.bf16.mxu0 0
    %3413 = vmatmul.mubr.bf16.gmra.mrb[0].mxu0 %v3270
    %v3414 = vpop.f32.mrb[0].mxu0
    %v3415 = vadd.f32 %v3283, %v3414
    %v3416 = vpop.f32.mrb[0].mxu0
    %v3417 = vpop.f32.mrb[0].mxu0
    %v3418 = vadd.f32 %v3283, %v3417
    %v3419 = vpop.f32.mrb[0].mxu0
    %3420 = vmatprep.mubr.bf16.mxu0 0
    %3421 = vmatmul.mubr.bf16.gmra.mrb[0].mxu0 %v3271
    %v3422 = vpop.f32.mrb[0].mxu0
    %v3423 = vadd.f32 %v3283, %v3422
    %v3424 = vpop.f32.mrb[0].mxu0
    %v3425 = vpop.f32.mrb[0].mxu0
    %v3426 = vadd.f32 %v3283, %v3425
    %v3427 = vpop.f32.mrb[0].mxu0
    %3428 = vmatprep.mubr.bf16.mxu0 0
    %3429 = vmatmul.mubr.bf16.gmra.mrb[0].mxu0 %v3272
    %v3430 = vpop.f32.mrb[0].mxu0
    %v3431 = vadd.f32 %v3283, %v3430
    %v3432 = vpop.f32.mrb[0].mxu0
    %v3433 = vpop.f32.mrb[0].mxu0
    %v3434 = vadd.f32 %v3283, %v3433
    %v3435 = vpop.f32.mrb[0].mxu0
    %3436 = vmatprep.mubr.bf16.mxu0 0
    %3437 = vmatmul.mubr.bf16.gmra.mrb[0].mxu0 %v3273
    %v3438 = vpop.f32.mrb[0].mxu0
    %v3439 = vadd.f32 %v3283, %v3438
    %v3440 = vpop.f32.mrb[0].mxu0
    %v3441 = vpop.f32.mrb[0].mxu0
    %v3442 = vadd.f32 %v3283, %v3441
    %v3443 = vpop.f32.mrb[0].mxu0
    %3444 = vmatprep.mubr.bf16.mxu0 0
    %3445 = vmatmul.mubr.bf16.gmra.mrb[0].mxu0 %v3274
    %v3446 = vpop.f32.mrb[0].mxu0
    %v3447 = vadd.f32 %v3283, %v3446
    %v3448 = vpop.f32.mrb[0].mxu0
    %v3449 = vpop.f32.mrb[0].mxu0
    %v3450 = vadd.f32 %v3283, %v3449
    %v3451 = vpop.f32.mrb[0].mxu0
    %3452 = vmatprep.mubr.bf16.mxu0 0
    %3453 = vmatmul.mubr.bf16.gmra.mrb[0].mxu0 %v3275
    %v3454 = vpop.f32.mrb[0].mxu0
    %v3455 = vadd.f32 %v3283, %v3454
    %v3456 = vpop.f32.mrb[0].mxu0
    %v3457 = vpop.f32.mrb[0].mxu0
    %v3458 = vadd.f32 %v3283, %v3457
    %v3459 = vpop.f32.mrb[0].mxu0
    %3460 = vmatprep.mubr.bf16.mxu0 0
    %3461 = vmatmul.mubr.bf16.gmra.mrb[0].mxu0 %v3276
    %v3462 = vpop.f32.mrb[0].mxu0
    %v3463 = vadd.f32 %v3283, %v3462
    %v3464 = vpop.f32.mrb[0].mxu0
    %v3465 = vpop.f32.mrb[0].mxu0
    %v3466 = vadd.f32 %v3283, %v3465
    %v3467 = vpop.f32.mrb[0].mxu0
    %3468 = vmatprep.mubr.bf16.mxu0 0
    %3469 = vmatmul.mubr.bf16.gmra.mrb[0].mxu0 %v3277
    %v3470 = vpop.f32.mrb[0].mxu0
    %v3471 = vadd.f32 %v3283, %v3470
    %v3472 = vpop.f32.mrb[0].mxu0
    %v3473 = vpop.f32.mrb[0].mxu0
    %v3474 = vadd.f32 %v3283, %v3473
    %v3475 = vpop.f32.mrb[0].mxu0
    %3476 = vmatprep.mubr.bf16.mxu0 0
    %3477 = vmatmul.mubr.bf16.gmra.mrb[0].mxu0 %v3278
    %v3478 = vpop.f32.mrb[0].mxu0
    %v3479 = vadd.f32 %v3283, %v3478
    %v3480 = vpop.f32.mrb[0].mxu0
    %v3481 = vpop.f32.mrb[0].mxu0
    %v3482 = vadd.f32 %v3283, %v3481
    %v3483 = vpop.f32.mrb[0].mxu0
    %3484 = vmatprep.mubr.bf16.mxu0 0
    %3485 = vmatmul.mubr.bf16.gmra.mrb[0].mxu0 %v3279
    %v3486 = vpop.f32.mrb[0].mxu0
    %v3487 = vadd.f32 %v3283, %v3486
    %v3488 = vpop.f32.mrb[0].mxu0
    %v3489 = vpop.f32.mrb[0].mxu0
    %v3490 = vadd.f32 %v3283, %v3489
    %v3491 = vpop.f32.mrb[0].mxu0
    %3492 = vdwg.mxu0
    %v3509 = vunpack.c.l.b16 %v3215
    %v3510 = vunpack.c.l.b16 %v3216
    %v3511 = vunpack.c.l.b16 %v3217
    %v3512 = vunpack.c.l.b16 %v3218
    %v3513 = vunpack.c.l.b16 %v3219
    %v3514 = vunpack.c.l.b16 %v3220
    %v3515 = vunpack.c.l.b16 %v3221
    %v3516 = vunpack.c.l.b16 %v3222
    %v3517 = vunpack.c.l.b16 %v3223
    %v3518 = vunpack.c.l.b16 %v3224
    %v3519 = vunpack.c.l.b16 %v3225
    %v3520 = vunpack.c.l.b16 %v3226
    %v3521 = vunpack.c.l.b16 %v3227
    %v3522 = vunpack.c.l.b16 %v3228
    %v3523 = vunpack.c.l.b16 %v3229
    %v3524 = vunpack.c.l.b16 %v3230
    %v3525 = vpack.c.b16 %v3510, %v3509
    %v3526 = vpack.c.b16 %v3512, %v3511
    %v3527 = vpack.c.b16 %v3514, %v3513
    %v3528 = vpack.c.b16 %v3516, %v3515
    %v3529 = vpack.c.b16 %v3518, %v3517
    %v3530 = vpack.c.b16 %v3520, %v3519
    %v3531 = vpack.c.b16 %v3522, %v3521
    %v3532 = vpack.c.b16 %v3524, %v3523
    %3541 = vmatprep.subr.bf16.mxu0 0
    %3542 = vmatpush1.bf16.msra.mxu0 %v3525
    %3543 = vmatprep.subr.bf16.mxu0 0
    %3544 = vmatpush1.bf16.msra.mxu0 %v3526
    %3545 = vmatprep.subr.bf16.mxu0 0
    %3546 = vmatpush1.bf16.msra.mxu0 %v3527
    %3547 = vmatprep.subr.bf16.mxu0 0
    %3548 = vmatpush1.bf16.msra.mxu0 %v3528
    %3549 = vmatprep.subr.bf16.mxu0 0
    %3550 = vmatpush1.bf16.msra.mxu0 %v3529
    %3551 = vmatprep.subr.bf16.mxu0 0
    %3552 = vmatpush1.bf16.msra.mxu0 %v3530
    %3553 = vmatprep.subr.bf16.mxu0 0
    %3554 = vmatpush1.bf16.msra.mxu0 %v3531
    %3555 = vmatprep.subr.bf16.mxu0 0
    %3556 = vmatpush1.bf16.msra.mxu0 %v3532
    %3557 = vmatprep.subr.bf16.mxu0 0
    %3558 = vmatpush1.bf16.msra.mxu0 0
    %3559 = vmatprep.subr.bf16.mxu0 0
    %3560 = vmatpush1.bf16.msra.mxu0 0
    %3561 = vmatprep.subr.bf16.mxu0 0
    %3562 = vmatpush1.bf16.msra.mxu0 0
    %3563 = vmatprep.subr.bf16.mxu0 0
    %3564 = vmatpush1.bf16.msra.mxu0 0
    %3565 = vmatprep.subr.bf16.mxu0 0
    %3566 = vmatpush1.bf16.msra.mxu0 0
    %3567 = vmatprep.subr.bf16.mxu0 0
    %3568 = vmatpush1.bf16.msra.mxu0 0
    %3569 = vmatprep.subr.bf16.mxu0 0
    %3570 = vmatpush1.bf16.msra.mxu0 0
    %3571 = vmatprep.subr.bf16.mxu0 0
    %3572 = vmatpush1.bf16.msra.mxu0 0
    %3573 = vmatprep.mubr.bf16.mxu0 0
    %3574 = vmatmul.mubr.bf16.gmra.mrb[0].mxu0 %v3231
    %v3575 = vpop.f32.mrb[0].mxu0
    %v3576 = vadd.f32 %v3367, %v3575
    %v3577 = vpop.f32.mrb[0].mxu0
    %v3578 = vpop.f32.mrb[0].mxu0
    %v3579 = vadd.f32 %v3370, %v3578
    %v3580 = vpop.f32.mrb[0].mxu0
    %3581 = vmatprep.mubr.bf16.mxu0 0
    %3582 = vmatmul.mubr.bf16.gmra.mrb[0].mxu0 %v3232
    %v3583 = vpop.f32.mrb[0].mxu0
    %v3584 = vadd.f32 %v3375, %v3583
    %v3585 = vpop.f32.mrb[0].mxu0
    %v3586 = vpop.f32.mrb[0].mxu0
    %v3587 = vadd.f32 %v3378, %v3586
    %v3588 = vpop.f32.mrb[0].mxu0
    %3589 = vmatprep.mubr.bf16.mxu0 0
    %3590 = vmatmul.mubr.bf16.gmra.mrb[0].mxu0 %v3233
    %v3591 = vpop.f32.mrb[0].mxu0
    %v3592 = vadd.f32 %v3383, %v3591
    %v3593 = vpop.f32.mrb[0].mxu0
    %v3594 = vpop.f32.mrb[0].mxu0
    %v3595 = vadd.f32 %v3386, %v3594
    %v3596 = vpop.f32.mrb[0].mxu0
    %3597 = vmatprep.mubr.bf16.mxu0 0
    %3598 = vmatmul.mubr.bf16.gmra.mrb[0].mxu0 %v3234
    %v3599 = vpop.f32.mrb[0].mxu0
    %v3600 = vadd.f32 %v3391, %v3599
    %v3601 = vpop.f32.mrb[0].mxu0
    %v3602 = vpop.f32.mrb[0].mxu0
    %v3603 = vadd.f32 %v3394, %v3602
    %v3604 = vpop.f32.mrb[0].mxu0
    %3605 = vmatprep.mubr.bf16.mxu0 0
    %3606 = vmatmul.mubr.bf16.gmra.mrb[0].mxu0 %v3235
    %v3607 = vpop.f32.mrb[0].mxu0
    %v3608 = vadd.f32 %v3399, %v3607
    %v3609 = vpop.f32.mrb[0].mxu0
    %v3610 = vpop.f32.mrb[0].mxu0
    %v3611 = vadd.f32 %v3402, %v3610
    %v3612 = vpop.f32.mrb[0].mxu0
    %3613 = vmatprep.mubr.bf16.mxu0 0
    %3614 = vmatmul.mubr.bf16.gmra.mrb[0].mxu0 %v3236
    %v3615 = vpop.f32.mrb[0].mxu0
    %v3616 = vadd.f32 %v3407, %v3615
    %v3617 = vpop.f32.mrb[0].mxu0
    %v3618 = vpop.f32.mrb[0].mxu0
    %v3619 = vadd.f32 %v3410, %v3618
    %v3620 = vpop.f32.mrb[0].mxu0
    %3621 = vmatprep.mubr.bf16.mxu0 0
    %3622 = vmatmul.mubr.bf16.gmra.mrb[0].mxu0 %v3237
    %v3623 = vpop.f32.mrb[0].mxu0
    %v3624 = vadd.f32 %v3415, %v3623
    %v3625 = vpop.f32.mrb[0].mxu0
    %v3626 = vpop.f32.mrb[0].mxu0
    %v3627 = vadd.f32 %v3418, %v3626
    %v3628 = vpop.f32.mrb[0].mxu0
    %3629 = vmatprep.mubr.bf16.mxu0 0
    %3630 = vmatmul.mubr.bf16.gmra.mrb[0].mxu0 %v3238
    %v3631 = vpop.f32.mrb[0].mxu0
    %v3632 = vadd.f32 %v3423, %v3631
    %v3633 = vpop.f32.mrb[0].mxu0
    %v3634 = vpop.f32.mrb[0].mxu0
    %v3635 = vadd.f32 %v3426, %v3634
    %v3636 = vpop.f32.mrb[0].mxu0
    %3637 = vmatprep.mubr.bf16.mxu0 0
    %3638 = vmatmul.mubr.bf16.gmra.mrb[0].mxu0 %v3239
    %v3639 = vpop.f32.mrb[0].mxu0
    %v3640 = vadd.f32 %v3431, %v3639
    %v3641 = vpop.f32.mrb[0].mxu0
    %v3642 = vpop.f32.mrb[0].mxu0
    %v3643 = vadd.f32 %v3434, %v3642
    %v3644 = vpop.f32.mrb[0].mxu0
    %3645 = vmatprep.mubr.bf16.mxu0 0
    %3646 = vmatmul.mubr.bf16.gmra.mrb[0].mxu0 %v3240
    %v3647 = vpop.f32.mrb[0].mxu0
    %v3648 = vadd.f32 %v3439, %v3647
    %v3649 = vpop.f32.mrb[0].mxu0
    %v3650 = vpop.f32.mrb[0].mxu0
    %v3651 = vadd.f32 %v3442, %v3650
    %v3652 = vpop.f32.mrb[0].mxu0
    %3653 = vmatprep.mubr.bf16.mxu0 0
    %3654 = vmatmul.mubr.bf16.gmra.mrb[0].mxu0 %v3241
    %v3655 = vpop.f32.mrb[0].mxu0
    %v3656 = vadd.f32 %v3447, %v3655
    %v3657 = vpop.f32.mrb[0].mxu0
    %v3658 = vpop.f32.mrb[0].mxu0
    %v3659 = vadd.f32 %v3450, %v3658
    %v3660 = vpop.f32.mrb[0].mxu0
    %3661 = vmatprep.mubr.bf16.mxu0 0
    %3662 = vmatmul.mubr.bf16.gmra.mrb[0].mxu0 %v3242
    %v3663 = vpop.f32.mrb[0].mxu0
    %v3664 = vadd.f32 %v3455, %v3663
    %v3665 = vpop.f32.mrb[0].mxu0
    %v3666 = vpop.f32.mrb[0].mxu0
    %v3667 = vadd.f32 %v3458, %v3666
    %v3668 = vpop.f32.mrb[0].mxu0
    %3669 = vmatprep.mubr.bf16.mxu0 0
    %3670 = vmatmul.mubr.bf16.gmra.mrb[0].mxu0 %v3243
    %v3671 = vpop.f32.mrb[0].mxu0
    %v3672 = vadd.f32 %v3463, %v3671
    %v3673 = vpop.f32.mrb[0].mxu0
    %v3674 = vpop.f32.mrb[0].mxu0
    %v3675 = vadd.f32 %v3466, %v3674
    %v3676 = vpop.f32.mrb[0].mxu0
    %3677 = vmatprep.mubr.bf16.mxu0 0
    %3678 = vmatmul.mubr.bf16.gmra.mrb[0].mxu0 %v3244
    %v3679 = vpop.f32.mrb[0].mxu0
    %v3680 = vadd.f32 %v3471, %v3679
    %v3681 = vpop.f32.mrb[0].mxu0
    %v3682 = vpop.f32.mrb[0].mxu0
    %v3683 = vadd.f32 %v3474, %v3682
    %v3684 = vpop.f32.mrb[0].mxu0
    %3685 = vmatprep.mubr.bf16.mxu0 0
    %3686 = vmatmul.mubr.bf16.gmra.mrb[0].mxu0 %v3245
    %v3687 = vpop.f32.mrb[0].mxu0
    %v3688 = vadd.f32 %v3479, %v3687
    %v3689 = vpop.f32.mrb[0].mxu0
    %v3690 = vpop.f32.mrb[0].mxu0
    %v3691 = vadd.f32 %v3482, %v3690
    %v3692 = vpop.f32.mrb[0].mxu0
    %3693 = vmatprep.mubr.bf16.mxu0 0
    %3694 = vmatmul.mubr.bf16.gmra.mrb[0].mxu0 %v3246
    %v3695 = vpop.f32.mrb[0].mxu0
    %v3696 = vadd.f32 %v3487, %v3695
    %v3697 = vpop.f32.mrb[0].mxu0
    %v3698 = vpop.f32.mrb[0].mxu0
    %v3699 = vadd.f32 %v3490, %v3698
    %v3700 = vpop.f32.mrb[0].mxu0
    %3701 = vdwg.mxu0
    %v3702 = vmax.f32 %v3576, 0.0
    %v3703 = vmax.f32 %v3579, 0.0
    %v3704 = vmax.f32 %v3584, 0.0
    %v3705 = vmax.f32 %v3587, 0.0
    %v3706 = vmax.f32 %v3592, 0.0
    %v3707 = vmax.f32 %v3595, 0.0
    %v3708 = vmax.f32 %v3600, 0.0
    %v3709 = vmax.f32 %v3603, 0.0
    %v3710 = vmax.f32 %v3608, 0.0
    %v3711 = vmax.f32 %v3611, 0.0
    %v3712 = vmax.f32 %v3616, 0.0
    %v3713 = vmax.f32 %v3619, 0.0
    %v3714 = vmax.f32 %v3624, 0.0
    %v3715 = vmax.f32 %v3627, 0.0
    %v3716 = vmax.f32 %v3632, 0.0
    %v3717 = vmax.f32 %v3635, 0.0
    %v3718 = vmax.f32 %v3640, 0.0
    %v3719 = vmax.f32 %v3643, 0.0
    %v3720 = vmax.f32 %v3648, 0.0
    %v3721 = vmax.f32 %v3651, 0.0
    %v3722 = vmax.f32 %v3656, 0.0
    %v3723 = vmax.f32 %v3659, 0.0
    %v3724 = vmax.f32 %v3664, 0.0
    %v3725 = vmax.f32 %v3667, 0.0
    %v3726 = vmax.f32 %v3672, 0.0
    %v3727 = vmax.f32 %v3675, 0.0
    %v3728 = vmax.f32 %v3680, 0.0
    %v3729 = vmax.f32 %v3683, 0.0
    %v3730 = vmax.f32 %v3688, 0.0
    %v3731 = vmax.f32 %v3691, 0.0
    %v3732 = vmax.f32 %v3696, 0.0
    %v3733 = vmax.f32 %v3699, 0.0
    %v3734 = vlaneseq
    %v3735 = vshrl.u32 %v3734, 7
    %v3736 = vsub.s32 0, %v3735
    %v3737 = vrot.slane %v58, %v3736
    %v3738 = vmul.f32 %v3702, %v3737
    %v3739 = vmul.f32 %v3703, %v3737
    %v3740 = vmul.f32 %v3704, %v3737
    %v3741 = vmul.f32 %v3705, %v3737
    %v3742 = vmul.f32 %v3706, %v3737
    %v3743 = vmul.f32 %v3707, %v3737
    %v3744 = vmul.f32 %v3708, %v3737
    %v3745 = vmul.f32 %v3709, %v3737
    %v3746 = vmul.f32 %v3710, %v3737
    %v3747 = vmul.f32 %v3711, %v3737
    %v3748 = vmul.f32 %v3712, %v3737
    %v3749 = vmul.f32 %v3713, %v3737
    %v3750 = vmul.f32 %v3714, %v3737
    %v3751 = vmul.f32 %v3715, %v3737
    %v3752 = vmul.f32 %v3716, %v3737
    %v3753 = vmul.f32 %v3717, %v3737
    %v3754 = vmul.f32 %v3718, %v3737
    %v3755 = vmul.f32 %v3719, %v3737
    %v3756 = vmul.f32 %v3720, %v3737
    %v3757 = vmul.f32 %v3721, %v3737
    %v3758 = vmul.f32 %v3722, %v3737
    %v3759 = vmul.f32 %v3723, %v3737
    %v3760 = vmul.f32 %v3724, %v3737
    %v3761 = vmul.f32 %v3725, %v3737
    %v3762 = vmul.f32 %v3726, %v3737
    %v3763 = vmul.f32 %v3727, %v3737
    %v3764 = vmul.f32 %v3728, %v3737
    %v3765 = vmul.f32 %v3729, %v3737
    %v3766 = vmul.f32 %v3730, %v3737
    %v3767 = vmul.f32 %v3731, %v3737
    %v3768 = vmul.f32 %v3732, %v3737
    %v3769 = vmul.f32 %v3733, %v3737
    %v3770 = vlaneseq
    %v3771 = vshrl.u32 %v3770, 7
    %v3772 = vsub.s32 1, %v3771
    %v3773 = vrot.slane %v58, %v3772
    %v3774 = vadd.f32 %v3738, %v3773
    %v3775 = vadd.f32 %v3739, %v3773
    %v3776 = vadd.f32 %v3740, %v3773
    %v3777 = vadd.f32 %v3741, %v3773
    %v3778 = vadd.f32 %v3742, %v3773
    %v3779 = vadd.f32 %v3743, %v3773
    %v3780 = vadd.f32 %v3744, %v3773
    %v3781 = vadd.f32 %v3745, %v3773
    %v3782 = vadd.f32 %v3746, %v3773
    %v3783 = vadd.f32 %v3747, %v3773
    %v3784 = vadd.f32 %v3748, %v3773
    %v3785 = vadd.f32 %v3749, %v3773
    %v3786 = vadd.f32 %v3750, %v3773
    %v3787 = vadd.f32 %v3751, %v3773
    %v3788 = vadd.f32 %v3752, %v3773
    %v3789 = vadd.f32 %v3753, %v3773
    %v3790 = vadd.f32 %v3754, %v3773
    %v3791 = vadd.f32 %v3755, %v3773
    %v3792 = vadd.f32 %v3756, %v3773
    %v3793 = vadd.f32 %v3757, %v3773
    %v3794 = vadd.f32 %v3758, %v3773
    %v3795 = vadd.f32 %v3759, %v3773
    %v3796 = vadd.f32 %v3760, %v3773
    %v3797 = vadd.f32 %v3761, %v3773
    %v3798 = vadd.f32 %v3762, %v3773
    %v3799 = vadd.f32 %v3763, %v3773
    %v3800 = vadd.f32 %v3764, %v3773
    %v3801 = vadd.f32 %v3765, %v3773
    %v3802 = vadd.f32 %v3766, %v3773
    %v3803 = vadd.f32 %v3767, %v3773
    %v3804 = vadd.f32 %v3768, %v3773
    %v3805 = vadd.f32 %v3769, %v3773
    %v3806 = vmax.f32 %v3774, 0.0
    %v3807 = vmax.f32 %v3775, 0.0
    %v3808 = vmax.f32 %v3776, 0.0
    %v3809 = vmax.f32 %v3777, 0.0
    %v3810 = vmax.f32 %v3778, 0.0
    %v3811 = vmax.f32 %v3779, 0.0
    %v3812 = vmax.f32 %v3780, 0.0
    %v3813 = vmax.f32 %v3781, 0.0
    %v3814 = vmax.f32 %v3782, 0.0
    %v3815 = vmax.f32 %v3783, 0.0
    %v3816 = vmax.f32 %v3784, 0.0
    %v3817 = vmax.f32 %v3785, 0.0
    %v3818 = vmax.f32 %v3786, 0.0
    %v3819 = vmax.f32 %v3787, 0.0
    %v3820 = vmax.f32 %v3788, 0.0
    %v3821 = vmax.f32 %v3789, 0.0
    %v3822 = vmax.f32 %v3790, 0.0
    %v3823 = vmax.f32 %v3791, 0.0
    %v3824 = vmax.f32 %v3792, 0.0
    %v3825 = vmax.f32 %v3793, 0.0
    %v3826 = vmax.f32 %v3794, 0.0
    %v3827 = vmax.f32 %v3795, 0.0
    %v3828 = vmax.f32 %v3796, 0.0
    %v3829 = vmax.f32 %v3797, 0.0
    %v3830 = vmax.f32 %v3798, 0.0
    %v3831 = vmax.f32 %v3799, 0.0
    %v3832 = vmax.f32 %v3800, 0.0
    %v3833 = vmax.f32 %v3801, 0.0
    %v3834 = vmax.f32 %v3802, 0.0
    %v3835 = vmax.f32 %v3803, 0.0
    %v3836 = vmax.f32 %v3804, 0.0
    %v3837 = vmax.f32 %v3805, 0.0
    %s3838 = scalar_lea.vmem [#allocation2], 768
    %v3839 = vld [vmem:[%s3838] sm:$0xf]
    %v3840 = vld [vmem:[%s3838 + $0x4] sm:$0xf]
    %v3841 = vld [vmem:[%s3838 + $0x8] sm:$0xf]
    %v3842 = vld [vmem:[%s3838 + $0xc] sm:$0xf]
    %v3843 = vld [vmem:[%s3838 + $0x10] sm:$0xf]
    %v3844 = vld [vmem:[%s3838 + $0x14] sm:$0xf]
    %v3845 = vld [vmem:[%s3838 + $0x18] sm:$0xf]
    %v3846 = vld [vmem:[%s3838 + $0x1c] sm:$0xf]
    %v3847 = vld [vmem:[%s3838 + $0x20] sm:$0xf]
    %v3848 = vld [vmem:[%s3838 + $0x24] sm:$0xf]
    %v3849 = vld [vmem:[%s3838 + $0x28] sm:$0xf]
    %v3850 = vld [vmem:[%s3838 + $0x2c] sm:$0xf]
    %v3851 = vld [vmem:[%s3838 + $0x30] sm:$0xf]
    %v3852 = vld [vmem:[%s3838 + $0x34] sm:$0xf]
    %v3853 = vld [vmem:[%s3838 + $0x38] sm:$0xf]
    %v3854 = vld [vmem:[%s3838 + $0x3c] sm:$0xf]
    %v3855 = vpack.c.bf16 %v3807, %v3806
    %v3856 = vpack.c.bf16 %v3809, %v3808
    %v3857 = vpack.c.bf16 %v3811, %v3810
    %v3858 = vpack.c.bf16 %v3813, %v3812
    %v3859 = vpack.c.bf16 %v3815, %v3814
    %v3860 = vpack.c.bf16 %v3817, %v3816
    %v3861 = vpack.c.bf16 %v3819, %v3818
    %v3862 = vpack.c.bf16 %v3821, %v3820
    %v3863 = vpack.c.bf16 %v3823, %v3822
    %v3864 = vpack.c.bf16 %v3825, %v3824
    %v3865 = vpack.c.bf16 %v3827, %v3826
    %v3866 = vpack.c.bf16 %v3829, %v3828
    %v3867 = vpack.c.bf16 %v3831, %v3830
    %v3868 = vpack.c.bf16 %v3833, %v3832
    %v3869 = vpack.c.bf16 %v3835, %v3834
    %v3870 = vpack.c.bf16 %v3837, %v3836
    %v3871 = vlaneseq
    %v3872 = vshrl.u32 %v3871, 7
    %v3873 = vsub.s32 2, %v3872
    %v3874 = vrot.slane %v58, %v3873
    %v3891 = vunpack.c.l.b16 %v3839
    %v3892 = vunpack.c.l.b16 %v3840
    %v3893 = vunpack.c.l.b16 %v3841
    %v3894 = vunpack.c.l.b16 %v3842
    %v3895 = vunpack.c.l.b16 %v3843
    %v3896 = vunpack.c.l.b16 %v3844
    %v3897 = vunpack.c.l.b16 %v3845
    %v3898 = vunpack.c.l.b16 %v3846
    %v3899 = vunpack.c.l.b16 %v3847
    %v3900 = vunpack.c.l.b16 %v3848
    %v3901 = vunpack.c.l.b16 %v3849
    %v3902 = vunpack.c.l.b16 %v3850
    %v3903 = vunpack.c.l.b16 %v3851
    %v3904 = vunpack.c.l.b16 %v3852
    %v3905 = vunpack.c.l.b16 %v3853
    %v3906 = vunpack.c.l.b16 %v3854
    %v3907 = vpack.c.b16 %v3892, %v3891
    %v3908 = vpack.c.b16 %v3894, %v3893
    %v3909 = vpack.c.b16 %v3896, %v3895
    %v3910 = vpack.c.b16 %v3898, %v3897
    %v3911 = vpack.c.b16 %v3900, %v3899
    %v3912 = vpack.c.b16 %v3902, %v3901
    %v3913 = vpack.c.b16 %v3904, %v3903
    %v3914 = vpack.c.b16 %v3906, %v3905
    %3923 = vmatprep.subr.bf16.mxu0 0
    %3924 = vmatpush1.bf16.msra.mxu0 %v3907
    %3925 = vmatprep.subr.bf16.mxu0 0
    %3926 = vmatpush1.bf16.msra.mxu0 %v3908
    %3927 = vmatprep.subr.bf16.mxu0 0
    %3928 = vmatpush1.bf16.msra.mxu0 %v3909
    %3929 = vmatprep.subr.bf16.mxu0 0
    %3930 = vmatpush1.bf16.msra.mxu0 %v3910
    %3931 = vmatprep.subr.bf16.mxu0 0
    %3932 = vmatpush1.bf16.msra.mxu0 %v3911
    %3933 = vmatprep.subr.bf16.mxu0 0
    %3934 = vmatpush1.bf16.msra.mxu0 %v3912
    %3935 = vmatprep.subr.bf16.mxu0 0
    %3936 = vmatpush1.bf16.msra.mxu0 %v3913
    %3937 = vmatprep.subr.bf16.mxu0 0
    %3938 = vmatpush1.bf16.msra.mxu0 %v3914
    %3939 = vmatprep.subr.bf16.mxu0 0
    %3940 = vmatpush1.bf16.msra.mxu0 0
    %3941 = vmatprep.subr.bf16.mxu0 0
    %3942 = vmatpush1.bf16.msra.mxu0 0
    %3943 = vmatprep.subr.bf16.mxu0 0
    %3944 = vmatpush1.bf16.msra.mxu0 0
    %3945 = vmatprep.subr.bf16.mxu0 0
    %3946 = vmatpush1.bf16.msra.mxu0 0
    %3947 = vmatprep.subr.bf16.mxu0 0
    %3948 = vmatpush1.bf16.msra.mxu0 0
    %3949 = vmatprep.subr.bf16.mxu0 0
    %3950 = vmatpush1.bf16.msra.mxu0 0
    %3951 = vmatprep.subr.bf16.mxu0 0
    %3952 = vmatpush1.bf16.msra.mxu0 0
    %3953 = vmatprep.subr.bf16.mxu0 0
    %3954 = vmatpush1.bf16.msra.mxu0 0
    %3955 = vmatprep.mubr.bf16.mxu0 0
    %3956 = vmatmul.mubr.bf16.gmra.mrb[0].mxu0 %v3855
    %v3957 = vpop.f32.mrb[0].mxu0
    %v3958 = vadd.f32 %v3874, %v3957
    %v3959 = vpop.f32.mrb[0].mxu0
    %v3960 = vpop.f32.mrb[0].mxu0
    %v3961 = vadd.f32 %v3874, %v3960
    %v3962 = vpop.f32.mrb[0].mxu0
    %3963 = vmatprep.mubr.bf16.mxu0 0
    %3964 = vmatmul.mubr.bf16.gmra.mrb[0].mxu0 %v3856
    %v3965 = vpop.f32.mrb[0].mxu0
    %v3966 = vadd.f32 %v3874, %v3965
    %v3967 = vpop.f32.mrb[0].mxu0
    %v3968 = vpop.f32.mrb[0].mxu0
    %v3969 = vadd.f32 %v3874, %v3968
    %v3970 = vpop.f32.mrb[0].mxu0
    %3971 = vmatprep.mubr.bf16.mxu0 0
    %3972 = vmatmul.mubr.bf16.gmra.mrb[0].mxu0 %v3857
    %v3973 = vpop.f32.mrb[0].mxu0
    %v3974 = vadd.f32 %v3874, %v3973
    %v3975 = vpop.f32.mrb[0].mxu0
    %v3976 = vpop.f32.mrb[0].mxu0
    %v3977 = vadd.f32 %v3874, %v3976
    %v3978 = vpop.f32.mrb[0].mxu0
    %3979 = vmatprep.mubr.bf16.mxu0 0
    %3980 = vmatmul.mubr.bf16.gmra.mrb[0].mxu0 %v3858
    %v3981 = vpop.f32.mrb[0].mxu0
    %v3982 = vadd.f32 %v3874, %v3981
    %v3983 = vpop.f32.mrb[0].mxu0
    %v3984 = vpop.f32.mrb[0].mxu0
    %v3985 = vadd.f32 %v3874, %v3984
    %v3986 = vpop.f32.mrb[0].mxu0
    %3987 = vmatprep.mubr.bf16.mxu0 0
    %3988 = vmatmul.mubr.bf16.gmra.mrb[0].mxu0 %v3859
    %v3989 = vpop.f32.mrb[0].mxu0
    %v3990 = vadd.f32 %v3874, %v3989
    %v3991 = vpop.f32.mrb[0].mxu0
    %v3992 = vpop.f32.mrb[0].mxu0
    %v3993 = vadd.f32 %v3874, %v3992
    %v3994 = vpop.f32.mrb[0].mxu0
    %3995 = vmatprep.mubr.bf16.mxu0 0
    %3996 = vmatmul.mubr.bf16.gmra.mrb[0].mxu0 %v3860
    %v3997 = vpop.f32.mrb[0].mxu0
    %v3998 = vadd.f32 %v3874, %v3997
    %v3999 = vpop.f32.mrb[0].mxu0
    %v4000 = vpop.f32.mrb[0].mxu0
    %v4001 = vadd.f32 %v3874, %v4000
    %v4002 = vpop.f32.mrb[0].mxu0
    %4003 = vmatprep.mubr.bf16.mxu0 0
    %4004 = vmatmul.mubr.bf16.gmra.mrb[0].mxu0 %v3861
    %v4005 = vpop.f32.mrb[0].mxu0
    %v4006 = vadd.f32 %v3874, %v4005
    %v4007 = vpop.f32.mrb[0].mxu0
    %v4008 = vpop.f32.mrb[0].mxu0
    %v4009 = vadd.f32 %v3874, %v4008
    %v4010 = vpop.f32.mrb[0].mxu0
    %4011 = vmatprep.mubr.bf16.mxu0 0
    %4012 = vmatmul.mubr.bf16.gmra.mrb[0].mxu0 %v3862
    %v4013 = vpop.f32.mrb[0].mxu0
    %v4014 = vadd.f32 %v3874, %v4013
    %v4015 = vpop.f32.mrb[0].mxu0
    %v4016 = vpop.f32.mrb[0].mxu0
    %v4017 = vadd.f32 %v3874, %v4016
    %v4018 = vpop.f32.mrb[0].mxu0
    %4019 = vmatprep.mubr.bf16.mxu0 0
    %4020 = vmatmul.mubr.bf16.gmra.mrb[0].mxu0 %v3863
    %v4021 = vpop.f32.mrb[0].mxu0
    %v4022 = vadd.f32 %v3874, %v4021
    %v4023 = vpop.f32.mrb[0].mxu0
    %v4024 = vpop.f32.mrb[0].mxu0
    %v4025 = vadd.f32 %v3874, %v4024
    %v4026 = vpop.f32.mrb[0].mxu0
    %4027 = vmatprep.mubr.bf16.mxu0 0
    %4028 = vmatmul.mubr.bf16.gmra.mrb[0].mxu0 %v3864
    %v4029 = vpop.f32.mrb[0].mxu0
    %v4030 = vadd.f32 %v3874, %v4029
    %v4031 = vpop.f32.mrb[0].mxu0
    %v4032 = vpop.f32.mrb[0].mxu0
    %v4033 = vadd.f32 %v3874, %v4032
    %v4034 = vpop.f32.mrb[0].mxu0
    %4035 = vmatprep.mubr.bf16.mxu0 0
    %4036 = vmatmul.mubr.bf16.gmra.mrb[0].mxu0 %v3865
    %v4037 = vpop.f32.mrb[0].mxu0
    %v4038 = vadd.f32 %v3874, %v4037
    %v4039 = vpop.f32.mrb[0].mxu0
    %v4040 = vpop.f32.mrb[0].mxu0
    %v4041 = vadd.f32 %v3874, %v4040
    %v4042 = vpop.f32.mrb[0].mxu0
    %4043 = vmatprep.mubr.bf16.mxu0 0
    %4044 = vmatmul.mubr.bf16.gmra.mrb[0].mxu0 %v3866
    %v4045 = vpop.f32.mrb[0].mxu0
    %v4046 = vadd.f32 %v3874, %v4045
    %v4047 = vpop.f32.mrb[0].mxu0
    %v4048 = vpop.f32.mrb[0].mxu0
    %v4049 = vadd.f32 %v3874, %v4048
    %v4050 = vpop.f32.mrb[0].mxu0
    %4051 = vmatprep.mubr.bf16.mxu0 0
    %4052 = vmatmul.mubr.bf16.gmra.mrb[0].mxu0 %v3867
    %v4053 = vpop.f32.mrb[0].mxu0
    %v4054 = vadd.f32 %v3874, %v4053
    %v4055 = vpop.f32.mrb[0].mxu0
    %v4056 = vpop.f32.mrb[0].mxu0
    %v4057 = vadd.f32 %v3874, %v4056
    %v4058 = vpop.f32.mrb[0].mxu0
    %4059 = vmatprep.mubr.bf16.mxu0 0
    %4060 = vmatmul.mubr.bf16.gmra.mrb[0].mxu0 %v3868
    %v4061 = vpop.f32.mrb[0].mxu0
    %v4062 = vadd.f32 %v3874, %v4061
    %v4063 = vpop.f32.mrb[0].mxu0
    %v4064 = vpop.f32.mrb[0].mxu0
    %v4065 = vadd.f32 %v3874, %v4064
    %v4066 = vpop.f32.mrb[0].mxu0
    %4067 = vmatprep.mubr.bf16.mxu0 0
    %4068 = vmatmul.mubr.bf16.gmra.mrb[0].mxu0 %v3869
    %v4069 = vpop.f32.mrb[0].mxu0
    %v4070 = vadd.f32 %v3874, %v4069
    %v4071 = vpop.f32.mrb[0].mxu0
    %v4072 = vpop.f32.mrb[0].mxu0
    %v4073 = vadd.f32 %v3874, %v4072
    %v4074 = vpop.f32.mrb[0].mxu0
    %4075 = vmatprep.mubr.bf16.mxu0 0
    %4076 = vmatmul.mubr.bf16.gmra.mrb[0].mxu0 %v3870
    %v4077 = vpop.f32.mrb[0].mxu0
    %v4078 = vadd.f32 %v3874, %v4077
    %v4079 = vpop.f32.mrb[0].mxu0
    %v4080 = vpop.f32.mrb[0].mxu0
    %v4081 = vadd.f32 %v3874, %v4080
    %v4082 = vpop.f32.mrb[0].mxu0
    %4083 = vdwg.mxu0
    %v4084 = vmax.f32 %v3958, 0.0
    %v4085 = vmax.f32 %v3961, 0.0
    %v4086 = vmax.f32 %v3966, 0.0
    %v4087 = vmax.f32 %v3969, 0.0
    %v4088 = vmax.f32 %v3974, 0.0
    %v4089 = vmax.f32 %v3977, 0.0
    %v4090 = vmax.f32 %v3982, 0.0
    %v4091 = vmax.f32 %v3985, 0.0
    %v4092 = vmax.f32 %v3990, 0.0
    %v4093 = vmax.f32 %v3993, 0.0
    %v4094 = vmax.f32 %v3998, 0.0
    %v4095 = vmax.f32 %v4001, 0.0
    %v4096 = vmax.f32 %v4006, 0.0
    %v4097 = vmax.f32 %v4009, 0.0
    %v4098 = vmax.f32 %v4014, 0.0
    %v4099 = vmax.f32 %v4017, 0.0
    %v4100 = vmax.f32 %v4022, 0.0
    %v4101 = vmax.f32 %v4025, 0.0
    %v4102 = vmax.f32 %v4030, 0.0
    %v4103 = vmax.f32 %v4033, 0.0
    %v4104 = vmax.f32 %v4038, 0.0
    %v4105 = vmax.f32 %v4041, 0.0
    %v4106 = vmax.f32 %v4046, 0.0
    %v4107 = vmax.f32 %v4049, 0.0
    %v4108 = vmax.f32 %v4054, 0.0
    %v4109 = vmax.f32 %v4057, 0.0
    %v4110 = vmax.f32 %v4062, 0.0
    %v4111 = vmax.f32 %v4065, 0.0
    %v4112 = vmax.f32 %v4070, 0.0
    %v4113 = vmax.f32 %v4073, 0.0
    %v4114 = vmax.f32 %v4078, 0.0
    %v4115 = vmax.f32 %v4081, 0.0
    %s4116 = scalar_lea.vmem [#allocation2], 832
    %v4117 = vld [vmem:[%s4116] sm:$0xf]
    %v4118 = vld [vmem:[%s4116 + $0x4] sm:$0xf]
    %v4119 = vld [vmem:[%s4116 + $0x8] sm:$0xf]
    %v4120 = vld [vmem:[%s4116 + $0xc] sm:$0xf]
    %v4121 = vld [vmem:[%s4116 + $0x10] sm:$0xf]
    %v4122 = vld [vmem:[%s4116 + $0x14] sm:$0xf]
    %v4123 = vld [vmem:[%s4116 + $0x18] sm:$0xf]
    %v4124 = vld [vmem:[%s4116 + $0x1c] sm:$0xf]
    %v4125 = vld [vmem:[%s4116 + $0x20] sm:$0xf]
    %v4126 = vld [vmem:[%s4116 + $0x24] sm:$0xf]
    %v4127 = vld [vmem:[%s4116 + $0x28] sm:$0xf]
    %v4128 = vld [vmem:[%s4116 + $0x2c] sm:$0xf]
    %v4129 = vld [vmem:[%s4116 + $0x30] sm:$0xf]
    %v4130 = vld [vmem:[%s4116 + $0x34] sm:$0xf]
    %v4131 = vld [vmem:[%s4116 + $0x38] sm:$0xf]
    %v4132 = vld [vmem:[%s4116 + $0x3c] sm:$0xf]
    %v4133 = vpack.c.bf16 %v4085, %v4084
    %v4134 = vpack.c.bf16 %v4087, %v4086
    %v4135 = vpack.c.bf16 %v4089, %v4088
    %v4136 = vpack.c.bf16 %v4091, %v4090
    %v4137 = vpack.c.bf16 %v4093, %v4092
    %v4138 = vpack.c.bf16 %v4095, %v4094
    %v4139 = vpack.c.bf16 %v4097, %v4096
    %v4140 = vpack.c.bf16 %v4099, %v4098
    %v4141 = vpack.c.bf16 %v4101, %v4100
    %v4142 = vpack.c.bf16 %v4103, %v4102
    %v4143 = vpack.c.bf16 %v4105, %v4104
    %v4144 = vpack.c.bf16 %v4107, %v4106
    %v4145 = vpack.c.bf16 %v4109, %v4108
    %v4146 = vpack.c.bf16 %v4111, %v4110
    %v4147 = vpack.c.bf16 %v4113, %v4112
    %v4148 = vpack.c.bf16 %v4115, %v4114
    %s4149 = scalar_lea.vmem [#allocation2], 896
    %v4150 = vld [vmem:[%s4149] sm:$0xf]
    %v4151 = vld [vmem:[%s4149 + $0x4] sm:$0xf]
    %v4152 = vld [vmem:[%s4149 + $0x8] sm:$0xf]
    %v4153 = vld [vmem:[%s4149 + $0xc] sm:$0xf]
    %v4154 = vld [vmem:[%s4149 + $0x10] sm:$0xf]
    %v4155 = vld [vmem:[%s4149 + $0x14] sm:$0xf]
    %v4156 = vld [vmem:[%s4149 + $0x18] sm:$0xf]
    %v4157 = vld [vmem:[%s4149 + $0x1c] sm:$0xf]
    %v4158 = vld [vmem:[%s4149 + $0x20] sm:$0xf]
    %v4159 = vld [vmem:[%s4149 + $0x24] sm:$0xf]
    %v4160 = vld [vmem:[%s4149 + $0x28] sm:$0xf]
    %v4161 = vld [vmem:[%s4149 + $0x2c] sm:$0xf]
    %v4162 = vld [vmem:[%s4149 + $0x30] sm:$0xf]
    %v4163 = vld [vmem:[%s4149 + $0x34] sm:$0xf]
    %v4164 = vld [vmem:[%s4149 + $0x38] sm:$0xf]
    %v4165 = vld [vmem:[%s4149 + $0x3c] sm:$0xf]
    %v4166 = vpack.c.bf16 %v3703, %v3702
    %v4167 = vpack.c.bf16 %v3705, %v3704
    %v4168 = vpack.c.bf16 %v3707, %v3706
    %v4169 = vpack.c.bf16 %v3709, %v3708
    %v4170 = vpack.c.bf16 %v3711, %v3710
    %v4171 = vpack.c.bf16 %v3713, %v3712
    %v4172 = vpack.c.bf16 %v3715, %v3714
    %v4173 = vpack.c.bf16 %v3717, %v3716
    %v4174 = vpack.c.bf16 %v3719, %v3718
    %v4175 = vpack.c.bf16 %v3721, %v3720
    %v4176 = vpack.c.bf16 %v3723, %v3722
    %v4177 = vpack.c.bf16 %v3725, %v3724
    %v4178 = vpack.c.bf16 %v3727, %v3726
    %v4179 = vpack.c.bf16 %v3729, %v3728
    %v4180 = vpack.c.bf16 %v3731, %v3730
    %v4181 = vpack.c.bf16 %v3733, %v3732
    %v4182 = vlaneseq
    %v4183 = vshrl.u32 %v4182, 7
    %v4184 = vsub.s32 3, %v4183
    %v4185 = vrot.slane %v58, %v4184
    %v4202 = vunpack.c.l.b16 %v4150
    %v4203 = vunpack.c.l.b16 %v4151
    %v4204 = vunpack.c.l.b16 %v4152
    %v4205 = vunpack.c.l.b16 %v4153
    %v4206 = vunpack.c.l.b16 %v4154
    %v4207 = vunpack.c.l.b16 %v4155
    %v4208 = vunpack.c.l.b16 %v4156
    %v4209 = vunpack.c.l.b16 %v4157
    %v4210 = vunpack.c.l.b16 %v4158
    %v4211 = vunpack.c.l.b16 %v4159
    %v4212 = vunpack.c.l.b16 %v4160
    %v4213 = vunpack.c.l.b16 %v4161
    %v4214 = vunpack.c.l.b16 %v4162
    %v4215 = vunpack.c.l.b16 %v4163
    %v4216 = vunpack.c.l.b16 %v4164
    %v4217 = vunpack.c.l.b16 %v4165
    %v4218 = vpack.c.b16 %v4203, %v4202
    %v4219 = vpack.c.b16 %v4205, %v4204
    %v4220 = vpack.c.b16 %v4207, %v4206
    %v4221 = vpack.c.b16 %v4209, %v4208
    %v4222 = vpack.c.b16 %v4211, %v4210
    %v4223 = vpack.c.b16 %v4213, %v4212
    %v4224 = vpack.c.b16 %v4215, %v4214
    %v4225 = vpack.c.b16 %v4217, %v4216
    %4234 = vmatprep.subr.bf16.mxu0 0
    %4235 = vmatpush1.bf16.msra.mxu0 %v4218
    %4236 = vmatprep.subr.bf16.mxu0 0
    %4237 = vmatpush1.bf16.msra.mxu0 %v4219
    %4238 = vmatprep.subr.bf16.mxu0 0
    %4239 = vmatpush1.bf16.msra.mxu0 %v4220
    %4240 = vmatprep.subr.bf16.mxu0 0
    %4241 = vmatpush1.bf16.msra.mxu0 %v4221
    %4242 = vmatprep.subr.bf16.mxu0 0
    %4243 = vmatpush1.bf16.msra.mxu0 %v4222
    %4244 = vmatprep.subr.bf16.mxu0 0
    %4245 = vmatpush1.bf16.msra.mxu0 %v4223
    %4246 = vmatprep.subr.bf16.mxu0 0
    %4247 = vmatpush1.bf16.msra.mxu0 %v4224
    %4248 = vmatprep.subr.bf16.mxu0 0
    %4249 = vmatpush1.bf16.msra.mxu0 %v4225
    %4250 = vmatprep.subr.bf16.mxu0 0
    %4251 = vmatpush1.bf16.msra.mxu0 0
    %4252 = vmatprep.subr.bf16.mxu0 0
    %4253 = vmatpush1.bf16.msra.mxu0 0
    %4254 = vmatprep.subr.bf16.mxu0 0
    %4255 = vmatpush1.bf16.msra.mxu0 0
    %4256 = vmatprep.subr.bf16.mxu0 0
    %4257 = vmatpush1.bf16.msra.mxu0 0
    %4258 = vmatprep.subr.bf16.mxu0 0
    %4259 = vmatpush1.bf16.msra.mxu0 0
    %4260 = vmatprep.subr.bf16.mxu0 0
    %4261 = vmatpush1.bf16.msra.mxu0 0
    %4262 = vmatprep.subr.bf16.mxu0 0
    %4263 = vmatpush1.bf16.msra.mxu0 0
    %4264 = vmatprep.subr.bf16.mxu0 0
    %4265 = vmatpush1.bf16.msra.mxu0 0
    %4266 = vmatprep.mubr.bf16.mxu0 0
    %4267 = vmatmul.mubr.bf16.gmra.mrb[0].mxu0 %v4166
    %v4268 = vpop.f32.mrb[0].mxu0
    %v4269 = vadd.f32 %v4185, %v4268
    %v4270 = vpop.f32.mrb[0].mxu0
    %v4271 = vpop.f32.mrb[0].mxu0
    %v4272 = vadd.f32 %v4185, %v4271
    %v4273 = vpop.f32.mrb[0].mxu0
    %4274 = vmatprep.mubr.bf16.mxu0 0
    %4275 = vmatmul.mubr.bf16.gmra.mrb[0].mxu0 %v4167
    %v4276 = vpop.f32.mrb[0].mxu0
    %v4277 = vadd.f32 %v4185, %v4276
    %v4278 = vpop.f32.mrb[0].mxu0
    %v4279 = vpop.f32.mrb[0].mxu0
    %v4280 = vadd.f32 %v4185, %v4279
    %v4281 = vpop.f32.mrb[0].mxu0
    %4282 = vmatprep.mubr.bf16.mxu0 0
    %4283 = vmatmul.mubr.bf16.gmra.mrb[0].mxu0 %v4168
    %v4284 = vpop.f32.mrb[0].mxu0
    %v4285 = vadd.f32 %v4185, %v4284
    %v4286 = vpop.f32.mrb[0].mxu0
    %v4287 = vpop.f32.mrb[0].mxu0
    %v4288 = vadd.f32 %v4185, %v4287
    %v4289 = vpop.f32.mrb[0].mxu0
    %4290 = vmatprep.mubr.bf16.mxu0 0
    %4291 = vmatmul.mubr.bf16.gmra.mrb[0].mxu0 %v4169
    %v4292 = vpop.f32.mrb[0].mxu0
    %v4293 = vadd.f32 %v4185, %v4292
    %v4294 = vpop.f32.mrb[0].mxu0
    %v4295 = vpop.f32.mrb[0].mxu0
    %v4296 = vadd.f32 %v4185, %v4295
    %v4297 = vpop.f32.mrb[0].mxu0
    %4298 = vmatprep.mubr.bf16.mxu0 0
    %4299 = vmatmul.mubr.bf16.gmra.mrb[0].mxu0 %v4170
    %v4300 = vpop.f32.mrb[0].mxu0
    %v4301 = vadd.f32 %v4185, %v4300
    %v4302 = vpop.f32.mrb[0].mxu0
    %v4303 = vpop.f32.mrb[0].mxu0
    %v4304 = vadd.f32 %v4185, %v4303
    %v4305 = vpop.f32.mrb[0].mxu0
    %4306 = vmatprep.mubr.bf16.mxu0 0
    %4307 = vmatmul.mubr.bf16.gmra.mrb[0].mxu0 %v4171
    %v4308 = vpop.f32.mrb[0].mxu0
    %v4309 = vadd.f32 %v4185, %v4308
    %v4310 = vpop.f32.mrb[0].mxu0
    %v4311 = vpop.f32.mrb[0].mxu0
    %v4312 = vadd.f32 %v4185, %v4311
    %v4313 = vpop.f32.mrb[0].mxu0
    %4314 = vmatprep.mubr.bf16.mxu0 0
    %4315 = vmatmul.mubr.bf16.gmra.mrb[0].mxu0 %v4172
    %v4316 = vpop.f32.mrb[0].mxu0
    %v4317 = vadd.f32 %v4185, %v4316
    %v4318 = vpop.f32.mrb[0].mxu0
    %v4319 = vpop.f32.mrb[0].mxu0
    %v4320 = vadd.f32 %v4185, %v4319
    %v4321 = vpop.f32.mrb[0].mxu0
    %4322 = vmatprep.mubr.bf16.mxu0 0
    %4323 = vmatmul.mubr.bf16.gmra.mrb[0].mxu0 %v4173
    %v4324 = vpop.f32.mrb[0].mxu0
    %v4325 = vadd.f32 %v4185, %v4324
    %v4326 = vpop.f32.mrb[0].mxu0
    %v4327 = vpop.f32.mrb[0].mxu0
    %v4328 = vadd.f32 %v4185, %v4327
    %v4329 = vpop.f32.mrb[0].mxu0
    %4330 = vmatprep.mubr.bf16.mxu0 0
    %4331 = vmatmul.mubr.bf16.gmra.mrb[0].mxu0 %v4174
    %v4332 = vpop.f32.mrb[0].mxu0
    %v4333 = vadd.f32 %v4185, %v4332
    %v4334 = vpop.f32.mrb[0].mxu0
    %v4335 = vpop.f32.mrb[0].mxu0
    %v4336 = vadd.f32 %v4185, %v4335
    %v4337 = vpop.f32.mrb[0].mxu0
    %4338 = vmatprep.mubr.bf16.mxu0 0
    %4339 = vmatmul.mubr.bf16.gmra.mrb[0].mxu0 %v4175
    %v4340 = vpop.f32.mrb[0].mxu0
    %v4341 = vadd.f32 %v4185, %v4340
    %v4342 = vpop.f32.mrb[0].mxu0
    %v4343 = vpop.f32.mrb[0].mxu0
    %v4344 = vadd.f32 %v4185, %v4343
    %v4345 = vpop.f32.mrb[0].mxu0
    %4346 = vmatprep.mubr.bf16.mxu0 0
    %4347 = vmatmul.mubr.bf16.gmra.mrb[0].mxu0 %v4176
    %v4348 = vpop.f32.mrb[0].mxu0
    %v4349 = vadd.f32 %v4185, %v4348
    %v4350 = vpop.f32.mrb[0].mxu0
    %v4351 = vpop.f32.mrb[0].mxu0
    %v4352 = vadd.f32 %v4185, %v4351
    %v4353 = vpop.f32.mrb[0].mxu0
    %4354 = vmatprep.mubr.bf16.mxu0 0
    %4355 = vmatmul.mubr.bf16.gmra.mrb[0].mxu0 %v4177
    %v4356 = vpop.f32.mrb[0].mxu0
    %v4357 = vadd.f32 %v4185, %v4356
    %v4358 = vpop.f32.mrb[0].mxu0
    %v4359 = vpop.f32.mrb[0].mxu0
    %v4360 = vadd.f32 %v4185, %v4359
    %v4361 = vpop.f32.mrb[0].mxu0
    %4362 = vmatprep.mubr.bf16.mxu0 0
    %4363 = vmatmul.mubr.bf16.gmra.mrb[0].mxu0 %v4178
    %v4364 = vpop.f32.mrb[0].mxu0
    %v4365 = vadd.f32 %v4185, %v4364
    %v4366 = vpop.f32.mrb[0].mxu0
    %v4367 = vpop.f32.mrb[0].mxu0
    %v4368 = vadd.f32 %v4185, %v4367
    %v4369 = vpop.f32.mrb[0].mxu0
    %4370 = vmatprep.mubr.bf16.mxu0 0
    %4371 = vmatmul.mubr.bf16.gmra.mrb[0].mxu0 %v4179
    %v4372 = vpop.f32.mrb[0].mxu0
    %v4373 = vadd.f32 %v4185, %v4372
    %v4374 = vpop.f32.mrb[0].mxu0
    %v4375 = vpop.f32.mrb[0].mxu0
    %v4376 = vadd.f32 %v4185, %v4375
    %v4377 = vpop.f32.mrb[0].mxu0
    %4378 = vmatprep.mubr.bf16.mxu0 0
    %4379 = vmatmul.mubr.bf16.gmra.mrb[0].mxu0 %v4180
    %v4380 = vpop.f32.mrb[0].mxu0
    %v4381 = vadd.f32 %v4185, %v4380
    %v4382 = vpop.f32.mrb[0].mxu0
    %v4383 = vpop.f32.mrb[0].mxu0
    %v4384 = vadd.f32 %v4185, %v4383
    %v4385 = vpop.f32.mrb[0].mxu0
    %4386 = vmatprep.mubr.bf16.mxu0 0
    %4387 = vmatmul.mubr.bf16.gmra.mrb[0].mxu0 %v4181
    %v4388 = vpop.f32.mrb[0].mxu0
    %v4389 = vadd.f32 %v4185, %v4388
    %v4390 = vpop.f32.mrb[0].mxu0
    %v4391 = vpop.f32.mrb[0].mxu0
    %v4392 = vadd.f32 %v4185, %v4391
    %v4393 = vpop.f32.mrb[0].mxu0
    %4394 = vdwg.mxu0
    %v4411 = vunpack.c.l.b16 %v4117
    %v4412 = vunpack.c.l.b16 %v4118
    %v4413 = vunpack.c.l.b16 %v4119
    %v4414 = vunpack.c.l.b16 %v4120
    %v4415 = vunpack.c.l.b16 %v4121
    %v4416 = vunpack.c.l.b16 %v4122
    %v4417 = vunpack.c.l.b16 %v4123
    %v4418 = vunpack.c.l.b16 %v4124
    %v4419 = vunpack.c.l.b16 %v4125
    %v4420 = vunpack.c.l.b16 %v4126
    %v4421 = vunpack.c.l.b16 %v4127
    %v4422 = vunpack.c.l.b16 %v4128
    %v4423 = vunpack.c.l.b16 %v4129
    %v4424 = vunpack.c.l.b16 %v4130
    %v4425 = vunpack.c.l.b16 %v4131
    %v4426 = vunpack.c.l.b16 %v4132
    %v4427 = vpack.c.b16 %v4412, %v4411
    %v4428 = vpack.c.b16 %v4414, %v4413
    %v4429 = vpack.c.b16 %v4416, %v4415
    %v4430 = vpack.c.b16 %v4418, %v4417
    %v4431 = vpack.c.b16 %v4420, %v4419
    %v4432 = vpack.c.b16 %v4422, %v4421
    %v4433 = vpack.c.b16 %v4424, %v4423
    %v4434 = vpack.c.b16 %v4426, %v4425
    %4443 = vmatprep.subr.bf16.mxu0 0
    %4444 = vmatpush1.bf16.msra.mxu0 %v4427
    %4445 = vmatprep.subr.bf16.mxu0 0
    %4446 = vmatpush1.bf16.msra.mxu0 %v4428
    %4447 = vmatprep.subr.bf16.mxu0 0
    %4448 = vmatpush1.bf16.msra.mxu0 %v4429
    %4449 = vmatprep.subr.bf16.mxu0 0
    %4450 = vmatpush1.bf16.msra.mxu0 %v4430
    %4451 = vmatprep.subr.bf16.mxu0 0
    %4452 = vmatpush1.bf16.msra.mxu0 %v4431
    %4453 = vmatprep.subr.bf16.mxu0 0
    %4454 = vmatpush1.bf16.msra.mxu0 %v4432
    %4455 = vmatprep.subr.bf16.mxu0 0
    %4456 = vmatpush1.bf16.msra.mxu0 %v4433
    %4457 = vmatprep.subr.bf16.mxu0 0
    %4458 = vmatpush1.bf16.msra.mxu0 %v4434
    %4459 = vmatprep.subr.bf16.mxu0 0
    %4460 = vmatpush1.bf16.msra.mxu0 0
    %4461 = vmatprep.subr.bf16.mxu0 0
    %4462 = vmatpush1.bf16.msra.mxu0 0
    %4463 = vmatprep.subr.bf16.mxu0 0
    %4464 = vmatpush1.bf16.msra.mxu0 0
    %4465 = vmatprep.subr.bf16.mxu0 0
    %4466 = vmatpush1.bf16.msra.mxu0 0
    %4467 = vmatprep.subr.bf16.mxu0 0
    %4468 = vmatpush1.bf16.msra.mxu0 0
    %4469 = vmatprep.subr.bf16.mxu0 0
    %4470 = vmatpush1.bf16.msra.mxu0 0
    %4471 = vmatprep.subr.bf16.mxu0 0
    %4472 = vmatpush1.bf16.msra.mxu0 0
    %4473 = vmatprep.subr.bf16.mxu0 0
    %4474 = vmatpush1.bf16.msra.mxu0 0
    %4475 = vmatprep.mubr.bf16.mxu0 0
    %4476 = vmatmul.mubr.bf16.gmra.mrb[0].mxu0 %v4133
    %v4477 = vpop.f32.mrb[0].mxu0
    %v4478 = vadd.f32 %v4269, %v4477
    %v4479 = vpop.f32.mrb[0].mxu0
    %v4480 = vpop.f32.mrb[0].mxu0
    %v4481 = vadd.f32 %v4272, %v4480
    %v4482 = vpop.f32.mrb[0].mxu0
    %4483 = vmatprep.mubr.bf16.mxu0 0
    %4484 = vmatmul.mubr.bf16.gmra.mrb[0].mxu0 %v4134
    %v4485 = vpop.f32.mrb[0].mxu0
    %v4486 = vadd.f32 %v4277, %v4485
    %v4487 = vpop.f32.mrb[0].mxu0
    %v4488 = vpop.f32.mrb[0].mxu0
    %v4489 = vadd.f32 %v4280, %v4488
    %v4490 = vpop.f32.mrb[0].mxu0
    %4491 = vmatprep.mubr.bf16.mxu0 0
    %4492 = vmatmul.mubr.bf16.gmra.mrb[0].mxu0 %v4135
    %v4493 = vpop.f32.mrb[0].mxu0
    %v4494 = vadd.f32 %v4285, %v4493
    %v4495 = vpop.f32.mrb[0].mxu0
    %v4496 = vpop.f32.mrb[0].mxu0
    %v4497 = vadd.f32 %v4288, %v4496
    %v4498 = vpop.f32.mrb[0].mxu0
    %4499 = vmatprep.mubr.bf16.mxu0 0
    %4500 = vmatmul.mubr.bf16.gmra.mrb[0].mxu0 %v4136
    %v4501 = vpop.f32.mrb[0].mxu0
    %v4502 = vadd.f32 %v4293, %v4501
    %v4503 = vpop.f32.mrb[0].mxu0
    %v4504 = vpop.f32.mrb[0].mxu0
    %v4505 = vadd.f32 %v4296, %v4504
    %v4506 = vpop.f32.mrb[0].mxu0
    %4507 = vmatprep.mubr.bf16.mxu0 0
    %4508 = vmatmul.mubr.bf16.gmra.mrb[0].mxu0 %v4137
    %v4509 = vpop.f32.mrb[0].mxu0
    %v4510 = vadd.f32 %v4301, %v4509
    %v4511 = vpop.f32.mrb[0].mxu0
    %v4512 = vpop.f32.mrb[0].mxu0
    %v4513 = vadd.f32 %v4304, %v4512
    %v4514 = vpop.f32.mrb[0].mxu0
    %4515 = vmatprep.mubr.bf16.mxu0 0
    %4516 = vmatmul.mubr.bf16.gmra.mrb[0].mxu0 %v4138
    %v4517 = vpop.f32.mrb[0].mxu0
    %v4518 = vadd.f32 %v4309, %v4517
    %v4519 = vpop.f32.mrb[0].mxu0
    %v4520 = vpop.f32.mrb[0].mxu0
    %v4521 = vadd.f32 %v4312, %v4520
    %v4522 = vpop.f32.mrb[0].mxu0
    %4523 = vmatprep.mubr.bf16.mxu0 0
    %4524 = vmatmul.mubr.bf16.gmra.mrb[0].mxu0 %v4139
    %v4525 = vpop.f32.mrb[0].mxu0
    %v4526 = vadd.f32 %v4317, %v4525
    %v4527 = vpop.f32.mrb[0].mxu0
    %v4528 = vpop.f32.mrb[0].mxu0
    %v4529 = vadd.f32 %v4320, %v4528
    %v4530 = vpop.f32.mrb[0].mxu0
    %4531 = vmatprep.mubr.bf16.mxu0 0
    %4532 = vmatmul.mubr.bf16.gmra.mrb[0].mxu0 %v4140
    %v4533 = vpop.f32.mrb[0].mxu0
    %v4534 = vadd.f32 %v4325, %v4533
    %v4535 = vpop.f32.mrb[0].mxu0
    %v4536 = vpop.f32.mrb[0].mxu0
    %v4537 = vadd.f32 %v4328, %v4536
    %v4538 = vpop.f32.mrb[0].mxu0
    %4539 = vmatprep.mubr.bf16.mxu0 0
    %4540 = vmatmul.mubr.bf16.gmra.mrb[0].mxu0 %v4141
    %v4541 = vpop.f32.mrb[0].mxu0
    %v4542 = vadd.f32 %v4333, %v4541
    %v4543 = vpop.f32.mrb[0].mxu0
    %v4544 = vpop.f32.mrb[0].mxu0
    %v4545 = vadd.f32 %v4336, %v4544
    %v4546 = vpop.f32.mrb[0].mxu0
    %4547 = vmatprep.mubr.bf16.mxu0 0
    %4548 = vmatmul.mubr.bf16.gmra.mrb[0].mxu0 %v4142
    %v4549 = vpop.f32.mrb[0].mxu0
    %v4550 = vadd.f32 %v4341, %v4549
    %v4551 = vpop.f32.mrb[0].mxu0
    %v4552 = vpop.f32.mrb[0].mxu0
    %v4553 = vadd.f32 %v4344, %v4552
    %v4554 = vpop.f32.mrb[0].mxu0
    %4555 = vmatprep.mubr.bf16.mxu0 0
    %4556 = vmatmul.mubr.bf16.gmra.mrb[0].mxu0 %v4143
    %v4557 = vpop.f32.mrb[0].mxu0
    %v4558 = vadd.f32 %v4349, %v4557
    %v4559 = vpop.f32.mrb[0].mxu0
    %v4560 = vpop.f32.mrb[0].mxu0
    %v4561 = vadd.f32 %v4352, %v4560
    %v4562 = vpop.f32.mrb[0].mxu0
    %4563 = vmatprep.mubr.bf16.mxu0 0
    %4564 = vmatmul.mubr.bf16.gmra.mrb[0].mxu0 %v4144
    %v4565 = vpop.f32.mrb[0].mxu0
    %v4566 = vadd.f32 %v4357, %v4565
    %v4567 = vpop.f32.mrb[0].mxu0
    %v4568 = vpop.f32.mrb[0].mxu0
    %v4569 = vadd.f32 %v4360, %v4568
    %v4570 = vpop.f32.mrb[0].mxu0
    %4571 = vmatprep.mubr.bf16.mxu0 0
    %4572 = vmatmul.mubr.bf16.gmra.mrb[0].mxu0 %v4145
    %v4573 = vpop.f32.mrb[0].mxu0
    %v4574 = vadd.f32 %v4365, %v4573
    %v4575 = vpop.f32.mrb[0].mxu0
    %v4576 = vpop.f32.mrb[0].mxu0
    %v4577 = vadd.f32 %v4368, %v4576
    %v4578 = vpop.f32.mrb[0].mxu0
    %4579 = vmatprep.mubr.bf16.mxu0 0
    %4580 = vmatmul.mubr.bf16.gmra.mrb[0].mxu0 %v4146
    %v4581 = vpop.f32.mrb[0].mxu0
    %v4582 = vadd.f32 %v4373, %v4581
    %v4583 = vpop.f32.mrb[0].mxu0
    %v4584 = vpop.f32.mrb[0].mxu0
    %v4585 = vadd.f32 %v4376, %v4584
    %v4586 = vpop.f32.mrb[0].mxu0
    %4587 = vmatprep.mubr.bf16.mxu0 0
    %4588 = vmatmul.mubr.bf16.gmra.mrb[0].mxu0 %v4147
    %v4589 = vpop.f32.mrb[0].mxu0
    %v4590 = vadd.f32 %v4381, %v4589
    %v4591 = vpop.f32.mrb[0].mxu0
    %v4592 = vpop.f32.mrb[0].mxu0
    %v4593 = vadd.f32 %v4384, %v4592
    %v4594 = vpop.f32.mrb[0].mxu0
    %4595 = vmatprep.mubr.bf16.mxu0 0
    %4596 = vmatmul.mubr.bf16.gmra.mrb[0].mxu0 %v4148
    %v4597 = vpop.f32.mrb[0].mxu0
    %v4598 = vadd.f32 %v4389, %v4597
    %v4599 = vpop.f32.mrb[0].mxu0
    %v4600 = vpop.f32.mrb[0].mxu0
    %v4601 = vadd.f32 %v4392, %v4600
    %v4602 = vpop.f32.mrb[0].mxu0
    %4603 = vdwg.mxu0
    %v4604 = vmax.f32 %v4478, 0.0
    %v4605 = vmax.f32 %v4481, 0.0
    %v4606 = vmax.f32 %v4486, 0.0
    %v4607 = vmax.f32 %v4489, 0.0
    %v4608 = vmax.f32 %v4494, 0.0
    %v4609 = vmax.f32 %v4497, 0.0
    %v4610 = vmax.f32 %v4502, 0.0
    %v4611 = vmax.f32 %v4505, 0.0
    %v4612 = vmax.f32 %v4510, 0.0
    %v4613 = vmax.f32 %v4513, 0.0
    %v4614 = vmax.f32 %v4518, 0.0
    %v4615 = vmax.f32 %v4521, 0.0
    %v4616 = vmax.f32 %v4526, 0.0
    %v4617 = vmax.f32 %v4529, 0.0
    %v4618 = vmax.f32 %v4534, 0.0
    %v4619 = vmax.f32 %v4537, 0.0
    %v4620 = vmax.f32 %v4542, 0.0
    %v4621 = vmax.f32 %v4545, 0.0
    %v4622 = vmax.f32 %v4550, 0.0
    %v4623 = vmax.f32 %v4553, 0.0
    %v4624 = vmax.f32 %v4558, 0.0
    %v4625 = vmax.f32 %v4561, 0.0
    %v4626 = vmax.f32 %v4566, 0.0
    %v4627 = vmax.f32 %v4569, 0.0
    %v4628 = vmax.f32 %v4574, 0.0
    %v4629 = vmax.f32 %v4577, 0.0
    %v4630 = vmax.f32 %v4582, 0.0
    %v4631 = vmax.f32 %v4585, 0.0
    %v4632 = vmax.f32 %v4590, 0.0
    %v4633 = vmax.f32 %v4593, 0.0
    %v4634 = vmax.f32 %v4598, 0.0
    %v4635 = vmax.f32 %v4601, 0.0
    %v4636 = vlaneseq
    %v4637 = vshrl.u32 %v4636, 7
    %v4638 = vsub.s32 0, %v4637
    %v4639 = vrot.slane %v59, %v4638
    %v4640 = vlaneseq
    %v4641 = vshrl.u32 %v4640, 7
    %v4642 = vsub.s32 0, %v4641
    %v4643 = vrot.slane %v60, %v4642
    %v4644 = vmul.f32 %v4604, %v4639
    %v4645 = vmul.f32 %v4604, %v4643
    %v4646 = vmul.f32 %v4605, %v4639
    %v4647 = vmul.f32 %v4605, %v4643
    %v4648 = vmul.f32 %v4606, %v4639
    %v4649 = vmul.f32 %v4606, %v4643
    %v4650 = vmul.f32 %v4607, %v4639
    %v4651 = vmul.f32 %v4607, %v4643
    %v4652 = vmul.f32 %v4608, %v4639
    %v4653 = vmul.f32 %v4608, %v4643
    %v4654 = vmul.f32 %v4609, %v4639
    %v4655 = vmul.f32 %v4609, %v4643
    %v4656 = vmul.f32 %v4610, %v4639
    %v4657 = vmul.f32 %v4610, %v4643
    %v4658 = vmul.f32 %v4611, %v4639
    %v4659 = vmul.f32 %v4611, %v4643
    %v4660 = vmul.f32 %v4612, %v4639
    %v4661 = vmul.f32 %v4612, %v4643
    %v4662 = vmul.f32 %v4613, %v4639
    %v4663 = vmul.f32 %v4613, %v4643
    %v4664 = vmul.f32 %v4614, %v4639
    %v4665 = vmul.f32 %v4614, %v4643
    %v4666 = vmul.f32 %v4615, %v4639
    %v4667 = vmul.f32 %v4615, %v4643
    %v4668 = vmul.f32 %v4616, %v4639
    %v4669 = vmul.f32 %v4616, %v4643
    %v4670 = vmul.f32 %v4617, %v4639
    %v4671 = vmul.f32 %v4617, %v4643
    %v4672 = vmul.f32 %v4618, %v4639
    %v4673 = vmul.f32 %v4618, %v4643
    %v4674 = vmul.f32 %v4619, %v4639
    %v4675 = vmul.f32 %v4619, %v4643
    %v4676 = vmul.f32 %v4620, %v4639
    %v4677 = vmul.f32 %v4620, %v4643
    %v4678 = vmul.f32 %v4621, %v4639
    %v4679 = vmul.f32 %v4621, %v4643
    %v4680 = vmul.f32 %v4622, %v4639
    %v4681 = vmul.f32 %v4622, %v4643
    %v4682 = vmul.f32 %v4623, %v4639
    %v4683 = vmul.f32 %v4623, %v4643
    %v4684 = vmul.f32 %v4624, %v4639
    %v4685 = vmul.f32 %v4624, %v4643
    %v4686 = vmul.f32 %v4625, %v4639
    %v4687 = vmul.f32 %v4625, %v4643
    %v4688 = vmul.f32 %v4626, %v4639
    %v4689 = vmul.f32 %v4626, %v4643
    %v4690 = vmul.f32 %v4627, %v4639
    %v4691 = vmul.f32 %v4627, %v4643
    %v4692 = vmul.f32 %v4628, %v4639
    %v4693 = vmul.f32 %v4628, %v4643
    %v4694 = vmul.f32 %v4629, %v4639
    %v4695 = vmul.f32 %v4629, %v4643
    %v4696 = vmul.f32 %v4630, %v4639
    %v4697 = vmul.f32 %v4630, %v4643
    %v4698 = vmul.f32 %v4631, %v4639
    %v4699 = vmul.f32 %v4631, %v4643
    %v4700 = vmul.f32 %v4632, %v4639
    %v4701 = vmul.f32 %v4632, %v4643
    %v4702 = vmul.f32 %v4633, %v4639
    %v4703 = vmul.f32 %v4633, %v4643
    %v4704 = vmul.f32 %v4634, %v4639
    %v4705 = vmul.f32 %v4634, %v4643
    %v4706 = vmul.f32 %v4635, %v4639
    %v4707 = vmul.f32 %v4635, %v4643
    %v4708 = vlaneseq
    %v4709 = vshrl.u32 %v4708, 7
    %v4710 = vsub.s32 1, %v4709
    %v4711 = vrot.slane %v59, %v4710
    %v4712 = vlaneseq
    %v4713 = vshrl.u32 %v4712, 7
    %v4714 = vsub.s32 1, %v4713
    %v4715 = vrot.slane %v60, %v4714
    %v4716 = vadd.f32 %v4644, %v4711
    %v4717 = vadd.f32 %v4645, %v4715
    %v4718 = vadd.f32 %v4646, %v4711
    %v4719 = vadd.f32 %v4647, %v4715
    %v4720 = vadd.f32 %v4648, %v4711
    %v4721 = vadd.f32 %v4649, %v4715
    %v4722 = vadd.f32 %v4650, %v4711
    %v4723 = vadd.f32 %v4651, %v4715
    %v4724 = vadd.f32 %v4652, %v4711
    %v4725 = vadd.f32 %v4653, %v4715
    %v4726 = vadd.f32 %v4654, %v4711
    %v4727 = vadd.f32 %v4655, %v4715
    %v4728 = vadd.f32 %v4656, %v4711
    %v4729 = vadd.f32 %v4657, %v4715
    %v4730 = vadd.f32 %v4658, %v4711
    %v4731 = vadd.f32 %v4659, %v4715
    %v4732 = vadd.f32 %v4660, %v4711
    %v4733 = vadd.f32 %v4661, %v4715
    %v4734 = vadd.f32 %v4662, %v4711
    %v4735 = vadd.f32 %v4663, %v4715
    %v4736 = vadd.f32 %v4664, %v4711
    %v4737 = vadd.f32 %v4665, %v4715
    %v4738 = vadd.f32 %v4666, %v4711
    %v4739 = vadd.f32 %v4667, %v4715
    %v4740 = vadd.f32 %v4668, %v4711
    %v4741 = vadd.f32 %v4669, %v4715
    %v4742 = vadd.f32 %v4670, %v4711
    %v4743 = vadd.f32 %v4671, %v4715
    %v4744 = vadd.f32 %v4672, %v4711
    %v4745 = vadd.f32 %v4673, %v4715
    %v4746 = vadd.f32 %v4674, %v4711
    %v4747 = vadd.f32 %v4675, %v4715
    %v4748 = vadd.f32 %v4676, %v4711
    %v4749 = vadd.f32 %v4677, %v4715
    %v4750 = vadd.f32 %v4678, %v4711
    %v4751 = vadd.f32 %v4679, %v4715
    %v4752 = vadd.f32 %v4680, %v4711
    %v4753 = vadd.f32 %v4681, %v4715
    %v4754 = vadd.f32 %v4682, %v4711
    %v4755 = vadd.f32 %v4683, %v4715
    %v4756 = vadd.f32 %v4684, %v4711
    %v4757 = vadd.f32 %v4685, %v4715
    %v4758 = vadd.f32 %v4686, %v4711
    %v4759 = vadd.f32 %v4687, %v4715
    %v4760 = vadd.f32 %v4688, %v4711
    %v4761 = vadd.f32 %v4689, %v4715
    %v4762 = vadd.f32 %v4690, %v4711
    %v4763 = vadd.f32 %v4691, %v4715
    %v4764 = vadd.f32 %v4692, %v4711
    %v4765 = vadd.f32 %v4693, %v4715
    %v4766 = vadd.f32 %v4694, %v4711
    %v4767 = vadd.f32 %v4695, %v4715
    %v4768 = vadd.f32 %v4696, %v4711
    %v4769 = vadd.f32 %v4697, %v4715
    %v4770 = vadd.f32 %v4698, %v4711
    %v4771 = vadd.f32 %v4699, %v4715
    %v4772 = vadd.f32 %v4700, %v4711
    %v4773 = vadd.f32 %v4701, %v4715
    %v4774 = vadd.f32 %v4702, %v4711
    %v4775 = vadd.f32 %v4703, %v4715
    %v4776 = vadd.f32 %v4704, %v4711
    %v4777 = vadd.f32 %v4705, %v4715
    %v4778 = vadd.f32 %v4706, %v4711
    %v4779 = vadd.f32 %v4707, %v4715
    %v4780 = vmax.f32 %v4716, 0.0
    %v4781 = vmax.f32 %v4717, 0.0
    %v4782 = vmax.f32 %v4718, 0.0
    %v4783 = vmax.f32 %v4719, 0.0
    %v4784 = vmax.f32 %v4720, 0.0
    %v4785 = vmax.f32 %v4721, 0.0
    %v4786 = vmax.f32 %v4722, 0.0
    %v4787 = vmax.f32 %v4723, 0.0
    %v4788 = vmax.f32 %v4724, 0.0
    %v4789 = vmax.f32 %v4725, 0.0
    %v4790 = vmax.f32 %v4726, 0.0
    %v4791 = vmax.f32 %v4727, 0.0
    %v4792 = vmax.f32 %v4728, 0.0
    %v4793 = vmax.f32 %v4729, 0.0
    %v4794 = vmax.f32 %v4730, 0.0
    %v4795 = vmax.f32 %v4731, 0.0
    %v4796 = vmax.f32 %v4732, 0.0
    %v4797 = vmax.f32 %v4733, 0.0
    %v4798 = vmax.f32 %v4734, 0.0
    %v4799 = vmax.f32 %v4735, 0.0
    %v4800 = vmax.f32 %v4736, 0.0
    %v4801 = vmax.f32 %v4737, 0.0
    %v4802 = vmax.f32 %v4738, 0.0
    %v4803 = vmax.f32 %v4739, 0.0
    %v4804 = vmax.f32 %v4740, 0.0
    %v4805 = vmax.f32 %v4741, 0.0
    %v4806 = vmax.f32 %v4742, 0.0
    %v4807 = vmax.f32 %v4743, 0.0
    %v4808 = vmax.f32 %v4744, 0.0
    %v4809 = vmax.f32 %v4745, 0.0
    %v4810 = vmax.f32 %v4746, 0.0
    %v4811 = vmax.f32 %v4747, 0.0
    %v4812 = vmax.f32 %v4748, 0.0
    %v4813 = vmax.f32 %v4749, 0.0
    %v4814 = vmax.f32 %v4750, 0.0
    %v4815 = vmax.f32 %v4751, 0.0
    %v4816 = vmax.f32 %v4752, 0.0
    %v4817 = vmax.f32 %v4753, 0.0
    %v4818 = vmax.f32 %v4754, 0.0
    %v4819 = vmax.f32 %v4755, 0.0
    %v4820 = vmax.f32 %v4756, 0.0
    %v4821 = vmax.f32 %v4757, 0.0
    %v4822 = vmax.f32 %v4758, 0.0
    %v4823 = vmax.f32 %v4759, 0.0
    %v4824 = vmax.f32 %v4760, 0.0
    %v4825 = vmax.f32 %v4761, 0.0
    %v4826 = vmax.f32 %v4762, 0.0
    %v4827 = vmax.f32 %v4763, 0.0
    %v4828 = vmax.f32 %v4764, 0.0
    %v4829 = vmax.f32 %v4765, 0.0
    %v4830 = vmax.f32 %v4766, 0.0
    %v4831 = vmax.f32 %v4767, 0.0
    %v4832 = vmax.f32 %v4768, 0.0
    %v4833 = vmax.f32 %v4769, 0.0
    %v4834 = vmax.f32 %v4770, 0.0
    %v4835 = vmax.f32 %v4771, 0.0
    %v4836 = vmax.f32 %v4772, 0.0
    %v4837 = vmax.f32 %v4773, 0.0
    %v4838 = vmax.f32 %v4774, 0.0
    %v4839 = vmax.f32 %v4775, 0.0
    %v4840 = vmax.f32 %v4776, 0.0
    %v4841 = vmax.f32 %v4777, 0.0
    %v4842 = vmax.f32 %v4778, 0.0
    %v4843 = vmax.f32 %v4779, 0.0
    %v4844 = vld [vmem:[#allocation5] sm:$0xff]
    %v4845 = vld [vmem:[#allocation5 + $0x8] sm:$0xff]
    %v4846 = vld [vmem:[#allocation5 + $0x10] sm:$0xff]
    %v4847 = vld [vmem:[#allocation5 + $0x18] sm:$0xff]
    %v4848 = vld [vmem:[#allocation5 + $0x20] sm:$0xff]
    %v4849 = vld [vmem:[#allocation5 + $0x28] sm:$0xff]
    %v4850 = vld [vmem:[#allocation5 + $0x30] sm:$0xff]
    %v4851 = vld [vmem:[#allocation5 + $0x38] sm:$0xff]
    %v4852 = vld [vmem:[#allocation5 + $0x40] sm:$0xff]
    %v4853 = vld [vmem:[#allocation5 + $0x48] sm:$0xff]
    %v4854 = vld [vmem:[#allocation5 + $0x50] sm:$0xff]
    %v4855 = vld [vmem:[#allocation5 + $0x58] sm:$0xff]
    %v4856 = vld [vmem:[#allocation5 + $0x60] sm:$0xff]
    %v4857 = vld [vmem:[#allocation5 + $0x68] sm:$0xff]
    %v4858 = vld [vmem:[#allocation5 + $0x70] sm:$0xff]
    %v4859 = vld [vmem:[#allocation5 + $0x78] sm:$0xff]
    %v4860 = vld [vmem:[#allocation5 + $0x80] sm:$0xff]
    %v4861 = vld [vmem:[#allocation5 + $0x88] sm:$0xff]
    %v4862 = vld [vmem:[#allocation5 + $0x90] sm:$0xff]
    %v4863 = vld [vmem:[#allocation5 + $0x98] sm:$0xff]
    %v4864 = vld [vmem:[#allocation5 + $0xa0] sm:$0xff]
    %v4865 = vld [vmem:[#allocation5 + $0xa8] sm:$0xff]
    %v4866 = vld [vmem:[#allocation5 + $0xb0] sm:$0xff]
    %v4867 = vld [vmem:[#allocation5 + $0xb8] sm:$0xff]
    %v4868 = vld [vmem:[#allocation5 + $0xc0] sm:$0xff]
    %v4869 = vld [vmem:[#allocation5 + $0xc8] sm:$0xff]
    %v4870 = vld [vmem:[#allocation5 + $0xd0] sm:$0xff]
    %v4871 = vld [vmem:[#allocation5 + $0xd8] sm:$0xff]
    %v4872 = vld [vmem:[#allocation5 + $0xe0] sm:$0xff]
    %v4873 = vld [vmem:[#allocation5 + $0xe8] sm:$0xff]
    %v4874 = vld [vmem:[#allocation5 + $0xf0] sm:$0xff]
    %v4875 = vld [vmem:[#allocation5 + $0xf8] sm:$0xff]
    %v4876 = vpack.c.bf16 %v4782, %v4780
    %v4877 = vpack.c.bf16 %v4783, %v4781
    %v4878 = vpack.c.bf16 %v4786, %v4784
    %v4879 = vpack.c.bf16 %v4787, %v4785
    %v4880 = vpack.c.bf16 %v4790, %v4788
    %v4881 = vpack.c.bf16 %v4791, %v4789
    %v4882 = vpack.c.bf16 %v4794, %v4792
    %v4883 = vpack.c.bf16 %v4795, %v4793
    %v4884 = vpack.c.bf16 %v4798, %v4796
    %v4885 = vpack.c.bf16 %v4799, %v4797
    %v4886 = vpack.c.bf16 %v4802, %v4800
    %v4887 = vpack.c.bf16 %v4803, %v4801
    %v4888 = vpack.c.bf16 %v4806, %v4804
    %v4889 = vpack.c.bf16 %v4807, %v4805
    %v4890 = vpack.c.bf16 %v4810, %v4808
    %v4891 = vpack.c.bf16 %v4811, %v4809
    %v4892 = vpack.c.bf16 %v4814, %v4812
    %v4893 = vpack.c.bf16 %v4815, %v4813
    %v4894 = vpack.c.bf16 %v4818, %v4816
    %v4895 = vpack.c.bf16 %v4819, %v4817
    %v4896 = vpack.c.bf16 %v4822, %v4820
    %v4897 = vpack.c.bf16 %v4823, %v4821
    %v4898 = vpack.c.bf16 %v4826, %v4824
    %v4899 = vpack.c.bf16 %v4827, %v4825
    %v4900 = vpack.c.bf16 %v4830, %v4828
    %v4901 = vpack.c.bf16 %v4831, %v4829
    %v4902 = vpack.c.bf16 %v4834, %v4832
    %v4903 = vpack.c.bf16 %v4835, %v4833
    %v4904 = vpack.c.bf16 %v4838, %v4836
    %v4905 = vpack.c.bf16 %v4839, %v4837
    %v4906 = vpack.c.bf16 %v4842, %v4840
    %v4907 = vpack.c.bf16 %v4843, %v4841
    %v4908 = vlaneseq
    %v4909 = vshrl.u32 %v4908, 7
    %v4910 = vsub.s32 2, %v4909
    %v4911 = vrot.slane %v59, %v4910
    %v4912 = vlaneseq
    %v4913 = vshrl.u32 %v4912, 7
    %v4914 = vsub.s32 2, %v4913
    %v4915 = vrot.slane %v60, %v4914
    %v4948 = vunpack.c.l.b16 %v4844
    %v4949 = vunpack.c.h.b16 %v4844
    %v4950 = vunpack.c.l.b16 %v4845
    %v4951 = vunpack.c.h.b16 %v4845
    %v4952 = vunpack.c.l.b16 %v4846
    %v4953 = vunpack.c.h.b16 %v4846
    %v4954 = vunpack.c.l.b16 %v4847
    %v4955 = vunpack.c.h.b16 %v4847
    %v4956 = vunpack.c.l.b16 %v4848
    %v4957 = vunpack.c.h.b16 %v4848
    %v4958 = vunpack.c.l.b16 %v4849
    %v4959 = vunpack.c.h.b16 %v4849
    %v4960 = vunpack.c.l.b16 %v4850
    %v4961 = vunpack.c.h.b16 %v4850
    %v4962 = vunpack.c.l.b16 %v4851
    %v4963 = vunpack.c.h.b16 %v4851
    %v4964 = vunpack.c.l.b16 %v4852
    %v4965 = vunpack.c.h.b16 %v4852
    %v4966 = vunpack.c.l.b16 %v4853
    %v4967 = vunpack.c.h.b16 %v4853
    %v4968 = vunpack.c.l.b16 %v4854
    %v4969 = vunpack.c.h.b16 %v4854
    %v4970 = vunpack.c.l.b16 %v4855
    %v4971 = vunpack.c.h.b16 %v4855
    %v4972 = vunpack.c.l.b16 %v4856
    %v4973 = vunpack.c.h.b16 %v4856
    %v4974 = vunpack.c.l.b16 %v4857
    %v4975 = vunpack.c.h.b16 %v4857
    %v4976 = vunpack.c.l.b16 %v4858
    %v4977 = vunpack.c.h.b16 %v4858
    %v4978 = vunpack.c.l.b16 %v4859
    %v4979 = vunpack.c.h.b16 %v4859
    %v4980 = vunpack.c.l.b16 %v4860
    %v4981 = vunpack.c.h.b16 %v4860
    %v4982 = vunpack.c.l.b16 %v4861
    %v4983 = vunpack.c.h.b16 %v4861
    %v4984 = vunpack.c.l.b16 %v4862
    %v4985 = vunpack.c.h.b16 %v4862
    %v4986 = vunpack.c.l.b16 %v4863
    %v4987 = vunpack.c.h.b16 %v4863
    %v4988 = vunpack.c.l.b16 %v4864
    %v4989 = vunpack.c.h.b16 %v4864
    %v4990 = vunpack.c.l.b16 %v4865
    %v4991 = vunpack.c.h.b16 %v4865
    %v4992 = vunpack.c.l.b16 %v4866
    %v4993 = vunpack.c.h.b16 %v4866
    %v4994 = vunpack.c.l.b16 %v4867
    %v4995 = vunpack.c.h.b16 %v4867
    %v4996 = vunpack.c.l.b16 %v4868
    %v4997 = vunpack.c.h.b16 %v4868
    %v4998 = vunpack.c.l.b16 %v4869
    %v4999 = vunpack.c.h.b16 %v4869
    %v5000 = vunpack.c.l.b16 %v4870
    %v5001 = vunpack.c.h.b16 %v4870
    %v5002 = vunpack.c.l.b16 %v4871
    %v5003 = vunpack.c.h.b16 %v4871
    %v5004 = vunpack.c.l.b16 %v4872
    %v5005 = vunpack.c.h.b16 %v4872
    %v5006 = vunpack.c.l.b16 %v4873
    %v5007 = vunpack.c.h.b16 %v4873
    %v5008 = vunpack.c.l.b16 %v4874
    %v5009 = vunpack.c.h.b16 %v4874
    %v5010 = vunpack.c.l.b16 %v4875
    %v5011 = vunpack.c.h.b16 %v4875
    %v5012 = vpack.c.b16 %v4950, %v4948
    %v5013 = vpack.c.b16 %v4951, %v4949
    %v5014 = vpack.c.b16 %v4954, %v4952
    %v5015 = vpack.c.b16 %v4955, %v4953
    %v5016 = vpack.c.b16 %v4958, %v4956
    %v5017 = vpack.c.b16 %v4959, %v4957
    %v5018 = vpack.c.b16 %v4962, %v4960
    %v5019 = vpack.c.b16 %v4963, %v4961
    %v5020 = vpack.c.b16 %v4966, %v4964
    %v5021 = vpack.c.b16 %v4967, %v4965
    %v5022 = vpack.c.b16 %v4970, %v4968
    %v5023 = vpack.c.b16 %v4971, %v4969
    %v5024 = vpack.c.b16 %v4974, %v4972
    %v5025 = vpack.c.b16 %v4975, %v4973
    %v5026 = vpack.c.b16 %v4978, %v4976
    %v5027 = vpack.c.b16 %v4979, %v4977
    %v5028 = vpack.c.b16 %v4982, %v4980
    %v5029 = vpack.c.b16 %v4983, %v4981
    %v5030 = vpack.c.b16 %v4986, %v4984
    %v5031 = vpack.c.b16 %v4987, %v4985
    %v5032 = vpack.c.b16 %v4990, %v4988
    %v5033 = vpack.c.b16 %v4991, %v4989
    %v5034 = vpack.c.b16 %v4994, %v4992
    %v5035 = vpack.c.b16 %v4995, %v4993
    %v5036 = vpack.c.b16 %v4998, %v4996
    %v5037 = vpack.c.b16 %v4999, %v4997
    %v5038 = vpack.c.b16 %v5002, %v5000
    %v5039 = vpack.c.b16 %v5003, %v5001
    %v5040 = vpack.c.b16 %v5006, %v5004
    %v5041 = vpack.c.b16 %v5007, %v5005
    %v5042 = vpack.c.b16 %v5010, %v5008
    %v5043 = vpack.c.b16 %v5011, %v5009
    %5076 = vmatprep.subr.bf16.mxu0 %v5013
    %5077 = vmatpush1.bf16.msra.mxu0 %v5012
    %5078 = vmatprep.subr.bf16.mxu0 %v5015
    %5079 = vmatpush1.bf16.msra.mxu0 %v5014
    %5080 = vmatprep.subr.bf16.mxu0 %v5017
    %5081 = vmatpush1.bf16.msra.mxu0 %v5016
    %5082 = vmatprep.subr.bf16.mxu0 %v5019
    %5083 = vmatpush1.bf16.msra.mxu0 %v5018
    %5084 = vmatprep.subr.bf16.mxu0 %v5021
    %5085 = vmatpush1.bf16.msra.mxu0 %v5020
    %5086 = vmatprep.subr.bf16.mxu0 %v5023
    %5087 = vmatpush1.bf16.msra.mxu0 %v5022
    %5088 = vmatprep.subr.bf16.mxu0 %v5025
    %5089 = vmatpush1.bf16.msra.mxu0 %v5024
    %5090 = vmatprep.subr.bf16.mxu0 %v5027
    %5091 = vmatpush1.bf16.msra.mxu0 %v5026
    %5092 = vmatprep.subr.bf16.mxu0 %v5029
    %5093 = vmatpush1.bf16.msra.mxu0 %v5028
    %5094 = vmatprep.subr.bf16.mxu0 %v5031
    %5095 = vmatpush1.bf16.msra.mxu0 %v5030
    %5096 = vmatprep.subr.bf16.mxu0 %v5033
    %5097 = vmatpush1.bf16.msra.mxu0 %v5032
    %5098 = vmatprep.subr.bf16.mxu0 %v5035
    %5099 = vmatpush1.bf16.msra.mxu0 %v5034
    %5100 = vmatprep.subr.bf16.mxu0 %v5037
    %5101 = vmatpush1.bf16.msra.mxu0 %v5036
    %5102 = vmatprep.subr.bf16.mxu0 %v5039
    %5103 = vmatpush1.bf16.msra.mxu0 %v5038
    %5104 = vmatprep.subr.bf16.mxu0 %v5041
    %5105 = vmatpush1.bf16.msra.mxu0 %v5040
    %5106 = vmatprep.subr.bf16.mxu0 %v5043
    %5107 = vmatpush1.bf16.msra.mxu0 %v5042
    %5108 = vmatprep.mubr.bf16.mxu0 %v4877
    %5109 = vmatmul.mubr.bf16.gmra.mrb[0].mxu0 %v4876
    %v5110 = vpop.f32.mrb[0].mxu0
    %v5111 = vadd.f32 %v4911, %v5110
    %v5112 = vpop.f32.mrb[0].mxu0
    %v5113 = vadd.f32 %v4915, %v5112
    %v5114 = vpop.f32.mrb[0].mxu0
    %v5115 = vadd.f32 %v4911, %v5114
    %v5116 = vpop.f32.mrb[0].mxu0
    %v5117 = vadd.f32 %v4915, %v5116
    %5118 = vmatprep.mubr.bf16.mxu0 %v4879
    %5119 = vmatmul.mubr.bf16.gmra.mrb[0].mxu0 %v4878
    %v5120 = vpop.f32.mrb[0].mxu0
    %v5121 = vadd.f32 %v4911, %v5120
    %v5122 = vpop.f32.mrb[0].mxu0
    %v5123 = vadd.f32 %v4915, %v5122
    %v5124 = vpop.f32.mrb[0].mxu0
    %v5125 = vadd.f32 %v4911, %v5124
    %v5126 = vpop.f32.mrb[0].mxu0
    %v5127 = vadd.f32 %v4915, %v5126
    %5128 = vmatprep.mubr.bf16.mxu0 %v4881
    %5129 = vmatmul.mubr.bf16.gmra.mrb[0].mxu0 %v4880
    %v5130 = vpop.f32.mrb[0].mxu0
    %v5131 = vadd.f32 %v4911, %v5130
    %v5132 = vpop.f32.mrb[0].mxu0
    %v5133 = vadd.f32 %v4915, %v5132
    %v5134 = vpop.f32.mrb[0].mxu0
    %v5135 = vadd.f32 %v4911, %v5134
    %v5136 = vpop.f32.mrb[0].mxu0
    %v5137 = vadd.f32 %v4915, %v5136
    %5138 = vmatprep.mubr.bf16.mxu0 %v4883
    %5139 = vmatmul.mubr.bf16.gmra.mrb[0].mxu0 %v4882
    %v5140 = vpop.f32.mrb[0].mxu0
    %v5141 = vadd.f32 %v4911, %v5140
    %v5142 = vpop.f32.mrb[0].mxu0
    %v5143 = vadd.f32 %v4915, %v5142
    %v5144 = vpop.f32.mrb[0].mxu0
    %v5145 = vadd.f32 %v4911, %v5144
    %v5146 = vpop.f32.mrb[0].mxu0
    %v5147 = vadd.f32 %v4915, %v5146
    %5148 = vmatprep.mubr.bf16.mxu0 %v4885
    %5149 = vmatmul.mubr.bf16.gmra.mrb[0].mxu0 %v4884
    %v5150 = vpop.f32.mrb[0].mxu0
    %v5151 = vadd.f32 %v4911, %v5150
    %v5152 = vpop.f32.mrb[0].mxu0
    %v5153 = vadd.f32 %v4915, %v5152
    %v5154 = vpop.f32.mrb[0].mxu0
    %v5155 = vadd.f32 %v4911, %v5154
    %v5156 = vpop.f32.mrb[0].mxu0
    %v5157 = vadd.f32 %v4915, %v5156
    %5158 = vmatprep.mubr.bf16.mxu0 %v4887
    %5159 = vmatmul.mubr.bf16.gmra.mrb[0].mxu0 %v4886
    %v5160 = vpop.f32.mrb[0].mxu0
    %v5161 = vadd.f32 %v4911, %v5160
    %v5162 = vpop.f32.mrb[0].mxu0
    %v5163 = vadd.f32 %v4915, %v5162
    %v5164 = vpop.f32.mrb[0].mxu0
    %v5165 = vadd.f32 %v4911, %v5164
    %v5166 = vpop.f32.mrb[0].mxu0
    %v5167 = vadd.f32 %v4915, %v5166
    %5168 = vmatprep.mubr.bf16.mxu0 %v4889
    %5169 = vmatmul.mubr.bf16.gmra.mrb[0].mxu0 %v4888
    %v5170 = vpop.f32.mrb[0].mxu0
    %v5171 = vadd.f32 %v4911, %v5170
    %v5172 = vpop.f32.mrb[0].mxu0
    %v5173 = vadd.f32 %v4915, %v5172
    %v5174 = vpop.f32.mrb[0].mxu0
    %v5175 = vadd.f32 %v4911, %v5174
    %v5176 = vpop.f32.mrb[0].mxu0
    %v5177 = vadd.f32 %v4915, %v5176
    %5178 = vmatprep.mubr.bf16.mxu0 %v4891
    %5179 = vmatmul.mubr.bf16.gmra.mrb[0].mxu0 %v4890
    %v5180 = vpop.f32.mrb[0].mxu0
    %v5181 = vadd.f32 %v4911, %v5180
    %v5182 = vpop.f32.mrb[0].mxu0
    %v5183 = vadd.f32 %v4915, %v5182
    %v5184 = vpop.f32.mrb[0].mxu0
    %v5185 = vadd.f32 %v4911, %v5184
    %v5186 = vpop.f32.mrb[0].mxu0
    %v5187 = vadd.f32 %v4915, %v5186
    %5188 = vmatprep.mubr.bf16.mxu0 %v4893
    %5189 = vmatmul.mubr.bf16.gmra.mrb[0].mxu0 %v4892
    %v5190 = vpop.f32.mrb[0].mxu0
    %v5191 = vadd.f32 %v4911, %v5190
    %v5192 = vpop.f32.mrb[0].mxu0
    %v5193 = vadd.f32 %v4915, %v5192
    %v5194 = vpop.f32.mrb[0].mxu0
    %v5195 = vadd.f32 %v4911, %v5194
    %v5196 = vpop.f32.mrb[0].mxu0
    %v5197 = vadd.f32 %v4915, %v5196
    %5198 = vmatprep.mubr.bf16.mxu0 %v4895
    %5199 = vmatmul.mubr.bf16.gmra.mrb[0].mxu0 %v4894
    %v5200 = vpop.f32.mrb[0].mxu0
    %v5201 = vadd.f32 %v4911, %v5200
    %v5202 = vpop.f32.mrb[0].mxu0
    %v5203 = vadd.f32 %v4915, %v5202
    %v5204 = vpop.f32.mrb[0].mxu0
    %v5205 = vadd.f32 %v4911, %v5204
    %v5206 = vpop.f32.mrb[0].mxu0
    %v5207 = vadd.f32 %v4915, %v5206
    %5208 = vmatprep.mubr.bf16.mxu0 %v4897
    %5209 = vmatmul.mubr.bf16.gmra.mrb[0].mxu0 %v4896
    %v5210 = vpop.f32.mrb[0].mxu0
    %v5211 = vadd.f32 %v4911, %v5210
    %v5212 = vpop.f32.mrb[0].mxu0
    %v5213 = vadd.f32 %v4915, %v5212
    %v5214 = vpop.f32.mrb[0].mxu0
    %v5215 = vadd.f32 %v4911, %v5214
    %v5216 = vpop.f32.mrb[0].mxu0
    %v5217 = vadd.f32 %v4915, %v5216
    %5218 = vmatprep.mubr.bf16.mxu0 %v4899
    %5219 = vmatmul.mubr.bf16.gmra.mrb[0].mxu0 %v4898
    %v5220 = vpop.f32.mrb[0].mxu0
    %v5221 = vadd.f32 %v4911, %v5220
    %v5222 = vpop.f32.mrb[0].mxu0
    %v5223 = vadd.f32 %v4915, %v5222
    %v5224 = vpop.f32.mrb[0].mxu0
    %v5225 = vadd.f32 %v4911, %v5224
    %v5226 = vpop.f32.mrb[0].mxu0
    %v5227 = vadd.f32 %v4915, %v5226
    %5228 = vmatprep.mubr.bf16.mxu0 %v4901
    %5229 = vmatmul.mubr.bf16.gmra.mrb[0].mxu0 %v4900
    %v5230 = vpop.f32.mrb[0].mxu0
    %v5231 = vadd.f32 %v4911, %v5230
    %v5232 = vpop.f32.mrb[0].mxu0
    %v5233 = vadd.f32 %v4915, %v5232
    %v5234 = vpop.f32.mrb[0].mxu0
    %v5235 = vadd.f32 %v4911, %v5234
    %v5236 = vpop.f32.mrb[0].mxu0
    %v5237 = vadd.f32 %v4915, %v5236
    %5238 = vmatprep.mubr.bf16.mxu0 %v4903
    %5239 = vmatmul.mubr.bf16.gmra.mrb[0].mxu0 %v4902
    %v5240 = vpop.f32.mrb[0].mxu0
    %v5241 = vadd.f32 %v4911, %v5240
    %v5242 = vpop.f32.mrb[0].mxu0
    %v5243 = vadd.f32 %v4915, %v5242
    %v5244 = vpop.f32.mrb[0].mxu0
    %v5245 = vadd.f32 %v4911, %v5244
    %v5246 = vpop.f32.mrb[0].mxu0
    %v5247 = vadd.f32 %v4915, %v5246
    %5248 = vmatprep.mubr.bf16.mxu0 %v4905
    %5249 = vmatmul.mubr.bf16.gmra.mrb[0].mxu0 %v4904
    %v5250 = vpop.f32.mrb[0].mxu0
    %v5251 = vadd.f32 %v4911, %v5250
    %v5252 = vpop.f32.mrb[0].mxu0
    %v5253 = vadd.f32 %v4915, %v5252
    %v5254 = vpop.f32.mrb[0].mxu0
    %v5255 = vadd.f32 %v4911, %v5254
    %v5256 = vpop.f32.mrb[0].mxu0
    %v5257 = vadd.f32 %v4915, %v5256
    %5258 = vmatprep.mubr.bf16.mxu0 %v4907
    %5259 = vmatmul.mubr.bf16.gmra.mrb[0].mxu0 %v4906
    %v5260 = vpop.f32.mrb[0].mxu0
    %v5261 = vadd.f32 %v4911, %v5260
    %v5262 = vpop.f32.mrb[0].mxu0
    %v5263 = vadd.f32 %v4915, %v5262
    %v5264 = vpop.f32.mrb[0].mxu0
    %v5265 = vadd.f32 %v4911, %v5264
    %v5266 = vpop.f32.mrb[0].mxu0
    %v5267 = vadd.f32 %v4915, %v5266
    %5268 = vdwg.mxu0
    %v5269 = vmax.f32 %v5111, 0.0
    %v5270 = vmax.f32 %v5113, 0.0
    %v5271 = vmax.f32 %v5115, 0.0
    %v5272 = vmax.f32 %v5117, 0.0
    %v5273 = vmax.f32 %v5121, 0.0
    %v5274 = vmax.f32 %v5123, 0.0
    %v5275 = vmax.f32 %v5125, 0.0
    %v5276 = vmax.f32 %v5127, 0.0
    %v5277 = vmax.f32 %v5131, 0.0
    %v5278 = vmax.f32 %v5133, 0.0
    %v5279 = vmax.f32 %v5135, 0.0
    %v5280 = vmax.f32 %v5137, 0.0
    %v5281 = vmax.f32 %v5141, 0.0
    %v5282 = vmax.f32 %v5143, 0.0
    %v5283 = vmax.f32 %v5145, 0.0
    %v5284 = vmax.f32 %v5147, 0.0
    %v5285 = vmax.f32 %v5151, 0.0
    %v5286 = vmax.f32 %v5153, 0.0
    %v5287 = vmax.f32 %v5155, 0.0
    %v5288 = vmax.f32 %v5157, 0.0
    %v5289 = vmax.f32 %v5161, 0.0
    %v5290 = vmax.f32 %v5163, 0.0
    %v5291 = vmax.f32 %v5165, 0.0
    %v5292 = vmax.f32 %v5167, 0.0
    %v5293 = vmax.f32 %v5171, 0.0
    %v5294 = vmax.f32 %v5173, 0.0
    %v5295 = vmax.f32 %v5175, 0.0
    %v5296 = vmax.f32 %v5177, 0.0
    %v5297 = vmax.f32 %v5181, 0.0
    %v5298 = vmax.f32 %v5183, 0.0
    %v5299 = vmax.f32 %v5185, 0.0
    %v5300 = vmax.f32 %v5187, 0.0
    %v5301 = vmax.f32 %v5191, 0.0
    %v5302 = vmax.f32 %v5193, 0.0
    %v5303 = vmax.f32 %v5195, 0.0
    %v5304 = vmax.f32 %v5197, 0.0
    %v5305 = vmax.f32 %v5201, 0.0
    %v5306 = vmax.f32 %v5203, 0.0
    %v5307 = vmax.f32 %v5205, 0.0
    %v5308 = vmax.f32 %v5207, 0.0
    %v5309 = vmax.f32 %v5211, 0.0
    %v5310 = vmax.f32 %v5213, 0.0
    %v5311 = vmax.f32 %v5215, 0.0
    %v5312 = vmax.f32 %v5217, 0.0
    %v5313 = vmax.f32 %v5221, 0.0
    %v5314 = vmax.f32 %v5223, 0.0
    %v5315 = vmax.f32 %v5225, 0.0
    %v5316 = vmax.f32 %v5227, 0.0
    %v5317 = vmax.f32 %v5231, 0.0
    %v5318 = vmax.f32 %v5233, 0.0
    %v5319 = vmax.f32 %v5235, 0.0
    %v5320 = vmax.f32 %v5237, 0.0
    %v5321 = vmax.f32 %v5241, 0.0
    %v5322 = vmax.f32 %v5243, 0.0
    %v5323 = vmax.f32 %v5245, 0.0
    %v5324 = vmax.f32 %v5247, 0.0
    %v5325 = vmax.f32 %v5251, 0.0
    %v5326 = vmax.f32 %v5253, 0.0
    %v5327 = vmax.f32 %v5255, 0.0
    %v5328 = vmax.f32 %v5257, 0.0
    %v5329 = vmax.f32 %v5261, 0.0
    %v5330 = vmax.f32 %v5263, 0.0
    %v5331 = vmax.f32 %v5265, 0.0
    %v5332 = vmax.f32 %v5267, 0.0
    %s5333 = scalar_lea.vmem [#allocation5], 256
    %v5334 = vld [vmem:[%s5333] sm:$0xff]
    %v5335 = vld [vmem:[%s5333 + $0x8] sm:$0xff]
    %v5336 = vld [vmem:[%s5333 + $0x10] sm:$0xff]
    %v5337 = vld [vmem:[%s5333 + $0x18] sm:$0xff]
    %v5338 = vld [vmem:[%s5333 + $0x20] sm:$0xff]
    %v5339 = vld [vmem:[%s5333 + $0x28] sm:$0xff]
    %v5340 = vld [vmem:[%s5333 + $0x30] sm:$0xff]
    %v5341 = vld [vmem:[%s5333 + $0x38] sm:$0xff]
    %v5342 = vld [vmem:[%s5333 + $0x40] sm:$0xff]
    %v5343 = vld [vmem:[%s5333 + $0x48] sm:$0xff]
    %v5344 = vld [vmem:[%s5333 + $0x50] sm:$0xff]
    %v5345 = vld [vmem:[%s5333 + $0x58] sm:$0xff]
    %v5346 = vld [vmem:[%s5333 + $0x60] sm:$0xff]
    %v5347 = vld [vmem:[%s5333 + $0x68] sm:$0xff]
    %v5348 = vld [vmem:[%s5333 + $0x70] sm:$0xff]
    %v5349 = vld [vmem:[%s5333 + $0x78] sm:$0xff]
    %v5350 = vld [vmem:[%s5333 + $0x80] sm:$0xff]
    %v5351 = vld [vmem:[%s5333 + $0x88] sm:$0xff]
    %v5352 = vld [vmem:[%s5333 + $0x90] sm:$0xff]
    %v5353 = vld [vmem:[%s5333 + $0x98] sm:$0xff]
    %v5354 = vld [vmem:[%s5333 + $0xa0] sm:$0xff]
    %v5355 = vld [vmem:[%s5333 + $0xa8] sm:$0xff]
    %v5356 = vld [vmem:[%s5333 + $0xb0] sm:$0xff]
    %v5357 = vld [vmem:[%s5333 + $0xb8] sm:$0xff]
    %v5358 = vld [vmem:[%s5333 + $0xc0] sm:$0xff]
    %v5359 = vld [vmem:[%s5333 + $0xc8] sm:$0xff]
    %v5360 = vld [vmem:[%s5333 + $0xd0] sm:$0xff]
    %v5361 = vld [vmem:[%s5333 + $0xd8] sm:$0xff]
    %v5362 = vld [vmem:[%s5333 + $0xe0] sm:$0xff]
    %v5363 = vld [vmem:[%s5333 + $0xe8] sm:$0xff]
    %v5364 = vld [vmem:[%s5333 + $0xf0] sm:$0xff]
    %v5365 = vld [vmem:[%s5333 + $0xf8] sm:$0xff]
    %v5366 = vpack.c.bf16 %v5271, %v5269
    %v5367 = vpack.c.bf16 %v5272, %v5270
    %v5368 = vpack.c.bf16 %v5275, %v5273
    %v5369 = vpack.c.bf16 %v5276, %v5274
    %v5370 = vpack.c.bf16 %v5279, %v5277
    %v5371 = vpack.c.bf16 %v5280, %v5278
    %v5372 = vpack.c.bf16 %v5283, %v5281
    %v5373 = vpack.c.bf16 %v5284, %v5282
    %v5374 = vpack.c.bf16 %v5287, %v5285
    %v5375 = vpack.c.bf16 %v5288, %v5286
    %v5376 = vpack.c.bf16 %v5291, %v5289
    %v5377 = vpack.c.bf16 %v5292, %v5290
    %v5378 = vpack.c.bf16 %v5295, %v5293
    %v5379 = vpack.c.bf16 %v5296, %v5294
    %v5380 = vpack.c.bf16 %v5299, %v5297
    %v5381 = vpack.c.bf16 %v5300, %v5298
    %v5382 = vpack.c.bf16 %v5303, %v5301
    %v5383 = vpack.c.bf16 %v5304, %v5302
    %v5384 = vpack.c.bf16 %v5307, %v5305
    %v5385 = vpack.c.bf16 %v5308, %v5306
    %v5386 = vpack.c.bf16 %v5311, %v5309
    %v5387 = vpack.c.bf16 %v5312, %v5310
    %v5388 = vpack.c.bf16 %v5315, %v5313
    %v5389 = vpack.c.bf16 %v5316, %v5314
    %v5390 = vpack.c.bf16 %v5319, %v5317
    %v5391 = vpack.c.bf16 %v5320, %v5318
    %v5392 = vpack.c.bf16 %v5323, %v5321
    %v5393 = vpack.c.bf16 %v5324, %v5322
    %v5394 = vpack.c.bf16 %v5327, %v5325
    %v5395 = vpack.c.bf16 %v5328, %v5326
    %v5396 = vpack.c.bf16 %v5331, %v5329
    %v5397 = vpack.c.bf16 %v5332, %v5330
    %v5430 = vunpack.c.l.b16 %v5334
    %v5431 = vunpack.c.h.b16 %v5334
    %v5432 = vunpack.c.l.b16 %v5335
    %v5433 = vunpack.c.h.b16 %v5335
    %v5434 = vunpack.c.l.b16 %v5336
    %v5435 = vunpack.c.h.b16 %v5336
    %v5436 = vunpack.c.l.b16 %v5337
    %v5437 = vunpack.c.h.b16 %v5337
    %v5438 = vunpack.c.l.b16 %v5338
    %v5439 = vunpack.c.h.b16 %v5338
    %v5440 = vunpack.c.l.b16 %v5339
    %v5441 = vunpack.c.h.b16 %v5339
    %v5442 = vunpack.c.l.b16 %v5340
    %v5443 = vunpack.c.h.b16 %v5340
    %v5444 = vunpack.c.l.b16 %v5341
    %v5445 = vunpack.c.h.b16 %v5341
    %v5446 = vunpack.c.l.b16 %v5342
    %v5447 = vunpack.c.h.b16 %v5342
    %v5448 = vunpack.c.l.b16 %v5343
    %v5449 = vunpack.c.h.b16 %v5343
    %v5450 = vunpack.c.l.b16 %v5344
    %v5451 = vunpack.c.h.b16 %v5344
    %v5452 = vunpack.c.l.b16 %v5345
    %v5453 = vunpack.c.h.b16 %v5345
    %v5454 = vunpack.c.l.b16 %v5346
    %v5455 = vunpack.c.h.b16 %v5346
    %v5456 = vunpack.c.l.b16 %v5347
    %v5457 = vunpack.c.h.b16 %v5347
    %v5458 = vunpack.c.l.b16 %v5348
    %v5459 = vunpack.c.h.b16 %v5348
    %v5460 = vunpack.c.l.b16 %v5349
    %v5461 = vunpack.c.h.b16 %v5349
    %v5462 = vunpack.c.l.b16 %v5350
    %v5463 = vunpack.c.h.b16 %v5350
    %v5464 = vunpack.c.l.b16 %v5351
    %v5465 = vunpack.c.h.b16 %v5351
    %v5466 = vunpack.c.l.b16 %v5352
    %v5467 = vunpack.c.h.b16 %v5352
    %v5468 = vunpack.c.l.b16 %v5353
    %v5469 = vunpack.c.h.b16 %v5353
    %v5470 = vunpack.c.l.b16 %v5354
    %v5471 = vunpack.c.h.b16 %v5354
    %v5472 = vunpack.c.l.b16 %v5355
    %v5473 = vunpack.c.h.b16 %v5355
    %v5474 = vunpack.c.l.b16 %v5356
    %v5475 = vunpack.c.h.b16 %v5356
    %v5476 = vunpack.c.l.b16 %v5357
    %v5477 = vunpack.c.h.b16 %v5357
    %v5478 = vunpack.c.l.b16 %v5358
    %v5479 = vunpack.c.h.b16 %v5358
    %v5480 = vunpack.c.l.b16 %v5359
    %v5481 = vunpack.c.h.b16 %v5359
    %v5482 = vunpack.c.l.b16 %v5360
    %v5483 = vunpack.c.h.b16 %v5360
    %v5484 = vunpack.c.l.b16 %v5361
    %v5485 = vunpack.c.h.b16 %v5361
    %v5486 = vunpack.c.l.b16 %v5362
    %v5487 = vunpack.c.h.b16 %v5362
    %v5488 = vunpack.c.l.b16 %v5363
    %v5489 = vunpack.c.h.b16 %v5363
    %v5490 = vunpack.c.l.b16 %v5364
    %v5491 = vunpack.c.h.b16 %v5364
    %v5492 = vunpack.c.l.b16 %v5365
    %v5493 = vunpack.c.h.b16 %v5365
    %v5494 = vpack.c.b16 %v5432, %v5430
    %v5495 = vpack.c.b16 %v5433, %v5431
    %v5496 = vpack.c.b16 %v5436, %v5434
    %v5497 = vpack.c.b16 %v5437, %v5435
    %v5498 = vpack.c.b16 %v5440, %v5438
    %v5499 = vpack.c.b16 %v5441, %v5439
    %v5500 = vpack.c.b16 %v5444, %v5442
    %v5501 = vpack.c.b16 %v5445, %v5443
    %v5502 = vpack.c.b16 %v5448, %v5446
    %v5503 = vpack.c.b16 %v5449, %v5447
    %v5504 = vpack.c.b16 %v5452, %v5450
    %v5505 = vpack.c.b16 %v5453, %v5451
    %v5506 = vpack.c.b16 %v5456, %v5454
    %v5507 = vpack.c.b16 %v5457, %v5455
    %v5508 = vpack.c.b16 %v5460, %v5458
    %v5509 = vpack.c.b16 %v5461, %v5459
    %v5510 = vpack.c.b16 %v5464, %v5462
    %v5511 = vpack.c.b16 %v5465, %v5463
    %v5512 = vpack.c.b16 %v5468, %v5466
    %v5513 = vpack.c.b16 %v5469, %v5467
    %v5514 = vpack.c.b16 %v5472, %v5470
    %v5515 = vpack.c.b16 %v5473, %v5471
    %v5516 = vpack.c.b16 %v5476, %v5474
    %v5517 = vpack.c.b16 %v5477, %v5475
    %v5518 = vpack.c.b16 %v5480, %v5478
    %v5519 = vpack.c.b16 %v5481, %v5479
    %v5520 = vpack.c.b16 %v5484, %v5482
    %v5521 = vpack.c.b16 %v5485, %v5483
    %v5522 = vpack.c.b16 %v5488, %v5486
    %v5523 = vpack.c.b16 %v5489, %v5487
    %v5524 = vpack.c.b16 %v5492, %v5490
    %v5525 = vpack.c.b16 %v5493, %v5491
    %5558 = vmatprep.subr.bf16.mxu0 %v5495
    %5559 = vmatpush1.bf16.msra.mxu0 %v5494
    %5560 = vmatprep.subr.bf16.mxu0 %v5497
    %5561 = vmatpush1.bf16.msra.mxu0 %v5496
    %5562 = vmatprep.subr.bf16.mxu0 %v5499
    %5563 = vmatpush1.bf16.msra.mxu0 %v5498
    %5564 = vmatprep.subr.bf16.mxu0 %v5501
    %5565 = vmatpush1.bf16.msra.mxu0 %v5500
    %5566 = vmatprep.subr.bf16.mxu0 %v5503
    %5567 = vmatpush1.bf16.msra.mxu0 %v5502
    %5568 = vmatprep.subr.bf16.mxu0 %v5505
    %5569 = vmatpush1.bf16.msra.mxu0 %v5504
    %5570 = vmatprep.subr.bf16.mxu0 %v5507
    %5571 = vmatpush1.bf16.msra.mxu0 %v5506
    %5572 = vmatprep.subr.bf16.mxu0 %v5509
    %5573 = vmatpush1.bf16.msra.mxu0 %v5508
    %5574 = vmatprep.subr.bf16.mxu0 %v5511
    %5575 = vmatpush1.bf16.msra.mxu0 %v5510
    %5576 = vmatprep.subr.bf16.mxu0 %v5513
    %5577 = vmatpush1.bf16.msra.mxu0 %v5512
    %5578 = vmatprep.subr.bf16.mxu0 %v5515
    %5579 = vmatpush1.bf16.msra.mxu0 %v5514
    %5580 = vmatprep.subr.bf16.mxu0 %v5517
    %5581 = vmatpush1.bf16.msra.mxu0 %v5516
    %5582 = vmatprep.subr.bf16.mxu0 %v5519
    %5583 = vmatpush1.bf16.msra.mxu0 %v5518
    %5584 = vmatprep.subr.bf16.mxu0 %v5521
    %5585 = vmatpush1.bf16.msra.mxu0 %v5520
    %5586 = vmatprep.subr.bf16.mxu0 %v5523
    %5587 = vmatpush1.bf16.msra.mxu0 %v5522
    %5588 = vmatprep.subr.bf16.mxu0 %v5525
    %5589 = vmatpush1.bf16.msra.mxu0 %v5524
    %5590 = vmatprep.mubr.bf16.mxu0 %v5367
    %5591 = vmatmul.mubr.bf16.gmra.mrb[0].mxu0 %v5366
    %v5592 = vpop.f32.mrb[0].mxu0
    %v5593 = vadd.f32 %v4604, %v5592
    %v5594 = vpop.f32.mrb[0].mxu0
    %v5595 = vadd.f32 %v4604, %v5594
    %v5596 = vpop.f32.mrb[0].mxu0
    %v5597 = vadd.f32 %v4605, %v5596
    %v5598 = vpop.f32.mrb[0].mxu0
    %v5599 = vadd.f32 %v4605, %v5598
    %5600 = vmatprep.mubr.bf16.mxu0 %v5369
    %5601 = vmatmul.mubr.bf16.gmra.mrb[0].mxu0 %v5368
    %v5602 = vpop.f32.mrb[0].mxu0
    %v5603 = vadd.f32 %v4606, %v5602
    %v5604 = vpop.f32.mrb[0].mxu0
    %v5605 = vadd.f32 %v4606, %v5604
    %v5606 = vpop.f32.mrb[0].mxu0
    %v5607 = vadd.f32 %v4607, %v5606
    %v5608 = vpop.f32.mrb[0].mxu0
    %v5609 = vadd.f32 %v4607, %v5608
    %5610 = vmatprep.mubr.bf16.mxu0 %v5371
    %5611 = vmatmul.mubr.bf16.gmra.mrb[0].mxu0 %v5370
    %v5612 = vpop.f32.mrb[0].mxu0
    %v5613 = vadd.f32 %v4608, %v5612
    %v5614 = vpop.f32.mrb[0].mxu0
    %v5615 = vadd.f32 %v4608, %v5614
    %v5616 = vpop.f32.mrb[0].mxu0
    %v5617 = vadd.f32 %v4609, %v5616
    %v5618 = vpop.f32.mrb[0].mxu0
    %v5619 = vadd.f32 %v4609, %v5618
    %5620 = vmatprep.mubr.bf16.mxu0 %v5373
    %5621 = vmatmul.mubr.bf16.gmra.mrb[0].mxu0 %v5372
    %v5622 = vpop.f32.mrb[0].mxu0
    %v5623 = vadd.f32 %v4610, %v5622
    %v5624 = vpop.f32.mrb[0].mxu0
    %v5625 = vadd.f32 %v4610, %v5624
    %v5626 = vpop.f32.mrb[0].mxu0
    %v5627 = vadd.f32 %v4611, %v5626
    %v5628 = vpop.f32.mrb[0].mxu0
    %v5629 = vadd.f32 %v4611, %v5628
    %5630 = vmatprep.mubr.bf16.mxu0 %v5375
    %5631 = vmatmul.mubr.bf16.gmra.mrb[0].mxu0 %v5374
    %v5632 = vpop.f32.mrb[0].mxu0
    %v5633 = vadd.f32 %v4612, %v5632
    %v5634 = vpop.f32.mrb[0].mxu0
    %v5635 = vadd.f32 %v4612, %v5634
    %v5636 = vpop.f32.mrb[0].mxu0
    %v5637 = vadd.f32 %v4613, %v5636
    %v5638 = vpop.f32.mrb[0].mxu0
    %v5639 = vadd.f32 %v4613, %v5638
    %5640 = vmatprep.mubr.bf16.mxu0 %v5377
    %5641 = vmatmul.mubr.bf16.gmra.mrb[0].mxu0 %v5376
    %v5642 = vpop.f32.mrb[0].mxu0
    %v5643 = vadd.f32 %v4614, %v5642
    %v5644 = vpop.f32.mrb[0].mxu0
    %v5645 = vadd.f32 %v4614, %v5644
    %v5646 = vpop.f32.mrb[0].mxu0
    %v5647 = vadd.f32 %v4615, %v5646
    %v5648 = vpop.f32.mrb[0].mxu0
    %v5649 = vadd.f32 %v4615, %v5648
    %5650 = vmatprep.mubr.bf16.mxu0 %v5379
    %5651 = vmatmul.mubr.bf16.gmra.mrb[0].mxu0 %v5378
    %v5652 = vpop.f32.mrb[0].mxu0
    %v5653 = vadd.f32 %v4616, %v5652
    %v5654 = vpop.f32.mrb[0].mxu0
    %v5655 = vadd.f32 %v4616, %v5654
    %v5656 = vpop.f32.mrb[0].mxu0
    %v5657 = vadd.f32 %v4617, %v5656
    %v5658 = vpop.f32.mrb[0].mxu0
    %v5659 = vadd.f32 %v4617, %v5658
    %5660 = vmatprep.mubr.bf16.mxu0 %v5381
    %5661 = vmatmul.mubr.bf16.gmra.mrb[0].mxu0 %v5380
    %v5662 = vpop.f32.mrb[0].mxu0
    %v5663 = vadd.f32 %v4618, %v5662
    %v5664 = vpop.f32.mrb[0].mxu0
    %v5665 = vadd.f32 %v4618, %v5664
    %v5666 = vpop.f32.mrb[0].mxu0
    %v5667 = vadd.f32 %v4619, %v5666
    %v5668 = vpop.f32.mrb[0].mxu0
    %v5669 = vadd.f32 %v4619, %v5668
    %5670 = vmatprep.mubr.bf16.mxu0 %v5383
    %5671 = vmatmul.mubr.bf16.gmra.mrb[0].mxu0 %v5382
    %v5672 = vpop.f32.mrb[0].mxu0
    %v5673 = vadd.f32 %v4620, %v5672
    %v5674 = vpop.f32.mrb[0].mxu0
    %v5675 = vadd.f32 %v4620, %v5674
    %v5676 = vpop.f32.mrb[0].mxu0
    %v5677 = vadd.f32 %v4621, %v5676
    %v5678 = vpop.f32.mrb[0].mxu0
    %v5679 = vadd.f32 %v4621, %v5678
    %5680 = vmatprep.mubr.bf16.mxu0 %v5385
    %5681 = vmatmul.mubr.bf16.gmra.mrb[0].mxu0 %v5384
    %v5682 = vpop.f32.mrb[0].mxu0
    %v5683 = vadd.f32 %v4622, %v5682
    %v5684 = vpop.f32.mrb[0].mxu0
    %v5685 = vadd.f32 %v4622, %v5684
    %v5686 = vpop.f32.mrb[0].mxu0
    %v5687 = vadd.f32 %v4623, %v5686
    %v5688 = vpop.f32.mrb[0].mxu0
    %v5689 = vadd.f32 %v4623, %v5688
    %5690 = vmatprep.mubr.bf16.mxu0 %v5387
    %5691 = vmatmul.mubr.bf16.gmra.mrb[0].mxu0 %v5386
    %v5692 = vpop.f32.mrb[0].mxu0
    %v5693 = vadd.f32 %v4624, %v5692
    %v5694 = vpop.f32.mrb[0].mxu0
    %v5695 = vadd.f32 %v4624, %v5694
    %v5696 = vpop.f32.mrb[0].mxu0
    %v5697 = vadd.f32 %v4625, %v5696
    %v5698 = vpop.f32.mrb[0].mxu0
    %v5699 = vadd.f32 %v4625, %v5698
    %5700 = vmatprep.mubr.bf16.mxu0 %v5389
    %5701 = vmatmul.mubr.bf16.gmra.mrb[0].mxu0 %v5388
    %v5702 = vpop.f32.mrb[0].mxu0
    %v5703 = vadd.f32 %v4626, %v5702
    %v5704 = vpop.f32.mrb[0].mxu0
    %v5705 = vadd.f32 %v4626, %v5704
    %v5706 = vpop.f32.mrb[0].mxu0
    %v5707 = vadd.f32 %v4627, %v5706
    %v5708 = vpop.f32.mrb[0].mxu0
    %v5709 = vadd.f32 %v4627, %v5708
    %5710 = vmatprep.mubr.bf16.mxu0 %v5391
    %5711 = vmatmul.mubr.bf16.gmra.mrb[0].mxu0 %v5390
    %v5712 = vpop.f32.mrb[0].mxu0
    %v5713 = vadd.f32 %v4628, %v5712
    %v5714 = vpop.f32.mrb[0].mxu0
    %v5715 = vadd.f32 %v4628, %v5714
    %v5716 = vpop.f32.mrb[0].mxu0
    %v5717 = vadd.f32 %v4629, %v5716
    %v5718 = vpop.f32.mrb[0].mxu0
    %v5719 = vadd.f32 %v4629, %v5718
    %5720 = vmatprep.mubr.bf16.mxu0 %v5393
    %5721 = vmatmul.mubr.bf16.gmra.mrb[0].mxu0 %v5392
    %v5722 = vpop.f32.mrb[0].mxu0
    %v5723 = vadd.f32 %v4630, %v5722
    %v5724 = vpop.f32.mrb[0].mxu0
    %v5725 = vadd.f32 %v4630, %v5724
    %v5726 = vpop.f32.mrb[0].mxu0
    %v5727 = vadd.f32 %v4631, %v5726
    %v5728 = vpop.f32.mrb[0].mxu0
    %v5729 = vadd.f32 %v4631, %v5728
    %5730 = vmatprep.mubr.bf16.mxu0 %v5395
    %5731 = vmatmul.mubr.bf16.gmra.mrb[0].mxu0 %v5394
    %v5732 = vpop.f32.mrb[0].mxu0
    %v5733 = vadd.f32 %v4632, %v5732
    %v5734 = vpop.f32.mrb[0].mxu0
    %v5735 = vadd.f32 %v4632, %v5734
    %v5736 = vpop.f32.mrb[0].mxu0
    %v5737 = vadd.f32 %v4633, %v5736
    %v5738 = vpop.f32.mrb[0].mxu0
    %v5739 = vadd.f32 %v4633, %v5738
    %5740 = vmatprep.mubr.bf16.mxu0 %v5397
    %5741 = vmatmul.mubr.bf16.gmra.mrb[0].mxu0 %v5396
    %v5742 = vpop.f32.mrb[0].mxu0
    %v5743 = vadd.f32 %v4634, %v5742
    %v5744 = vpop.f32.mrb[0].mxu0
    %v5745 = vadd.f32 %v4634, %v5744
    %v5746 = vpop.f32.mrb[0].mxu0
    %v5747 = vadd.f32 %v4635, %v5746
    %v5748 = vpop.f32.mrb[0].mxu0
    %v5749 = vadd.f32 %v4635, %v5748
    %5750 = vdwg.mxu0
    %v5751 = vmax.f32 %v5593, 0.0
    %v5752 = vmax.f32 %v5595, 0.0
    %v5753 = vmax.f32 %v5597, 0.0
    %v5754 = vmax.f32 %v5599, 0.0
    %v5755 = vmax.f32 %v5603, 0.0
    %v5756 = vmax.f32 %v5605, 0.0
    %v5757 = vmax.f32 %v5607, 0.0
    %v5758 = vmax.f32 %v5609, 0.0
    %v5759 = vmax.f32 %v5613, 0.0
    %v5760 = vmax.f32 %v5615, 0.0
    %v5761 = vmax.f32 %v5617, 0.0
    %v5762 = vmax.f32 %v5619, 0.0
    %v5763 = vmax.f32 %v5623, 0.0
    %v5764 = vmax.f32 %v5625, 0.0
    %v5765 = vmax.f32 %v5627, 0.0
    %v5766 = vmax.f32 %v5629, 0.0
    %v5767 = vmax.f32 %v5633, 0.0
    %v5768 = vmax.f32 %v5635, 0.0
    %v5769 = vmax.f32 %v5637, 0.0
    %v5770 = vmax.f32 %v5639, 0.0
    %v5771 = vmax.f32 %v5643, 0.0
    %v5772 = vmax.f32 %v5645, 0.0
    %v5773 = vmax.f32 %v5647, 0.0
    %v5774 = vmax.f32 %v5649, 0.0
    %v5775 = vmax.f32 %v5653, 0.0
    %v5776 = vmax.f32 %v5655, 0.0
    %v5777 = vmax.f32 %v5657, 0.0
    %v5778 = vmax.f32 %v5659, 0.0
    %v5779 = vmax.f32 %v5663, 0.0
    %v5780 = vmax.f32 %v5665, 0.0
    %v5781 = vmax.f32 %v5667, 0.0
    %v5782 = vmax.f32 %v5669, 0.0
    %v5783 = vmax.f32 %v5673, 0.0
    %v5784 = vmax.f32 %v5675, 0.0
    %v5785 = vmax.f32 %v5677, 0.0
    %v5786 = vmax.f32 %v5679, 0.0
    %v5787 = vmax.f32 %v5683, 0.0
    %v5788 = vmax.f32 %v5685, 0.0
    %v5789 = vmax.f32 %v5687, 0.0
    %v5790 = vmax.f32 %v5689, 0.0
    %v5791 = vmax.f32 %v5693, 0.0
    %v5792 = vmax.f32 %v5695, 0.0
    %v5793 = vmax.f32 %v5697, 0.0
    %v5794 = vmax.f32 %v5699, 0.0
    %v5795 = vmax.f32 %v5703, 0.0
    %v5796 = vmax.f32 %v5705, 0.0
    %v5797 = vmax.f32 %v5707, 0.0
    %v5798 = vmax.f32 %v5709, 0.0
    %v5799 = vmax.f32 %v5713, 0.0
    %v5800 = vmax.f32 %v5715, 0.0
    %v5801 = vmax.f32 %v5717, 0.0
    %v5802 = vmax.f32 %v5719, 0.0
    %v5803 = vmax.f32 %v5723, 0.0
    %v5804 = vmax.f32 %v5725, 0.0
    %v5805 = vmax.f32 %v5727, 0.0
    %v5806 = vmax.f32 %v5729, 0.0
    %v5807 = vmax.f32 %v5733, 0.0
    %v5808 = vmax.f32 %v5735, 0.0
    %v5809 = vmax.f32 %v5737, 0.0
    %v5810 = vmax.f32 %v5739, 0.0
    %v5811 = vmax.f32 %v5743, 0.0
    %v5812 = vmax.f32 %v5745, 0.0
    %v5813 = vmax.f32 %v5747, 0.0
    %v5814 = vmax.f32 %v5749, 0.0
    %v5815 = vlaneseq
    %v5816 = vshrl.u32 %v5815, 7
    %v5817 = vsub.s32 3, %v5816
    %v5818 = vrot.slane %v59, %v5817
    %v5819 = vlaneseq
    %v5820 = vshrl.u32 %v5819, 7
    %v5821 = vsub.s32 3, %v5820
    %v5822 = vrot.slane %v60, %v5821
    %v5823 = vmul.f32 %v5751, %v5818
    %v5824 = vmul.f32 %v5752, %v5822
    %v5825 = vmul.f32 %v5753, %v5818
    %v5826 = vmul.f32 %v5754, %v5822
    %v5827 = vmul.f32 %v5755, %v5818
    %v5828 = vmul.f32 %v5756, %v5822
    %v5829 = vmul.f32 %v5757, %v5818
    %v5830 = vmul.f32 %v5758, %v5822
    %v5831 = vmul.f32 %v5759, %v5818
    %v5832 = vmul.f32 %v5760, %v5822
    %v5833 = vmul.f32 %v5761, %v5818
    %v5834 = vmul.f32 %v5762, %v5822
    %v5835 = vmul.f32 %v5763, %v5818
    %v5836 = vmul.f32 %v5764, %v5822
    %v5837 = vmul.f32 %v5765, %v5818
    %v5838 = vmul.f32 %v5766, %v5822
    %v5839 = vmul.f32 %v5767, %v5818
    %v5840 = vmul.f32 %v5768, %v5822
    %v5841 = vmul.f32 %v5769, %v5818
    %v5842 = vmul.f32 %v5770, %v5822
    %v5843 = vmul.f32 %v5771, %v5818
    %v5844 = vmul.f32 %v5772, %v5822
    %v5845 = vmul.f32 %v5773, %v5818
    %v5846 = vmul.f32 %v5774, %v5822
    %v5847 = vmul.f32 %v5775, %v5818
    %v5848 = vmul.f32 %v5776, %v5822
    %v5849 = vmul.f32 %v5777, %v5818
    %v5850 = vmul.f32 %v5778, %v5822
    %v5851 = vmul.f32 %v5779, %v5818
    %v5852 = vmul.f32 %v5780, %v5822
    %v5853 = vmul.f32 %v5781, %v5818
    %v5854 = vmul.f32 %v5782, %v5822
    %v5855 = vmul.f32 %v5783, %v5818
    %v5856 = vmul.f32 %v5784, %v5822
    %v5857 = vmul.f32 %v5785, %v5818
    %v5858 = vmul.f32 %v5786, %v5822
    %v5859 = vmul.f32 %v5787, %v5818
    %v5860 = vmul.f32 %v5788, %v5822
    %v5861 = vmul.f32 %v5789, %v5818
    %v5862 = vmul.f32 %v5790, %v5822
    %v5863 = vmul.f32 %v5791, %v5818
    %v5864 = vmul.f32 %v5792, %v5822
    %v5865 = vmul.f32 %v5793, %v5818
    %v5866 = vmul.f32 %v5794, %v5822
    %v5867 = vmul.f32 %v5795, %v5818
    %v5868 = vmul.f32 %v5796, %v5822
    %v5869 = vmul.f32 %v5797, %v5818
    %v5870 = vmul.f32 %v5798, %v5822
    %v5871 = vmul.f32 %v5799, %v5818
    %v5872 = vmul.f32 %v5800, %v5822
    %v5873 = vmul.f32 %v5801, %v5818
    %v5874 = vmul.f32 %v5802, %v5822
    %v5875 = vmul.f32 %v5803, %v5818
    %v5876 = vmul.f32 %v5804, %v5822
    %v5877 = vmul.f32 %v5805, %v5818
    %v5878 = vmul.f32 %v5806, %v5822
    %v5879 = vmul.f32 %v5807, %v5818
    %v5880 = vmul.f32 %v5808, %v5822
    %v5881 = vmul.f32 %v5809, %v5818
    %v5882 = vmul.f32 %v5810, %v5822
    %v5883 = vmul.f32 %v5811, %v5818
    %v5884 = vmul.f32 %v5812, %v5822
    %v5885 = vmul.f32 %v5813, %v5818
    %v5886 = vmul.f32 %v5814, %v5822
    %v5887 = vlaneseq
    %v5888 = vshrl.u32 %v5887, 7
    %v5889 = vsub.s32 4, %v5888
    %v5890 = vrot.slane %v59, %v5889
    %v5891 = vlaneseq
    %v5892 = vshrl.u32 %v5891, 7
    %v5893 = vsub.s32 4, %v5892
    %v5894 = vrot.slane %v60, %v5893
    %v5895 = vadd.f32 %v5823, %v5890
    %v5896 = vadd.f32 %v5824, %v5894
    %v5897 = vadd.f32 %v5825, %v5890
    %v5898 = vadd.f32 %v5826, %v5894
    %v5899 = vadd.f32 %v5827, %v5890
    %v5900 = vadd.f32 %v5828, %v5894
    %v5901 = vadd.f32 %v5829, %v5890
    %v5902 = vadd.f32 %v5830, %v5894
    %v5903 = vadd.f32 %v5831, %v5890
    %v5904 = vadd.f32 %v5832, %v5894
    %v5905 = vadd.f32 %v5833, %v5890
    %v5906 = vadd.f32 %v5834, %v5894
    %v5907 = vadd.f32 %v5835, %v5890
    %v5908 = vadd.f32 %v5836, %v5894
    %v5909 = vadd.f32 %v5837, %v5890
    %v5910 = vadd.f32 %v5838, %v5894
    %v5911 = vadd.f32 %v5839, %v5890
    %v5912 = vadd.f32 %v5840, %v5894
    %v5913 = vadd.f32 %v5841, %v5890
    %v5914 = vadd.f32 %v5842, %v5894
    %v5915 = vadd.f32 %v5843, %v5890
    %v5916 = vadd.f32 %v5844, %v5894
    %v5917 = vadd.f32 %v5845, %v5890
    %v5918 = vadd.f32 %v5846, %v5894
    %v5919 = vadd.f32 %v5847, %v5890
    %v5920 = vadd.f32 %v5848, %v5894
    %v5921 = vadd.f32 %v5849, %v5890
    %v5922 = vadd.f32 %v5850, %v5894
    %v5923 = vadd.f32 %v5851, %v5890
    %v5924 = vadd.f32 %v5852, %v5894
    %v5925 = vadd.f32 %v5853, %v5890
    %v5926 = vadd.f32 %v5854, %v5894
    %v5927 = vadd.f32 %v5855, %v5890
    %v5928 = vadd.f32 %v5856, %v5894
    %v5929 = vadd.f32 %v5857, %v5890
    %v5930 = vadd.f32 %v5858, %v5894
    %v5931 = vadd.f32 %v5859, %v5890
    %v5932 = vadd.f32 %v5860, %v5894
    %v5933 = vadd.f32 %v5861, %v5890
    %v5934 = vadd.f32 %v5862, %v5894
    %v5935 = vadd.f32 %v5863, %v5890
    %v5936 = vadd.f32 %v5864, %v5894
    %v5937 = vadd.f32 %v5865, %v5890
    %v5938 = vadd.f32 %v5866, %v5894
    %v5939 = vadd.f32 %v5867, %v5890
    %v5940 = vadd.f32 %v5868, %v5894
    %v5941 = vadd.f32 %v5869, %v5890
    %v5942 = vadd.f32 %v5870, %v5894
    %v5943 = vadd.f32 %v5871, %v5890
    %v5944 = vadd.f32 %v5872, %v5894
    %v5945 = vadd.f32 %v5873, %v5890
    %v5946 = vadd.f32 %v5874, %v5894
    %v5947 = vadd.f32 %v5875, %v5890
    %v5948 = vadd.f32 %v5876, %v5894
    %v5949 = vadd.f32 %v5877, %v5890
    %v5950 = vadd.f32 %v5878, %v5894
    %v5951 = vadd.f32 %v5879, %v5890
    %v5952 = vadd.f32 %v5880, %v5894
    %v5953 = vadd.f32 %v5881, %v5890
    %v5954 = vadd.f32 %v5882, %v5894
    %v5955 = vadd.f32 %v5883, %v5890
    %v5956 = vadd.f32 %v5884, %v5894
    %v5957 = vadd.f32 %v5885, %v5890
    %v5958 = vadd.f32 %v5886, %v5894
    %v5959 = vmax.f32 %v5895, 0.0
    %v5960 = vmax.f32 %v5896, 0.0
    %v5961 = vmax.f32 %v5897, 0.0
    %v5962 = vmax.f32 %v5898, 0.0
    %v5963 = vmax.f32 %v5899, 0.0
    %v5964 = vmax.f32 %v5900, 0.0
    %v5965 = vmax.f32 %v5901, 0.0
    %v5966 = vmax.f32 %v5902, 0.0
    %v5967 = vmax.f32 %v5903, 0.0
    %v5968 = vmax.f32 %v5904, 0.0
    %v5969 = vmax.f32 %v5905, 0.0
    %v5970 = vmax.f32 %v5906, 0.0
    %v5971 = vmax.f32 %v5907, 0.0
    %v5972 = vmax.f32 %v5908, 0.0
    %v5973 = vmax.f32 %v5909, 0.0
    %v5974 = vmax.f32 %v5910, 0.0
    %v5975 = vmax.f32 %v5911, 0.0
    %v5976 = vmax.f32 %v5912, 0.0
    %v5977 = vmax.f32 %v5913, 0.0
    %v5978 = vmax.f32 %v5914, 0.0
    %v5979 = vmax.f32 %v5915, 0.0
    %v5980 = vmax.f32 %v5916, 0.0
    %v5981 = vmax.f32 %v5917, 0.0
    %v5982 = vmax.f32 %v5918, 0.0
    %v5983 = vmax.f32 %v5919, 0.0
    %v5984 = vmax.f32 %v5920, 0.0
    %v5985 = vmax.f32 %v5921, 0.0
    %v5986 = vmax.f32 %v5922, 0.0
    %v5987 = vmax.f32 %v5923, 0.0
    %v5988 = vmax.f32 %v5924, 0.0
    %v5989 = vmax.f32 %v5925, 0.0
    %v5990 = vmax.f32 %v5926, 0.0
    %v5991 = vmax.f32 %v5927, 0.0
    %v5992 = vmax.f32 %v5928, 0.0
    %v5993 = vmax.f32 %v5929, 0.0
    %v5994 = vmax.f32 %v5930, 0.0
    %v5995 = vmax.f32 %v5931, 0.0
    %v5996 = vmax.f32 %v5932, 0.0
    %v5997 = vmax.f32 %v5933, 0.0
    %v5998 = vmax.f32 %v5934, 0.0
    %v5999 = vmax.f32 %v5935, 0.0
    %v6000 = vmax.f32 %v5936, 0.0
    %v6001 = vmax.f32 %v5937, 0.0
    %v6002 = vmax.f32 %v5938, 0.0
    %v6003 = vmax.f32 %v5939, 0.0
    %v6004 = vmax.f32 %v5940, 0.0
    %v6005 = vmax.f32 %v5941, 0.0
    %v6006 = vmax.f32 %v5942, 0.0
    %v6007 = vmax.f32 %v5943, 0.0
    %v6008 = vmax.f32 %v5944, 0.0
    %v6009 = vmax.f32 %v5945, 0.0
    %v6010 = vmax.f32 %v5946, 0.0
    %v6011 = vmax.f32 %v5947, 0.0
    %v6012 = vmax.f32 %v5948, 0.0
    %v6013 = vmax.f32 %v5949, 0.0
    %v6014 = vmax.f32 %v5950, 0.0
    %v6015 = vmax.f32 %v5951, 0.0
    %v6016 = vmax.f32 %v5952, 0.0
    %v6017 = vmax.f32 %v5953, 0.0
    %v6018 = vmax.f32 %v5954, 0.0
    %v6019 = vmax.f32 %v5955, 0.0
    %v6020 = vmax.f32 %v5956, 0.0
    %v6021 = vmax.f32 %v5957, 0.0
    %v6022 = vmax.f32 %v5958, 0.0
    %v6023 = vld [vmem:[%s4] sm:$0xf]
    %v6024 = vld [vmem:[%s4 + $0x4] sm:$0xf]
    %v6025 = vld [vmem:[%s4 + $0x8] sm:$0xf]
    %v6026 = vld [vmem:[%s4 + $0xc] sm:$0xf]
    %v6027 = vld [vmem:[%s4 + $0x10] sm:$0xf]
    %v6028 = vld [vmem:[%s4 + $0x14] sm:$0xf]
    %v6029 = vld [vmem:[%s4 + $0x18] sm:$0xf]
    %v6030 = vld [vmem:[%s4 + $0x1c] sm:$0xf]
    %v6031 = vld [vmem:[%s4 + $0x20] sm:$0xf]
    %v6032 = vld [vmem:[%s4 + $0x24] sm:$0xf]
    %v6033 = vld [vmem:[%s4 + $0x28] sm:$0xf]
    %v6034 = vld [vmem:[%s4 + $0x2c] sm:$0xf]
    %v6035 = vld [vmem:[%s4 + $0x30] sm:$0xf]
    %v6036 = vld [vmem:[%s4 + $0x34] sm:$0xf]
    %v6037 = vld [vmem:[%s4 + $0x38] sm:$0xf]
    %v6038 = vld [vmem:[%s4 + $0x3c] sm:$0xf]
    %v6039 = vld [vmem:[%s4 + $0x40] sm:$0xf]
    %v6040 = vld [vmem:[%s4 + $0x44] sm:$0xf]
    %v6041 = vld [vmem:[%s4 + $0x48] sm:$0xf]
    %v6042 = vld [vmem:[%s4 + $0x4c] sm:$0xf]
    %v6043 = vld [vmem:[%s4 + $0x50] sm:$0xf]
    %v6044 = vld [vmem:[%s4 + $0x54] sm:$0xf]
    %v6045 = vld [vmem:[%s4 + $0x58] sm:$0xf]
    %v6046 = vld [vmem:[%s4 + $0x5c] sm:$0xf]
    %v6047 = vld [vmem:[%s4 + $0x60] sm:$0xf]
    %v6048 = vld [vmem:[%s4 + $0x64] sm:$0xf]
    %v6049 = vld [vmem:[%s4 + $0x68] sm:$0xf]
    %v6050 = vld [vmem:[%s4 + $0x6c] sm:$0xf]
    %v6051 = vld [vmem:[%s4 + $0x70] sm:$0xf]
    %v6052 = vld [vmem:[%s4 + $0x74] sm:$0xf]
    %v6053 = vld [vmem:[%s4 + $0x78] sm:$0xf]
    %v6054 = vld [vmem:[%s4 + $0x7c] sm:$0xf]
    %v6055 = vpack.c.bf16 %v5961, %v5959
    %v6056 = vpack.c.bf16 %v5962, %v5960
    %v6057 = vpack.c.bf16 %v5965, %v5963
    %v6058 = vpack.c.bf16 %v5966, %v5964
    %v6059 = vpack.c.bf16 %v5969, %v5967
    %v6060 = vpack.c.bf16 %v5970, %v5968
    %v6061 = vpack.c.bf16 %v5973, %v5971
    %v6062 = vpack.c.bf16 %v5974, %v5972
    %v6063 = vpack.c.bf16 %v5977, %v5975
    %v6064 = vpack.c.bf16 %v5978, %v5976
    %v6065 = vpack.c.bf16 %v5981, %v5979
    %v6066 = vpack.c.bf16 %v5982, %v5980
    %v6067 = vpack.c.bf16 %v5985, %v5983
    %v6068 = vpack.c.bf16 %v5986, %v5984
    %v6069 = vpack.c.bf16 %v5989, %v5987
    %v6070 = vpack.c.bf16 %v5990, %v5988
    %v6071 = vpack.c.bf16 %v5993, %v5991
    %v6072 = vpack.c.bf16 %v5994, %v5992
    %v6073 = vpack.c.bf16 %v5997, %v5995
    %v6074 = vpack.c.bf16 %v5998, %v5996
    %v6075 = vpack.c.bf16 %v6001, %v5999
    %v6076 = vpack.c.bf16 %v6002, %v6000
    %v6077 = vpack.c.bf16 %v6005, %v6003
    %v6078 = vpack.c.bf16 %v6006, %v6004
    %v6079 = vpack.c.bf16 %v6009, %v6007
    %v6080 = vpack.c.bf16 %v6010, %v6008
    %v6081 = vpack.c.bf16 %v6013, %v6011
    %v6082 = vpack.c.bf16 %v6014, %v6012
    %v6083 = vpack.c.bf16 %v6017, %v6015
    %v6084 = vpack.c.bf16 %v6018, %v6016
    %v6085 = vpack.c.bf16 %v6021, %v6019
    %v6086 = vpack.c.bf16 %v6022, %v6020
    %v6087 = vlaneseq
    %v6088 = vshrl.u32 %v6087, 7
    %v6089 = vsub.s32 0, %v6088
    %v6090 = vrot.slane %v61, %v6089
    %v6123 = vunpack.c.l.b16 %v6023
    %v6124 = vunpack.c.l.b16 %v6024
    %v6125 = vunpack.c.l.b16 %v6025
    %v6126 = vunpack.c.l.b16 %v6026
    %v6127 = vunpack.c.l.b16 %v6027
    %v6128 = vunpack.c.l.b16 %v6028
    %v6129 = vunpack.c.l.b16 %v6029
    %v6130 = vunpack.c.l.b16 %v6030
    %v6131 = vunpack.c.l.b16 %v6031
    %v6132 = vunpack.c.l.b16 %v6032
    %v6133 = vunpack.c.l.b16 %v6033
    %v6134 = vunpack.c.l.b16 %v6034
    %v6135 = vunpack.c.l.b16 %v6035
    %v6136 = vunpack.c.l.b16 %v6036
    %v6137 = vunpack.c.l.b16 %v6037
    %v6138 = vunpack.c.l.b16 %v6038
    %v6139 = vunpack.c.l.b16 %v6039
    %v6140 = vunpack.c.l.b16 %v6040
    %v6141 = vunpack.c.l.b16 %v6041
    %v6142 = vunpack.c.l.b16 %v6042
    %v6143 = vunpack.c.l.b16 %v6043
    %v6144 = vunpack.c.l.b16 %v6044
    %v6145 = vunpack.c.l.b16 %v6045
    %v6146 = vunpack.c.l.b16 %v6046
    %v6147 = vunpack.c.l.b16 %v6047
    %v6148 = vunpack.c.l.b16 %v6048
    %v6149 = vunpack.c.l.b16 %v6049
    %v6150 = vunpack.c.l.b16 %v6050
    %v6151 = vunpack.c.l.b16 %v6051
    %v6152 = vunpack.c.l.b16 %v6052
    %v6153 = vunpack.c.l.b16 %v6053
    %v6154 = vunpack.c.l.b16 %v6054
    %v6155 = vpack.c.b16 %v6124, %v6123
    %v6156 = vpack.c.b16 %v6126, %v6125
    %v6157 = vpack.c.b16 %v6128, %v6127
    %v6158 = vpack.c.b16 %v6130, %v6129
    %v6159 = vpack.c.b16 %v6132, %v6131
    %v6160 = vpack.c.b16 %v6134, %v6133
    %v6161 = vpack.c.b16 %v6136, %v6135
    %v6162 = vpack.c.b16 %v6138, %v6137
    %v6163 = vpack.c.b16 %v6140, %v6139
    %v6164 = vpack.c.b16 %v6142, %v6141
    %v6165 = vpack.c.b16 %v6144, %v6143
    %v6166 = vpack.c.b16 %v6146, %v6145
    %v6167 = vpack.c.b16 %v6148, %v6147
    %v6168 = vpack.c.b16 %v6150, %v6149
    %v6169 = vpack.c.b16 %v6152, %v6151
    %v6170 = vpack.c.b16 %v6154, %v6153
    %6187 = vmatprep.subr.bf16.mxu0 0
    %6188 = vmatpush1.bf16.msra.mxu0 %v6155
    %6189 = vmatprep.subr.bf16.mxu0 0
    %6190 = vmatpush1.bf16.msra.mxu0 %v6156
    %6191 = vmatprep.subr.bf16.mxu0 0
    %6192 = vmatpush1.bf16.msra.mxu0 %v6157
    %6193 = vmatprep.subr.bf16.mxu0 0
    %6194 = vmatpush1.bf16.msra.mxu0 %v6158
    %6195 = vmatprep.subr.bf16.mxu0 0
    %6196 = vmatpush1.bf16.msra.mxu0 %v6159
    %6197 = vmatprep.subr.bf16.mxu0 0
    %6198 = vmatpush1.bf16.msra.mxu0 %v6160
    %6199 = vmatprep.subr.bf16.mxu0 0
    %6200 = vmatpush1.bf16.msra.mxu0 %v6161
    %6201 = vmatprep.subr.bf16.mxu0 0
    %6202 = vmatpush1.bf16.msra.mxu0 %v6162
    %6203 = vmatprep.subr.bf16.mxu0 0
    %6204 = vmatpush1.bf16.msra.mxu0 %v6163
    %6205 = vmatprep.subr.bf16.mxu0 0
    %6206 = vmatpush1.bf16.msra.mxu0 %v6164
    %6207 = vmatprep.subr.bf16.mxu0 0
    %6208 = vmatpush1.bf16.msra.mxu0 %v6165
    %6209 = vmatprep.subr.bf16.mxu0 0
    %6210 = vmatpush1.bf16.msra.mxu0 %v6166
    %6211 = vmatprep.subr.bf16.mxu0 0
    %6212 = vmatpush1.bf16.msra.mxu0 %v6167
    %6213 = vmatprep.subr.bf16.mxu0 0
    %6214 = vmatpush1.bf16.msra.mxu0 %v6168
    %6215 = vmatprep.subr.bf16.mxu0 0
    %6216 = vmatpush1.bf16.msra.mxu0 %v6169
    %6217 = vmatprep.subr.bf16.mxu0 0
    %6218 = vmatpush1.bf16.msra.mxu0 %v6170
    %6219 = vmatprep.mubr.bf16.mxu0 %v6056
    %6220 = vmatmul.mubr.bf16.gmra.mrb[0].mxu0 %v6055
    %v6221 = vpop.f32.mrb[0].mxu0
    %v6222 = vadd.f32 %v6090, %v6221
    %v6223 = vpop.f32.mrb[0].mxu0
    %v6224 = vpop.f32.mrb[0].mxu0
    %v6225 = vadd.f32 %v6090, %v6224
    %v6226 = vpop.f32.mrb[0].mxu0
    %6227 = vmatprep.mubr.bf16.mxu0 %v6058
    %6228 = vmatmul.mubr.bf16.gmra.mrb[0].mxu0 %v6057
    %v6229 = vpop.f32.mrb[0].mxu0
    %v6230 = vadd.f32 %v6090, %v6229
    %v6231 = vpop.f32.mrb[0].mxu0
    %v6232 = vpop.f32.mrb[0].mxu0
    %v6233 = vadd.f32 %v6090, %v6232
    %v6234 = vpop.f32.mrb[0].mxu0
    %6235 = vmatprep.mubr.bf16.mxu0 %v6060
    %6236 = vmatmul.mubr.bf16.gmra.mrb[0].mxu0 %v6059
    %v6237 = vpop.f32.mrb[0].mxu0
    %v6238 = vadd.f32 %v6090, %v6237
    %v6239 = vpop.f32.mrb[0].mxu0
    %v6240 = vpop.f32.mrb[0].mxu0
    %v6241 = vadd.f32 %v6090, %v6240
    %v6242 = vpop.f32.mrb[0].mxu0
    %6243 = vmatprep.mubr.bf16.mxu0 %v6062
    %6244 = vmatmul.mubr.bf16.gmra.mrb[0].mxu0 %v6061
    %v6245 = vpop.f32.mrb[0].mxu0
    %v6246 = vadd.f32 %v6090, %v6245
    %v6247 = vpop.f32.mrb[0].mxu0
    %v6248 = vpop.f32.mrb[0].mxu0
    %v6249 = vadd.f32 %v6090, %v6248
    %v6250 = vpop.f32.mrb[0].mxu0
    %6251 = vmatprep.mubr.bf16.mxu0 %v6064
    %6252 = vmatmul.mubr.bf16.gmra.mrb[0].mxu0 %v6063
    %v6253 = vpop.f32.mrb[0].mxu0
    %v6254 = vadd.f32 %v6090, %v6253
    %v6255 = vpop.f32.mrb[0].mxu0
    %v6256 = vpop.f32.mrb[0].mxu0
    %v6257 = vadd.f32 %v6090, %v6256
    %v6258 = vpop.f32.mrb[0].mxu0
    %6259 = vmatprep.mubr.bf16.mxu0 %v6066
    %6260 = vmatmul.mubr.bf16.gmra.mrb[0].mxu0 %v6065
    %v6261 = vpop.f32.mrb[0].mxu0
    %v6262 = vadd.f32 %v6090, %v6261
    %v6263 = vpop.f32.mrb[0].mxu0
    %v6264 = vpop.f32.mrb[0].mxu0
    %v6265 = vadd.f32 %v6090, %v6264
    %v6266 = vpop.f32.mrb[0].mxu0
    %6267 = vmatprep.mubr.bf16.mxu0 %v6068
    %6268 = vmatmul.mubr.bf16.gmra.mrb[0].mxu0 %v6067
    %v6269 = vpop.f32.mrb[0].mxu0
    %v6270 = vadd.f32 %v6090, %v6269
    %v6271 = vpop.f32.mrb[0].mxu0
    %v6272 = vpop.f32.mrb[0].mxu0
    %v6273 = vadd.f32 %v6090, %v6272
    %v6274 = vpop.f32.mrb[0].mxu0
    %6275 = vmatprep.mubr.bf16.mxu0 %v6070
    %6276 = vmatmul.mubr.bf16.gmra.mrb[0].mxu0 %v6069
    %v6277 = vpop.f32.mrb[0].mxu0
    %v6278 = vadd.f32 %v6090, %v6277
    %v6279 = vpop.f32.mrb[0].mxu0
    %v6280 = vpop.f32.mrb[0].mxu0
    %v6281 = vadd.f32 %v6090, %v6280
    %v6282 = vpop.f32.mrb[0].mxu0
    %6283 = vmatprep.mubr.bf16.mxu0 %v6072
    %6284 = vmatmul.mubr.bf16.gmra.mrb[0].mxu0 %v6071
    %v6285 = vpop.f32.mrb[0].mxu0
    %v6286 = vadd.f32 %v6090, %v6285
    %v6287 = vpop.f32.mrb[0].mxu0
    %v6288 = vpop.f32.mrb[0].mxu0
    %v6289 = vadd.f32 %v6090, %v6288
    %v6290 = vpop.f32.mrb[0].mxu0
    %6291 = vmatprep.mubr.bf16.mxu0 %v6074
    %6292 = vmatmul.mubr.bf16.gmra.mrb[0].mxu0 %v6073
    %v6293 = vpop.f32.mrb[0].mxu0
    %v6294 = vadd.f32 %v6090, %v6293
    %v6295 = vpop.f32.mrb[0].mxu0
    %v6296 = vpop.f32.mrb[0].mxu0
    %v6297 = vadd.f32 %v6090, %v6296
    %v6298 = vpop.f32.mrb[0].mxu0
    %6299 = vmatprep.mubr.bf16.mxu0 %v6076
    %6300 = vmatmul.mubr.bf16.gmra.mrb[0].mxu0 %v6075
    %v6301 = vpop.f32.mrb[0].mxu0
    %v6302 = vadd.f32 %v6090, %v6301
    %v6303 = vpop.f32.mrb[0].mxu0
    %v6304 = vpop.f32.mrb[0].mxu0
    %v6305 = vadd.f32 %v6090, %v6304
    %v6306 = vpop.f32.mrb[0].mxu0
    %6307 = vmatprep.mubr.bf16.mxu0 %v6078
    %6308 = vmatmul.mubr.bf16.gmra.mrb[0].mxu0 %v6077
    %v6309 = vpop.f32.mrb[0].mxu0
    %v6310 = vadd.f32 %v6090, %v6309
    %v6311 = vpop.f32.mrb[0].mxu0
    %v6312 = vpop.f32.mrb[0].mxu0
    %v6313 = vadd.f32 %v6090, %v6312
    %v6314 = vpop.f32.mrb[0].mxu0
    %6315 = vmatprep.mubr.bf16.mxu0 %v6080
    %6316 = vmatmul.mubr.bf16.gmra.mrb[0].mxu0 %v6079
    %v6317 = vpop.f32.mrb[0].mxu0
    %v6318 = vadd.f32 %v6090, %v6317
    %v6319 = vpop.f32.mrb[0].mxu0
    %v6320 = vpop.f32.mrb[0].mxu0
    %v6321 = vadd.f32 %v6090, %v6320
    %v6322 = vpop.f32.mrb[0].mxu0
    %6323 = vmatprep.mubr.bf16.mxu0 %v6082
    %6324 = vmatmul.mubr.bf16.gmra.mrb[0].mxu0 %v6081
    %v6325 = vpop.f32.mrb[0].mxu0
    %v6326 = vadd.f32 %v6090, %v6325
    %v6327 = vpop.f32.mrb[0].mxu0
    %v6328 = vpop.f32.mrb[0].mxu0
    %v6329 = vadd.f32 %v6090, %v6328
    %v6330 = vpop.f32.mrb[0].mxu0
    %6331 = vmatprep.mubr.bf16.mxu0 %v6084
    %6332 = vmatmul.mubr.bf16.gmra.mrb[0].mxu0 %v6083
    %v6333 = vpop.f32.mrb[0].mxu0
    %v6334 = vadd.f32 %v6090, %v6333
    %v6335 = vpop.f32.mrb[0].mxu0
    %v6336 = vpop.f32.mrb[0].mxu0
    %v6337 = vadd.f32 %v6090, %v6336
    %v6338 = vpop.f32.mrb[0].mxu0
    %6339 = vmatprep.mubr.bf16.mxu0 %v6086
    %6340 = vmatmul.mubr.bf16.gmra.mrb[0].mxu0 %v6085
    %v6341 = vpop.f32.mrb[0].mxu0
    %v6342 = vadd.f32 %v6090, %v6341
    %v6343 = vpop.f32.mrb[0].mxu0
    %v6344 = vpop.f32.mrb[0].mxu0
    %v6345 = vadd.f32 %v6090, %v6344
    %v6346 = vpop.f32.mrb[0].mxu0
    %6347 = vdwg.mxu0
    %v6348 = vmax.f32 %v6222, 0.0
    %v6349 = vmax.f32 %v6225, 0.0
    %v6350 = vmax.f32 %v6230, 0.0
    %v6351 = vmax.f32 %v6233, 0.0
    %v6352 = vmax.f32 %v6238, 0.0
    %v6353 = vmax.f32 %v6241, 0.0
    %v6354 = vmax.f32 %v6246, 0.0
    %v6355 = vmax.f32 %v6249, 0.0
    %v6356 = vmax.f32 %v6254, 0.0
    %v6357 = vmax.f32 %v6257, 0.0
    %v6358 = vmax.f32 %v6262, 0.0
    %v6359 = vmax.f32 %v6265, 0.0
    %v6360 = vmax.f32 %v6270, 0.0
    %v6361 = vmax.f32 %v6273, 0.0
    %v6362 = vmax.f32 %v6278, 0.0
    %v6363 = vmax.f32 %v6281, 0.0
    %v6364 = vmax.f32 %v6286, 0.0
    %v6365 = vmax.f32 %v6289, 0.0
    %v6366 = vmax.f32 %v6294, 0.0
    %v6367 = vmax.f32 %v6297, 0.0
    %v6368 = vmax.f32 %v6302, 0.0
    %v6369 = vmax.f32 %v6305, 0.0
    %v6370 = vmax.f32 %v6310, 0.0
    %v6371 = vmax.f32 %v6313, 0.0
    %v6372 = vmax.f32 %v6318, 0.0
    %v6373 = vmax.f32 %v6321, 0.0
    %v6374 = vmax.f32 %v6326, 0.0
    %v6375 = vmax.f32 %v6329, 0.0
    %v6376 = vmax.f32 %v6334, 0.0
    %v6377 = vmax.f32 %v6337, 0.0
    %v6378 = vmax.f32 %v6342, 0.0
    %v6379 = vmax.f32 %v6345, 0.0
    %s6380 = scalar_lea.vmem [#allocation2], 960
    %v6381 = vld [vmem:[%s6380] sm:$0xf]
    %v6382 = vld [vmem:[%s6380 + $0x4] sm:$0xf]
    %v6383 = vld [vmem:[%s6380 + $0x8] sm:$0xf]
    %v6384 = vld [vmem:[%s6380 + $0xc] sm:$0xf]
    %v6385 = vld [vmem:[%s6380 + $0x10] sm:$0xf]
    %v6386 = vld [vmem:[%s6380 + $0x14] sm:$0xf]
    %v6387 = vld [vmem:[%s6380 + $0x18] sm:$0xf]
    %v6388 = vld [vmem:[%s6380 + $0x1c] sm:$0xf]
    %v6389 = vld [vmem:[%s6380 + $0x20] sm:$0xf]
    %v6390 = vld [vmem:[%s6380 + $0x24] sm:$0xf]
    %v6391 = vld [vmem:[%s6380 + $0x28] sm:$0xf]
    %v6392 = vld [vmem:[%s6380 + $0x2c] sm:$0xf]
    %v6393 = vld [vmem:[%s6380 + $0x30] sm:$0xf]
    %v6394 = vld [vmem:[%s6380 + $0x34] sm:$0xf]
    %v6395 = vld [vmem:[%s6380 + $0x38] sm:$0xf]
    %v6396 = vld [vmem:[%s6380 + $0x3c] sm:$0xf]
    %v6397 = vpack.c.bf16 %v6349, %v6348
    %v6398 = vpack.c.bf16 %v6351, %v6350
    %v6399 = vpack.c.bf16 %v6353, %v6352
    %v6400 = vpack.c.bf16 %v6355, %v6354
    %v6401 = vpack.c.bf16 %v6357, %v6356
    %v6402 = vpack.c.bf16 %v6359, %v6358
    %v6403 = vpack.c.bf16 %v6361, %v6360
    %v6404 = vpack.c.bf16 %v6363, %v6362
    %v6405 = vpack.c.bf16 %v6365, %v6364
    %v6406 = vpack.c.bf16 %v6367, %v6366
    %v6407 = vpack.c.bf16 %v6369, %v6368
    %v6408 = vpack.c.bf16 %v6371, %v6370
    %v6409 = vpack.c.bf16 %v6373, %v6372
    %v6410 = vpack.c.bf16 %v6375, %v6374
    %v6411 = vpack.c.bf16 %v6377, %v6376
    %v6412 = vpack.c.bf16 %v6379, %v6378
    %s6413 = scalar_lea.vmem %s4, 128
    %v6414 = vld [vmem:[%s6413] sm:$0xf]
    %v6415 = vld [vmem:[%s6413 + $0x4] sm:$0xf]
    %v6416 = vld [vmem:[%s6413 + $0x8] sm:$0xf]
    %v6417 = vld [vmem:[%s6413 + $0xc] sm:$0xf]
    %v6418 = vld [vmem:[%s6413 + $0x10] sm:$0xf]
    %v6419 = vld [vmem:[%s6413 + $0x14] sm:$0xf]
    %v6420 = vld [vmem:[%s6413 + $0x18] sm:$0xf]
    %v6421 = vld [vmem:[%s6413 + $0x1c] sm:$0xf]
    %v6422 = vld [vmem:[%s6413 + $0x20] sm:$0xf]
    %v6423 = vld [vmem:[%s6413 + $0x24] sm:$0xf]
    %v6424 = vld [vmem:[%s6413 + $0x28] sm:$0xf]
    %v6425 = vld [vmem:[%s6413 + $0x2c] sm:$0xf]
    %v6426 = vld [vmem:[%s6413 + $0x30] sm:$0xf]
    %v6427 = vld [vmem:[%s6413 + $0x34] sm:$0xf]
    %v6428 = vld [vmem:[%s6413 + $0x38] sm:$0xf]
    %v6429 = vld [vmem:[%s6413 + $0x3c] sm:$0xf]
    %v6430 = vld [vmem:[%s6413 + $0x40] sm:$0xf]
    %v6431 = vld [vmem:[%s6413 + $0x44] sm:$0xf]
    %v6432 = vld [vmem:[%s6413 + $0x48] sm:$0xf]
    %v6433 = vld [vmem:[%s6413 + $0x4c] sm:$0xf]
    %v6434 = vld [vmem:[%s6413 + $0x50] sm:$0xf]
    %v6435 = vld [vmem:[%s6413 + $0x54] sm:$0xf]
    %v6436 = vld [vmem:[%s6413 + $0x58] sm:$0xf]
    %v6437 = vld [vmem:[%s6413 + $0x5c] sm:$0xf]
    %v6438 = vld [vmem:[%s6413 + $0x60] sm:$0xf]
    %v6439 = vld [vmem:[%s6413 + $0x64] sm:$0xf]
    %v6440 = vld [vmem:[%s6413 + $0x68] sm:$0xf]
    %v6441 = vld [vmem:[%s6413 + $0x6c] sm:$0xf]
    %v6442 = vld [vmem:[%s6413 + $0x70] sm:$0xf]
    %v6443 = vld [vmem:[%s6413 + $0x74] sm:$0xf]
    %v6444 = vld [vmem:[%s6413 + $0x78] sm:$0xf]
    %v6445 = vld [vmem:[%s6413 + $0x7c] sm:$0xf]
    %v6446 = vpack.c.bf16 %v5753, %v5751
    %v6447 = vpack.c.bf16 %v5754, %v5752
    %v6448 = vpack.c.bf16 %v5757, %v5755
    %v6449 = vpack.c.bf16 %v5758, %v5756
    %v6450 = vpack.c.bf16 %v5761, %v5759
    %v6451 = vpack.c.bf16 %v5762, %v5760
    %v6452 = vpack.c.bf16 %v5765, %v5763
    %v6453 = vpack.c.bf16 %v5766, %v5764
    %v6454 = vpack.c.bf16 %v5769, %v5767
    %v6455 = vpack.c.bf16 %v5770, %v5768
    %v6456 = vpack.c.bf16 %v5773, %v5771
    %v6457 = vpack.c.bf16 %v5774, %v5772
    %v6458 = vpack.c.bf16 %v5777, %v5775
    %v6459 = vpack.c.bf16 %v5778, %v5776
    %v6460 = vpack.c.bf16 %v5781, %v5779
    %v6461 = vpack.c.bf16 %v5782, %v5780
    %v6462 = vpack.c.bf16 %v5785, %v5783
    %v6463 = vpack.c.bf16 %v5786, %v5784
    %v6464 = vpack.c.bf16 %v5789, %v5787
    %v6465 = vpack.c.bf16 %v5790, %v5788
    %v6466 = vpack.c.bf16 %v5793, %v5791
    %v6467 = vpack.c.bf16 %v5794, %v5792
    %v6468 = vpack.c.bf16 %v5797, %v5795
    %v6469 = vpack.c.bf16 %v5798, %v5796
    %v6470 = vpack.c.bf16 %v5801, %v5799
    %v6471 = vpack.c.bf16 %v5802, %v5800
    %v6472 = vpack.c.bf16 %v5805, %v5803
    %v6473 = vpack.c.bf16 %v5806, %v5804
    %v6474 = vpack.c.bf16 %v5809, %v5807
    %v6475 = vpack.c.bf16 %v5810, %v5808
    %v6476 = vpack.c.bf16 %v5813, %v5811
    %v6477 = vpack.c.bf16 %v5814, %v5812
    %v6478 = vlaneseq
    %v6479 = vshrl.u32 %v6478, 7
    %v6480 = vsub.s32 1, %v6479
    %v6481 = vrot.slane %v61, %v6480
    %v6514 = vunpack.c.l.b16 %v6414
    %v6515 = vunpack.c.l.b16 %v6415
    %v6516 = vunpack.c.l.b16 %v6416
    %v6517 = vunpack.c.l.b16 %v6417
    %v6518 = vunpack.c.l.b16 %v6418
    %v6519 = vunpack.c.l.b16 %v6419
    %v6520 = vunpack.c.l.b16 %v6420
    %v6521 = vunpack.c.l.b16 %v6421
    %v6522 = vunpack.c.l.b16 %v6422
    %v6523 = vunpack.c.l.b16 %v6423
    %v6524 = vunpack.c.l.b16 %v6424
    %v6525 = vunpack.c.l.b16 %v6425
    %v6526 = vunpack.c.l.b16 %v6426
    %v6527 = vunpack.c.l.b16 %v6427
    %v6528 = vunpack.c.l.b16 %v6428
    %v6529 = vunpack.c.l.b16 %v6429
    %v6530 = vunpack.c.l.b16 %v6430
    %v6531 = vunpack.c.l.b16 %v6431
    %v6532 = vunpack.c.l.b16 %v6432
    %v6533 = vunpack.c.l.b16 %v6433
    %v6534 = vunpack.c.l.b16 %v6434
    %v6535 = vunpack.c.l.b16 %v6435
    %v6536 = vunpack.c.l.b16 %v6436
    %v6537 = vunpack.c.l.b16 %v6437
    %v6538 = vunpack.c.l.b16 %v6438
    %v6539 = vunpack.c.l.b16 %v6439
    %v6540 = vunpack.c.l.b16 %v6440
    %v6541 = vunpack.c.l.b16 %v6441
    %v6542 = vunpack.c.l.b16 %v6442
    %v6543 = vunpack.c.l.b16 %v6443
    %v6544 = vunpack.c.l.b16 %v6444
    %v6545 = vunpack.c.l.b16 %v6445
    %v6546 = vpack.c.b16 %v6515, %v6514
    %v6547 = vpack.c.b16 %v6517, %v6516
    %v6548 = vpack.c.b16 %v6519, %v6518
    %v6549 = vpack.c.b16 %v6521, %v6520
    %v6550 = vpack.c.b16 %v6523, %v6522
    %v6551 = vpack.c.b16 %v6525, %v6524
    %v6552 = vpack.c.b16 %v6527, %v6526
    %v6553 = vpack.c.b16 %v6529, %v6528
    %v6554 = vpack.c.b16 %v6531, %v6530
    %v6555 = vpack.c.b16 %v6533, %v6532
    %v6556 = vpack.c.b16 %v6535, %v6534
    %v6557 = vpack.c.b16 %v6537, %v6536
    %v6558 = vpack.c.b16 %v6539, %v6538
    %v6559 = vpack.c.b16 %v6541, %v6540
    %v6560 = vpack.c.b16 %v6543, %v6542
    %v6561 = vpack.c.b16 %v6545, %v6544
    %6578 = vmatprep.subr.bf16.mxu0 0
    %6579 = vmatpush1.bf16.msra.mxu0 %v6546
    %6580 = vmatprep.subr.bf16.mxu0 0
    %6581 = vmatpush1.bf16.msra.mxu0 %v6547
    %6582 = vmatprep.subr.bf16.mxu0 0
    %6583 = vmatpush1.bf16.msra.mxu0 %v6548
    %6584 = vmatprep.subr.bf16.mxu0 0
    %6585 = vmatpush1.bf16.msra.mxu0 %v6549
    %6586 = vmatprep.subr.bf16.mxu0 0
    %6587 = vmatpush1.bf16.msra.mxu0 %v6550
    %6588 = vmatprep.subr.bf16.mxu0 0
    %6589 = vmatpush1.bf16.msra.mxu0 %v6551
    %6590 = vmatprep.subr.bf16.mxu0 0
    %6591 = vmatpush1.bf16.msra.mxu0 %v6552
    %6592 = vmatprep.subr.bf16.mxu0 0
    %6593 = vmatpush1.bf16.msra.mxu0 %v6553
    %6594 = vmatprep.subr.bf16.mxu0 0
    %6595 = vmatpush1.bf16.msra.mxu0 %v6554
    %6596 = vmatprep.subr.bf16.mxu0 0
    %6597 = vmatpush1.bf16.msra.mxu0 %v6555
    %6598 = vmatprep.subr.bf16.mxu0 0
    %6599 = vmatpush1.bf16.msra.mxu0 %v6556
    %6600 = vmatprep.subr.bf16.mxu0 0
    %6601 = vmatpush1.bf16.msra.mxu0 %v6557
    %6602 = vmatprep.subr.bf16.mxu0 0
    %6603 = vmatpush1.bf16.msra.mxu0 %v6558
    %6604 = vmatprep.subr.bf16.mxu0 0
    %6605 = vmatpush1.bf16.msra.mxu0 %v6559
    %6606 = vmatprep.subr.bf16.mxu0 0
    %6607 = vmatpush1.bf16.msra.mxu0 %v6560
    %6608 = vmatprep.subr.bf16.mxu0 0
    %6609 = vmatpush1.bf16.msra.mxu0 %v6561
    %6610 = vmatprep.mubr.bf16.mxu0 %v6447
    %6611 = vmatmul.mubr.bf16.gmra.mrb[0].mxu0 %v6446
    %v6612 = vpop.f32.mrb[0].mxu0
    %v6613 = vadd.f32 %v6481, %v6612
    %v6614 = vpop.f32.mrb[0].mxu0
    %v6615 = vpop.f32.mrb[0].mxu0
    %v6616 = vadd.f32 %v6481, %v6615
    %v6617 = vpop.f32.mrb[0].mxu0
    %6618 = vmatprep.mubr.bf16.mxu0 %v6449
    %6619 = vmatmul.mubr.bf16.gmra.mrb[0].mxu0 %v6448
    %v6620 = vpop.f32.mrb[0].mxu0
    %v6621 = vadd.f32 %v6481, %v6620
    %v6622 = vpop.f32.mrb[0].mxu0
    %v6623 = vpop.f32.mrb[0].mxu0
    %v6624 = vadd.f32 %v6481, %v6623
    %v6625 = vpop.f32.mrb[0].mxu0
    %6626 = vmatprep.mubr.bf16.mxu0 %v6451
    %6627 = vmatmul.mubr.bf16.gmra.mrb[0].mxu0 %v6450
    %v6628 = vpop.f32.mrb[0].mxu0
    %v6629 = vadd.f32 %v6481, %v6628
    %v6630 = vpop.f32.mrb[0].mxu0
    %v6631 = vpop.f32.mrb[0].mxu0
    %v6632 = vadd.f32 %v6481, %v6631
    %v6633 = vpop.f32.mrb[0].mxu0
    %6634 = vmatprep.mubr.bf16.mxu0 %v6453
    %6635 = vmatmul.mubr.bf16.gmra.mrb[0].mxu0 %v6452
    %v6636 = vpop.f32.mrb[0].mxu0
    %v6637 = vadd.f32 %v6481, %v6636
    %v6638 = vpop.f32.mrb[0].mxu0
    %v6639 = vpop.f32.mrb[0].mxu0
    %v6640 = vadd.f32 %v6481, %v6639
    %v6641 = vpop.f32.mrb[0].mxu0
    %6642 = vmatprep.mubr.bf16.mxu0 %v6455
    %6643 = vmatmul.mubr.bf16.gmra.mrb[0].mxu0 %v6454
    %v6644 = vpop.f32.mrb[0].mxu0
    %v6645 = vadd.f32 %v6481, %v6644
    %v6646 = vpop.f32.mrb[0].mxu0
    %v6647 = vpop.f32.mrb[0].mxu0
    %v6648 = vadd.f32 %v6481, %v6647
    %v6649 = vpop.f32.mrb[0].mxu0
    %6650 = vmatprep.mubr.bf16.mxu0 %v6457
    %6651 = vmatmul.mubr.bf16.gmra.mrb[0].mxu0 %v6456
    %v6652 = vpop.f32.mrb[0].mxu0
    %v6653 = vadd.f32 %v6481, %v6652
    %v6654 = vpop.f32.mrb[0].mxu0
    %v6655 = vpop.f32.mrb[0].mxu0
    %v6656 = vadd.f32 %v6481, %v6655
    %v6657 = vpop.f32.mrb[0].mxu0
    %6658 = vmatprep.mubr.bf16.mxu0 %v6459
    %6659 = vmatmul.mubr.bf16.gmra.mrb[0].mxu0 %v6458
    %v6660 = vpop.f32.mrb[0].mxu0
    %v6661 = vadd.f32 %v6481, %v6660
    %v6662 = vpop.f32.mrb[0].mxu0
    %v6663 = vpop.f32.mrb[0].mxu0
    %v6664 = vadd.f32 %v6481, %v6663
    %v6665 = vpop.f32.mrb[0].mxu0
    %6666 = vmatprep.mubr.bf16.mxu0 %v6461
    %6667 = vmatmul.mubr.bf16.gmra.mrb[0].mxu0 %v6460
    %v6668 = vpop.f32.mrb[0].mxu0
    %v6669 = vadd.f32 %v6481, %v6668
    %v6670 = vpop.f32.mrb[0].mxu0
    %v6671 = vpop.f32.mrb[0].mxu0
    %v6672 = vadd.f32 %v6481, %v6671
    %v6673 = vpop.f32.mrb[0].mxu0
    %6674 = vmatprep.mubr.bf16.mxu0 %v6463
    %6675 = vmatmul.mubr.bf16.gmra.mrb[0].mxu0 %v6462
    %v6676 = vpop.f32.mrb[0].mxu0
    %v6677 = vadd.f32 %v6481, %v6676
    %v6678 = vpop.f32.mrb[0].mxu0
    %v6679 = vpop.f32.mrb[0].mxu0
    %v6680 = vadd.f32 %v6481, %v6679
    %v6681 = vpop.f32.mrb[0].mxu0
    %6682 = vmatprep.mubr.bf16.mxu0 %v6465
    %6683 = vmatmul.mubr.bf16.gmra.mrb[0].mxu0 %v6464
    %v6684 = vpop.f32.mrb[0].mxu0
    %v6685 = vadd.f32 %v6481, %v6684
    %v6686 = vpop.f32.mrb[0].mxu0
    %v6687 = vpop.f32.mrb[0].mxu0
    %v6688 = vadd.f32 %v6481, %v6687
    %v6689 = vpop.f32.mrb[0].mxu0
    %6690 = vmatprep.mubr.bf16.mxu0 %v6467
    %6691 = vmatmul.mubr.bf16.gmra.mrb[0].mxu0 %v6466
    %v6692 = vpop.f32.mrb[0].mxu0
    %v6693 = vadd.f32 %v6481, %v6692
    %v6694 = vpop.f32.mrb[0].mxu0
    %v6695 = vpop.f32.mrb[0].mxu0
    %v6696 = vadd.f32 %v6481, %v6695
    %v6697 = vpop.f32.mrb[0].mxu0
    %6698 = vmatprep.mubr.bf16.mxu0 %v6469
    %6699 = vmatmul.mubr.bf16.gmra.mrb[0].mxu0 %v6468
    %v6700 = vpop.f32.mrb[0].mxu0
    %v6701 = vadd.f32 %v6481, %v6700
    %v6702 = vpop.f32.mrb[0].mxu0
    %v6703 = vpop.f32.mrb[0].mxu0
    %v6704 = vadd.f32 %v6481, %v6703
    %v6705 = vpop.f32.mrb[0].mxu0
    %6706 = vmatprep.mubr.bf16.mxu0 %v6471
    %6707 = vmatmul.mubr.bf16.gmra.mrb[0].mxu0 %v6470
    %v6708 = vpop.f32.mrb[0].mxu0
    %v6709 = vadd.f32 %v6481, %v6708
    %v6710 = vpop.f32.mrb[0].mxu0
    %v6711 = vpop.f32.mrb[0].mxu0
    %v6712 = vadd.f32 %v6481, %v6711
    %v6713 = vpop.f32.mrb[0].mxu0
    %6714 = vmatprep.mubr.bf16.mxu0 %v6473
    %6715 = vmatmul.mubr.bf16.gmra.mrb[0].mxu0 %v6472
    %v6716 = vpop.f32.mrb[0].mxu0
    %v6717 = vadd.f32 %v6481, %v6716
    %v6718 = vpop.f32.mrb[0].mxu0
    %v6719 = vpop.f32.mrb[0].mxu0
    %v6720 = vadd.f32 %v6481, %v6719
    %v6721 = vpop.f32.mrb[0].mxu0
    %6722 = vmatprep.mubr.bf16.mxu0 %v6475
    %6723 = vmatmul.mubr.bf16.gmra.mrb[0].mxu0 %v6474
    %v6724 = vpop.f32.mrb[0].mxu0
    %v6725 = vadd.f32 %v6481, %v6724
    %v6726 = vpop.f32.mrb[0].mxu0
    %v6727 = vpop.f32.mrb[0].mxu0
    %v6728 = vadd.f32 %v6481, %v6727
    %v6729 = vpop.f32.mrb[0].mxu0
    %6730 = vmatprep.mubr.bf16.mxu0 %v6477
    %6731 = vmatmul.mubr.bf16.gmra.mrb[0].mxu0 %v6476
    %v6732 = vpop.f32.mrb[0].mxu0
    %v6733 = vadd.f32 %v6481, %v6732
    %v6734 = vpop.f32.mrb[0].mxu0
    %v6735 = vpop.f32.mrb[0].mxu0
    %v6736 = vadd.f32 %v6481, %v6735
    %v6737 = vpop.f32.mrb[0].mxu0
    %6738 = vdwg.mxu0
    %v6755 = vunpack.c.l.b16 %v6381
    %v6756 = vunpack.c.l.b16 %v6382
    %v6757 = vunpack.c.l.b16 %v6383
    %v6758 = vunpack.c.l.b16 %v6384
    %v6759 = vunpack.c.l.b16 %v6385
    %v6760 = vunpack.c.l.b16 %v6386
    %v6761 = vunpack.c.l.b16 %v6387
    %v6762 = vunpack.c.l.b16 %v6388
    %v6763 = vunpack.c.l.b16 %v6389
    %v6764 = vunpack.c.l.b16 %v6390
    %v6765 = vunpack.c.l.b16 %v6391
    %v6766 = vunpack.c.l.b16 %v6392
    %v6767 = vunpack.c.l.b16 %v6393
    %v6768 = vunpack.c.l.b16 %v6394
    %v6769 = vunpack.c.l.b16 %v6395
    %v6770 = vunpack.c.l.b16 %v6396
    %v6771 = vpack.c.b16 %v6756, %v6755
    %v6772 = vpack.c.b16 %v6758, %v6757
    %v6773 = vpack.c.b16 %v6760, %v6759
    %v6774 = vpack.c.b16 %v6762, %v6761
    %v6775 = vpack.c.b16 %v6764, %v6763
    %v6776 = vpack.c.b16 %v6766, %v6765
    %v6777 = vpack.c.b16 %v6768, %v6767
    %v6778 = vpack.c.b16 %v6770, %v6769
    %6787 = vmatprep.subr.bf16.mxu0 0
    %6788 = vmatpush1.bf16.msra.mxu0 %v6771
    %6789 = vmatprep.subr.bf16.mxu0 0
    %6790 = vmatpush1.bf16.msra.mxu0 %v6772
    %6791 = vmatprep.subr.bf16.mxu0 0
    %6792 = vmatpush1.bf16.msra.mxu0 %v6773
    %6793 = vmatprep.subr.bf16.mxu0 0
    %6794 = vmatpush1.bf16.msra.mxu0 %v6774
    %6795 = vmatprep.subr.bf16.mxu0 0
    %6796 = vmatpush1.bf16.msra.mxu0 %v6775
    %6797 = vmatprep.subr.bf16.mxu0 0
    %6798 = vmatpush1.bf16.msra.mxu0 %v6776
    %6799 = vmatprep.subr.bf16.mxu0 0
    %6800 = vmatpush1.bf16.msra.mxu0 %v6777
    %6801 = vmatprep.subr.bf16.mxu0 0
    %6802 = vmatpush1.bf16.msra.mxu0 %v6778
    %6803 = vmatprep.subr.bf16.mxu0 0
    %6804 = vmatpush1.bf16.msra.mxu0 0
    %6805 = vmatprep.subr.bf16.mxu0 0
    %6806 = vmatpush1.bf16.msra.mxu0 0
    %6807 = vmatprep.subr.bf16.mxu0 0
    %6808 = vmatpush1.bf16.msra.mxu0 0
    %6809 = vmatprep.subr.bf16.mxu0 0
    %6810 = vmatpush1.bf16.msra.mxu0 0
    %6811 = vmatprep.subr.bf16.mxu0 0
    %6812 = vmatpush1.bf16.msra.mxu0 0
    %6813 = vmatprep.subr.bf16.mxu0 0
    %6814 = vmatpush1.bf16.msra.mxu0 0
    %6815 = vmatprep.subr.bf16.mxu0 0
    %6816 = vmatpush1.bf16.msra.mxu0 0
    %6817 = vmatprep.subr.bf16.mxu0 0
    %6818 = vmatpush1.bf16.msra.mxu0 0
    %6819 = vmatprep.mubr.bf16.mxu0 0
    %6820 = vmatmul.mubr.bf16.gmra.mrb[0].mxu0 %v6397
    %v6821 = vpop.f32.mrb[0].mxu0
    %v6822 = vadd.f32 %v6613, %v6821
    %v6823 = vpop.f32.mrb[0].mxu0
    %v6824 = vpop.f32.mrb[0].mxu0
    %v6825 = vadd.f32 %v6616, %v6824
    %v6826 = vpop.f32.mrb[0].mxu0
    %6827 = vmatprep.mubr.bf16.mxu0 0
    %6828 = vmatmul.mubr.bf16.gmra.mrb[0].mxu0 %v6398
    %v6829 = vpop.f32.mrb[0].mxu0
    %v6830 = vadd.f32 %v6621, %v6829
    %v6831 = vpop.f32.mrb[0].mxu0
    %v6832 = vpop.f32.mrb[0].mxu0
    %v6833 = vadd.f32 %v6624, %v6832
    %v6834 = vpop.f32.mrb[0].mxu0
    %6835 = vmatprep.mubr.bf16.mxu0 0
    %6836 = vmatmul.mubr.bf16.gmra.mrb[0].mxu0 %v6399
    %v6837 = vpop.f32.mrb[0].mxu0
    %v6838 = vadd.f32 %v6629, %v6837
    %v6839 = vpop.f32.mrb[0].mxu0
    %v6840 = vpop.f32.mrb[0].mxu0
    %v6841 = vadd.f32 %v6632, %v6840
    %v6842 = vpop.f32.mrb[0].mxu0
    %6843 = vmatprep.mubr.bf16.mxu0 0
    %6844 = vmatmul.mubr.bf16.gmra.mrb[0].mxu0 %v6400
    %v6845 = vpop.f32.mrb[0].mxu0
    %v6846 = vadd.f32 %v6637, %v6845
    %v6847 = vpop.f32.mrb[0].mxu0
    %v6848 = vpop.f32.mrb[0].mxu0
    %v6849 = vadd.f32 %v6640, %v6848
    %v6850 = vpop.f32.mrb[0].mxu0
    %6851 = vmatprep.mubr.bf16.mxu0 0
    %6852 = vmatmul.mubr.bf16.gmra.mrb[0].mxu0 %v6401
    %v6853 = vpop.f32.mrb[0].mxu0
    %v6854 = vadd.f32 %v6645, %v6853
    %v6855 = vpop.f32.mrb[0].mxu0
    %v6856 = vpop.f32.mrb[0].mxu0
    %v6857 = vadd.f32 %v6648, %v6856
    %v6858 = vpop.f32.mrb[0].mxu0
    %6859 = vmatprep.mubr.bf16.mxu0 0
    %6860 = vmatmul.mubr.bf16.gmra.mrb[0].mxu0 %v6402
    %v6861 = vpop.f32.mrb[0].mxu0
    %v6862 = vadd.f32 %v6653, %v6861
    %v6863 = vpop.f32.mrb[0].mxu0
    %v6864 = vpop.f32.mrb[0].mxu0
    %v6865 = vadd.f32 %v6656, %v6864
    %v6866 = vpop.f32.mrb[0].mxu0
    %6867 = vmatprep.mubr.bf16.mxu0 0
    %6868 = vmatmul.mubr.bf16.gmra.mrb[0].mxu0 %v6403
    %v6869 = vpop.f32.mrb[0].mxu0
    %v6870 = vadd.f32 %v6661, %v6869
    %v6871 = vpop.f32.mrb[0].mxu0
    %v6872 = vpop.f32.mrb[0].mxu0
    %v6873 = vadd.f32 %v6664, %v6872
    %v6874 = vpop.f32.mrb[0].mxu0
    %6875 = vmatprep.mubr.bf16.mxu0 0
    %6876 = vmatmul.mubr.bf16.gmra.mrb[0].mxu0 %v6404
    %v6877 = vpop.f32.mrb[0].mxu0
    %v6878 = vadd.f32 %v6669, %v6877
    %v6879 = vpop.f32.mrb[0].mxu0
    %v6880 = vpop.f32.mrb[0].mxu0
    %v6881 = vadd.f32 %v6672, %v6880
    %v6882 = vpop.f32.mrb[0].mxu0
    %6883 = vmatprep.mubr.bf16.mxu0 0
    %6884 = vmatmul.mubr.bf16.gmra.mrb[0].mxu0 %v6405
    %v6885 = vpop.f32.mrb[0].mxu0
    %v6886 = vadd.f32 %v6677, %v6885
    %v6887 = vpop.f32.mrb[0].mxu0
    %v6888 = vpop.f32.mrb[0].mxu0
    %v6889 = vadd.f32 %v6680, %v6888
    %v6890 = vpop.f32.mrb[0].mxu0
    %6891 = vmatprep.mubr.bf16.mxu0 0
    %6892 = vmatmul.mubr.bf16.gmra.mrb[0].mxu0 %v6406
    %v6893 = vpop.f32.mrb[0].mxu0
    %v6894 = vadd.f32 %v6685, %v6893
    %v6895 = vpop.f32.mrb[0].mxu0
    %v6896 = vpop.f32.mrb[0].mxu0
    %v6897 = vadd.f32 %v6688, %v6896
    %v6898 = vpop.f32.mrb[0].mxu0
    %6899 = vmatprep.mubr.bf16.mxu0 0
    %6900 = vmatmul.mubr.bf16.gmra.mrb[0].mxu0 %v6407
    %v6901 = vpop.f32.mrb[0].mxu0
    %v6902 = vadd.f32 %v6693, %v6901
    %v6903 = vpop.f32.mrb[0].mxu0
    %v6904 = vpop.f32.mrb[0].mxu0
    %v6905 = vadd.f32 %v6696, %v6904
    %v6906 = vpop.f32.mrb[0].mxu0
    %6907 = vmatprep.mubr.bf16.mxu0 0
    %6908 = vmatmul.mubr.bf16.gmra.mrb[0].mxu0 %v6408
    %v6909 = vpop.f32.mrb[0].mxu0
    %v6910 = vadd.f32 %v6701, %v6909
    %v6911 = vpop.f32.mrb[0].mxu0
    %v6912 = vpop.f32.mrb[0].mxu0
    %v6913 = vadd.f32 %v6704, %v6912
    %v6914 = vpop.f32.mrb[0].mxu0
    %6915 = vmatprep.mubr.bf16.mxu0 0
    %6916 = vmatmul.mubr.bf16.gmra.mrb[0].mxu0 %v6409
    %v6917 = vpop.f32.mrb[0].mxu0
    %v6918 = vadd.f32 %v6709, %v6917
    %v6919 = vpop.f32.mrb[0].mxu0
    %v6920 = vpop.f32.mrb[0].mxu0
    %v6921 = vadd.f32 %v6712, %v6920
    %v6922 = vpop.f32.mrb[0].mxu0
    %6923 = vmatprep.mubr.bf16.mxu0 0
    %6924 = vmatmul.mubr.bf16.gmra.mrb[0].mxu0 %v6410
    %v6925 = vpop.f32.mrb[0].mxu0
    %v6926 = vadd.f32 %v6717, %v6925
    %v6927 = vpop.f32.mrb[0].mxu0
    %v6928 = vpop.f32.mrb[0].mxu0
    %v6929 = vadd.f32 %v6720, %v6928
    %v6930 = vpop.f32.mrb[0].mxu0
    %6931 = vmatprep.mubr.bf16.mxu0 0
    %6932 = vmatmul.mubr.bf16.gmra.mrb[0].mxu0 %v6411
    %v6933 = vpop.f32.mrb[0].mxu0
    %v6934 = vadd.f32 %v6725, %v6933
    %v6935 = vpop.f32.mrb[0].mxu0
    %v6936 = vpop.f32.mrb[0].mxu0
    %v6937 = vadd.f32 %v6728, %v6936
    %v6938 = vpop.f32.mrb[0].mxu0
    %6939 = vmatprep.mubr.bf16.mxu0 0
    %6940 = vmatmul.mubr.bf16.gmra.mrb[0].mxu0 %v6412
    %v6941 = vpop.f32.mrb[0].mxu0
    %v6942 = vadd.f32 %v6733, %v6941
    %v6943 = vpop.f32.mrb[0].mxu0
    %v6944 = vpop.f32.mrb[0].mxu0
    %v6945 = vadd.f32 %v6736, %v6944
    %v6946 = vpop.f32.mrb[0].mxu0
    %6947 = vdwg.mxu0
    %6948 = vst [vmem:[#allocation7] sm:$0xff] %v6822
    %6949 = vst [vmem:[#allocation7 + $0x8] sm:$0xff] %v6825
    %6950 = vst [vmem:[#allocation7 + $0x10] sm:$0xff] %v6830
    %6951 = vst [vmem:[#allocation7 + $0x18] sm:$0xff] %v6833
    %6952 = vst [vmem:[#allocation7 + $0x20] sm:$0xff] %v6838
    %6953 = vst [vmem:[#allocation7 + $0x28] sm:$0xff] %v6841
    %6954 = vst [vmem:[#allocation7 + $0x30] sm:$0xff] %v6846
    %6955 = vst [vmem:[#allocation7 + $0x38] sm:$0xff] %v6849
    %6956 = vst [vmem:[#allocation7 + $0x40] sm:$0xff] %v6854
    %6957 = vst [vmem:[#allocation7 + $0x48] sm:$0xff] %v6857
    %6958 = vst [vmem:[#allocation7 + $0x50] sm:$0xff] %v6862
    %6959 = vst [vmem:[#allocation7 + $0x58] sm:$0xff] %v6865
    %6960 = vst [vmem:[#allocation7 + $0x60] sm:$0xff] %v6870
    %6961 = vst [vmem:[#allocation7 + $0x68] sm:$0xff] %v6873
    %6962 = vst [vmem:[#allocation7 + $0x70] sm:$0xff] %v6878
    %6963 = vst [vmem:[#allocation7 + $0x78] sm:$0xff] %v6881
    %6964 = vst [vmem:[#allocation7 + $0x80] sm:$0xff] %v6886
    %6965 = vst [vmem:[#allocation7 + $0x88] sm:$0xff] %v6889
    %6966 = vst [vmem:[#allocation7 + $0x90] sm:$0xff] %v6894
    %6967 = vst [vmem:[#allocation7 + $0x98] sm:$0xff] %v6897
    %6968 = vst [vmem:[#allocation7 + $0xa0] sm:$0xff] %v6902
    %6969 = vst [vmem:[#allocation7 + $0xa8] sm:$0xff] %v6905
    %6970 = vst [vmem:[#allocation7 + $0xb0] sm:$0xff] %v6910
    %6971 = vst [vmem:[#allocation7 + $0xb8] sm:$0xff] %v6913
    %6972 = vst [vmem:[#allocation7 + $0xc0] sm:$0xff] %v6918
    %6973 = vst [vmem:[#allocation7 + $0xc8] sm:$0xff] %v6921
    %6974 = vst [vmem:[#allocation7 + $0xd0] sm:$0xff] %v6926
    %6975 = vst [vmem:[#allocation7 + $0xd8] sm:$0xff] %v6929
    %6976 = vst [vmem:[#allocation7 + $0xe0] sm:$0xff] %v6934
    %6977 = vst [vmem:[#allocation7 + $0xe8] sm:$0xff] %v6937
    %6978 = vst [vmem:[#allocation7 + $0xf0] sm:$0xff] %v6942
    %6979 = vst [vmem:[#allocation7 + $0xf8] sm:$0xff] %v6945
    // Predicated region
    $region38: #{tpu_custom_call.1} parent=1 // pred_check
      _
    $region39: #{tpu_custom_call.1} parent=1 // pred_check_branch
      %6981 = sbr.rel (0) target = $region41
    $region40: #{tpu_custom_call.1} parent=1 // pred_region
      %s6983 = ssub.s32 4096, 4096
      %6984 = vsyncadd [#allocation4], %s6983
      %s6985 = sshll.u32 [#allocation7], 4
      %s6986 = int_to_ptr.vmem [resolvable:$true] %s6985
      %6991 = dma.vmem_to_hbm [thread:$0]  %s6986, 4096, %s7, [#allocation4], 128, 128, 8
    $region41: #{tpu_custom_call.1} parent=1 // pred_fallthru
      _
    // Predicated region
    $region42: #{tpu_custom_call.1} parent=1 // pred_check
      _
    $region43: #{tpu_custom_call.1} parent=1 // pred_check_branch
      %6993 = sbr.rel (0) target = $region45
    $region44: #{tpu_custom_call.1} parent=1 // pred_region
      %6994 = dma.done [#allocation4], 4096
    $region45: #{tpu_custom_call.1} parent=1 // pred_fallthru
      _
    %6995 = vsyncpa [#allocation3], 1
    %6996 = vsyncpa [#allocation6], 1
    %6997 = vsyncpa [#allocation4], 1

</llo_original>
